<compile_context>
chip_gen: v5e
topology: v5e:2x2
jax: 0.10.0
libtpu: 0.0.40
codegen_flags: <defaults>
</compile_context>

<pallas_src>
import jax
import jax.numpy as jnp
from jax.experimental import pallas as pl
from jax.experimental.pallas import tpu as pltpu

LANE = 128

# Original PyTorch layer list: (in_features, out_features, relu_after).
LAYERS = [
    (784, 512, True),
    (512, 256, True),
    (256, 128, True),
    (128, 64, True),
    (64, 8, False),     # end of encoder: no ReLU
    (8, 64, True),
    (64, 128, True),
    (128, 256, True),
    (256, 512, True),
    (512, 784, False),  # end of decoder: no ReLU
]

# Effective layers after fusing the bottleneck pair (64->8 no-ReLU, 8->64 ReLU)
# into a single 64->64 layer with ReLU (no nonlinearity sits between them, so
# this is an exact algebraic rewrite up to bf16 rounding of the fused weight).
EFF_LAYERS = [
    (784, 512, True),
    (512, 256, True),
    (256, 128, True),
    (128, 64, True),
    (64, 64, True),     # fused bottleneck
    (64, 128, True),
    (128, 256, True),
    (256, 512, True),
    (512, 784, False),
]


def _round_up(n, m):
    return ((n + m - 1) // m) * m


EFF_FEATS = [EFF_LAYERS[0][0]] + [fout for (_, fout, _) in EFF_LAYERS]
EFF_PAD = [_round_up(d, LANE) for d in EFF_FEATS]   # [896,512,256,128,128,128,128,256,512,896]
IN_P, OUT_P = EFF_PAD[0], EFF_PAD[-1]


def _act_dtype():
    """bf16 elementwise chain on chips with a bf16 VPU; f32 on v5e/v2/v3."""
    try:
        kind = jax.devices()[0].device_kind.lower()
    except Exception:
        return jnp.float32
    if any(t in kind for t in ("v2", "v3", "v5 lite", "v5e", "v5lite")):
        return jnp.float32
    return jnp.bfloat16


def autoencoder_kernel(x_ref, *refs):
    """refs = (w1, b1, ..., w9, b9, out_ref). x/out/weights bf16, f32 MXU accumulation."""
    out_ref = refs[-1]
    params = refs[:-1]

    h = x_ref[...]  # (TB, 896) bf16
    for i, (_, _, relu) in enumerate(EFF_LAYERS):
        w = params[2 * i][...]        # (in_p, out_p) bf16
        b = params[2 * i + 1][...]    # (1, out_p)  act dtype
        acc = jnp.dot(h.astype(jnp.bfloat16), w,
                      preferred_element_type=jnp.float32)
        h = acc.astype(b.dtype) + b
        if relu:
            h = jnp.maximum(h, 0)
    out_ref[...] = h.astype(out_ref.dtype)


def make_params(key):
    """Deterministic synthetic parameters in PyTorch Linear layout (out, in)."""
    weights, biases = [], []
    for (fin, fout, _) in LAYERS:
        kw, kb, key = jax.random.split(key, 3)
        bound = 1.0 / jnp.sqrt(jnp.float32(fin))
        weights.append(jax.random.uniform(kw, (fout, fin), jnp.float32, -bound, bound))
        biases.append(jax.random.uniform(kb, (fout,), jnp.float32, -bound, bound))
    return weights, biases


def prepare_params(weights, biases, act_dtype):
    """Transpose to (in, out), fuse the bottleneck pair, pad to 128 multiples, cast."""
    w_t = [jnp.transpose(w) for w in weights]           # (fin, fout) f32
    fused_w = w_t[4] @ w_t[5]                           # (64, 64) f32
    fused_b = biases[4] @ w_t[5] + biases[5]            # (64,)
    eff_w = w_t[:4] + [fused_w] + w_t[6:]
    eff_b = list(biases[:4]) + [fused_b] + list(biases[6:])

    w_pad, b_pad = [], []
    for i, (fin, fout, _) in enumerate(EFF_LAYERS):
        in_p, out_p = EFF_PAD[i], EFF_PAD[i + 1]
        wp = jnp.zeros((in_p, out_p), jnp.float32).at[:fin, :fout].set(eff_w[i])
        w_pad.append(wp.astype(jnp.bfloat16))
        bp = jnp.zeros((1, out_p), jnp.float32).at[0, :fout].set(eff_b[i])
        b_pad.append(bp.astype(act_dtype))
    return w_pad, b_pad


def pad_input(x):
    """Producer-side pad + bf16 cast (kept OUT of the per-call hot path)."""
    B, F = x.shape
    b_tot = _round_up(max(B, LANE), LANE)
    xp = jnp.zeros((b_tot, IN_P), jnp.bfloat16)
    return xp.at[:B, :F].set(x.astype(jnp.bfloat16))


def _choose_tb(b_tot):
    """Largest batch tile that still leaves >= 2 grid steps (v7x 2-TC sharding)."""
    for tb in (512, 256):
        if b_tot % tb == 0 and b_tot // tb >= 2:
            return tb
    return 128


@jax.jit
def big_autoencoder_padded(x_p, w_pad, b_pad):
    """Hot path: padded bf16 in -> padded bf16 out. No pad/slice copies here."""
    b_tot = x_p.shape[0]
    tb = _choose_tb(b_tot)

    args = [x_p]
    in_specs = [pl.BlockSpec((tb, IN_P), lambda i: (i, 0))]
    for w, b in zip(w_pad, b_pad):
        args.append(w)
        in_specs.append(pl.BlockSpec(w.shape, lambda i: (0, 0)))  # VMEM-resident
        args.append(b)
        in_specs.append(pl.BlockSpec(b.shape, lambda i: (0, 0)))

    return pl.pallas_call(
        autoencoder_kernel,
        grid=(b_tot // tb,),
        in_specs=in_specs,
        out_specs=pl.BlockSpec((tb, OUT_P), lambda i: (i, 0)),
        out_shape=jax.ShapeDtypeStruct((b_tot, OUT_P), jnp.bfloat16),
        compiler_params=pltpu.CompilerParams(
            dimension_semantics=("parallel",),
            vmem_limit_bytes=32 << 20,
        ),
    )(*args)


def reference_matching(x_p, w_pad, b_pad):
    """Pure-JAX reference with the kernel's exact numerics (bf16 / f32-acc / fusion)."""
    h = x_p
    for i, (_, _, relu) in enumerate(EFF_LAYERS):
        acc = jnp.dot(h.astype(jnp.bfloat16), w_pad[i],
                      preferred_element_type=jnp.float32)
        h = acc.astype(b_pad[i].dtype) + b_pad[i]
        if relu:
            h = jnp.maximum(h, 0)
    return h.astype(jnp.bfloat16)


def reference_f32(x, weights, biases):
    """Full-precision PyTorch-semantics reference (un-fused, f32 everywhere)."""
    h = x
    for i, (_, _, relu) in enumerate(LAYERS):
        h = h @ weights[i].T + biases[i]
        if relu:
            h = jnp.maximum(h, 0.0)
    return h


if __name__ == "__main__":
    key = jax.random.PRNGKey(0)
    kx, kp = jax.random.split(key)

    B = 200  # not a multiple of the batch tile -> exercises pad + (consumer-side) slice
    x = jax.random.normal(kx, (B, 784), jnp.float32)
    weights, biases = make_params(kp)
    w_pad, b_pad = prepare_params(weights, biases, _act_dtype())

    x_p = pad_input(x)                         # one-time producer-side pad/cast
    out_pad = big_autoencoder_padded(x_p, w_pad, b_pad)
    out_pad = jax.block_until_ready(out_pad)

    assert out_pad.shape == (x_p.shape[0], OUT_P), out_pad.shape
    out = out_pad[:B, :784].astype(jnp.float32)          # consumer-side slice

    ref_match = reference_matching(x_p, w_pad, b_pad)[:B, :784].astype(jnp.float32)
    assert jnp.allclose(out, ref_match, atol=1e-2, rtol=1e-2), \
        "mismatch vs matching-numerics reference"

    ref = reference_f32(x, weights, biases)
    max_err = float(jnp.max(jnp.abs(out - ref)))
    assert max_err < 1e-1, f"mismatch vs f32 reference (max_err={max_err})"

    print("KERNEL_OK")
</pallas_src>

<mosaic_0001>
module attributes {stable_mosaic.version = 11 : i64} {
  func.func @autoencoder_kernel(%arg0: i32, %arg1: memref<128x896xbf16, #tpu.memory_space<vmem>>, %arg2: memref<896x512xbf16, #tpu.memory_space<vmem>>, %arg3: memref<1x512xbf16, #tpu.memory_space<vmem>>, %arg4: memref<512x256xbf16, #tpu.memory_space<vmem>>, %arg5: memref<1x256xbf16, #tpu.memory_space<vmem>>, %arg6: memref<256x128xbf16, #tpu.memory_space<vmem>>, %arg7: memref<1x128xbf16, #tpu.memory_space<vmem>>, %arg8: memref<128x128xbf16, #tpu.memory_space<vmem>>, %arg9: memref<1x128xbf16, #tpu.memory_space<vmem>>, %arg10: memref<128x128xbf16, #tpu.memory_space<vmem>>, %arg11: memref<1x128xbf16, #tpu.memory_space<vmem>>, %arg12: memref<128x128xbf16, #tpu.memory_space<vmem>>, %arg13: memref<1x128xbf16, #tpu.memory_space<vmem>>, %arg14: memref<128x256xbf16, #tpu.memory_space<vmem>>, %arg15: memref<1x256xbf16, #tpu.memory_space<vmem>>, %arg16: memref<256x512xbf16, #tpu.memory_space<vmem>>, %arg17: memref<1x512xbf16, #tpu.memory_space<vmem>>, %arg18: memref<512x896xbf16, #tpu.memory_space<vmem>>, %arg19: memref<1x896xbf16, #tpu.memory_space<vmem>>, %arg20: memref<128x896xbf16, #tpu.memory_space<vmem>>) attributes {dimension_semantics = [#tpu.dimension_semantics<parallel>], iteration_bounds = array<i64: 2>, scalar_prefetch = 0 : i64, scratch_operands = 0 : i64, tpu.core_type = #tpu.core_type<tc>, window_params = [{transform_indices = @transform_0, window_bounds = array<i64: 128, 896>}, {pipeline_mode = #tpu.pipeline_mode<synchronous>, transform_indices = @transform_1, window_bounds = array<i64: 896, 512>}, {pipeline_mode = #tpu.pipeline_mode<synchronous>, transform_indices = @transform_2, window_bounds = array<i64: 1, 512>}, {pipeline_mode = #tpu.pipeline_mode<synchronous>, transform_indices = @transform_3, window_bounds = array<i64: 512, 256>}, {pipeline_mode = #tpu.pipeline_mode<synchronous>, transform_indices = @transform_4, window_bounds = array<i64: 1, 256>}, {pipeline_mode = #tpu.pipeline_mode<synchronous>, transform_indices = @transform_5, window_bounds = array<i64: 256, 128>}, {pipeline_mode = #tpu.pipeline_mode<synchronous>, transform_indices = @transform_6, window_bounds = array<i64: 1, 128>}, {pipeline_mode = #tpu.pipeline_mode<synchronous>, transform_indices = @transform_7, window_bounds = array<i64: 128, 128>}, {pipeline_mode = #tpu.pipeline_mode<synchronous>, transform_indices = @transform_8, window_bounds = array<i64: 1, 128>}, {pipeline_mode = #tpu.pipeline_mode<synchronous>, transform_indices = @transform_9, window_bounds = array<i64: 128, 128>}, {pipeline_mode = #tpu.pipeline_mode<synchronous>, transform_indices = @transform_10, window_bounds = array<i64: 1, 128>}, {pipeline_mode = #tpu.pipeline_mode<synchronous>, transform_indices = @transform_11, window_bounds = array<i64: 128, 128>}, {pipeline_mode = #tpu.pipeline_mode<synchronous>, transform_indices = @transform_12, window_bounds = array<i64: 1, 128>}, {pipeline_mode = #tpu.pipeline_mode<synchronous>, transform_indices = @transform_13, window_bounds = array<i64: 128, 256>}, {pipeline_mode = #tpu.pipeline_mode<synchronous>, transform_indices = @transform_14, window_bounds = array<i64: 1, 256>}, {pipeline_mode = #tpu.pipeline_mode<synchronous>, transform_indices = @transform_15, window_bounds = array<i64: 256, 512>}, {pipeline_mode = #tpu.pipeline_mode<synchronous>, transform_indices = @transform_16, window_bounds = array<i64: 1, 512>}, {pipeline_mode = #tpu.pipeline_mode<synchronous>, transform_indices = @transform_17, window_bounds = array<i64: 512, 896>}, {pipeline_mode = #tpu.pipeline_mode<synchronous>, transform_indices = @transform_18, window_bounds = array<i64: 1, 896>}, {transform_indices = @transform_19, window_bounds = array<i64: 128, 896>}]} {
    %c0 = arith.constant 0 : index
    %c0_0 = arith.constant 0 : index
    %0 = vector.load %arg1[%c0, %c0_0] : memref<128x896xbf16, #tpu.memory_space<vmem>>, vector<128x896xbf16>
    %c0_1 = arith.constant 0 : index
    %c0_2 = arith.constant 0 : index
    %1 = vector.load %arg2[%c0_1, %c0_2] : memref<896x512xbf16, #tpu.memory_space<vmem>>, vector<896x512xbf16>
    %c0_3 = arith.constant 0 : index
    %c0_4 = arith.constant 0 : index
    %2 = vector.load %arg3[%c0_3, %c0_4] : memref<1x512xbf16, #tpu.memory_space<vmem>>, vector<1x512xbf16>
    %cst = arith.constant dense<0.000000e+00> : vector<128x512xf32>
    %3 = tpu.matmul %0, %1, %cst {dimension_numbers = #tpu.dot_dimension_numbers<[1], [0], [0], [1], [0, 0, 1, 1], [], []>} : vector<128x896xbf16>, vector<896x512xbf16>, vector<128x512xf32> -> vector<128x512xf32>
    %4 = arith.truncf %3 : vector<128x512xf32> to vector<128x512xbf16>
    %5 = vector.broadcast %2 : vector<1x512xbf16> to vector<128x512xbf16>
    %6 = arith.addf %4, %5 : vector<128x512xbf16>
    %cst_5 = arith.constant 0.000000e+00 : bf16
    %7 = vector.broadcast %cst_5 : bf16 to vector<128x512xbf16>
    %8 = arith.maximumf %6, %7 : vector<128x512xbf16>
    %c0_6 = arith.constant 0 : index
    %c0_7 = arith.constant 0 : index
    %9 = vector.load %arg4[%c0_6, %c0_7] : memref<512x256xbf16, #tpu.memory_space<vmem>>, vector<512x256xbf16>
    %c0_8 = arith.constant 0 : index
    %c0_9 = arith.constant 0 : index
    %10 = vector.load %arg5[%c0_8, %c0_9] : memref<1x256xbf16, #tpu.memory_space<vmem>>, vector<1x256xbf16>
    %cst_10 = arith.constant dense<0.000000e+00> : vector<128x256xf32>
    %11 = tpu.matmul %8, %9, %cst_10 {dimension_numbers = #tpu.dot_dimension_numbers<[1], [0], [0], [1], [0, 0, 1, 1], [], []>} : vector<128x512xbf16>, vector<512x256xbf16>, vector<128x256xf32> -> vector<128x256xf32>
    %12 = arith.truncf %11 : vector<128x256xf32> to vector<128x256xbf16>
    %13 = vector.broadcast %10 : vector<1x256xbf16> to vector<128x256xbf16>
    %14 = arith.addf %12, %13 : vector<128x256xbf16>
    %cst_11 = arith.constant 0.000000e+00 : bf16
    %15 = vector.broadcast %cst_11 : bf16 to vector<128x256xbf16>
    %16 = arith.maximumf %14, %15 : vector<128x256xbf16>
    %c0_12 = arith.constant 0 : index
    %c0_13 = arith.constant 0 : index
    %17 = vector.load %arg6[%c0_12, %c0_13] : memref<256x128xbf16, #tpu.memory_space<vmem>>, vector<256x128xbf16>
    %c0_14 = arith.constant 0 : index
    %c0_15 = arith.constant 0 : index
    %18 = vector.load %arg7[%c0_14, %c0_15] : memref<1x128xbf16, #tpu.memory_space<vmem>>, vector<1x128xbf16>
    %cst_16 = arith.constant dense<0.000000e+00> : vector<128x128xf32>
    %19 = tpu.matmul %16, %17, %cst_16 {dimension_numbers = #tpu.dot_dimension_numbers<[1], [0], [0], [1], [0, 0, 1, 1], [], []>} : vector<128x256xbf16>, vector<256x128xbf16>, vector<128x128xf32> -> vector<128x128xf32>
    %20 = arith.truncf %19 : vector<128x128xf32> to vector<128x128xbf16>
    %21 = vector.broadcast %18 : vector<1x128xbf16> to vector<128x128xbf16>
    %22 = arith.addf %20, %21 : vector<128x128xbf16>
    %cst_17 = arith.constant 0.000000e+00 : bf16
    %23 = vector.broadcast %cst_17 : bf16 to vector<128x128xbf16>
    %24 = arith.maximumf %22, %23 : vector<128x128xbf16>
    %c0_18 = arith.constant 0 : index
    %c0_19 = arith.constant 0 : index
    %25 = vector.load %arg8[%c0_18, %c0_19] : memref<128x128xbf16, #tpu.memory_space<vmem>>, vector<128x128xbf16>
    %c0_20 = arith.constant 0 : index
    %c0_21 = arith.constant 0 : index
    %26 = vector.load %arg9[%c0_20, %c0_21] : memref<1x128xbf16, #tpu.memory_space<vmem>>, vector<1x128xbf16>
    %cst_22 = arith.constant dense<0.000000e+00> : vector<128x128xf32>
    %27 = tpu.matmul %24, %25, %cst_22 {dimension_numbers = #tpu.dot_dimension_numbers<[1], [0], [0], [1], [0, 0, 1, 1], [], []>} : vector<128x128xbf16>, vector<128x128xbf16>, vector<128x128xf32> -> vector<128x128xf32>
    %28 = arith.truncf %27 : vector<128x128xf32> to vector<128x128xbf16>
    %29 = vector.broadcast %26 : vector<1x128xbf16> to vector<128x128xbf16>
    %30 = arith.addf %28, %29 : vector<128x128xbf16>
    %cst_23 = arith.constant 0.000000e+00 : bf16
    %31 = vector.broadcast %cst_23 : bf16 to vector<128x128xbf16>
    %32 = arith.maximumf %30, %31 : vector<128x128xbf16>
    %c0_24 = arith.constant 0 : index
    %c0_25 = arith.constant 0 : index
    %33 = vector.load %arg10[%c0_24, %c0_25] : memref<128x128xbf16, #tpu.memory_space<vmem>>, vector<128x128xbf16>
    %c0_26 = arith.constant 0 : index
    %c0_27 = arith.constant 0 : index
    %34 = vector.load %arg11[%c0_26, %c0_27] : memref<1x128xbf16, #tpu.memory_space<vmem>>, vector<1x128xbf16>
    %cst_28 = arith.constant dense<0.000000e+00> : vector<128x128xf32>
    %35 = tpu.matmul %32, %33, %cst_28 {dimension_numbers = #tpu.dot_dimension_numbers<[1], [0], [0], [1], [0, 0, 1, 1], [], []>} : vector<128x128xbf16>, vector<128x128xbf16>, vector<128x128xf32> -> vector<128x128xf32>
    %36 = arith.truncf %35 : vector<128x128xf32> to vector<128x128xbf16>
    %37 = vector.broadcast %34 : vector<1x128xbf16> to vector<128x128xbf16>
    %38 = arith.addf %36, %37 : vector<128x128xbf16>
    %cst_29 = arith.constant 0.000000e+00 : bf16
    %39 = vector.broadcast %cst_29 : bf16 to vector<128x128xbf16>
    %40 = arith.maximumf %38, %39 : vector<128x128xbf16>
    %c0_30 = arith.constant 0 : index
    %c0_31 = arith.constant 0 : index
    %41 = vector.load %arg12[%c0_30, %c0_31] : memref<128x128xbf16, #tpu.memory_space<vmem>>, vector<128x128xbf16>
    %c0_32 = arith.constant 0 : index
    %c0_33 = arith.constant 0 : index
    %42 = vector.load %arg13[%c0_32, %c0_33] : memref<1x128xbf16, #tpu.memory_space<vmem>>, vector<1x128xbf16>
    %cst_34 = arith.constant dense<0.000000e+00> : vector<128x128xf32>
    %43 = tpu.matmul %40, %41, %cst_34 {dimension_numbers = #tpu.dot_dimension_numbers<[1], [0], [0], [1], [0, 0, 1, 1], [], []>} : vector<128x128xbf16>, vector<128x128xbf16>, vector<128x128xf32> -> vector<128x128xf32>
    %44 = arith.truncf %43 : vector<128x128xf32> to vector<128x128xbf16>
    %45 = vector.broadcast %42 : vector<1x128xbf16> to vector<128x128xbf16>
    %46 = arith.addf %44, %45 : vector<128x128xbf16>
    %cst_35 = arith.constant 0.000000e+00 : bf16
    %47 = vector.broadcast %cst_35 : bf16 to vector<128x128xbf16>
    %48 = arith.maximumf %46, %47 : vector<128x128xbf16>
    %c0_36 = arith.constant 0 : index
    %c0_37 = arith.constant 0 : index
    %49 = vector.load %arg14[%c0_36, %c0_37] : memref<128x256xbf16, #tpu.memory_space<vmem>>, vector<128x256xbf16>
    %c0_38 = arith.constant 0 : index
    %c0_39 = arith.constant 0 : index
    %50 = vector.load %arg15[%c0_38, %c0_39] : memref<1x256xbf16, #tpu.memory_space<vmem>>, vector<1x256xbf16>
    %cst_40 = arith.constant dense<0.000000e+00> : vector<128x256xf32>
    %51 = tpu.matmul %48, %49, %cst_40 {dimension_numbers = #tpu.dot_dimension_numbers<[1], [0], [0], [1], [0, 0, 1, 1], [], []>} : vector<128x128xbf16>, vector<128x256xbf16>, vector<128x256xf32> -> vector<128x256xf32>
    %52 = arith.truncf %51 : vector<128x256xf32> to vector<128x256xbf16>
    %53 = vector.broadcast %50 : vector<1x256xbf16> to vector<128x256xbf16>
    %54 = arith.addf %52, %53 : vector<128x256xbf16>
    %cst_41 = arith.constant 0.000000e+00 : bf16
    %55 = vector.broadcast %cst_41 : bf16 to vector<128x256xbf16>
    %56 = arith.maximumf %54, %55 : vector<128x256xbf16>
    %c0_42 = arith.constant 0 : index
    %c0_43 = arith.constant 0 : index
    %57 = vector.load %arg16[%c0_42, %c0_43] : memref<256x512xbf16, #tpu.memory_space<vmem>>, vector<256x512xbf16>
    %c0_44 = arith.constant 0 : index
    %c0_45 = arith.constant 0 : index
    %58 = vector.load %arg17[%c0_44, %c0_45] : memref<1x512xbf16, #tpu.memory_space<vmem>>, vector<1x512xbf16>
    %cst_46 = arith.constant dense<0.000000e+00> : vector<128x512xf32>
    %59 = tpu.matmul %56, %57, %cst_46 {dimension_numbers = #tpu.dot_dimension_numbers<[1], [0], [0], [1], [0, 0, 1, 1], [], []>} : vector<128x256xbf16>, vector<256x512xbf16>, vector<128x512xf32> -> vector<128x512xf32>
    %60 = arith.truncf %59 : vector<128x512xf32> to vector<128x512xbf16>
    %61 = vector.broadcast %58 : vector<1x512xbf16> to vector<128x512xbf16>
    %62 = arith.addf %60, %61 : vector<128x512xbf16>
    %cst_47 = arith.constant 0.000000e+00 : bf16
    %63 = vector.broadcast %cst_47 : bf16 to vector<128x512xbf16>
    %64 = arith.maximumf %62, %63 : vector<128x512xbf16>
    %c0_48 = arith.constant 0 : index
    %c0_49 = arith.constant 0 : index
    %65 = vector.load %arg18[%c0_48, %c0_49] : memref<512x896xbf16, #tpu.memory_space<vmem>>, vector<512x896xbf16>
    %c0_50 = arith.constant 0 : index
    %c0_51 = arith.constant 0 : index
    %66 = vector.load %arg19[%c0_50, %c0_51] : memref<1x896xbf16, #tpu.memory_space<vmem>>, vector<1x896xbf16>
    %cst_52 = arith.constant dense<0.000000e+00> : vector<128x896xf32>
    %67 = tpu.matmul %64, %65, %cst_52 {dimension_numbers = #tpu.dot_dimension_numbers<[1], [0], [0], [1], [0, 0, 1, 1], [], []>} : vector<128x512xbf16>, vector<512x896xbf16>, vector<128x896xf32> -> vector<128x896xf32>
    %68 = arith.truncf %67 : vector<128x896xf32> to vector<128x896xbf16>
    %69 = vector.broadcast %66 : vector<1x896xbf16> to vector<128x896xbf16>
    %70 = arith.addf %68, %69 : vector<128x896xbf16>
    %c0_53 = arith.constant 0 : index
    %c0_54 = arith.constant 0 : index
    %71 = vector.load %arg20[%c0_53, %c0_54] : memref<128x896xbf16, #tpu.memory_space<vmem>>, vector<128x896xbf16>
    tpu.vector_store %arg20[%c0_53, %c0_54], %70 {strides = array<i32>} : memref<128x896xbf16, #tpu.memory_space<vmem>>, vector<128x896xbf16>,
    return
  }
  func.func @transform_0(%arg0: i32) -> (i32, i32) {
    %c0_i32 = arith.constant 0 : i32
    %c0_i32_0 = arith.constant 0 : i32
    return %arg0, %c0_i32 : i32, i32
  }
  func.func @transform_1(%arg0: i32) -> (i32, i32) {
    %c0_i32 = arith.constant 0 : i32
    %c0_i32_0 = arith.constant 0 : i32
    %c0_i32_1 = arith.constant 0 : i32
    return %c0_i32, %c0_i32_0 : i32, i32
  }
  func.func @transform_2(%arg0: i32) -> (i32, i32) {
    %c0_i32 = arith.constant 0 : i32
    %c0_i32_0 = arith.constant 0 : i32
    %c0_i32_1 = arith.constant 0 : i32
    return %c0_i32, %c0_i32_0 : i32, i32
  }
  func.func @transform_3(%arg0: i32) -> (i32, i32) {
    %c0_i32 = arith.constant 0 : i32
    %c0_i32_0 = arith.constant 0 : i32
    %c0_i32_1 = arith.constant 0 : i32
    return %c0_i32, %c0_i32_0 : i32, i32
  }
  func.func @transform_4(%arg0: i32) -> (i32, i32) {
    %c0_i32 = arith.constant 0 : i32
    %c0_i32_0 = arith.constant 0 : i32
    %c0_i32_1 = arith.constant 0 : i32
    return %c0_i32, %c0_i32_0 : i32, i32
  }
  func.func @transform_5(%arg0: i32) -> (i32, i32) {
    %c0_i32 = arith.constant 0 : i32
    %c0_i32_0 = arith.constant 0 : i32
    %c0_i32_1 = arith.constant 0 : i32
    return %c0_i32, %c0_i32_0 : i32, i32
  }
  func.func @transform_6(%arg0: i32) -> (i32, i32) {
    %c0_i32 = arith.constant 0 : i32
    %c0_i32_0 = arith.constant 0 : i32
    %c0_i32_1 = arith.constant 0 : i32
    return %c0_i32, %c0_i32_0 : i32, i32
  }
  func.func @transform_7(%arg0: i32) -> (i32, i32) {
    %c0_i32 = arith.constant 0 : i32
    %c0_i32_0 = arith.constant 0 : i32
    %c0_i32_1 = arith.constant 0 : i32
    return %c0_i32, %c0_i32_0 : i32, i32
  }
  func.func @transform_8(%arg0: i32) -> (i32, i32) {
    %c0_i32 = arith.constant 0 : i32
    %c0_i32_0 = arith.constant 0 : i32
    %c0_i32_1 = arith.constant 0 : i32
    return %c0_i32, %c0_i32_0 : i32, i32
  }
  func.func @transform_9(%arg0: i32) -> (i32, i32) {
    %c0_i32 = arith.constant 0 : i32
    %c0_i32_0 = arith.constant 0 : i32
    %c0_i32_1 = arith.constant 0 : i32
    return %c0_i32, %c0_i32_0 : i32, i32
  }
  func.func @transform_10(%arg0: i32) -> (i32, i32) {
    %c0_i32 = arith.constant 0 : i32
    %c0_i32_0 = arith.constant 0 : i32
    %c0_i32_1 = arith.constant 0 : i32
    return %c0_i32, %c0_i32_0 : i32, i32
  }
  func.func @transform_11(%arg0: i32) -> (i32, i32) {
    %c0_i32 = arith.constant 0 : i32
    %c0_i32_0 = arith.constant 0 : i32
    %c0_i32_1 = arith.constant 0 : i32
    return %c0_i32, %c0_i32_0 : i32, i32
  }
  func.func @transform_12(%arg0: i32) -> (i32, i32) {
    %c0_i32 = arith.constant 0 : i32
    %c0_i32_0 = arith.constant 0 : i32
    %c0_i32_1 = arith.constant 0 : i32
    return %c0_i32, %c0_i32_0 : i32, i32
  }
  func.func @transform_13(%arg0: i32) -> (i32, i32) {
    %c0_i32 = arith.constant 0 : i32
    %c0_i32_0 = arith.constant 0 : i32
    %c0_i32_1 = arith.constant 0 : i32
    return %c0_i32, %c0_i32_0 : i32, i32
  }
  func.func @transform_14(%arg0: i32) -> (i32, i32) {
    %c0_i32 = arith.constant 0 : i32
    %c0_i32_0 = arith.constant 0 : i32
    %c0_i32_1 = arith.constant 0 : i32
    return %c0_i32, %c0_i32_0 : i32, i32
  }
  func.func @transform_15(%arg0: i32) -> (i32, i32) {
    %c0_i32 = arith.constant 0 : i32
    %c0_i32_0 = arith.constant 0 : i32
    %c0_i32_1 = arith.constant 0 : i32
    return %c0_i32, %c0_i32_0 : i32, i32
  }
  func.func @transform_16(%arg0: i32) -> (i32, i32) {
    %c0_i32 = arith.constant 0 : i32
    %c0_i32_0 = arith.constant 0 : i32
    %c0_i32_1 = arith.constant 0 : i32
    return %c0_i32, %c0_i32_0 : i32, i32
  }
  func.func @transform_17(%arg0: i32) -> (i32, i32) {
    %c0_i32 = arith.constant 0 : i32
    %c0_i32_0 = arith.constant 0 : i32
    %c0_i32_1 = arith.constant 0 : i32
    return %c0_i32, %c0_i32_0 : i32, i32
  }
  func.func @transform_18(%arg0: i32) -> (i32, i32) {
    %c0_i32 = arith.constant 0 : i32
    %c0_i32_0 = arith.constant 0 : i32
    %c0_i32_1 = arith.constant 0 : i32
    return %c0_i32, %c0_i32_0 : i32, i32
  }
  func.func @transform_19(%arg0: i32) -> (i32, i32) {
    %c0_i32 = arith.constant 0 : i32
    %c0_i32_0 = arith.constant 0 : i32
    return %arg0, %c0_i32 : i32, i32
  }
}

</mosaic_0001>

<llo_original>
// kernel: big_autoencoder_padded.1
$region0: #{big_autoencoder_padded.1}
  #allocation0 [shape = 'u32[]', space=smem, size = 0x4, offset = 0x4, fixed_abs, tag = 'smem constant byte address 0x4 - core index']
  #allocation1 [shape = 'u32[72,128]{1,0:T(1,128)}', space=vmem, size = 0x9000, scoped, tag = 'internal scratch']
  %s0 = inlined_call_operand.hbm [shape: bf16[256,896], index: 0, kind: input, shape index: {}]
  %s1 = inlined_call_operand.hbm [shape: bf16[896,512], index: 1, kind: input, shape index: {}]
  %s2 = inlined_call_operand.vmem [shape: bf16[1,512], index: 2, kind: input, shape index: {}]
  %s3 = inlined_call_operand.hbm [shape: bf16[512,256], index: 3, kind: input, shape index: {}]
  %s4 = inlined_call_operand.hbm [shape: bf16[1,256], index: 4, kind: input, shape index: {}]
  %s5 = inlined_call_operand.hbm [shape: bf16[256,128], index: 5, kind: input, shape index: {}]
  %s6 = inlined_call_operand.hbm [shape: bf16[1,128], index: 6, kind: input, shape index: {}]
  %s7 = inlined_call_operand.hbm [shape: bf16[128,128], index: 7, kind: input, shape index: {}]
  %s8 = inlined_call_operand.hbm [shape: bf16[1,128], index: 8, kind: input, shape index: {}]
  %s9 = inlined_call_operand.hbm [shape: bf16[128,128], index: 9, kind: input, shape index: {}]
  %s10 = inlined_call_operand.hbm [shape: bf16[1,128], index: 10, kind: input, shape index: {}]
  %s11 = inlined_call_operand.hbm [shape: bf16[128,128], index: 11, kind: input, shape index: {}]
  %s12 = inlined_call_operand.hbm [shape: bf16[1,128], index: 12, kind: input, shape index: {}]
  %s13 = inlined_call_operand.hbm [shape: bf16[128,256], index: 13, kind: input, shape index: {}]
  %s14 = inlined_call_operand.hbm [shape: bf16[1,256], index: 14, kind: input, shape index: {}]
  %s15 = inlined_call_operand.hbm [shape: bf16[256,512], index: 15, kind: input, shape index: {}]
  %s16 = inlined_call_operand.vmem [shape: bf16[1,512], index: 16, kind: input, shape index: {}]
  %s17 = inlined_call_operand.hbm [shape: bf16[512,896], index: 17, kind: input, shape index: {}]
  %s18 = inlined_call_operand.vmem [shape: bf16[1,896], index: 18, kind: input, shape index: {}]
  %s19 = inlined_call_operand.hbm [shape: bf16[256,896], index: 19, kind: output, shape index: {}]
  %s20 = sld [smem:[#allocation0]]
  $region173: #{big_autoencoder_padded.1} parent=0
    _
  %s22 = ssub.s32 1, %s20
  %s23 = scalar_select 0, %s22, %s20
  $region1: #{big_autoencoder_padded.1} parent=0
    #allocation2 [shape = 'u8[458752]{0}', space=vmem, size = 0x70000, scoped, tag = 'input window, operand 0']
    #allocation3 [shape = 's32[2]{0}', space=sflag, size = 0x8, scoped, tag = 'scoped memory for big_autoencoder_padded.1']
    #allocation4 [shape = 's32[2]{0}', space=sflag, size = 0x8, scoped, tag = 'scoped memory for big_autoencoder_padded.1']
    #allocation5 [shape = 'u8[917504]{0}', space=vmem, size = 0xe0000, scoped, tag = 'input window, operand 1, single buffered']
    #allocation6 [shape = 's32[1]{0}', space=sflag, size = 0x4, scoped, tag = 'scoped memory for big_autoencoder_padded.1']
    #allocation7 [shape = 'u8[262144]{0}', space=vmem, size = 0x40000, scoped, tag = 'input window, operand 3, single buffered']
    #allocation8 [shape = 'u8[1024]{0}', space=vmem, size = 0x400, scoped, tag = 'input window, operand 4, single buffered']
    #allocation9 [shape = 's32[1]{0}', space=sflag, size = 0x4, scoped, tag = 'scoped memory for big_autoencoder_padded.1']
    #allocation10 [shape = 'u8[65536]{0}', space=vmem, size = 0x10000, scoped, tag = 'input window, operand 5, single buffered']
    #allocation11 [shape = 'u8[512]{0}', space=vmem, size = 0x400, scoped, tag = 'input window, operand 6, single buffered']
    #allocation12 [shape = 's32[1]{0}', space=sflag, size = 0x4, scoped, tag = 'scoped memory for big_autoencoder_padded.1']
    #allocation13 [shape = 'u8[32768]{0}', space=vmem, size = 0x8000, scoped, tag = 'input window, operand 7, single buffered']
    #allocation14 [shape = 'u8[512]{0}', space=vmem, size = 0x400, scoped, tag = 'input window, operand 8, single buffered']
    #allocation15 [shape = 's32[1]{0}', space=sflag, size = 0x4, scoped, tag = 'scoped memory for big_autoencoder_padded.1']
    #allocation16 [shape = 'u8[32768]{0}', space=vmem, size = 0x8000, scoped, tag = 'input window, operand 9, single buffered']
    #allocation17 [shape = 'u8[512]{0}', space=vmem, size = 0x400, scoped, tag = 'input window, operand 10, single buffered']
    #allocation18 [shape = 's32[1]{0}', space=sflag, size = 0x4, scoped, tag = 'scoped memory for big_autoencoder_padded.1']
    #allocation19 [shape = 'u8[32768]{0}', space=vmem, size = 0x8000, scoped, tag = 'input window, operand 11, single buffered']
    #allocation20 [shape = 'u8[512]{0}', space=vmem, size = 0x400, scoped, tag = 'input window, operand 12, single buffered']
    #allocation21 [shape = 's32[1]{0}', space=sflag, size = 0x4, scoped, tag = 'scoped memory for big_autoencoder_padded.1']
    #allocation22 [shape = 'u8[65536]{0}', space=vmem, size = 0x10000, scoped, tag = 'input window, operand 13, single buffered']
    #allocation23 [shape = 'u8[1024]{0}', space=vmem, size = 0x400, scoped, tag = 'input window, operand 14, single buffered']
    #allocation24 [shape = 's32[1]{0}', space=sflag, size = 0x4, scoped, tag = 'scoped memory for big_autoencoder_padded.1']
    #allocation25 [shape = 'u8[262144]{0}', space=vmem, size = 0x40000, scoped, tag = 'input window, operand 15, single buffered']
    #allocation26 [shape = 'u8[917504]{0}', space=vmem, size = 0xe0000, scoped, tag = 'input window, operand 17, single buffered']
    #allocation27 [shape = 's32[1]{0}', space=sflag, size = 0x4, scoped, tag = 'scoped memory for big_autoencoder_padded.1']
    #allocation28 [shape = 'u8[458752]{0}', space=vmem, size = 0x70000, scoped, tag = 'output window, operand 0']
    %24 = vsyncpa [#allocation3], 0
    %s25 = scalar_lea.sflag [#allocation3], 1
    %26 = vsyncpa %s25, 0
    %27 = vsyncpa [#allocation6], 0
    %28 = vsyncpa [#allocation9], 0
    %29 = vsyncpa [#allocation12], 0
    %30 = vsyncpa [#allocation15], 0
    %31 = vsyncpa [#allocation18], 0
    %32 = vsyncpa [#allocation21], 0
    %33 = vsyncpa [#allocation24], 0
    %34 = vsyncpa [#allocation27], 0
    %35 = vsyncpa [#allocation4], 0
    %s36 = scalar_lea.sflag [#allocation4], 1
    %37 = vsyncpa %s36, 0
    loop: start=0, step=1, limit=4
    $region2: #{big_autoencoder_padded.1} parent=1 // loop_pre_header
      _
    $region3: #{big_autoencoder_padded.1} parent=1 // loop_header
      %s39 = sphi 0, %s43
      %p40 = scmp.ge.s32.totalorder %s39, 4
      %s49 = sphi 0, %s51
      %s52 = sphi 0, %s49
      %s53 = sphi 0, %s52
      %s69 = sphi 0, %s53
      %s73 = sphi 0, %s73
      %s75 = sphi 0, %s73
      %s76 = sphi 0, %s75
      %s90 = sphi 0, %s76
      %s94 = sphi 0, %s94
      %s96 = sphi 0, %s94
      %s97 = sphi 0, %s96
      %s111 = sphi 0, %s97
      %s115 = sphi 0, %s115
      %s117 = sphi 0, %s115
      %s118 = sphi 0, %s117
      %s132 = sphi 0, %s118
      %s136 = sphi 0, %s136
      %s138 = sphi 0, %s136
      %s139 = sphi 0, %s138
      %s153 = sphi 0, %s139
      %s157 = sphi 0, %s157
      %s159 = sphi 0, %s157
      %s160 = sphi 0, %s159
      %s174 = sphi 0, %s160
      %s178 = sphi 0, %s178
      %s180 = sphi 0, %s178
      %s181 = sphi 0, %s180
      %s195 = sphi 0, %s181
      %s199 = sphi 0, %s199
      %s201 = sphi 0, %s199
      %s202 = sphi 0, %s201
      %s216 = sphi 0, %s202
      %s220 = sphi 0, %s220
      %s222 = sphi 0, %s220
      %s223 = sphi 0, %s222
      %s237 = sphi 0, %s223
      %s241 = sphi 0, %s241
      %s243 = sphi 0, %s241
      %s244 = sphi 0, %s243
      %s258 = sphi 0, %s244
      %s262 = sphi 0, %s262
      %s264 = sphi 0, %s262
      %s265 = sphi 0, %s264
      %s279 = sphi 0, %s265
      %s283 = sphi 0, %s283
      %s285 = sphi 0, %s283
      %s286 = sphi 0, %s285
      %s300 = sphi 0, %s286
      %s304 = sphi 0, %s304
      %s306 = sphi 0, %s304
      %s307 = sphi 0, %s306
      %s321 = sphi 0, %s307
      %s325 = sphi 0, %s325
      %s327 = sphi 0, %s325
      %s328 = sphi 0, %s327
      %s342 = sphi 0, %s328
      %s346 = sphi 0, %s346
      %s348 = sphi 0, %s346
      %s349 = sphi 0, %s348
      %s363 = sphi 0, %s349
      %s367 = sphi 0, %s367
      %s369 = sphi 0, %s367
      %s370 = sphi 0, %s369
      %s384 = sphi 0, %s370
      %s388 = sphi 0, %s388
      %s390 = sphi 0, %s388
      %s391 = sphi 0, %s390
      %s405 = sphi 0, %s391
      %s409 = sphi 0, %s409
      %s411 = sphi 0, %s409
      %s412 = sphi 0, %s411
      %s426 = sphi 0, %s412
      %s430 = sphi 0, %s430
      %s432 = sphi 0, %s430
      %s433 = sphi 0, %s432
      %s447 = sphi 0, %s433
      %s453 = sphi 0, %s455
      %s456 = sphi 0, %s453
      %s457 = sphi 0, %s456
      %s473 = sphi 0, %s457
    $region4: #{big_autoencoder_padded.1} parent=1 // loop_header_branch
      %42 = sbr.rel (%p40) target = $region8
    $region5: #{big_autoencoder_padded.1} parent=1 // loop_body
      %s44 = ssub.s32 %s39, 1
      %s45 = ssub.s32 %s39, 2
      %s46 = sadd.s32 %s39, 1
      %s47 = ssub.s32 %s39, %s46
      %p48 = scmp.eq.s32.totalorder %s47, 0
      %s50 = sadd.s32 %s49, 1
      %s51 = scalar_select %p48, %s49, %s50
      %p54 = pneg %p48
      %p55 = scmp.eq.s32.totalorder %s39, 1
      %p56 = por %p54, %p55
      %p57 = scmp.ne.s32.totalorder %s49, %s52
      %p58 = scmp.eq.s32.totalorder %s39, 0
      %p59 = por %p57, %p58
      %p60 = scmp.ne.s32.totalorder %s49, %s52
      %p61 = scmp.eq.s32.totalorder %s44, 1
      %p62 = por %p60, %p61
      %p63 = scmp.ne.s32.totalorder %s52, %s53
      %p64 = scmp.eq.s32.totalorder %s44, 0
      %p65 = por %p63, %p64
      %p66 = scmp.ne.s32.totalorder %s52, %s53
      %p67 = scmp.eq.s32.totalorder %s45, 1
      %p68 = por %p66, %p67
      %p70 = scmp.ne.s32.totalorder %s53, %s69
      %p71 = scmp.eq.s32.totalorder %s45, 0
      %p72 = por %p70, %p71
      %s74 = sadd.s32 %s73, 1
      %p77 = scmp.eq.s32.totalorder %s39, 1
      %p78 = scmp.ne.s32.totalorder %s73, %s75
      %p79 = scmp.eq.s32.totalorder %s39, 0
      %p80 = por %p78, %p79
      %p81 = scmp.ne.s32.totalorder %s73, %s75
      %p82 = scmp.eq.s32.totalorder %s44, 1
      %p83 = por %p81, %p82
      %p84 = scmp.ne.s32.totalorder %s75, %s76
      %p85 = scmp.eq.s32.totalorder %s44, 0
      %p86 = por %p84, %p85
      %p87 = scmp.ne.s32.totalorder %s75, %s76
      %p88 = scmp.eq.s32.totalorder %s45, 1
      %p89 = por %p87, %p88
      %p91 = scmp.ne.s32.totalorder %s76, %s90
      %p92 = scmp.eq.s32.totalorder %s45, 0
      %p93 = por %p91, %p92
      %s95 = sadd.s32 %s94, 1
      %p98 = scmp.eq.s32.totalorder %s39, 1
      %p99 = scmp.ne.s32.totalorder %s94, %s96
      %p100 = scmp.eq.s32.totalorder %s39, 0
      %p101 = por %p99, %p100
      %p102 = scmp.ne.s32.totalorder %s94, %s96
      %p103 = scmp.eq.s32.totalorder %s44, 1
      %p104 = por %p102, %p103
      %p105 = scmp.ne.s32.totalorder %s96, %s97
      %p106 = scmp.eq.s32.totalorder %s44, 0
      %p107 = por %p105, %p106
      %p108 = scmp.ne.s32.totalorder %s96, %s97
      %p109 = scmp.eq.s32.totalorder %s45, 1
      %p110 = por %p108, %p109
      %p112 = scmp.ne.s32.totalorder %s97, %s111
      %p113 = scmp.eq.s32.totalorder %s45, 0
      %p114 = por %p112, %p113
      %s116 = sadd.s32 %s115, 1
      %p119 = scmp.eq.s32.totalorder %s39, 1
      %p120 = scmp.ne.s32.totalorder %s115, %s117
      %p121 = scmp.eq.s32.totalorder %s39, 0
      %p122 = por %p120, %p121
      %p123 = scmp.ne.s32.totalorder %s115, %s117
      %p124 = scmp.eq.s32.totalorder %s44, 1
      %p125 = por %p123, %p124
      %p126 = scmp.ne.s32.totalorder %s117, %s118
      %p127 = scmp.eq.s32.totalorder %s44, 0
      %p128 = por %p126, %p127
      %p129 = scmp.ne.s32.totalorder %s117, %s118
      %p130 = scmp.eq.s32.totalorder %s45, 1
      %p131 = por %p129, %p130
      %p133 = scmp.ne.s32.totalorder %s118, %s132
      %p134 = scmp.eq.s32.totalorder %s45, 0
      %p135 = por %p133, %p134
      %s137 = sadd.s32 %s136, 1
      %p140 = scmp.eq.s32.totalorder %s39, 1
      %p141 = scmp.ne.s32.totalorder %s136, %s138
      %p142 = scmp.eq.s32.totalorder %s39, 0
      %p143 = por %p141, %p142
      %p144 = scmp.ne.s32.totalorder %s136, %s138
      %p145 = scmp.eq.s32.totalorder %s44, 1
      %p146 = por %p144, %p145
      %p147 = scmp.ne.s32.totalorder %s138, %s139
      %p148 = scmp.eq.s32.totalorder %s44, 0
      %p149 = por %p147, %p148
      %p150 = scmp.ne.s32.totalorder %s138, %s139
      %p151 = scmp.eq.s32.totalorder %s45, 1
      %p152 = por %p150, %p151
      %p154 = scmp.ne.s32.totalorder %s139, %s153
      %p155 = scmp.eq.s32.totalorder %s45, 0
      %p156 = por %p154, %p155
      %s158 = sadd.s32 %s157, 1
      %p161 = scmp.eq.s32.totalorder %s39, 1
      %p162 = scmp.ne.s32.totalorder %s157, %s159
      %p163 = scmp.eq.s32.totalorder %s39, 0
      %p164 = por %p162, %p163
      %p165 = scmp.ne.s32.totalorder %s157, %s159
      %p166 = scmp.eq.s32.totalorder %s44, 1
      %p167 = por %p165, %p166
      %p168 = scmp.ne.s32.totalorder %s159, %s160
      %p169 = scmp.eq.s32.totalorder %s44, 0
      %p170 = por %p168, %p169
      %p171 = scmp.ne.s32.totalorder %s159, %s160
      %p172 = scmp.eq.s32.totalorder %s45, 1
      %p173 = por %p171, %p172
      %p175 = scmp.ne.s32.totalorder %s160, %s174
      %p176 = scmp.eq.s32.totalorder %s45, 0
      %p177 = por %p175, %p176
      %s179 = sadd.s32 %s178, 1
      %p182 = scmp.eq.s32.totalorder %s39, 1
      %p183 = scmp.ne.s32.totalorder %s178, %s180
      %p184 = scmp.eq.s32.totalorder %s39, 0
      %p185 = por %p183, %p184
      %p186 = scmp.ne.s32.totalorder %s178, %s180
      %p187 = scmp.eq.s32.totalorder %s44, 1
      %p188 = por %p186, %p187
      %p189 = scmp.ne.s32.totalorder %s180, %s181
      %p190 = scmp.eq.s32.totalorder %s44, 0
      %p191 = por %p189, %p190
      %p192 = scmp.ne.s32.totalorder %s180, %s181
      %p193 = scmp.eq.s32.totalorder %s45, 1
      %p194 = por %p192, %p193
      %p196 = scmp.ne.s32.totalorder %s181, %s195
      %p197 = scmp.eq.s32.totalorder %s45, 0
      %p198 = por %p196, %p197
      %s200 = sadd.s32 %s199, 1
      %p203 = scmp.eq.s32.totalorder %s39, 1
      %p204 = scmp.ne.s32.totalorder %s199, %s201
      %p205 = scmp.eq.s32.totalorder %s39, 0
      %p206 = por %p204, %p205
      %p207 = scmp.ne.s32.totalorder %s199, %s201
      %p208 = scmp.eq.s32.totalorder %s44, 1
      %p209 = por %p207, %p208
      %p210 = scmp.ne.s32.totalorder %s201, %s202
      %p211 = scmp.eq.s32.totalorder %s44, 0
      %p212 = por %p210, %p211
      %p213 = scmp.ne.s32.totalorder %s201, %s202
      %p214 = scmp.eq.s32.totalorder %s45, 1
      %p215 = por %p213, %p214
      %p217 = scmp.ne.s32.totalorder %s202, %s216
      %p218 = scmp.eq.s32.totalorder %s45, 0
      %p219 = por %p217, %p218
      %s221 = sadd.s32 %s220, 1
      %p224 = scmp.eq.s32.totalorder %s39, 1
      %p225 = scmp.ne.s32.totalorder %s220, %s222
      %p226 = scmp.eq.s32.totalorder %s39, 0
      %p227 = por %p225, %p226
      %p228 = scmp.ne.s32.totalorder %s220, %s222
      %p229 = scmp.eq.s32.totalorder %s44, 1
      %p230 = por %p228, %p229
      %p231 = scmp.ne.s32.totalorder %s222, %s223
      %p232 = scmp.eq.s32.totalorder %s44, 0
      %p233 = por %p231, %p232
      %p234 = scmp.ne.s32.totalorder %s222, %s223
      %p235 = scmp.eq.s32.totalorder %s45, 1
      %p236 = por %p234, %p235
      %p238 = scmp.ne.s32.totalorder %s223, %s237
      %p239 = scmp.eq.s32.totalorder %s45, 0
      %p240 = por %p238, %p239
      %s242 = sadd.s32 %s241, 1
      %p245 = scmp.eq.s32.totalorder %s39, 1
      %p246 = scmp.ne.s32.totalorder %s241, %s243
      %p247 = scmp.eq.s32.totalorder %s39, 0
      %p248 = por %p246, %p247
      %p249 = scmp.ne.s32.totalorder %s241, %s243
      %p250 = scmp.eq.s32.totalorder %s44, 1
      %p251 = por %p249, %p250
      %p252 = scmp.ne.s32.totalorder %s243, %s244
      %p253 = scmp.eq.s32.totalorder %s44, 0
      %p254 = por %p252, %p253
      %p255 = scmp.ne.s32.totalorder %s243, %s244
      %p256 = scmp.eq.s32.totalorder %s45, 1
      %p257 = por %p255, %p256
      %p259 = scmp.ne.s32.totalorder %s244, %s258
      %p260 = scmp.eq.s32.totalorder %s45, 0
      %p261 = por %p259, %p260
      %s263 = sadd.s32 %s262, 1
      %p266 = scmp.eq.s32.totalorder %s39, 1
      %p267 = scmp.ne.s32.totalorder %s262, %s264
      %p268 = scmp.eq.s32.totalorder %s39, 0
      %p269 = por %p267, %p268
      %p270 = scmp.ne.s32.totalorder %s262, %s264
      %p271 = scmp.eq.s32.totalorder %s44, 1
      %p272 = por %p270, %p271
      %p273 = scmp.ne.s32.totalorder %s264, %s265
      %p274 = scmp.eq.s32.totalorder %s44, 0
      %p275 = por %p273, %p274
      %p276 = scmp.ne.s32.totalorder %s264, %s265
      %p277 = scmp.eq.s32.totalorder %s45, 1
      %p278 = por %p276, %p277
      %p280 = scmp.ne.s32.totalorder %s265, %s279
      %p281 = scmp.eq.s32.totalorder %s45, 0
      %p282 = por %p280, %p281
      %s284 = sadd.s32 %s283, 1
      %p287 = scmp.eq.s32.totalorder %s39, 1
      %p288 = scmp.ne.s32.totalorder %s283, %s285
      %p289 = scmp.eq.s32.totalorder %s39, 0
      %p290 = por %p288, %p289
      %p291 = scmp.ne.s32.totalorder %s283, %s285
      %p292 = scmp.eq.s32.totalorder %s44, 1
      %p293 = por %p291, %p292
      %p294 = scmp.ne.s32.totalorder %s285, %s286
      %p295 = scmp.eq.s32.totalorder %s44, 0
      %p296 = por %p294, %p295
      %p297 = scmp.ne.s32.totalorder %s285, %s286
      %p298 = scmp.eq.s32.totalorder %s45, 1
      %p299 = por %p297, %p298
      %p301 = scmp.ne.s32.totalorder %s286, %s300
      %p302 = scmp.eq.s32.totalorder %s45, 0
      %p303 = por %p301, %p302
      %s305 = sadd.s32 %s304, 1
      %p308 = scmp.eq.s32.totalorder %s39, 1
      %p309 = scmp.ne.s32.totalorder %s304, %s306
      %p310 = scmp.eq.s32.totalorder %s39, 0
      %p311 = por %p309, %p310
      %p312 = scmp.ne.s32.totalorder %s304, %s306
      %p313 = scmp.eq.s32.totalorder %s44, 1
      %p314 = por %p312, %p313
      %p315 = scmp.ne.s32.totalorder %s306, %s307
      %p316 = scmp.eq.s32.totalorder %s44, 0
      %p317 = por %p315, %p316
      %p318 = scmp.ne.s32.totalorder %s306, %s307
      %p319 = scmp.eq.s32.totalorder %s45, 1
      %p320 = por %p318, %p319
      %p322 = scmp.ne.s32.totalorder %s307, %s321
      %p323 = scmp.eq.s32.totalorder %s45, 0
      %p324 = por %p322, %p323
      %s326 = sadd.s32 %s325, 1
      %p329 = scmp.eq.s32.totalorder %s39, 1
      %p330 = scmp.ne.s32.totalorder %s325, %s327
      %p331 = scmp.eq.s32.totalorder %s39, 0
      %p332 = por %p330, %p331
      %p333 = scmp.ne.s32.totalorder %s325, %s327
      %p334 = scmp.eq.s32.totalorder %s44, 1
      %p335 = por %p333, %p334
      %p336 = scmp.ne.s32.totalorder %s327, %s328
      %p337 = scmp.eq.s32.totalorder %s44, 0
      %p338 = por %p336, %p337
      %p339 = scmp.ne.s32.totalorder %s327, %s328
      %p340 = scmp.eq.s32.totalorder %s45, 1
      %p341 = por %p339, %p340
      %p343 = scmp.ne.s32.totalorder %s328, %s342
      %p344 = scmp.eq.s32.totalorder %s45, 0
      %p345 = por %p343, %p344
      %s347 = sadd.s32 %s346, 1
      %p350 = scmp.eq.s32.totalorder %s39, 1
      %p351 = scmp.ne.s32.totalorder %s346, %s348
      %p352 = scmp.eq.s32.totalorder %s39, 0
      %p353 = por %p351, %p352
      %p354 = scmp.ne.s32.totalorder %s346, %s348
      %p355 = scmp.eq.s32.totalorder %s44, 1
      %p356 = por %p354, %p355
      %p357 = scmp.ne.s32.totalorder %s348, %s349
      %p358 = scmp.eq.s32.totalorder %s44, 0
      %p359 = por %p357, %p358
      %p360 = scmp.ne.s32.totalorder %s348, %s349
      %p361 = scmp.eq.s32.totalorder %s45, 1
      %p362 = por %p360, %p361
      %p364 = scmp.ne.s32.totalorder %s349, %s363
      %p365 = scmp.eq.s32.totalorder %s45, 0
      %p366 = por %p364, %p365
      %s368 = sadd.s32 %s367, 1
      %p371 = scmp.eq.s32.totalorder %s39, 1
      %p372 = scmp.ne.s32.totalorder %s367, %s369
      %p373 = scmp.eq.s32.totalorder %s39, 0
      %p374 = por %p372, %p373
      %p375 = scmp.ne.s32.totalorder %s367, %s369
      %p376 = scmp.eq.s32.totalorder %s44, 1
      %p377 = por %p375, %p376
      %p378 = scmp.ne.s32.totalorder %s369, %s370
      %p379 = scmp.eq.s32.totalorder %s44, 0
      %p380 = por %p378, %p379
      %p381 = scmp.ne.s32.totalorder %s369, %s370
      %p382 = scmp.eq.s32.totalorder %s45, 1
      %p383 = por %p381, %p382
      %p385 = scmp.ne.s32.totalorder %s370, %s384
      %p386 = scmp.eq.s32.totalorder %s45, 0
      %p387 = por %p385, %p386
      %s389 = sadd.s32 %s388, 1
      %p392 = scmp.eq.s32.totalorder %s39, 1
      %p393 = scmp.ne.s32.totalorder %s388, %s390
      %p394 = scmp.eq.s32.totalorder %s39, 0
      %p395 = por %p393, %p394
      %p396 = scmp.ne.s32.totalorder %s388, %s390
      %p397 = scmp.eq.s32.totalorder %s44, 1
      %p398 = por %p396, %p397
      %p399 = scmp.ne.s32.totalorder %s390, %s391
      %p400 = scmp.eq.s32.totalorder %s44, 0
      %p401 = por %p399, %p400
      %p402 = scmp.ne.s32.totalorder %s390, %s391
      %p403 = scmp.eq.s32.totalorder %s45, 1
      %p404 = por %p402, %p403
      %p406 = scmp.ne.s32.totalorder %s391, %s405
      %p407 = scmp.eq.s32.totalorder %s45, 0
      %p408 = por %p406, %p407
      %s410 = sadd.s32 %s409, 1
      %p413 = scmp.eq.s32.totalorder %s39, 1
      %p414 = scmp.ne.s32.totalorder %s409, %s411
      %p415 = scmp.eq.s32.totalorder %s39, 0
      %p416 = por %p414, %p415
      %p417 = scmp.ne.s32.totalorder %s409, %s411
      %p418 = scmp.eq.s32.totalorder %s44, 1
      %p419 = por %p417, %p418
      %p420 = scmp.ne.s32.totalorder %s411, %s412
      %p421 = scmp.eq.s32.totalorder %s44, 0
      %p422 = por %p420, %p421
      %p423 = scmp.ne.s32.totalorder %s411, %s412
      %p424 = scmp.eq.s32.totalorder %s45, 1
      %p425 = por %p423, %p424
      %p427 = scmp.ne.s32.totalorder %s412, %s426
      %p428 = scmp.eq.s32.totalorder %s45, 0
      %p429 = por %p427, %p428
      %s431 = sadd.s32 %s430, 1
      %p434 = scmp.eq.s32.totalorder %s39, 1
      %p435 = scmp.ne.s32.totalorder %s430, %s432
      %p436 = scmp.eq.s32.totalorder %s39, 0
      %p437 = por %p435, %p436
      %p438 = scmp.ne.s32.totalorder %s430, %s432
      %p439 = scmp.eq.s32.totalorder %s44, 1
      %p440 = por %p438, %p439
      %p441 = scmp.ne.s32.totalorder %s432, %s433
      %p442 = scmp.eq.s32.totalorder %s44, 0
      %p443 = por %p441, %p442
      %p444 = scmp.ne.s32.totalorder %s432, %s433
      %p445 = scmp.eq.s32.totalorder %s45, 1
      %p446 = por %p444, %p445
      %p448 = scmp.ne.s32.totalorder %s433, %s447
      %p449 = scmp.eq.s32.totalorder %s45, 0
      %p450 = por %p448, %p449
      %s451 = ssub.s32 %s39, %s46
      %p452 = scmp.eq.s32.totalorder %s451, 0
      %s454 = sadd.s32 %s453, 1
      %s455 = scalar_select %p452, %s453, %s454
      %p458 = pneg %p452
      %p459 = scmp.eq.s32.totalorder %s39, 1
      %p460 = por %p458, %p459
      %p461 = scmp.ne.s32.totalorder %s453, %s456
      %p462 = scmp.eq.s32.totalorder %s39, 0
      %p463 = por %p461, %p462
      %p464 = scmp.ne.s32.totalorder %s453, %s456
      %p465 = scmp.eq.s32.totalorder %s44, 1
      %p466 = por %p464, %p465
      %p467 = scmp.ne.s32.totalorder %s456, %s457
      %p468 = scmp.eq.s32.totalorder %s44, 0
      %p469 = por %p467, %p468
      %p470 = scmp.ne.s32.totalorder %s456, %s457
      %p471 = scmp.eq.s32.totalorder %s45, 1
      %p472 = por %p470, %p471
      %p474 = scmp.ne.s32.totalorder %s457, %s473
      %p475 = scmp.eq.s32.totalorder %s45, 0
      %p476 = por %p474, %p475
      %p477 = scmp.le.s32.totalorder 1, %s39
      %p478 = scmp.lt.s32.totalorder %s39, 3
      %p479 = pnand %p477, %p478
      %p480 = pneg %p479
      // Predicated region
      $region9: #{big_autoencoder_padded.1} parent=5 // pred_check
        _
      $region10: #{big_autoencoder_padded.1} parent=5 // pred_check_branch
        %482 = sbr.rel (%p479) target = $region12
      $region11: #{big_autoencoder_padded.1} parent=5 // pred_region
        %s483 = ssub.s32 %s39, 1
        // Predicated region
        $region13: #{big_autoencoder_padded.1} parent=11 // pred_check
          %p484 = pneg %p86
        $region14: #{big_autoencoder_padded.1} parent=11 // pred_check_branch
          %486 = sbr.rel (%p484) target = $region16
        $region15: #{big_autoencoder_padded.1} parent=11 // pred_region
          %488 = vsyncadd [#allocation6], 0
          %s489 = sshll.u32 %s1, 4
          %s490 = int_to_ptr.hbm [resolvable:$true] %s489
          %s491 = sshll.u32 [#allocation5], 4
          %s492 = int_to_ptr.vmem [resolvable:$true] %s491
          %497 = dma.hbm_to_vmem [thread:$0]  %s490, 28672, %s492, [#allocation6], 256, 256, 16
        $region16: #{big_autoencoder_padded.1} parent=11 // pred_fallthru
          _
        // Predicated region
        $region17: #{big_autoencoder_padded.1} parent=11 // pred_check
          %p498 = pneg %p107
        $region18: #{big_autoencoder_padded.1} parent=11 // pred_check_branch
          %500 = sbr.rel (%p498) target = $region20
        $region19: #{big_autoencoder_padded.1} parent=11 // pred_region
          _
        $region20: #{big_autoencoder_padded.1} parent=11 // pred_fallthru
          _
        // Predicated region
        $region21: #{big_autoencoder_padded.1} parent=11 // pred_check
          %p501 = pneg %p128
        $region22: #{big_autoencoder_padded.1} parent=11 // pred_check_branch
          %503 = sbr.rel (%p501) target = $region24
        $region23: #{big_autoencoder_padded.1} parent=11 // pred_region
          %505 = vsyncadd [#allocation6], 0
          %s506 = sshll.u32 %s3, 4
          %s507 = int_to_ptr.hbm [resolvable:$true] %s506
          %s508 = sshll.u32 [#allocation7], 4
          %s509 = int_to_ptr.vmem [resolvable:$true] %s508
          %514 = dma.hbm_to_vmem [thread:$0]  %s507, 8192, %s509, [#allocation6], 128, 128, 8
        $region24: #{big_autoencoder_padded.1} parent=11 // pred_fallthru
          _
        // Predicated region
        $region25: #{big_autoencoder_padded.1} parent=11 // pred_check
          %p515 = pneg %p149
        $region26: #{big_autoencoder_padded.1} parent=11 // pred_check_branch
          %517 = sbr.rel (%p515) target = $region28
        $region27: #{big_autoencoder_padded.1} parent=11 // pred_region
          %519 = vsyncadd [#allocation9], 0
          %s521 = sshll.u32 %s4, 4
          %s522 = int_to_ptr.hbm [resolvable:$true] %s521
          %s523 = sshll.u32 [#allocation8], 4
          %s524 = int_to_ptr.vmem [resolvable:$true] %s523
          %526 = dma.hbm_to_vmem [thread:$0]  %s522, 32, %s524, [#allocation9]
        $region28: #{big_autoencoder_padded.1} parent=11 // pred_fallthru
          _
        // Predicated region
        $region29: #{big_autoencoder_padded.1} parent=11 // pred_check
          %p527 = pneg %p170
        $region30: #{big_autoencoder_padded.1} parent=11 // pred_check_branch
          %529 = sbr.rel (%p527) target = $region32
        $region31: #{big_autoencoder_padded.1} parent=11 // pred_region
          %531 = vsyncadd [#allocation9], 0
          %s532 = sshll.u32 %s5, 4
          %s533 = int_to_ptr.hbm [resolvable:$true] %s532
          %s534 = sshll.u32 [#allocation10], 4
          %s535 = int_to_ptr.vmem [resolvable:$true] %s534
          %540 = dma.hbm_to_vmem [thread:$0]  %s533, 2048, %s535, [#allocation9], 64, 64, 4
        $region32: #{big_autoencoder_padded.1} parent=11 // pred_fallthru
          _
        // Predicated region
        $region33: #{big_autoencoder_padded.1} parent=11 // pred_check
          %p541 = pneg %p191
        $region34: #{big_autoencoder_padded.1} parent=11 // pred_check_branch
          %543 = sbr.rel (%p541) target = $region36
        $region35: #{big_autoencoder_padded.1} parent=11 // pred_region
          %545 = vsyncadd [#allocation12], 0
          %s547 = sshll.u32 %s6, 4
          %s548 = int_to_ptr.hbm [resolvable:$true] %s547
          %s549 = sshll.u32 [#allocation11], 4
          %s550 = int_to_ptr.vmem [resolvable:$true] %s549
          %552 = dma.hbm_to_vmem [thread:$0]  %s548, 16, %s550, [#allocation12]
        $region36: #{big_autoencoder_padded.1} parent=11 // pred_fallthru
          _
        // Predicated region
        $region37: #{big_autoencoder_padded.1} parent=11 // pred_check
          %p553 = pneg %p212
        $region38: #{big_autoencoder_padded.1} parent=11 // pred_check_branch
          %555 = sbr.rel (%p553) target = $region40
        $region39: #{big_autoencoder_padded.1} parent=11 // pred_region
          %557 = vsyncadd [#allocation12], 0
          %s558 = sshll.u32 %s7, 4
          %s559 = int_to_ptr.hbm [resolvable:$true] %s558
          %s560 = sshll.u32 [#allocation13], 4
          %s561 = int_to_ptr.vmem [resolvable:$true] %s560
          %566 = dma.hbm_to_vmem [thread:$0]  %s559, 1024, %s561, [#allocation12], 64, 64, 4
        $region40: #{big_autoencoder_padded.1} parent=11 // pred_fallthru
          _
        // Predicated region
        $region41: #{big_autoencoder_padded.1} parent=11 // pred_check
          %p567 = pneg %p233
        $region42: #{big_autoencoder_padded.1} parent=11 // pred_check_branch
          %569 = sbr.rel (%p567) target = $region44
        $region43: #{big_autoencoder_padded.1} parent=11 // pred_region
          %571 = vsyncadd [#allocation15], 0
          %s573 = sshll.u32 %s8, 4
          %s574 = int_to_ptr.hbm [resolvable:$true] %s573
          %s575 = sshll.u32 [#allocation14], 4
          %s576 = int_to_ptr.vmem [resolvable:$true] %s575
          %578 = dma.hbm_to_vmem [thread:$0]  %s574, 16, %s576, [#allocation15]
        $region44: #{big_autoencoder_padded.1} parent=11 // pred_fallthru
          _
        // Predicated region
        $region45: #{big_autoencoder_padded.1} parent=11 // pred_check
          %p579 = pneg %p254
        $region46: #{big_autoencoder_padded.1} parent=11 // pred_check_branch
          %581 = sbr.rel (%p579) target = $region48
        $region47: #{big_autoencoder_padded.1} parent=11 // pred_region
          %583 = vsyncadd [#allocation15], 0
          %s584 = sshll.u32 %s9, 4
          %s585 = int_to_ptr.hbm [resolvable:$true] %s584
          %s586 = sshll.u32 [#allocation16], 4
          %s587 = int_to_ptr.vmem [resolvable:$true] %s586
          %592 = dma.hbm_to_vmem [thread:$0]  %s585, 1024, %s587, [#allocation15], 64, 64, 4
        $region48: #{big_autoencoder_padded.1} parent=11 // pred_fallthru
          _
        // Predicated region
        $region49: #{big_autoencoder_padded.1} parent=11 // pred_check
          %p593 = pneg %p275
        $region50: #{big_autoencoder_padded.1} parent=11 // pred_check_branch
          %595 = sbr.rel (%p593) target = $region52
        $region51: #{big_autoencoder_padded.1} parent=11 // pred_region
          %597 = vsyncadd [#allocation18], 0
          %s599 = sshll.u32 %s10, 4
          %s600 = int_to_ptr.hbm [resolvable:$true] %s599
          %s601 = sshll.u32 [#allocation17], 4
          %s602 = int_to_ptr.vmem [resolvable:$true] %s601
          %604 = dma.hbm_to_vmem [thread:$0]  %s600, 16, %s602, [#allocation18]
        $region52: #{big_autoencoder_padded.1} parent=11 // pred_fallthru
          _
        // Predicated region
        $region53: #{big_autoencoder_padded.1} parent=11 // pred_check
          %p605 = pneg %p296
        $region54: #{big_autoencoder_padded.1} parent=11 // pred_check_branch
          %607 = sbr.rel (%p605) target = $region56
        $region55: #{big_autoencoder_padded.1} parent=11 // pred_region
          %609 = vsyncadd [#allocation18], 0
          %s610 = sshll.u32 %s11, 4
          %s611 = int_to_ptr.hbm [resolvable:$true] %s610
          %s612 = sshll.u32 [#allocation19], 4
          %s613 = int_to_ptr.vmem [resolvable:$true] %s612
          %618 = dma.hbm_to_vmem [thread:$0]  %s611, 1024, %s613, [#allocation18], 64, 64, 4
        $region56: #{big_autoencoder_padded.1} parent=11 // pred_fallthru
          _
        // Predicated region
        $region57: #{big_autoencoder_padded.1} parent=11 // pred_check
          %p619 = pneg %p317
        $region58: #{big_autoencoder_padded.1} parent=11 // pred_check_branch
          %621 = sbr.rel (%p619) target = $region60
        $region59: #{big_autoencoder_padded.1} parent=11 // pred_region
          %623 = vsyncadd [#allocation21], 0
          %s625 = sshll.u32 %s12, 4
          %s626 = int_to_ptr.hbm [resolvable:$true] %s625
          %s627 = sshll.u32 [#allocation20], 4
          %s628 = int_to_ptr.vmem [resolvable:$true] %s627
          %630 = dma.hbm_to_vmem [thread:$0]  %s626, 16, %s628, [#allocation21]
        $region60: #{big_autoencoder_padded.1} parent=11 // pred_fallthru
          _
        // Predicated region
        $region61: #{big_autoencoder_padded.1} parent=11 // pred_check
          %p631 = pneg %p338
        $region62: #{big_autoencoder_padded.1} parent=11 // pred_check_branch
          %633 = sbr.rel (%p631) target = $region64
        $region63: #{big_autoencoder_padded.1} parent=11 // pred_region
          %635 = vsyncadd [#allocation21], 0
          %s636 = sshll.u32 %s13, 4
          %s637 = int_to_ptr.hbm [resolvable:$true] %s636
          %s638 = sshll.u32 [#allocation22], 4
          %s639 = int_to_ptr.vmem [resolvable:$true] %s638
          %644 = dma.hbm_to_vmem [thread:$0]  %s637, 2048, %s639, [#allocation21], 128, 128, 8
        $region64: #{big_autoencoder_padded.1} parent=11 // pred_fallthru
          _
        // Predicated region
        $region65: #{big_autoencoder_padded.1} parent=11 // pred_check
          %p645 = pneg %p359
        $region66: #{big_autoencoder_padded.1} parent=11 // pred_check_branch
          %647 = sbr.rel (%p645) target = $region68
        $region67: #{big_autoencoder_padded.1} parent=11 // pred_region
          %649 = vsyncadd [#allocation24], 0
          %s651 = sshll.u32 %s14, 4
          %s652 = int_to_ptr.hbm [resolvable:$true] %s651
          %s653 = sshll.u32 [#allocation23], 4
          %s654 = int_to_ptr.vmem [resolvable:$true] %s653
          %656 = dma.hbm_to_vmem [thread:$0]  %s652, 32, %s654, [#allocation24]
        $region68: #{big_autoencoder_padded.1} parent=11 // pred_fallthru
          _
        // Predicated region
        $region69: #{big_autoencoder_padded.1} parent=11 // pred_check
          %p657 = pneg %p380
        $region70: #{big_autoencoder_padded.1} parent=11 // pred_check_branch
          %659 = sbr.rel (%p657) target = $region72
        $region71: #{big_autoencoder_padded.1} parent=11 // pred_region
          %661 = vsyncadd [#allocation24], 0
          %s662 = sshll.u32 %s15, 4
          %s663 = int_to_ptr.hbm [resolvable:$true] %s662
          %s664 = sshll.u32 [#allocation25], 4
          %s665 = int_to_ptr.vmem [resolvable:$true] %s664
          %670 = dma.hbm_to_vmem [thread:$0]  %s663, 8192, %s665, [#allocation24], 256, 256, 16
        $region72: #{big_autoencoder_padded.1} parent=11 // pred_fallthru
          _
        // Predicated region
        $region73: #{big_autoencoder_padded.1} parent=11 // pred_check
          %p671 = pneg %p401
        $region74: #{big_autoencoder_padded.1} parent=11 // pred_check_branch
          %673 = sbr.rel (%p671) target = $region76
        $region75: #{big_autoencoder_padded.1} parent=11 // pred_region
          _
        $region76: #{big_autoencoder_padded.1} parent=11 // pred_fallthru
          _
        // Predicated region
        $region77: #{big_autoencoder_padded.1} parent=11 // pred_check
          %p674 = pneg %p422
        $region78: #{big_autoencoder_padded.1} parent=11 // pred_check_branch
          %676 = sbr.rel (%p674) target = $region80
        $region79: #{big_autoencoder_padded.1} parent=11 // pred_region
          %678 = vsyncadd [#allocation27], 0
          %s679 = sshll.u32 %s17, 4
          %s680 = int_to_ptr.hbm [resolvable:$true] %s679
          %s681 = sshll.u32 [#allocation26], 4
          %s682 = int_to_ptr.vmem [resolvable:$true] %s681
          %687 = dma.hbm_to_vmem [thread:$0]  %s680, 28672, %s682, [#allocation27], 448, 448, 28
        $region80: #{big_autoencoder_padded.1} parent=11 // pred_fallthru
          _
        // Predicated region
        $region81: #{big_autoencoder_padded.1} parent=11 // pred_check
          %p688 = pneg %p443
        $region82: #{big_autoencoder_padded.1} parent=11 // pred_check_branch
          %690 = sbr.rel (%p688) target = $region84
        $region83: #{big_autoencoder_padded.1} parent=11 // pred_region
          _
        $region84: #{big_autoencoder_padded.1} parent=11 // pred_fallthru
          _
      $region12: #{big_autoencoder_padded.1} parent=5 // pred_fallthru
        _
      %p691 = scmp.lt.s32.totalorder %s39, 2
      // Predicated region
      $region85: #{big_autoencoder_padded.1} parent=5 // pred_check
        %p692 = pneg %p691
      $region86: #{big_autoencoder_padded.1} parent=5 // pred_check_branch
        %694 = sbr.rel (%p692) target = $region88
      $region87: #{big_autoencoder_padded.1} parent=5 // pred_region
        // Predicated region
        $region89: #{big_autoencoder_padded.1} parent=87 // pred_check
          %p695 = pneg %p59
        $region90: #{big_autoencoder_padded.1} parent=87 // pred_check_branch
          %697 = sbr.rel (%p695) target = $region92
        $region91: #{big_autoencoder_padded.1} parent=87 // pred_region
          %s698 = sand.u32 %s49, 1
          %s699 = scalar_lea.sflag [#allocation3], %s698
          %s700 = sand.u32 %s49, 1
          %s701 = smul.addr %s700, 448
          %s702 = scalar_lea.vmem [#allocation2], %s701
          %s703 = smul.u32 16, %s39
          %705 = vsyncadd %s699, 0
          %s706 = smul.addr %s703, 7
          %s707 = smul.addr %s706, 4
          %s708 = scalar_lea.hbm %s0, %s707
          %s709 = sshll.u32 %s708, 4
          %s710 = int_to_ptr.hbm [resolvable:$true] %s709
          %s711 = sshll.u32 %s702, 4
          %s712 = int_to_ptr.vmem [resolvable:$true] %s711
          %717 = dma.hbm_to_vmem [thread:$0]  %s710, 7168, %s712, %s699, 448, 448, 28
        $region92: #{big_autoencoder_padded.1} parent=87 // pred_fallthru
          _
      $region88: #{big_autoencoder_padded.1} parent=5 // pred_fallthru
        _
      %p718 = scmp.le.s32.totalorder 1, %s39
      %p719 = scmp.lt.s32.totalorder %s39, 3
      %p720 = pnand %p718, %p719
      %p721 = pneg %p720
      // Predicated region
      $region93: #{big_autoencoder_padded.1} parent=5 // pred_check
        _
      $region94: #{big_autoencoder_padded.1} parent=5 // pred_check_branch
        %723 = sbr.rel (%p720) target = $region96
      $region95: #{big_autoencoder_padded.1} parent=5 // pred_region
        %s724 = ssub.s32 %s39, 1
        %s725 = sand.u32 %s52, 1
        %s726 = scalar_lea.sflag [#allocation3], %s725
        %s727 = sand.u32 %s52, 1
        %s728 = smul.addr %s727, 448
        %s729 = scalar_lea.vmem [#allocation2], %s728
        // Predicated region
        $region97: #{big_autoencoder_padded.1} parent=95 // pred_check
          %p730 = pneg %p65
        $region98: #{big_autoencoder_padded.1} parent=95 // pred_check_branch
          %732 = sbr.rel (%p730) target = $region100
        $region99: #{big_autoencoder_padded.1} parent=95 // pred_region
          %734 = dma.done %s726, 7168
        $region100: #{big_autoencoder_padded.1} parent=95 // pred_fallthru
          _
        // Predicated region
        $region101: #{big_autoencoder_padded.1} parent=95 // pred_check
          %p735 = pneg %p86
        $region102: #{big_autoencoder_padded.1} parent=95 // pred_check_branch
          %737 = sbr.rel (%p735) target = $region104
        $region103: #{big_autoencoder_padded.1} parent=95 // pred_region
          %739 = dma.done [#allocation6], 28672
        $region104: #{big_autoencoder_padded.1} parent=95 // pred_fallthru
          _
        // Predicated region
        $region105: #{big_autoencoder_padded.1} parent=95 // pred_check
          %p740 = pneg %p128
        $region106: #{big_autoencoder_padded.1} parent=95 // pred_check_branch
          %742 = sbr.rel (%p740) target = $region108
        $region107: #{big_autoencoder_padded.1} parent=95 // pred_region
          %744 = dma.done [#allocation6], 8192
        $region108: #{big_autoencoder_padded.1} parent=95 // pred_fallthru
          _
        // Predicated region
        $region109: #{big_autoencoder_padded.1} parent=95 // pred_check
          %p745 = pneg %p149
        $region110: #{big_autoencoder_padded.1} parent=95 // pred_check_branch
          %747 = sbr.rel (%p745) target = $region112
        $region111: #{big_autoencoder_padded.1} parent=95 // pred_region
          %749 = dma.done [#allocation9], 32
        $region112: #{big_autoencoder_padded.1} parent=95 // pred_fallthru
          _
        // Predicated region
        $region113: #{big_autoencoder_padded.1} parent=95 // pred_check
          %p750 = pneg %p170
        $region114: #{big_autoencoder_padded.1} parent=95 // pred_check_branch
          %752 = sbr.rel (%p750) target = $region116
        $region115: #{big_autoencoder_padded.1} parent=95 // pred_region
          %754 = dma.done [#allocation9], 2048
        $region116: #{big_autoencoder_padded.1} parent=95 // pred_fallthru
          _
        // Predicated region
        $region117: #{big_autoencoder_padded.1} parent=95 // pred_check
          %p755 = pneg %p191
        $region118: #{big_autoencoder_padded.1} parent=95 // pred_check_branch
          %757 = sbr.rel (%p755) target = $region120
        $region119: #{big_autoencoder_padded.1} parent=95 // pred_region
          %759 = dma.done [#allocation12], 16
        $region120: #{big_autoencoder_padded.1} parent=95 // pred_fallthru
          _
        // Predicated region
        $region121: #{big_autoencoder_padded.1} parent=95 // pred_check
          %p760 = pneg %p212
        $region122: #{big_autoencoder_padded.1} parent=95 // pred_check_branch
          %762 = sbr.rel (%p760) target = $region124
        $region123: #{big_autoencoder_padded.1} parent=95 // pred_region
          %764 = dma.done [#allocation12], 1024
        $region124: #{big_autoencoder_padded.1} parent=95 // pred_fallthru
          _
        // Predicated region
        $region125: #{big_autoencoder_padded.1} parent=95 // pred_check
          %p765 = pneg %p233
        $region126: #{big_autoencoder_padded.1} parent=95 // pred_check_branch
          %767 = sbr.rel (%p765) target = $region128
        $region127: #{big_autoencoder_padded.1} parent=95 // pred_region
          %769 = dma.done [#allocation15], 16
        $region128: #{big_autoencoder_padded.1} parent=95 // pred_fallthru
          _
        // Predicated region
        $region129: #{big_autoencoder_padded.1} parent=95 // pred_check
          %p770 = pneg %p254
        $region130: #{big_autoencoder_padded.1} parent=95 // pred_check_branch
          %772 = sbr.rel (%p770) target = $region132
        $region131: #{big_autoencoder_padded.1} parent=95 // pred_region
          %774 = dma.done [#allocation15], 1024
        $region132: #{big_autoencoder_padded.1} parent=95 // pred_fallthru
          _
        // Predicated region
        $region133: #{big_autoencoder_padded.1} parent=95 // pred_check
          %p775 = pneg %p275
        $region134: #{big_autoencoder_padded.1} parent=95 // pred_check_branch
          %777 = sbr.rel (%p775) target = $region136
        $region135: #{big_autoencoder_padded.1} parent=95 // pred_region
          %779 = dma.done [#allocation18], 16
        $region136: #{big_autoencoder_padded.1} parent=95 // pred_fallthru
          _
        // Predicated region
        $region137: #{big_autoencoder_padded.1} parent=95 // pred_check
          %p780 = pneg %p296
        $region138: #{big_autoencoder_padded.1} parent=95 // pred_check_branch
          %782 = sbr.rel (%p780) target = $region140
        $region139: #{big_autoencoder_padded.1} parent=95 // pred_region
          %784 = dma.done [#allocation18], 1024
        $region140: #{big_autoencoder_padded.1} parent=95 // pred_fallthru
          _
        // Predicated region
        $region141: #{big_autoencoder_padded.1} parent=95 // pred_check
          %p785 = pneg %p317
        $region142: #{big_autoencoder_padded.1} parent=95 // pred_check_branch
          %787 = sbr.rel (%p785) target = $region144
        $region143: #{big_autoencoder_padded.1} parent=95 // pred_region
          %789 = dma.done [#allocation21], 16
        $region144: #{big_autoencoder_padded.1} parent=95 // pred_fallthru
          _
        // Predicated region
        $region145: #{big_autoencoder_padded.1} parent=95 // pred_check
          %p790 = pneg %p338
        $region146: #{big_autoencoder_padded.1} parent=95 // pred_check_branch
          %792 = sbr.rel (%p790) target = $region148
        $region147: #{big_autoencoder_padded.1} parent=95 // pred_region
          %794 = dma.done [#allocation21], 2048
        $region148: #{big_autoencoder_padded.1} parent=95 // pred_fallthru
          _
        // Predicated region
        $region149: #{big_autoencoder_padded.1} parent=95 // pred_check
          %p795 = pneg %p359
        $region150: #{big_autoencoder_padded.1} parent=95 // pred_check_branch
          %797 = sbr.rel (%p795) target = $region152
        $region151: #{big_autoencoder_padded.1} parent=95 // pred_region
          %799 = dma.done [#allocation24], 32
        $region152: #{big_autoencoder_padded.1} parent=95 // pred_fallthru
          _
        // Predicated region
        $region153: #{big_autoencoder_padded.1} parent=95 // pred_check
          %p800 = pneg %p380
        $region154: #{big_autoencoder_padded.1} parent=95 // pred_check_branch
          %802 = sbr.rel (%p800) target = $region156
        $region155: #{big_autoencoder_padded.1} parent=95 // pred_region
          %804 = dma.done [#allocation24], 8192
        $region156: #{big_autoencoder_padded.1} parent=95 // pred_fallthru
          _
        // Predicated region
        $region157: #{big_autoencoder_padded.1} parent=95 // pred_check
          %p805 = pneg %p422
        $region158: #{big_autoencoder_padded.1} parent=95 // pred_check_branch
          %807 = sbr.rel (%p805) target = $region160
        $region159: #{big_autoencoder_padded.1} parent=95 // pred_region
          %809 = dma.done [#allocation27], 28672
        $region160: #{big_autoencoder_padded.1} parent=95 // pred_fallthru
          _
        %s810 = sand.u32 %s52, 1
        %s811 = scalar_lea.sflag [#allocation3], %s810
        %s812 = sand.u32 %s52, 1
        %s813 = smul.addr %s812, 448
        %s814 = scalar_lea.vmem [#allocation2], %s813
        %p815 = pneg %p65
        %p816 = pneg %p62
        %p817 = pneg %p86
        %p818 = pneg %p83
        %p819 = pneg %p107
        %p820 = pneg %p104
        %p821 = pneg %p128
        %p822 = pneg %p125
        %p823 = pneg %p149
        %p824 = pneg %p146
        %p825 = pneg %p170
        %p826 = pneg %p167
        %p827 = pneg %p191
        %p828 = pneg %p188
        %p829 = pneg %p212
        %p830 = pneg %p209
        %p831 = pneg %p233
        %p832 = pneg %p230
        %p833 = pneg %p254
        %p834 = pneg %p251
        %p835 = pneg %p275
        %p836 = pneg %p272
        %p837 = pneg %p296
        %p838 = pneg %p293
        %p839 = pneg %p317
        %p840 = pneg %p314
        %p841 = pneg %p338
        %p842 = pneg %p335
        %p843 = pneg %p359
        %p844 = pneg %p356
        %p845 = pneg %p380
        %p846 = pneg %p377
        %p847 = pneg %p401
        %p848 = pneg %p398
        %p849 = pneg %p422
        %p850 = pneg %p419
        %p851 = pneg %p443
        %p852 = pneg %p440
        %p853 = pneg %p469
        %p854 = pneg %p466
        %s855 = sand.u32 %s456, 1
        %s856 = scalar_lea.sflag [#allocation4], %s855
        %s857 = sand.u32 %s456, 1
        %s858 = smul.addr %s857, 448
        %s859 = scalar_lea.vmem [#allocation28], %s858
        %s860 = smul.u32 16, %s44
        %s861 = smul.u32 16, %s44
        %v862 = vld [vmem:[%s729] sm:$0xff]
        %v863 = vld [vmem:[%s729 + $0x8] sm:$0xff]
        %v864 = vld [vmem:[%s729 + $0x10] sm:$0xff]
        %v865 = vld [vmem:[%s729 + $0x18] sm:$0xf]
        %v866 = vld [vmem:[%s729 + $0x1c] sm:$0xff]
        %v867 = vld [vmem:[%s729 + $0x24] sm:$0xff]
        %v868 = vld [vmem:[%s729 + $0x2c] sm:$0xff]
        %v869 = vld [vmem:[%s729 + $0x34] sm:$0xf]
        %v870 = vld [vmem:[%s729 + $0x38] sm:$0xff]
        %v871 = vld [vmem:[%s729 + $0x40] sm:$0xff]
        %v872 = vld [vmem:[%s729 + $0x48] sm:$0xff]
        %v873 = vld [vmem:[%s729 + $0x50] sm:$0xf]
        %v874 = vld [vmem:[%s729 + $0x54] sm:$0xff]
        %v875 = vld [vmem:[%s729 + $0x5c] sm:$0xff]
        %v876 = vld [vmem:[%s729 + $0x64] sm:$0xff]
        %v877 = vld [vmem:[%s729 + $0x6c] sm:$0xf]
        %v878 = vld [vmem:[%s729 + $0x70] sm:$0xff]
        %v879 = vld [vmem:[%s729 + $0x78] sm:$0xff]
        %v880 = vld [vmem:[%s729 + $0x80] sm:$0xff]
        %v881 = vld [vmem:[%s729 + $0x88] sm:$0xf]
        %v882 = vld [vmem:[%s729 + $0x8c] sm:$0xff]
        %v883 = vld [vmem:[%s729 + $0x94] sm:$0xff]
        %v884 = vld [vmem:[%s729 + $0x9c] sm:$0xff]
        %v885 = vld [vmem:[%s729 + $0xa4] sm:$0xf]
        %v886 = vld [vmem:[%s729 + $0xa8] sm:$0xff]
        %v887 = vld [vmem:[%s729 + $0xb0] sm:$0xff]
        %v888 = vld [vmem:[%s729 + $0xb8] sm:$0xff]
        %v889 = vld [vmem:[%s729 + $0xc0] sm:$0xf]
        %v890 = vld [vmem:[%s729 + $0xc4] sm:$0xff]
        %v891 = vld [vmem:[%s729 + $0xcc] sm:$0xff]
        %v892 = vld [vmem:[%s729 + $0xd4] sm:$0xff]
        %v893 = vld [vmem:[%s729 + $0xdc] sm:$0xf]
        %v894 = vld [vmem:[%s729 + $0xe0] sm:$0xff]
        %v895 = vld [vmem:[%s729 + $0xe8] sm:$0xff]
        %v896 = vld [vmem:[%s729 + $0xf0] sm:$0xff]
        %v897 = vld [vmem:[%s729 + $0xf8] sm:$0xf]
        %v898 = vld [vmem:[%s729 + $0xfc] sm:$0xff]
        %v899 = vld [vmem:[%s729 + $0x104] sm:$0xff]
        %v900 = vld [vmem:[%s729 + $0x10c] sm:$0xff]
        %v901 = vld [vmem:[%s729 + $0x114] sm:$0xf]
        %v902 = vld [vmem:[%s729 + $0x118] sm:$0xff]
        %v903 = vld [vmem:[%s729 + $0x120] sm:$0xff]
        %v904 = vld [vmem:[%s729 + $0x128] sm:$0xff]
        %v905 = vld [vmem:[%s729 + $0x130] sm:$0xf]
        %v906 = vld [vmem:[%s729 + $0x134] sm:$0xff]
        %v907 = vld [vmem:[%s729 + $0x13c] sm:$0xff]
        %v908 = vld [vmem:[%s729 + $0x144] sm:$0xff]
        %v909 = vld [vmem:[%s729 + $0x14c] sm:$0xf]
        %v910 = vld [vmem:[%s729 + $0x150] sm:$0xff]
        %v911 = vld [vmem:[%s729 + $0x158] sm:$0xff]
        %v912 = vld [vmem:[%s729 + $0x160] sm:$0xff]
        %v913 = vld [vmem:[%s729 + $0x168] sm:$0xf]
        %v914 = vld [vmem:[%s729 + $0x16c] sm:$0xff]
        %v915 = vld [vmem:[%s729 + $0x174] sm:$0xff]
        %v916 = vld [vmem:[%s729 + $0x17c] sm:$0xff]
        %v917 = vld [vmem:[%s729 + $0x184] sm:$0xf]
        %v918 = vld [vmem:[%s729 + $0x188] sm:$0xff]
        %v919 = vld [vmem:[%s729 + $0x190] sm:$0xff]
        %v920 = vld [vmem:[%s729 + $0x198] sm:$0xff]
        %v921 = vld [vmem:[%s729 + $0x1a0] sm:$0xf]
        %v922 = vld [vmem:[%s729 + $0x1a4] sm:$0xff]
        %v923 = vld [vmem:[%s729 + $0x1ac] sm:$0xff]
        %v924 = vld [vmem:[%s729 + $0x1b4] sm:$0xff]
        %v925 = vld [vmem:[%s729 + $0x1bc] sm:$0xf]
        %v926 = vld [vmem:[#allocation5] sm:$0xff]
        %v927 = vld [vmem:[#allocation5 + $0x8] sm:$0xff]
        %v928 = vld [vmem:[#allocation5 + $0x10] sm:$0xff]
        %v929 = vld [vmem:[#allocation5 + $0x18] sm:$0xff]
        %v930 = vld [vmem:[#allocation5 + $0x20] sm:$0xff]
        %v931 = vld [vmem:[#allocation5 + $0x28] sm:$0xff]
        %v932 = vld [vmem:[#allocation5 + $0x30] sm:$0xff]
        %v933 = vld [vmem:[#allocation5 + $0x38] sm:$0xff]
        %v934 = vld [vmem:[#allocation5 + $0x40] sm:$0xff]
        %v935 = vld [vmem:[#allocation5 + $0x48] sm:$0xff]
        %v936 = vld [vmem:[#allocation5 + $0x50] sm:$0xff]
        %v937 = vld [vmem:[#allocation5 + $0x58] sm:$0xff]
        %v938 = vld [vmem:[#allocation5 + $0x60] sm:$0xff]
        %v939 = vld [vmem:[#allocation5 + $0x68] sm:$0xff]
        %v940 = vld [vmem:[#allocation5 + $0x70] sm:$0xff]
        %v941 = vld [vmem:[#allocation5 + $0x78] sm:$0xff]
        %v942 = vld [vmem:[#allocation5 + $0x80] sm:$0xff]
        %v943 = vld [vmem:[#allocation5 + $0x88] sm:$0xff]
        %v944 = vld [vmem:[#allocation5 + $0x90] sm:$0xff]
        %v945 = vld [vmem:[#allocation5 + $0x98] sm:$0xff]
        %v946 = vld [vmem:[#allocation5 + $0xa0] sm:$0xff]
        %v947 = vld [vmem:[#allocation5 + $0xa8] sm:$0xff]
        %v948 = vld [vmem:[#allocation5 + $0xb0] sm:$0xff]
        %v949 = vld [vmem:[#allocation5 + $0xb8] sm:$0xff]
        %v950 = vld [vmem:[#allocation5 + $0xc0] sm:$0xff]
        %v951 = vld [vmem:[#allocation5 + $0xc8] sm:$0xff]
        %v952 = vld [vmem:[#allocation5 + $0xd0] sm:$0xff]
        %v953 = vld [vmem:[#allocation5 + $0xd8] sm:$0xff]
        %v954 = vld [vmem:[#allocation5 + $0xe0] sm:$0xff]
        %v955 = vld [vmem:[#allocation5 + $0xe8] sm:$0xff]
        %v956 = vld [vmem:[#allocation5 + $0xf0] sm:$0xff]
        %v957 = vld [vmem:[#allocation5 + $0xf8] sm:$0xff]
        %v958 = vld [vmem:[#allocation5 + $0x100] sm:$0xff]
        %v959 = vld [vmem:[#allocation5 + $0x108] sm:$0xff]
        %v960 = vld [vmem:[#allocation5 + $0x110] sm:$0xff]
        %v961 = vld [vmem:[#allocation5 + $0x118] sm:$0xff]
        %v962 = vld [vmem:[#allocation5 + $0x120] sm:$0xff]
        %v963 = vld [vmem:[#allocation5 + $0x128] sm:$0xff]
        %v964 = vld [vmem:[#allocation5 + $0x130] sm:$0xff]
        %v965 = vld [vmem:[#allocation5 + $0x138] sm:$0xff]
        %v966 = vld [vmem:[#allocation5 + $0x140] sm:$0xff]
        %v967 = vld [vmem:[#allocation5 + $0x148] sm:$0xff]
        %v968 = vld [vmem:[#allocation5 + $0x150] sm:$0xff]
        %v969 = vld [vmem:[#allocation5 + $0x158] sm:$0xff]
        %v970 = vld [vmem:[#allocation5 + $0x160] sm:$0xff]
        %v971 = vld [vmem:[#allocation5 + $0x168] sm:$0xff]
        %v972 = vld [vmem:[#allocation5 + $0x170] sm:$0xff]
        %v973 = vld [vmem:[#allocation5 + $0x178] sm:$0xff]
        %v974 = vld [vmem:[#allocation5 + $0x180] sm:$0xff]
        %v975 = vld [vmem:[#allocation5 + $0x188] sm:$0xff]
        %v976 = vld [vmem:[#allocation5 + $0x190] sm:$0xff]
        %v977 = vld [vmem:[#allocation5 + $0x198] sm:$0xff]
        %v978 = vld [vmem:[#allocation5 + $0x1a0] sm:$0xff]
        %v979 = vld [vmem:[#allocation5 + $0x1a8] sm:$0xff]
        %v980 = vld [vmem:[#allocation5 + $0x1b0] sm:$0xff]
        %v981 = vld [vmem:[#allocation5 + $0x1b8] sm:$0xff]
        %v982 = vld [vmem:[#allocation5 + $0x1c0] sm:$0xff]
        %v983 = vld [vmem:[#allocation5 + $0x1c8] sm:$0xff]
        %v984 = vld [vmem:[#allocation5 + $0x1d0] sm:$0xff]
        %v985 = vld [vmem:[#allocation5 + $0x1d8] sm:$0xff]
        %v986 = vld [vmem:[#allocation5 + $0x1e0] sm:$0xff]
        %v987 = vld [vmem:[#allocation5 + $0x1e8] sm:$0xff]
        %v988 = vld [vmem:[#allocation5 + $0x1f0] sm:$0xff]
        %v989 = vld [vmem:[#allocation5 + $0x1f8] sm:$0xff]
        %v990 = vld [vmem:[#allocation5 + $0x200] sm:$0xff]
        %v991 = vld [vmem:[#allocation5 + $0x208] sm:$0xff]
        %v992 = vld [vmem:[#allocation5 + $0x210] sm:$0xff]
        %v993 = vld [vmem:[#allocation5 + $0x218] sm:$0xff]
        %v994 = vld [vmem:[#allocation5 + $0x220] sm:$0xff]
        %v995 = vld [vmem:[#allocation5 + $0x228] sm:$0xff]
        %v996 = vld [vmem:[#allocation5 + $0x230] sm:$0xff]
        %v997 = vld [vmem:[#allocation5 + $0x238] sm:$0xff]
        %v998 = vld [vmem:[#allocation5 + $0x240] sm:$0xff]
        %v999 = vld [vmem:[#allocation5 + $0x248] sm:$0xff]
        %v1000 = vld [vmem:[#allocation5 + $0x250] sm:$0xff]
        %v1001 = vld [vmem:[#allocation5 + $0x258] sm:$0xff]
        %v1002 = vld [vmem:[#allocation5 + $0x260] sm:$0xff]
        %v1003 = vld [vmem:[#allocation5 + $0x268] sm:$0xff]
        %v1004 = vld [vmem:[#allocation5 + $0x270] sm:$0xff]
        %v1005 = vld [vmem:[#allocation5 + $0x278] sm:$0xff]
        %v1006 = vld [vmem:[#allocation5 + $0x280] sm:$0xff]
        %v1007 = vld [vmem:[#allocation5 + $0x288] sm:$0xff]
        %v1008 = vld [vmem:[#allocation5 + $0x290] sm:$0xff]
        %v1009 = vld [vmem:[#allocation5 + $0x298] sm:$0xff]
        %v1010 = vld [vmem:[#allocation5 + $0x2a0] sm:$0xff]
        %v1011 = vld [vmem:[#allocation5 + $0x2a8] sm:$0xff]
        %v1012 = vld [vmem:[#allocation5 + $0x2b0] sm:$0xff]
        %v1013 = vld [vmem:[#allocation5 + $0x2b8] sm:$0xff]
        %v1014 = vld [vmem:[#allocation5 + $0x2c0] sm:$0xff]
        %v1015 = vld [vmem:[#allocation5 + $0x2c8] sm:$0xff]
        %v1016 = vld [vmem:[#allocation5 + $0x2d0] sm:$0xff]
        %v1017 = vld [vmem:[#allocation5 + $0x2d8] sm:$0xff]
        %v1018 = vld [vmem:[#allocation5 + $0x2e0] sm:$0xff]
        %v1019 = vld [vmem:[#allocation5 + $0x2e8] sm:$0xff]
        %v1020 = vld [vmem:[#allocation5 + $0x2f0] sm:$0xff]
        %v1021 = vld [vmem:[#allocation5 + $0x2f8] sm:$0xff]
        %v1022 = vld [vmem:[#allocation5 + $0x300] sm:$0xff]
        %v1023 = vld [vmem:[#allocation5 + $0x308] sm:$0xff]
        %v1024 = vld [vmem:[#allocation5 + $0x310] sm:$0xff]
        %v1025 = vld [vmem:[#allocation5 + $0x318] sm:$0xff]
        %v1026 = vld [vmem:[#allocation5 + $0x320] sm:$0xff]
        %v1027 = vld [vmem:[#allocation5 + $0x328] sm:$0xff]
        %v1028 = vld [vmem:[#allocation5 + $0x330] sm:$0xff]
        %v1029 = vld [vmem:[#allocation5 + $0x338] sm:$0xff]
        %v1030 = vld [vmem:[#allocation5 + $0x340] sm:$0xff]
        %v1031 = vld [vmem:[#allocation5 + $0x348] sm:$0xff]
        %v1032 = vld [vmem:[#allocation5 + $0x350] sm:$0xff]
        %v1033 = vld [vmem:[#allocation5 + $0x358] sm:$0xff]
        %v1034 = vld [vmem:[#allocation5 + $0x360] sm:$0xff]
        %v1035 = vld [vmem:[#allocation5 + $0x368] sm:$0xff]
        %v1036 = vld [vmem:[#allocation5 + $0x370] sm:$0xff]
        %v1037 = vld [vmem:[#allocation5 + $0x378] sm:$0xff]
        %v1038 = vld [vmem:[#allocation5 + $0x380] sm:$0xff]
        %v1039 = vld [vmem:[#allocation5 + $0x388] sm:$0xff]
        %v1040 = vld [vmem:[#allocation5 + $0x390] sm:$0xff]
        %v1041 = vld [vmem:[#allocation5 + $0x398] sm:$0xff]
        %v1042 = vld [vmem:[#allocation5 + $0x3a0] sm:$0xff]
        %v1043 = vld [vmem:[#allocation5 + $0x3a8] sm:$0xff]
        %v1044 = vld [vmem:[#allocation5 + $0x3b0] sm:$0xff]
        %v1045 = vld [vmem:[#allocation5 + $0x3b8] sm:$0xff]
        %v1046 = vld [vmem:[#allocation5 + $0x3c0] sm:$0xff]
        %v1047 = vld [vmem:[#allocation5 + $0x3c8] sm:$0xff]
        %v1048 = vld [vmem:[#allocation5 + $0x3d0] sm:$0xff]
        %v1049 = vld [vmem:[#allocation5 + $0x3d8] sm:$0xff]
        %v1050 = vld [vmem:[#allocation5 + $0x3e0] sm:$0xff]
        %v1051 = vld [vmem:[#allocation5 + $0x3e8] sm:$0xff]
        %v1052 = vld [vmem:[#allocation5 + $0x3f0] sm:$0xff]
        %v1053 = vld [vmem:[#allocation5 + $0x3f8] sm:$0xff]
        %v1054 = vld [vmem:[#allocation5 + $0x400] sm:$0xff]
        %v1055 = vld [vmem:[#allocation5 + $0x408] sm:$0xff]
        %v1056 = vld [vmem:[#allocation5 + $0x410] sm:$0xff]
        %v1057 = vld [vmem:[#allocation5 + $0x418] sm:$0xff]
        %v1058 = vld [vmem:[#allocation5 + $0x420] sm:$0xff]
        %v1059 = vld [vmem:[#allocation5 + $0x428] sm:$0xff]
        %v1060 = vld [vmem:[#allocation5 + $0x430] sm:$0xff]
        %v1061 = vld [vmem:[#allocation5 + $0x438] sm:$0xff]
        %v1062 = vld [vmem:[#allocation5 + $0x440] sm:$0xff]
        %v1063 = vld [vmem:[#allocation5 + $0x448] sm:$0xff]
        %v1064 = vld [vmem:[#allocation5 + $0x450] sm:$0xff]
        %v1065 = vld [vmem:[#allocation5 + $0x458] sm:$0xff]
        %v1066 = vld [vmem:[#allocation5 + $0x460] sm:$0xff]
        %v1067 = vld [vmem:[#allocation5 + $0x468] sm:$0xff]
        %v1068 = vld [vmem:[#allocation5 + $0x470] sm:$0xff]
        %v1069 = vld [vmem:[#allocation5 + $0x478] sm:$0xff]
        %v1070 = vld [vmem:[#allocation5 + $0x480] sm:$0xff]
        %v1071 = vld [vmem:[#allocation5 + $0x488] sm:$0xff]
        %v1072 = vld [vmem:[#allocation5 + $0x490] sm:$0xff]
        %v1073 = vld [vmem:[#allocation5 + $0x498] sm:$0xff]
        %v1074 = vld [vmem:[#allocation5 + $0x4a0] sm:$0xff]
        %v1075 = vld [vmem:[#allocation5 + $0x4a8] sm:$0xff]
        %v1076 = vld [vmem:[#allocation5 + $0x4b0] sm:$0xff]
        %v1077 = vld [vmem:[#allocation5 + $0x4b8] sm:$0xff]
        %v1078 = vld [vmem:[#allocation5 + $0x4c0] sm:$0xff]
        %v1079 = vld [vmem:[#allocation5 + $0x4c8] sm:$0xff]
        %v1080 = vld [vmem:[#allocation5 + $0x4d0] sm:$0xff]
        %v1081 = vld [vmem:[#allocation5 + $0x4d8] sm:$0xff]
        %v1082 = vld [vmem:[#allocation5 + $0x4e0] sm:$0xff]
        %v1083 = vld [vmem:[#allocation5 + $0x4e8] sm:$0xff]
        %v1084 = vld [vmem:[#allocation5 + $0x4f0] sm:$0xff]
        %v1085 = vld [vmem:[#allocation5 + $0x4f8] sm:$0xff]
        %v1086 = vld [vmem:[#allocation5 + $0x500] sm:$0xff]
        %v1087 = vld [vmem:[#allocation5 + $0x508] sm:$0xff]
        %v1088 = vld [vmem:[#allocation5 + $0x510] sm:$0xff]
        %v1089 = vld [vmem:[#allocation5 + $0x518] sm:$0xff]
        %v1090 = vld [vmem:[#allocation5 + $0x520] sm:$0xff]
        %v1091 = vld [vmem:[#allocation5 + $0x528] sm:$0xff]
        %v1092 = vld [vmem:[#allocation5 + $0x530] sm:$0xff]
        %v1093 = vld [vmem:[#allocation5 + $0x538] sm:$0xff]
        %v1094 = vld [vmem:[#allocation5 + $0x540] sm:$0xff]
        %v1095 = vld [vmem:[#allocation5 + $0x548] sm:$0xff]
        %v1096 = vld [vmem:[#allocation5 + $0x550] sm:$0xff]
        %v1097 = vld [vmem:[#allocation5 + $0x558] sm:$0xff]
        %v1098 = vld [vmem:[#allocation5 + $0x560] sm:$0xff]
        %v1099 = vld [vmem:[#allocation5 + $0x568] sm:$0xff]
        %v1100 = vld [vmem:[#allocation5 + $0x570] sm:$0xff]
        %v1101 = vld [vmem:[#allocation5 + $0x578] sm:$0xff]
        %v1102 = vld [vmem:[#allocation5 + $0x580] sm:$0xff]
        %v1103 = vld [vmem:[#allocation5 + $0x588] sm:$0xff]
        %v1104 = vld [vmem:[#allocation5 + $0x590] sm:$0xff]
        %v1105 = vld [vmem:[#allocation5 + $0x598] sm:$0xff]
        %v1106 = vld [vmem:[#allocation5 + $0x5a0] sm:$0xff]
        %v1107 = vld [vmem:[#allocation5 + $0x5a8] sm:$0xff]
        %v1108 = vld [vmem:[#allocation5 + $0x5b0] sm:$0xff]
        %v1109 = vld [vmem:[#allocation5 + $0x5b8] sm:$0xff]
        %v1110 = vld [vmem:[#allocation5 + $0x5c0] sm:$0xff]
        %v1111 = vld [vmem:[#allocation5 + $0x5c8] sm:$0xff]
        %v1112 = vld [vmem:[#allocation5 + $0x5d0] sm:$0xff]
        %v1113 = vld [vmem:[#allocation5 + $0x5d8] sm:$0xff]
        %v1114 = vld [vmem:[#allocation5 + $0x5e0] sm:$0xff]
        %v1115 = vld [vmem:[#allocation5 + $0x5e8] sm:$0xff]
        %v1116 = vld [vmem:[#allocation5 + $0x5f0] sm:$0xff]
        %v1117 = vld [vmem:[#allocation5 + $0x5f8] sm:$0xff]
        %v1118 = vld [vmem:[#allocation5 + $0x600] sm:$0xff]
        %v1119 = vld [vmem:[#allocation5 + $0x608] sm:$0xff]
        %v1120 = vld [vmem:[#allocation5 + $0x610] sm:$0xff]
        %v1121 = vld [vmem:[#allocation5 + $0x618] sm:$0xff]
        %v1122 = vld [vmem:[#allocation5 + $0x620] sm:$0xff]
        %v1123 = vld [vmem:[#allocation5 + $0x628] sm:$0xff]
        %v1124 = vld [vmem:[#allocation5 + $0x630] sm:$0xff]
        %v1125 = vld [vmem:[#allocation5 + $0x638] sm:$0xff]
        %v1126 = vld [vmem:[#allocation5 + $0x640] sm:$0xff]
        %v1127 = vld [vmem:[#allocation5 + $0x648] sm:$0xff]
        %v1128 = vld [vmem:[#allocation5 + $0x650] sm:$0xff]
        %v1129 = vld [vmem:[#allocation5 + $0x658] sm:$0xff]
        %v1130 = vld [vmem:[#allocation5 + $0x660] sm:$0xff]
        %v1131 = vld [vmem:[#allocation5 + $0x668] sm:$0xff]
        %v1132 = vld [vmem:[#allocation5 + $0x670] sm:$0xff]
        %v1133 = vld [vmem:[#allocation5 + $0x678] sm:$0xff]
        %v1134 = vld [vmem:[#allocation5 + $0x680] sm:$0xff]
        %v1135 = vld [vmem:[#allocation5 + $0x688] sm:$0xff]
        %v1136 = vld [vmem:[#allocation5 + $0x690] sm:$0xff]
        %v1137 = vld [vmem:[#allocation5 + $0x698] sm:$0xff]
        %v1138 = vld [vmem:[#allocation5 + $0x6a0] sm:$0xff]
        %v1139 = vld [vmem:[#allocation5 + $0x6a8] sm:$0xff]
        %v1140 = vld [vmem:[#allocation5 + $0x6b0] sm:$0xff]
        %v1141 = vld [vmem:[#allocation5 + $0x6b8] sm:$0xff]
        %v1142 = vld [vmem:[#allocation5 + $0x6c0] sm:$0xff]
        %v1143 = vld [vmem:[#allocation5 + $0x6c8] sm:$0xff]
        %v1144 = vld [vmem:[#allocation5 + $0x6d0] sm:$0xff]
        %v1145 = vld [vmem:[#allocation5 + $0x6d8] sm:$0xff]
        %v1146 = vld [vmem:[#allocation5 + $0x6e0] sm:$0xff]
        %v1147 = vld [vmem:[#allocation5 + $0x6e8] sm:$0xff]
        %v1148 = vld [vmem:[#allocation5 + $0x6f0] sm:$0xff]
        %v1149 = vld [vmem:[#allocation5 + $0x6f8] sm:$0xff]
        %v1150 = vld [vmem:[%s2] sm:$0xf]
        %v1215 = vunpack.c.l.b16 %v862
        %v1216 = vunpack.c.h.b16 %v862
        %v1217 = vunpack.c.l.b16 %v863
        %v1218 = vunpack.c.h.b16 %v863
        %v1219 = vunpack.c.l.b16 %v864
        %v1220 = vunpack.c.h.b16 %v864
        %v1221 = vunpack.c.l.b16 %v865
        %v1222 = vunpack.c.l.b16 %v866
        %v1223 = vunpack.c.h.b16 %v866
        %v1224 = vunpack.c.l.b16 %v867
        %v1225 = vunpack.c.h.b16 %v867
        %v1226 = vunpack.c.l.b16 %v868
        %v1227 = vunpack.c.h.b16 %v868
        %v1228 = vunpack.c.l.b16 %v869
        %v1229 = vunpack.c.l.b16 %v870
        %v1230 = vunpack.c.h.b16 %v870
        %v1231 = vunpack.c.l.b16 %v871
        %v1232 = vunpack.c.h.b16 %v871
        %v1233 = vunpack.c.l.b16 %v872
        %v1234 = vunpack.c.h.b16 %v872
        %v1235 = vunpack.c.l.b16 %v873
        %v1236 = vunpack.c.l.b16 %v874
        %v1237 = vunpack.c.h.b16 %v874
        %v1238 = vunpack.c.l.b16 %v875
        %v1239 = vunpack.c.h.b16 %v875
        %v1240 = vunpack.c.l.b16 %v876
        %v1241 = vunpack.c.h.b16 %v876
        %v1242 = vunpack.c.l.b16 %v877
        %v1243 = vunpack.c.l.b16 %v878
        %v1244 = vunpack.c.h.b16 %v878
        %v1245 = vunpack.c.l.b16 %v879
        %v1246 = vunpack.c.h.b16 %v879
        %v1247 = vunpack.c.l.b16 %v880
        %v1248 = vunpack.c.h.b16 %v880
        %v1249 = vunpack.c.l.b16 %v881
        %v1250 = vunpack.c.l.b16 %v882
        %v1251 = vunpack.c.h.b16 %v882
        %v1252 = vunpack.c.l.b16 %v883
        %v1253 = vunpack.c.h.b16 %v883
        %v1254 = vunpack.c.l.b16 %v884
        %v1255 = vunpack.c.h.b16 %v884
        %v1256 = vunpack.c.l.b16 %v885
        %v1257 = vunpack.c.l.b16 %v886
        %v1258 = vunpack.c.h.b16 %v886
        %v1259 = vunpack.c.l.b16 %v887
        %v1260 = vunpack.c.h.b16 %v887
        %v1261 = vunpack.c.l.b16 %v888
        %v1262 = vunpack.c.h.b16 %v888
        %v1263 = vunpack.c.l.b16 %v889
        %v1264 = vunpack.c.l.b16 %v890
        %v1265 = vunpack.c.h.b16 %v890
        %v1266 = vunpack.c.l.b16 %v891
        %v1267 = vunpack.c.h.b16 %v891
        %v1268 = vunpack.c.l.b16 %v892
        %v1269 = vunpack.c.h.b16 %v892
        %v1270 = vunpack.c.l.b16 %v893
        %v1271 = vunpack.c.l.b16 %v894
        %v1272 = vunpack.c.h.b16 %v894
        %v1273 = vunpack.c.l.b16 %v895
        %v1274 = vunpack.c.h.b16 %v895
        %v1275 = vunpack.c.l.b16 %v896
        %v1276 = vunpack.c.h.b16 %v896
        %v1277 = vunpack.c.l.b16 %v897
        %v1278 = vunpack.c.l.b16 %v898
        %v1279 = vunpack.c.h.b16 %v898
        %v1280 = vunpack.c.l.b16 %v899
        %v1281 = vunpack.c.h.b16 %v899
        %v1282 = vunpack.c.l.b16 %v900
        %v1283 = vunpack.c.h.b16 %v900
        %v1284 = vunpack.c.l.b16 %v901
        %v1285 = vunpack.c.l.b16 %v902
        %v1286 = vunpack.c.h.b16 %v902
        %v1287 = vunpack.c.l.b16 %v903
        %v1288 = vunpack.c.h.b16 %v903
        %v1289 = vunpack.c.l.b16 %v904
        %v1290 = vunpack.c.h.b16 %v904
        %v1291 = vunpack.c.l.b16 %v905
        %v1292 = vunpack.c.l.b16 %v906
        %v1293 = vunpack.c.h.b16 %v906
        %v1294 = vunpack.c.l.b16 %v907
        %v1295 = vunpack.c.h.b16 %v907
        %v1296 = vunpack.c.l.b16 %v908
        %v1297 = vunpack.c.h.b16 %v908
        %v1298 = vunpack.c.l.b16 %v909
        %v1299 = vunpack.c.l.b16 %v910
        %v1300 = vunpack.c.h.b16 %v910
        %v1301 = vunpack.c.l.b16 %v911
        %v1302 = vunpack.c.h.b16 %v911
        %v1303 = vunpack.c.l.b16 %v912
        %v1304 = vunpack.c.h.b16 %v912
        %v1305 = vunpack.c.l.b16 %v913
        %v1306 = vunpack.c.l.b16 %v914
        %v1307 = vunpack.c.h.b16 %v914
        %v1308 = vunpack.c.l.b16 %v915
        %v1309 = vunpack.c.h.b16 %v915
        %v1310 = vunpack.c.l.b16 %v916
        %v1311 = vunpack.c.h.b16 %v916
        %v1312 = vunpack.c.l.b16 %v917
        %v1313 = vunpack.c.l.b16 %v918
        %v1314 = vunpack.c.h.b16 %v918
        %v1315 = vunpack.c.l.b16 %v919
        %v1316 = vunpack.c.h.b16 %v919
        %v1317 = vunpack.c.l.b16 %v920
        %v1318 = vunpack.c.h.b16 %v920
        %v1319 = vunpack.c.l.b16 %v921
        %v1320 = vunpack.c.l.b16 %v922
        %v1321 = vunpack.c.h.b16 %v922
        %v1322 = vunpack.c.l.b16 %v923
        %v1323 = vunpack.c.h.b16 %v923
        %v1324 = vunpack.c.l.b16 %v924
        %v1325 = vunpack.c.h.b16 %v924
        %v1326 = vunpack.c.l.b16 %v925
        %v1327 = vpack.c.b16 %v1222, %v1215
        %v1328 = vpack.c.b16 %v1223, %v1216
        %v1329 = vpack.c.b16 %v1224, %v1217
        %v1330 = vpack.c.b16 %v1225, %v1218
        %v1331 = vpack.c.b16 %v1226, %v1219
        %v1332 = vpack.c.b16 %v1227, %v1220
        %v1333 = vpack.c.b16 %v1228, %v1221
        %v1334 = vpack.c.b16 %v1236, %v1229
        %v1335 = vpack.c.b16 %v1237, %v1230
        %v1336 = vpack.c.b16 %v1238, %v1231
        %v1337 = vpack.c.b16 %v1239, %v1232
        %v1338 = vpack.c.b16 %v1240, %v1233
        %v1339 = vpack.c.b16 %v1241, %v1234
        %v1340 = vpack.c.b16 %v1242, %v1235
        %v1341 = vpack.c.b16 %v1250, %v1243
        %v1342 = vpack.c.b16 %v1251, %v1244
        %v1343 = vpack.c.b16 %v1252, %v1245
        %v1344 = vpack.c.b16 %v1253, %v1246
        %v1345 = vpack.c.b16 %v1254, %v1247
        %v1346 = vpack.c.b16 %v1255, %v1248
        %v1347 = vpack.c.b16 %v1256, %v1249
        %v1348 = vpack.c.b16 %v1264, %v1257
        %v1349 = vpack.c.b16 %v1265, %v1258
        %v1350 = vpack.c.b16 %v1266, %v1259
        %v1351 = vpack.c.b16 %v1267, %v1260
        %v1352 = vpack.c.b16 %v1268, %v1261
        %v1353 = vpack.c.b16 %v1269, %v1262
        %v1354 = vpack.c.b16 %v1270, %v1263
        %v1355 = vpack.c.b16 %v1278, %v1271
        %v1356 = vpack.c.b16 %v1279, %v1272
        %v1357 = vpack.c.b16 %v1280, %v1273
        %v1358 = vpack.c.b16 %v1281, %v1274
        %v1359 = vpack.c.b16 %v1282, %v1275
        %v1360 = vpack.c.b16 %v1283, %v1276
        %v1361 = vpack.c.b16 %v1284, %v1277
        %v1362 = vpack.c.b16 %v1292, %v1285
        %v1363 = vpack.c.b16 %v1293, %v1286
        %v1364 = vpack.c.b16 %v1294, %v1287
        %v1365 = vpack.c.b16 %v1295, %v1288
        %v1366 = vpack.c.b16 %v1296, %v1289
        %v1367 = vpack.c.b16 %v1297, %v1290
        %v1368 = vpack.c.b16 %v1298, %v1291
        %v1369 = vpack.c.b16 %v1306, %v1299
        %v1370 = vpack.c.b16 %v1307, %v1300
        %v1371 = vpack.c.b16 %v1308, %v1301
        %v1372 = vpack.c.b16 %v1309, %v1302
        %v1373 = vpack.c.b16 %v1310, %v1303
        %v1374 = vpack.c.b16 %v1311, %v1304
        %v1375 = vpack.c.b16 %v1312, %v1305
        %v1376 = vpack.c.b16 %v1320, %v1313
        %v1377 = vpack.c.b16 %v1321, %v1314
        %v1378 = vpack.c.b16 %v1322, %v1315
        %v1379 = vpack.c.b16 %v1323, %v1316
        %v1380 = vpack.c.b16 %v1324, %v1317
        %v1381 = vpack.c.b16 %v1325, %v1318
        %v1382 = vpack.c.b16 %v1326, %v1319
        %v1663 = vunpack.c.l.b16 %v926
        %v1664 = vunpack.c.h.b16 %v926
        %v1665 = vunpack.c.l.b16 %v927
        %v1666 = vunpack.c.h.b16 %v927
        %v1667 = vunpack.c.l.b16 %v928
        %v1668 = vunpack.c.h.b16 %v928
        %v1669 = vunpack.c.l.b16 %v929
        %v1670 = vunpack.c.h.b16 %v929
        %v1671 = vunpack.c.l.b16 %v930
        %v1672 = vunpack.c.h.b16 %v930
        %v1673 = vunpack.c.l.b16 %v931
        %v1674 = vunpack.c.h.b16 %v931
        %v1675 = vunpack.c.l.b16 %v932
        %v1676 = vunpack.c.h.b16 %v932
        %v1677 = vunpack.c.l.b16 %v933
        %v1678 = vunpack.c.h.b16 %v933
        %v1679 = vunpack.c.l.b16 %v934
        %v1680 = vunpack.c.h.b16 %v934
        %v1681 = vunpack.c.l.b16 %v935
        %v1682 = vunpack.c.h.b16 %v935
        %v1683 = vunpack.c.l.b16 %v936
        %v1684 = vunpack.c.h.b16 %v936
        %v1685 = vunpack.c.l.b16 %v937
        %v1686 = vunpack.c.h.b16 %v937
        %v1687 = vunpack.c.l.b16 %v938
        %v1688 = vunpack.c.h.b16 %v938
        %v1689 = vunpack.c.l.b16 %v939
        %v1690 = vunpack.c.h.b16 %v939
        %v1691 = vunpack.c.l.b16 %v940
        %v1692 = vunpack.c.h.b16 %v940
        %v1693 = vunpack.c.l.b16 %v941
        %v1694 = vunpack.c.h.b16 %v941
        %v1695 = vunpack.c.l.b16 %v942
        %v1696 = vunpack.c.h.b16 %v942
        %v1697 = vunpack.c.l.b16 %v943
        %v1698 = vunpack.c.h.b16 %v943
        %v1699 = vunpack.c.l.b16 %v944
        %v1700 = vunpack.c.h.b16 %v944
        %v1701 = vunpack.c.l.b16 %v945
        %v1702 = vunpack.c.h.b16 %v945
        %v1703 = vunpack.c.l.b16 %v946
        %v1704 = vunpack.c.h.b16 %v946
        %v1705 = vunpack.c.l.b16 %v947
        %v1706 = vunpack.c.h.b16 %v947
        %v1707 = vunpack.c.l.b16 %v948
        %v1708 = vunpack.c.h.b16 %v948
        %v1709 = vunpack.c.l.b16 %v949
        %v1710 = vunpack.c.h.b16 %v949
        %v1711 = vunpack.c.l.b16 %v950
        %v1712 = vunpack.c.h.b16 %v950
        %v1713 = vunpack.c.l.b16 %v951
        %v1714 = vunpack.c.h.b16 %v951
        %v1715 = vunpack.c.l.b16 %v952
        %v1716 = vunpack.c.h.b16 %v952
        %v1717 = vunpack.c.l.b16 %v953
        %v1718 = vunpack.c.h.b16 %v953
        %v1719 = vunpack.c.l.b16 %v954
        %v1720 = vunpack.c.h.b16 %v954
        %v1721 = vunpack.c.l.b16 %v955
        %v1722 = vunpack.c.h.b16 %v955
        %v1723 = vunpack.c.l.b16 %v956
        %v1724 = vunpack.c.h.b16 %v956
        %v1725 = vunpack.c.l.b16 %v957
        %v1726 = vunpack.c.h.b16 %v957
        %v1727 = vunpack.c.l.b16 %v958
        %v1728 = vunpack.c.h.b16 %v958
        %v1729 = vunpack.c.l.b16 %v959
        %v1730 = vunpack.c.h.b16 %v959
        %v1731 = vunpack.c.l.b16 %v960
        %v1732 = vunpack.c.h.b16 %v960
        %v1733 = vunpack.c.l.b16 %v961
        %v1734 = vunpack.c.h.b16 %v961
        %v1735 = vunpack.c.l.b16 %v962
        %v1736 = vunpack.c.h.b16 %v962
        %v1737 = vunpack.c.l.b16 %v963
        %v1738 = vunpack.c.h.b16 %v963
        %v1739 = vunpack.c.l.b16 %v964
        %v1740 = vunpack.c.h.b16 %v964
        %v1741 = vunpack.c.l.b16 %v965
        %v1742 = vunpack.c.h.b16 %v965
        %v1743 = vunpack.c.l.b16 %v966
        %v1744 = vunpack.c.h.b16 %v966
        %v1745 = vunpack.c.l.b16 %v967
        %v1746 = vunpack.c.h.b16 %v967
        %v1747 = vunpack.c.l.b16 %v968
        %v1748 = vunpack.c.h.b16 %v968
        %v1749 = vunpack.c.l.b16 %v969
        %v1750 = vunpack.c.h.b16 %v969
        %v1751 = vunpack.c.l.b16 %v970
        %v1752 = vunpack.c.h.b16 %v970
        %v1753 = vunpack.c.l.b16 %v971
        %v1754 = vunpack.c.h.b16 %v971
        %v1755 = vunpack.c.l.b16 %v972
        %v1756 = vunpack.c.h.b16 %v972
        %v1757 = vunpack.c.l.b16 %v973
        %v1758 = vunpack.c.h.b16 %v973
        %v1759 = vunpack.c.l.b16 %v974
        %v1760 = vunpack.c.h.b16 %v974
        %v1761 = vunpack.c.l.b16 %v975
        %v1762 = vunpack.c.h.b16 %v975
        %v1763 = vunpack.c.l.b16 %v976
        %v1764 = vunpack.c.h.b16 %v976
        %v1765 = vunpack.c.l.b16 %v977
        %v1766 = vunpack.c.h.b16 %v977
        %v1767 = vunpack.c.l.b16 %v978
        %v1768 = vunpack.c.h.b16 %v978
        %v1769 = vunpack.c.l.b16 %v979
        %v1770 = vunpack.c.h.b16 %v979
        %v1771 = vunpack.c.l.b16 %v980
        %v1772 = vunpack.c.h.b16 %v980
        %v1773 = vunpack.c.l.b16 %v981
        %v1774 = vunpack.c.h.b16 %v981
        %v1775 = vunpack.c.l.b16 %v982
        %v1776 = vunpack.c.h.b16 %v982
        %v1777 = vunpack.c.l.b16 %v983
        %v1778 = vunpack.c.h.b16 %v983
        %v1779 = vunpack.c.l.b16 %v984
        %v1780 = vunpack.c.h.b16 %v984
        %v1781 = vunpack.c.l.b16 %v985
        %v1782 = vunpack.c.h.b16 %v985
        %v1783 = vunpack.c.l.b16 %v986
        %v1784 = vunpack.c.h.b16 %v986
        %v1785 = vunpack.c.l.b16 %v987
        %v1786 = vunpack.c.h.b16 %v987
        %v1787 = vunpack.c.l.b16 %v988
        %v1788 = vunpack.c.h.b16 %v988
        %v1789 = vunpack.c.l.b16 %v989
        %v1790 = vunpack.c.h.b16 %v989
        %v1791 = vunpack.c.l.b16 %v990
        %v1792 = vunpack.c.h.b16 %v990
        %v1793 = vunpack.c.l.b16 %v991
        %v1794 = vunpack.c.h.b16 %v991
        %v1795 = vunpack.c.l.b16 %v992
        %v1796 = vunpack.c.h.b16 %v992
        %v1797 = vunpack.c.l.b16 %v993
        %v1798 = vunpack.c.h.b16 %v993
        %v1799 = vunpack.c.l.b16 %v994
        %v1800 = vunpack.c.h.b16 %v994
        %v1801 = vunpack.c.l.b16 %v995
        %v1802 = vunpack.c.h.b16 %v995
        %v1803 = vunpack.c.l.b16 %v996
        %v1804 = vunpack.c.h.b16 %v996
        %v1805 = vunpack.c.l.b16 %v997
        %v1806 = vunpack.c.h.b16 %v997
        %v1807 = vunpack.c.l.b16 %v998
        %v1808 = vunpack.c.h.b16 %v998
        %v1809 = vunpack.c.l.b16 %v999
        %v1810 = vunpack.c.h.b16 %v999
        %v1811 = vunpack.c.l.b16 %v1000
        %v1812 = vunpack.c.h.b16 %v1000
        %v1813 = vunpack.c.l.b16 %v1001
        %v1814 = vunpack.c.h.b16 %v1001
        %v1815 = vunpack.c.l.b16 %v1002
        %v1816 = vunpack.c.h.b16 %v1002
        %v1817 = vunpack.c.l.b16 %v1003
        %v1818 = vunpack.c.h.b16 %v1003
        %v1819 = vunpack.c.l.b16 %v1004
        %v1820 = vunpack.c.h.b16 %v1004
        %v1821 = vunpack.c.l.b16 %v1005
        %v1822 = vunpack.c.h.b16 %v1005
        %v1823 = vunpack.c.l.b16 %v1006
        %v1824 = vunpack.c.h.b16 %v1006
        %v1825 = vunpack.c.l.b16 %v1007
        %v1826 = vunpack.c.h.b16 %v1007
        %v1827 = vunpack.c.l.b16 %v1008
        %v1828 = vunpack.c.h.b16 %v1008
        %v1829 = vunpack.c.l.b16 %v1009
        %v1830 = vunpack.c.h.b16 %v1009
        %v1831 = vunpack.c.l.b16 %v1010
        %v1832 = vunpack.c.h.b16 %v1010
        %v1833 = vunpack.c.l.b16 %v1011
        %v1834 = vunpack.c.h.b16 %v1011
        %v1835 = vunpack.c.l.b16 %v1012
        %v1836 = vunpack.c.h.b16 %v1012
        %v1837 = vunpack.c.l.b16 %v1013
        %v1838 = vunpack.c.h.b16 %v1013
        %v1839 = vunpack.c.l.b16 %v1014
        %v1840 = vunpack.c.h.b16 %v1014
        %v1841 = vunpack.c.l.b16 %v1015
        %v1842 = vunpack.c.h.b16 %v1015
        %v1843 = vunpack.c.l.b16 %v1016
        %v1844 = vunpack.c.h.b16 %v1016
        %v1845 = vunpack.c.l.b16 %v1017
        %v1846 = vunpack.c.h.b16 %v1017
        %v1847 = vunpack.c.l.b16 %v1018
        %v1848 = vunpack.c.h.b16 %v1018
        %v1849 = vunpack.c.l.b16 %v1019
        %v1850 = vunpack.c.h.b16 %v1019
        %v1851 = vunpack.c.l.b16 %v1020
        %v1852 = vunpack.c.h.b16 %v1020
        %v1853 = vunpack.c.l.b16 %v1021
        %v1854 = vunpack.c.h.b16 %v1021
        %v1855 = vunpack.c.l.b16 %v1022
        %v1856 = vunpack.c.h.b16 %v1022
        %v1857 = vunpack.c.l.b16 %v1023
        %v1858 = vunpack.c.h.b16 %v1023
        %v1859 = vunpack.c.l.b16 %v1024
        %v1860 = vunpack.c.h.b16 %v1024
        %v1861 = vunpack.c.l.b16 %v1025
        %v1862 = vunpack.c.h.b16 %v1025
        %v1863 = vunpack.c.l.b16 %v1026
        %v1864 = vunpack.c.h.b16 %v1026
        %v1865 = vunpack.c.l.b16 %v1027
        %v1866 = vunpack.c.h.b16 %v1027
        %v1867 = vunpack.c.l.b16 %v1028
        %v1868 = vunpack.c.h.b16 %v1028
        %v1869 = vunpack.c.l.b16 %v1029
        %v1870 = vunpack.c.h.b16 %v1029
        %v1871 = vunpack.c.l.b16 %v1030
        %v1872 = vunpack.c.h.b16 %v1030
        %v1873 = vunpack.c.l.b16 %v1031
        %v1874 = vunpack.c.h.b16 %v1031
        %v1875 = vunpack.c.l.b16 %v1032
        %v1876 = vunpack.c.h.b16 %v1032
        %v1877 = vunpack.c.l.b16 %v1033
        %v1878 = vunpack.c.h.b16 %v1033
        %v1879 = vunpack.c.l.b16 %v1034
        %v1880 = vunpack.c.h.b16 %v1034
        %v1881 = vunpack.c.l.b16 %v1035
        %v1882 = vunpack.c.h.b16 %v1035
        %v1883 = vunpack.c.l.b16 %v1036
        %v1884 = vunpack.c.h.b16 %v1036
        %v1885 = vunpack.c.l.b16 %v1037
        %v1886 = vunpack.c.h.b16 %v1037
        %v1887 = vunpack.c.l.b16 %v1038
        %v1888 = vunpack.c.h.b16 %v1038
        %v1889 = vunpack.c.l.b16 %v1039
        %v1890 = vunpack.c.h.b16 %v1039
        %v1891 = vunpack.c.l.b16 %v1040
        %v1892 = vunpack.c.h.b16 %v1040
        %v1893 = vunpack.c.l.b16 %v1041
        %v1894 = vunpack.c.h.b16 %v1041
        %v1895 = vunpack.c.l.b16 %v1042
        %v1896 = vunpack.c.h.b16 %v1042
        %v1897 = vunpack.c.l.b16 %v1043
        %v1898 = vunpack.c.h.b16 %v1043
        %v1899 = vunpack.c.l.b16 %v1044
        %v1900 = vunpack.c.h.b16 %v1044
        %v1901 = vunpack.c.l.b16 %v1045
        %v1902 = vunpack.c.h.b16 %v1045
        %v1903 = vunpack.c.l.b16 %v1046
        %v1904 = vunpack.c.h.b16 %v1046
        %v1905 = vunpack.c.l.b16 %v1047
        %v1906 = vunpack.c.h.b16 %v1047
        %v1907 = vunpack.c.l.b16 %v1048
        %v1908 = vunpack.c.h.b16 %v1048
        %v1909 = vunpack.c.l.b16 %v1049
        %v1910 = vunpack.c.h.b16 %v1049
        %v1911 = vunpack.c.l.b16 %v1050
        %v1912 = vunpack.c.h.b16 %v1050
        %v1913 = vunpack.c.l.b16 %v1051
        %v1914 = vunpack.c.h.b16 %v1051
        %v1915 = vunpack.c.l.b16 %v1052
        %v1916 = vunpack.c.h.b16 %v1052
        %v1917 = vunpack.c.l.b16 %v1053
        %v1918 = vunpack.c.h.b16 %v1053
        %v1919 = vunpack.c.l.b16 %v1054
        %v1920 = vunpack.c.h.b16 %v1054
        %v1921 = vunpack.c.l.b16 %v1055
        %v1922 = vunpack.c.h.b16 %v1055
        %v1923 = vunpack.c.l.b16 %v1056
        %v1924 = vunpack.c.h.b16 %v1056
        %v1925 = vunpack.c.l.b16 %v1057
        %v1926 = vunpack.c.h.b16 %v1057
        %v1927 = vunpack.c.l.b16 %v1058
        %v1928 = vunpack.c.h.b16 %v1058
        %v1929 = vunpack.c.l.b16 %v1059
        %v1930 = vunpack.c.h.b16 %v1059
        %v1931 = vunpack.c.l.b16 %v1060
        %v1932 = vunpack.c.h.b16 %v1060
        %v1933 = vunpack.c.l.b16 %v1061
        %v1934 = vunpack.c.h.b16 %v1061
        %v1935 = vunpack.c.l.b16 %v1062
        %v1936 = vunpack.c.h.b16 %v1062
        %v1937 = vunpack.c.l.b16 %v1063
        %v1938 = vunpack.c.h.b16 %v1063
        %v1939 = vunpack.c.l.b16 %v1064
        %v1940 = vunpack.c.h.b16 %v1064
        %v1941 = vunpack.c.l.b16 %v1065
        %v1942 = vunpack.c.h.b16 %v1065
        %v1943 = vunpack.c.l.b16 %v1066
        %v1944 = vunpack.c.h.b16 %v1066
        %v1945 = vunpack.c.l.b16 %v1067
        %v1946 = vunpack.c.h.b16 %v1067
        %v1947 = vunpack.c.l.b16 %v1068
        %v1948 = vunpack.c.h.b16 %v1068
        %v1949 = vunpack.c.l.b16 %v1069
        %v1950 = vunpack.c.h.b16 %v1069
        %v1951 = vunpack.c.l.b16 %v1070
        %v1952 = vunpack.c.h.b16 %v1070
        %v1953 = vunpack.c.l.b16 %v1071
        %v1954 = vunpack.c.h.b16 %v1071
        %v1955 = vunpack.c.l.b16 %v1072
        %v1956 = vunpack.c.h.b16 %v1072
        %v1957 = vunpack.c.l.b16 %v1073
        %v1958 = vunpack.c.h.b16 %v1073
        %v1959 = vunpack.c.l.b16 %v1074
        %v1960 = vunpack.c.h.b16 %v1074
        %v1961 = vunpack.c.l.b16 %v1075
        %v1962 = vunpack.c.h.b16 %v1075
        %v1963 = vunpack.c.l.b16 %v1076
        %v1964 = vunpack.c.h.b16 %v1076
        %v1965 = vunpack.c.l.b16 %v1077
        %v1966 = vunpack.c.h.b16 %v1077
        %v1967 = vunpack.c.l.b16 %v1078
        %v1968 = vunpack.c.h.b16 %v1078
        %v1969 = vunpack.c.l.b16 %v1079
        %v1970 = vunpack.c.h.b16 %v1079
        %v1971 = vunpack.c.l.b16 %v1080
        %v1972 = vunpack.c.h.b16 %v1080
        %v1973 = vunpack.c.l.b16 %v1081
        %v1974 = vunpack.c.h.b16 %v1081
        %v1975 = vunpack.c.l.b16 %v1082
        %v1976 = vunpack.c.h.b16 %v1082
        %v1977 = vunpack.c.l.b16 %v1083
        %v1978 = vunpack.c.h.b16 %v1083
        %v1979 = vunpack.c.l.b16 %v1084
        %v1980 = vunpack.c.h.b16 %v1084
        %v1981 = vunpack.c.l.b16 %v1085
        %v1982 = vunpack.c.h.b16 %v1085
        %v1983 = vunpack.c.l.b16 %v1086
        %v1984 = vunpack.c.h.b16 %v1086
        %v1985 = vunpack.c.l.b16 %v1087
        %v1986 = vunpack.c.h.b16 %v1087
        %v1987 = vunpack.c.l.b16 %v1088
        %v1988 = vunpack.c.h.b16 %v1088
        %v1989 = vunpack.c.l.b16 %v1089
        %v1990 = vunpack.c.h.b16 %v1089
        %v1991 = vunpack.c.l.b16 %v1090
        %v1992 = vunpack.c.h.b16 %v1090
        %v1993 = vunpack.c.l.b16 %v1091
        %v1994 = vunpack.c.h.b16 %v1091
        %v1995 = vunpack.c.l.b16 %v1092
        %v1996 = vunpack.c.h.b16 %v1092
        %v1997 = vunpack.c.l.b16 %v1093
        %v1998 = vunpack.c.h.b16 %v1093
        %v1999 = vunpack.c.l.b16 %v1094
        %v2000 = vunpack.c.h.b16 %v1094
        %v2001 = vunpack.c.l.b16 %v1095
        %v2002 = vunpack.c.h.b16 %v1095
        %v2003 = vunpack.c.l.b16 %v1096
        %v2004 = vunpack.c.h.b16 %v1096
        %v2005 = vunpack.c.l.b16 %v1097
        %v2006 = vunpack.c.h.b16 %v1097
        %v2007 = vunpack.c.l.b16 %v1098
        %v2008 = vunpack.c.h.b16 %v1098
        %v2009 = vunpack.c.l.b16 %v1099
        %v2010 = vunpack.c.h.b16 %v1099
        %v2011 = vunpack.c.l.b16 %v1100
        %v2012 = vunpack.c.h.b16 %v1100
        %v2013 = vunpack.c.l.b16 %v1101
        %v2014 = vunpack.c.h.b16 %v1101
        %v2015 = vunpack.c.l.b16 %v1102
        %v2016 = vunpack.c.h.b16 %v1102
        %v2017 = vunpack.c.l.b16 %v1103
        %v2018 = vunpack.c.h.b16 %v1103
        %v2019 = vunpack.c.l.b16 %v1104
        %v2020 = vunpack.c.h.b16 %v1104
        %v2021 = vunpack.c.l.b16 %v1105
        %v2022 = vunpack.c.h.b16 %v1105
        %v2023 = vunpack.c.l.b16 %v1106
        %v2024 = vunpack.c.h.b16 %v1106
        %v2025 = vunpack.c.l.b16 %v1107
        %v2026 = vunpack.c.h.b16 %v1107
        %v2027 = vunpack.c.l.b16 %v1108
        %v2028 = vunpack.c.h.b16 %v1108
        %v2029 = vunpack.c.l.b16 %v1109
        %v2030 = vunpack.c.h.b16 %v1109
        %v2031 = vunpack.c.l.b16 %v1110
        %v2032 = vunpack.c.h.b16 %v1110
        %v2033 = vunpack.c.l.b16 %v1111
        %v2034 = vunpack.c.h.b16 %v1111
        %v2035 = vunpack.c.l.b16 %v1112
        %v2036 = vunpack.c.h.b16 %v1112
        %v2037 = vunpack.c.l.b16 %v1113
        %v2038 = vunpack.c.h.b16 %v1113
        %v2039 = vunpack.c.l.b16 %v1114
        %v2040 = vunpack.c.h.b16 %v1114
        %v2041 = vunpack.c.l.b16 %v1115
        %v2042 = vunpack.c.h.b16 %v1115
        %v2043 = vunpack.c.l.b16 %v1116
        %v2044 = vunpack.c.h.b16 %v1116
        %v2045 = vunpack.c.l.b16 %v1117
        %v2046 = vunpack.c.h.b16 %v1117
        %v2047 = vunpack.c.l.b16 %v1118
        %v2048 = vunpack.c.h.b16 %v1118
        %v2049 = vunpack.c.l.b16 %v1119
        %v2050 = vunpack.c.h.b16 %v1119
        %v2051 = vunpack.c.l.b16 %v1120
        %v2052 = vunpack.c.h.b16 %v1120
        %v2053 = vunpack.c.l.b16 %v1121
        %v2054 = vunpack.c.h.b16 %v1121
        %v2055 = vunpack.c.l.b16 %v1122
        %v2056 = vunpack.c.h.b16 %v1122
        %v2057 = vunpack.c.l.b16 %v1123
        %v2058 = vunpack.c.h.b16 %v1123
        %v2059 = vunpack.c.l.b16 %v1124
        %v2060 = vunpack.c.h.b16 %v1124
        %v2061 = vunpack.c.l.b16 %v1125
        %v2062 = vunpack.c.h.b16 %v1125
        %v2063 = vunpack.c.l.b16 %v1126
        %v2064 = vunpack.c.h.b16 %v1126
        %v2065 = vunpack.c.l.b16 %v1127
        %v2066 = vunpack.c.h.b16 %v1127
        %v2067 = vunpack.c.l.b16 %v1128
        %v2068 = vunpack.c.h.b16 %v1128
        %v2069 = vunpack.c.l.b16 %v1129
        %v2070 = vunpack.c.h.b16 %v1129
        %v2071 = vunpack.c.l.b16 %v1130
        %v2072 = vunpack.c.h.b16 %v1130
        %v2073 = vunpack.c.l.b16 %v1131
        %v2074 = vunpack.c.h.b16 %v1131
        %v2075 = vunpack.c.l.b16 %v1132
        %v2076 = vunpack.c.h.b16 %v1132
        %v2077 = vunpack.c.l.b16 %v1133
        %v2078 = vunpack.c.h.b16 %v1133
        %v2079 = vunpack.c.l.b16 %v1134
        %v2080 = vunpack.c.h.b16 %v1134
        %v2081 = vunpack.c.l.b16 %v1135
        %v2082 = vunpack.c.h.b16 %v1135
        %v2083 = vunpack.c.l.b16 %v1136
        %v2084 = vunpack.c.h.b16 %v1136
        %v2085 = vunpack.c.l.b16 %v1137
        %v2086 = vunpack.c.h.b16 %v1137
        %v2087 = vunpack.c.l.b16 %v1138
        %v2088 = vunpack.c.h.b16 %v1138
        %v2089 = vunpack.c.l.b16 %v1139
        %v2090 = vunpack.c.h.b16 %v1139
        %v2091 = vunpack.c.l.b16 %v1140
        %v2092 = vunpack.c.h.b16 %v1140
        %v2093 = vunpack.c.l.b16 %v1141
        %v2094 = vunpack.c.h.b16 %v1141
        %v2095 = vunpack.c.l.b16 %v1142
        %v2096 = vunpack.c.h.b16 %v1142
        %v2097 = vunpack.c.l.b16 %v1143
        %v2098 = vunpack.c.h.b16 %v1143
        %v2099 = vunpack.c.l.b16 %v1144
        %v2100 = vunpack.c.h.b16 %v1144
        %v2101 = vunpack.c.l.b16 %v1145
        %v2102 = vunpack.c.h.b16 %v1145
        %v2103 = vunpack.c.l.b16 %v1146
        %v2104 = vunpack.c.h.b16 %v1146
        %v2105 = vunpack.c.l.b16 %v1147
        %v2106 = vunpack.c.h.b16 %v1147
        %v2107 = vunpack.c.l.b16 %v1148
        %v2108 = vunpack.c.h.b16 %v1148
        %v2109 = vunpack.c.l.b16 %v1149
        %v2110 = vunpack.c.h.b16 %v1149
        %v2111 = vpack.c.b16 %v1667, %v1663
        %v2112 = vpack.c.b16 %v1668, %v1664
        %v2113 = vpack.c.b16 %v1669, %v1665
        %v2114 = vpack.c.b16 %v1670, %v1666
        %v2115 = vpack.c.b16 %v1675, %v1671
        %v2116 = vpack.c.b16 %v1676, %v1672
        %v2117 = vpack.c.b16 %v1677, %v1673
        %v2118 = vpack.c.b16 %v1678, %v1674
        %v2119 = vpack.c.b16 %v1683, %v1679
        %v2120 = vpack.c.b16 %v1684, %v1680
        %v2121 = vpack.c.b16 %v1685, %v1681
        %v2122 = vpack.c.b16 %v1686, %v1682
        %v2123 = vpack.c.b16 %v1691, %v1687
        %v2124 = vpack.c.b16 %v1692, %v1688
        %v2125 = vpack.c.b16 %v1693, %v1689
        %v2126 = vpack.c.b16 %v1694, %v1690
        %v2127 = vpack.c.b16 %v1699, %v1695
        %v2128 = vpack.c.b16 %v1700, %v1696
        %v2129 = vpack.c.b16 %v1701, %v1697
        %v2130 = vpack.c.b16 %v1702, %v1698
        %v2131 = vpack.c.b16 %v1707, %v1703
        %v2132 = vpack.c.b16 %v1708, %v1704
        %v2133 = vpack.c.b16 %v1709, %v1705
        %v2134 = vpack.c.b16 %v1710, %v1706
        %v2135 = vpack.c.b16 %v1715, %v1711
        %v2136 = vpack.c.b16 %v1716, %v1712
        %v2137 = vpack.c.b16 %v1717, %v1713
        %v2138 = vpack.c.b16 %v1718, %v1714
        %v2139 = vpack.c.b16 %v1723, %v1719
        %v2140 = vpack.c.b16 %v1724, %v1720
        %v2141 = vpack.c.b16 %v1725, %v1721
        %v2142 = vpack.c.b16 %v1726, %v1722
        %v2143 = vpack.c.b16 %v1731, %v1727
        %v2144 = vpack.c.b16 %v1732, %v1728
        %v2145 = vpack.c.b16 %v1733, %v1729
        %v2146 = vpack.c.b16 %v1734, %v1730
        %v2147 = vpack.c.b16 %v1739, %v1735
        %v2148 = vpack.c.b16 %v1740, %v1736
        %v2149 = vpack.c.b16 %v1741, %v1737
        %v2150 = vpack.c.b16 %v1742, %v1738
        %v2151 = vpack.c.b16 %v1747, %v1743
        %v2152 = vpack.c.b16 %v1748, %v1744
        %v2153 = vpack.c.b16 %v1749, %v1745
        %v2154 = vpack.c.b16 %v1750, %v1746
        %v2155 = vpack.c.b16 %v1755, %v1751
        %v2156 = vpack.c.b16 %v1756, %v1752
        %v2157 = vpack.c.b16 %v1757, %v1753
        %v2158 = vpack.c.b16 %v1758, %v1754
        %v2159 = vpack.c.b16 %v1763, %v1759
        %v2160 = vpack.c.b16 %v1764, %v1760
        %v2161 = vpack.c.b16 %v1765, %v1761
        %v2162 = vpack.c.b16 %v1766, %v1762
        %v2163 = vpack.c.b16 %v1771, %v1767
        %v2164 = vpack.c.b16 %v1772, %v1768
        %v2165 = vpack.c.b16 %v1773, %v1769
        %v2166 = vpack.c.b16 %v1774, %v1770
        %v2167 = vpack.c.b16 %v1779, %v1775
        %v2168 = vpack.c.b16 %v1780, %v1776
        %v2169 = vpack.c.b16 %v1781, %v1777
        %v2170 = vpack.c.b16 %v1782, %v1778
        %v2171 = vpack.c.b16 %v1787, %v1783
        %v2172 = vpack.c.b16 %v1788, %v1784
        %v2173 = vpack.c.b16 %v1789, %v1785
        %v2174 = vpack.c.b16 %v1790, %v1786
        %v2175 = vpack.c.b16 %v1795, %v1791
        %v2176 = vpack.c.b16 %v1796, %v1792
        %v2177 = vpack.c.b16 %v1797, %v1793
        %v2178 = vpack.c.b16 %v1798, %v1794
        %v2179 = vpack.c.b16 %v1803, %v1799
        %v2180 = vpack.c.b16 %v1804, %v1800
        %v2181 = vpack.c.b16 %v1805, %v1801
        %v2182 = vpack.c.b16 %v1806, %v1802
        %v2183 = vpack.c.b16 %v1811, %v1807
        %v2184 = vpack.c.b16 %v1812, %v1808
        %v2185 = vpack.c.b16 %v1813, %v1809
        %v2186 = vpack.c.b16 %v1814, %v1810
        %v2187 = vpack.c.b16 %v1819, %v1815
        %v2188 = vpack.c.b16 %v1820, %v1816
        %v2189 = vpack.c.b16 %v1821, %v1817
        %v2190 = vpack.c.b16 %v1822, %v1818
        %v2191 = vpack.c.b16 %v1827, %v1823
        %v2192 = vpack.c.b16 %v1828, %v1824
        %v2193 = vpack.c.b16 %v1829, %v1825
        %v2194 = vpack.c.b16 %v1830, %v1826
        %v2195 = vpack.c.b16 %v1835, %v1831
        %v2196 = vpack.c.b16 %v1836, %v1832
        %v2197 = vpack.c.b16 %v1837, %v1833
        %v2198 = vpack.c.b16 %v1838, %v1834
        %v2199 = vpack.c.b16 %v1843, %v1839
        %v2200 = vpack.c.b16 %v1844, %v1840
        %v2201 = vpack.c.b16 %v1845, %v1841
        %v2202 = vpack.c.b16 %v1846, %v1842
        %v2203 = vpack.c.b16 %v1851, %v1847
        %v2204 = vpack.c.b16 %v1852, %v1848
        %v2205 = vpack.c.b16 %v1853, %v1849
        %v2206 = vpack.c.b16 %v1854, %v1850
        %v2207 = vpack.c.b16 %v1859, %v1855
        %v2208 = vpack.c.b16 %v1860, %v1856
        %v2209 = vpack.c.b16 %v1861, %v1857
        %v2210 = vpack.c.b16 %v1862, %v1858
        %v2211 = vpack.c.b16 %v1867, %v1863
        %v2212 = vpack.c.b16 %v1868, %v1864
        %v2213 = vpack.c.b16 %v1869, %v1865
        %v2214 = vpack.c.b16 %v1870, %v1866
        %v2215 = vpack.c.b16 %v1875, %v1871
        %v2216 = vpack.c.b16 %v1876, %v1872
        %v2217 = vpack.c.b16 %v1877, %v1873
        %v2218 = vpack.c.b16 %v1878, %v1874
        %v2219 = vpack.c.b16 %v1883, %v1879
        %v2220 = vpack.c.b16 %v1884, %v1880
        %v2221 = vpack.c.b16 %v1885, %v1881
        %v2222 = vpack.c.b16 %v1886, %v1882
        %v2223 = vpack.c.b16 %v1891, %v1887
        %v2224 = vpack.c.b16 %v1892, %v1888
        %v2225 = vpack.c.b16 %v1893, %v1889
        %v2226 = vpack.c.b16 %v1894, %v1890
        %v2227 = vpack.c.b16 %v1899, %v1895
        %v2228 = vpack.c.b16 %v1900, %v1896
        %v2229 = vpack.c.b16 %v1901, %v1897
        %v2230 = vpack.c.b16 %v1902, %v1898
        %v2231 = vpack.c.b16 %v1907, %v1903
        %v2232 = vpack.c.b16 %v1908, %v1904
        %v2233 = vpack.c.b16 %v1909, %v1905
        %v2234 = vpack.c.b16 %v1910, %v1906
        %v2235 = vpack.c.b16 %v1915, %v1911
        %v2236 = vpack.c.b16 %v1916, %v1912
        %v2237 = vpack.c.b16 %v1917, %v1913
        %v2238 = vpack.c.b16 %v1918, %v1914
        %v2239 = vpack.c.b16 %v1923, %v1919
        %v2240 = vpack.c.b16 %v1924, %v1920
        %v2241 = vpack.c.b16 %v1925, %v1921
        %v2242 = vpack.c.b16 %v1926, %v1922
        %v2243 = vpack.c.b16 %v1931, %v1927
        %v2244 = vpack.c.b16 %v1932, %v1928
        %v2245 = vpack.c.b16 %v1933, %v1929
        %v2246 = vpack.c.b16 %v1934, %v1930
        %v2247 = vpack.c.b16 %v1939, %v1935
        %v2248 = vpack.c.b16 %v1940, %v1936
        %v2249 = vpack.c.b16 %v1941, %v1937
        %v2250 = vpack.c.b16 %v1942, %v1938
        %v2251 = vpack.c.b16 %v1947, %v1943
        %v2252 = vpack.c.b16 %v1948, %v1944
        %v2253 = vpack.c.b16 %v1949, %v1945
        %v2254 = vpack.c.b16 %v1950, %v1946
        %v2255 = vpack.c.b16 %v1955, %v1951
        %v2256 = vpack.c.b16 %v1956, %v1952
        %v2257 = vpack.c.b16 %v1957, %v1953
        %v2258 = vpack.c.b16 %v1958, %v1954
        %v2259 = vpack.c.b16 %v1963, %v1959
        %v2260 = vpack.c.b16 %v1964, %v1960
        %v2261 = vpack.c.b16 %v1965, %v1961
        %v2262 = vpack.c.b16 %v1966, %v1962
        %v2263 = vpack.c.b16 %v1971, %v1967
        %v2264 = vpack.c.b16 %v1972, %v1968
        %v2265 = vpack.c.b16 %v1973, %v1969
        %v2266 = vpack.c.b16 %v1974, %v1970
        %v2267 = vpack.c.b16 %v1979, %v1975
        %v2268 = vpack.c.b16 %v1980, %v1976
        %v2269 = vpack.c.b16 %v1981, %v1977
        %v2270 = vpack.c.b16 %v1982, %v1978
        %v2271 = vpack.c.b16 %v1987, %v1983
        %v2272 = vpack.c.b16 %v1988, %v1984
        %v2273 = vpack.c.b16 %v1989, %v1985
        %v2274 = vpack.c.b16 %v1990, %v1986
        %v2275 = vpack.c.b16 %v1995, %v1991
        %v2276 = vpack.c.b16 %v1996, %v1992
        %v2277 = vpack.c.b16 %v1997, %v1993
        %v2278 = vpack.c.b16 %v1998, %v1994
        %v2279 = vpack.c.b16 %v2003, %v1999
        %v2280 = vpack.c.b16 %v2004, %v2000
        %v2281 = vpack.c.b16 %v2005, %v2001
        %v2282 = vpack.c.b16 %v2006, %v2002
        %v2283 = vpack.c.b16 %v2011, %v2007
        %v2284 = vpack.c.b16 %v2012, %v2008
        %v2285 = vpack.c.b16 %v2013, %v2009
        %v2286 = vpack.c.b16 %v2014, %v2010
        %v2287 = vpack.c.b16 %v2019, %v2015
        %v2288 = vpack.c.b16 %v2020, %v2016
        %v2289 = vpack.c.b16 %v2021, %v2017
        %v2290 = vpack.c.b16 %v2022, %v2018
        %v2291 = vpack.c.b16 %v2027, %v2023
        %v2292 = vpack.c.b16 %v2028, %v2024
        %v2293 = vpack.c.b16 %v2029, %v2025
        %v2294 = vpack.c.b16 %v2030, %v2026
        %v2295 = vpack.c.b16 %v2035, %v2031
        %v2296 = vpack.c.b16 %v2036, %v2032
        %v2297 = vpack.c.b16 %v2037, %v2033
        %v2298 = vpack.c.b16 %v2038, %v2034
        %v2299 = vpack.c.b16 %v2043, %v2039
        %v2300 = vpack.c.b16 %v2044, %v2040
        %v2301 = vpack.c.b16 %v2045, %v2041
        %v2302 = vpack.c.b16 %v2046, %v2042
        %v2303 = vpack.c.b16 %v2051, %v2047
        %v2304 = vpack.c.b16 %v2052, %v2048
        %v2305 = vpack.c.b16 %v2053, %v2049
        %v2306 = vpack.c.b16 %v2054, %v2050
        %v2307 = vpack.c.b16 %v2059, %v2055
        %v2308 = vpack.c.b16 %v2060, %v2056
        %v2309 = vpack.c.b16 %v2061, %v2057
        %v2310 = vpack.c.b16 %v2062, %v2058
        %v2311 = vpack.c.b16 %v2067, %v2063
        %v2312 = vpack.c.b16 %v2068, %v2064
        %v2313 = vpack.c.b16 %v2069, %v2065
        %v2314 = vpack.c.b16 %v2070, %v2066
        %v2315 = vpack.c.b16 %v2075, %v2071
        %v2316 = vpack.c.b16 %v2076, %v2072
        %v2317 = vpack.c.b16 %v2077, %v2073
        %v2318 = vpack.c.b16 %v2078, %v2074
        %v2319 = vpack.c.b16 %v2083, %v2079
        %v2320 = vpack.c.b16 %v2084, %v2080
        %v2321 = vpack.c.b16 %v2085, %v2081
        %v2322 = vpack.c.b16 %v2086, %v2082
        %v2323 = vpack.c.b16 %v2091, %v2087
        %v2324 = vpack.c.b16 %v2092, %v2088
        %v2325 = vpack.c.b16 %v2093, %v2089
        %v2326 = vpack.c.b16 %v2094, %v2090
        %v2327 = vpack.c.b16 %v2099, %v2095
        %v2328 = vpack.c.b16 %v2100, %v2096
        %v2329 = vpack.c.b16 %v2101, %v2097
        %v2330 = vpack.c.b16 %v2102, %v2098
        %v2331 = vpack.c.b16 %v2107, %v2103
        %v2332 = vpack.c.b16 %v2108, %v2104
        %v2333 = vpack.c.b16 %v2109, %v2105
        %v2334 = vpack.c.b16 %v2110, %v2106
        %2559 = vmatpush.bf16.msra.mxu0 %v2139
        %2560 = vmatpush.bf16.msra.mxu0 %v2135
        %2561 = vmatpush.bf16.msra.mxu0 %v2131
        %2562 = vmatpush.bf16.msra.mxu0 %v2127
        %2563 = vmatpush.bf16.msra.mxu0 %v2123
        %2564 = vmatpush.bf16.msra.mxu0 %v2119
        %2565 = vmatpush.bf16.msra.mxu0 %v2115
        %2566 = vmatpush.bf16.msra.mxu0 %v2111
        %2567 = vmatmul.bf16.gmra.mxu0 %v1327
        %v2568 = vpop.f32.mrf.mxu0
        %v2569 = vadd.f32 0.0, %v2568
        %v2570 = vpop.f32.mrf.mxu0
        %v2571 = vadd.f32 0.0, %v2570
        %2572 = vmatmul.bf16.gmra.mxu0 %v1334
        %v2573 = vpop.f32.mrf.mxu0
        %v2574 = vadd.f32 0.0, %v2573
        %v2575 = vpop.f32.mrf.mxu0
        %v2576 = vadd.f32 0.0, %v2575
        %2577 = vmatmul.bf16.gmra.mxu0 %v1341
        %v2578 = vpop.f32.mrf.mxu0
        %v2579 = vadd.f32 0.0, %v2578
        %v2580 = vpop.f32.mrf.mxu0
        %v2581 = vadd.f32 0.0, %v2580
        %2582 = vmatmul.bf16.gmra.mxu0 %v1348
        %v2583 = vpop.f32.mrf.mxu0
        %v2584 = vadd.f32 0.0, %v2583
        %v2585 = vpop.f32.mrf.mxu0
        %v2586 = vadd.f32 0.0, %v2585
        %2587 = vmatmul.bf16.gmra.mxu0 %v1355
        %v2588 = vpop.f32.mrf.mxu0
        %v2589 = vadd.f32 0.0, %v2588
        %v2590 = vpop.f32.mrf.mxu0
        %v2591 = vadd.f32 0.0, %v2590
        %2592 = vmatmul.bf16.gmra.mxu0 %v1362
        %v2593 = vpop.f32.mrf.mxu0
        %v2594 = vadd.f32 0.0, %v2593
        %v2595 = vpop.f32.mrf.mxu0
        %v2596 = vadd.f32 0.0, %v2595
        %2597 = vmatmul.bf16.gmra.mxu0 %v1369
        %v2598 = vpop.f32.mrf.mxu0
        %v2599 = vadd.f32 0.0, %v2598
        %v2600 = vpop.f32.mrf.mxu0
        %v2601 = vadd.f32 0.0, %v2600
        %2602 = vmatmul.bf16.gmra.mxu0 %v1376
        %v2603 = vpop.f32.mrf.mxu0
        %v2604 = vadd.f32 0.0, %v2603
        %v2605 = vpop.f32.mrf.mxu0
        %v2606 = vadd.f32 0.0, %v2605
        %2607 = vdwg.mxu0
        %2608 = vmatpush.bf16.msra.mxu0 %v2171
        %2609 = vmatpush.bf16.msra.mxu0 %v2167
        %2610 = vmatpush.bf16.msra.mxu0 %v2163
        %2611 = vmatpush.bf16.msra.mxu0 %v2159
        %2612 = vmatpush.bf16.msra.mxu0 %v2155
        %2613 = vmatpush.bf16.msra.mxu0 %v2151
        %2614 = vmatpush.bf16.msra.mxu0 %v2147
        %2615 = vmatpush.bf16.msra.mxu0 %v2143
        %2616 = vmatmul.bf16.gmra.mxu0 %v1328
        %v2617 = vpop.f32.mrf.mxu0
        %v2618 = vadd.f32 %v2569, %v2617
        %v2619 = vpop.f32.mrf.mxu0
        %v2620 = vadd.f32 %v2571, %v2619
        %2621 = vmatmul.bf16.gmra.mxu0 %v1335
        %v2622 = vpop.f32.mrf.mxu0
        %v2623 = vadd.f32 %v2574, %v2622
        %v2624 = vpop.f32.mrf.mxu0
        %v2625 = vadd.f32 %v2576, %v2624
        %2626 = vmatmul.bf16.gmra.mxu0 %v1342
        %v2627 = vpop.f32.mrf.mxu0
        %v2628 = vadd.f32 %v2579, %v2627
        %v2629 = vpop.f32.mrf.mxu0
        %v2630 = vadd.f32 %v2581, %v2629
        %2631 = vmatmul.bf16.gmra.mxu0 %v1349
        %v2632 = vpop.f32.mrf.mxu0
        %v2633 = vadd.f32 %v2584, %v2632
        %v2634 = vpop.f32.mrf.mxu0
        %v2635 = vadd.f32 %v2586, %v2634
        %2636 = vmatmul.bf16.gmra.mxu0 %v1356
        %v2637 = vpop.f32.mrf.mxu0
        %v2638 = vadd.f32 %v2589, %v2637
        %v2639 = vpop.f32.mrf.mxu0
        %v2640 = vadd.f32 %v2591, %v2639
        %2641 = vmatmul.bf16.gmra.mxu0 %v1363
        %v2642 = vpop.f32.mrf.mxu0
        %v2643 = vadd.f32 %v2594, %v2642
        %v2644 = vpop.f32.mrf.mxu0
        %v2645 = vadd.f32 %v2596, %v2644
        %2646 = vmatmul.bf16.gmra.mxu0 %v1370
        %v2647 = vpop.f32.mrf.mxu0
        %v2648 = vadd.f32 %v2599, %v2647
        %v2649 = vpop.f32.mrf.mxu0
        %v2650 = vadd.f32 %v2601, %v2649
        %2651 = vmatmul.bf16.gmra.mxu0 %v1377
        %v2652 = vpop.f32.mrf.mxu0
        %v2653 = vadd.f32 %v2604, %v2652
        %v2654 = vpop.f32.mrf.mxu0
        %v2655 = vadd.f32 %v2606, %v2654
        %2656 = vdwg.mxu0
        %2657 = vmatpush.bf16.msra.mxu0 %v2203
        %2658 = vmatpush.bf16.msra.mxu0 %v2199
        %2659 = vmatpush.bf16.msra.mxu0 %v2195
        %2660 = vmatpush.bf16.msra.mxu0 %v2191
        %2661 = vmatpush.bf16.msra.mxu0 %v2187
        %2662 = vmatpush.bf16.msra.mxu0 %v2183
        %2663 = vmatpush.bf16.msra.mxu0 %v2179
        %2664 = vmatpush.bf16.msra.mxu0 %v2175
        %2665 = vmatmul.bf16.gmra.mxu0 %v1329
        %v2666 = vpop.f32.mrf.mxu0
        %v2667 = vadd.f32 %v2618, %v2666
        %v2668 = vpop.f32.mrf.mxu0
        %v2669 = vadd.f32 %v2620, %v2668
        %2670 = vmatmul.bf16.gmra.mxu0 %v1336
        %v2671 = vpop.f32.mrf.mxu0
        %v2672 = vadd.f32 %v2623, %v2671
        %v2673 = vpop.f32.mrf.mxu0
        %v2674 = vadd.f32 %v2625, %v2673
        %2675 = vmatmul.bf16.gmra.mxu0 %v1343
        %v2676 = vpop.f32.mrf.mxu0
        %v2677 = vadd.f32 %v2628, %v2676
        %v2678 = vpop.f32.mrf.mxu0
        %v2679 = vadd.f32 %v2630, %v2678
        %2680 = vmatmul.bf16.gmra.mxu0 %v1350
        %v2681 = vpop.f32.mrf.mxu0
        %v2682 = vadd.f32 %v2633, %v2681
        %v2683 = vpop.f32.mrf.mxu0
        %v2684 = vadd.f32 %v2635, %v2683
        %2685 = vmatmul.bf16.gmra.mxu0 %v1357
        %v2686 = vpop.f32.mrf.mxu0
        %v2687 = vadd.f32 %v2638, %v2686
        %v2688 = vpop.f32.mrf.mxu0
        %v2689 = vadd.f32 %v2640, %v2688
        %2690 = vmatmul.bf16.gmra.mxu0 %v1364
        %v2691 = vpop.f32.mrf.mxu0
        %v2692 = vadd.f32 %v2643, %v2691
        %v2693 = vpop.f32.mrf.mxu0
        %v2694 = vadd.f32 %v2645, %v2693
        %2695 = vmatmul.bf16.gmra.mxu0 %v1371
        %v2696 = vpop.f32.mrf.mxu0
        %v2697 = vadd.f32 %v2648, %v2696
        %v2698 = vpop.f32.mrf.mxu0
        %v2699 = vadd.f32 %v2650, %v2698
        %2700 = vmatmul.bf16.gmra.mxu0 %v1378
        %v2701 = vpop.f32.mrf.mxu0
        %v2702 = vadd.f32 %v2653, %v2701
        %v2703 = vpop.f32.mrf.mxu0
        %v2704 = vadd.f32 %v2655, %v2703
        %2705 = vdwg.mxu0
        %2706 = vmatpush.bf16.msra.mxu0 %v2235
        %2707 = vmatpush.bf16.msra.mxu0 %v2231
        %2708 = vmatpush.bf16.msra.mxu0 %v2227
        %2709 = vmatpush.bf16.msra.mxu0 %v2223
        %2710 = vmatpush.bf16.msra.mxu0 %v2219
        %2711 = vmatpush.bf16.msra.mxu0 %v2215
        %2712 = vmatpush.bf16.msra.mxu0 %v2211
        %2713 = vmatpush.bf16.msra.mxu0 %v2207
        %2714 = vmatmul.bf16.gmra.mxu0 %v1330
        %v2715 = vpop.f32.mrf.mxu0
        %v2716 = vadd.f32 %v2667, %v2715
        %v2717 = vpop.f32.mrf.mxu0
        %v2718 = vadd.f32 %v2669, %v2717
        %2719 = vmatmul.bf16.gmra.mxu0 %v1337
        %v2720 = vpop.f32.mrf.mxu0
        %v2721 = vadd.f32 %v2672, %v2720
        %v2722 = vpop.f32.mrf.mxu0
        %v2723 = vadd.f32 %v2674, %v2722
        %2724 = vmatmul.bf16.gmra.mxu0 %v1344
        %v2725 = vpop.f32.mrf.mxu0
        %v2726 = vadd.f32 %v2677, %v2725
        %v2727 = vpop.f32.mrf.mxu0
        %v2728 = vadd.f32 %v2679, %v2727
        %2729 = vmatmul.bf16.gmra.mxu0 %v1351
        %v2730 = vpop.f32.mrf.mxu0
        %v2731 = vadd.f32 %v2682, %v2730
        %v2732 = vpop.f32.mrf.mxu0
        %v2733 = vadd.f32 %v2684, %v2732
        %2734 = vmatmul.bf16.gmra.mxu0 %v1358
        %v2735 = vpop.f32.mrf.mxu0
        %v2736 = vadd.f32 %v2687, %v2735
        %v2737 = vpop.f32.mrf.mxu0
        %v2738 = vadd.f32 %v2689, %v2737
        %2739 = vmatmul.bf16.gmra.mxu0 %v1365
        %v2740 = vpop.f32.mrf.mxu0
        %v2741 = vadd.f32 %v2692, %v2740
        %v2742 = vpop.f32.mrf.mxu0
        %v2743 = vadd.f32 %v2694, %v2742
        %2744 = vmatmul.bf16.gmra.mxu0 %v1372
        %v2745 = vpop.f32.mrf.mxu0
        %v2746 = vadd.f32 %v2697, %v2745
        %v2747 = vpop.f32.mrf.mxu0
        %v2748 = vadd.f32 %v2699, %v2747
        %2749 = vmatmul.bf16.gmra.mxu0 %v1379
        %v2750 = vpop.f32.mrf.mxu0
        %v2751 = vadd.f32 %v2702, %v2750
        %v2752 = vpop.f32.mrf.mxu0
        %v2753 = vadd.f32 %v2704, %v2752
        %2754 = vdwg.mxu0
        %2755 = vmatpush.bf16.msra.mxu0 %v2267
        %2756 = vmatpush.bf16.msra.mxu0 %v2263
        %2757 = vmatpush.bf16.msra.mxu0 %v2259
        %2758 = vmatpush.bf16.msra.mxu0 %v2255
        %2759 = vmatpush.bf16.msra.mxu0 %v2251
        %2760 = vmatpush.bf16.msra.mxu0 %v2247
        %2761 = vmatpush.bf16.msra.mxu0 %v2243
        %2762 = vmatpush.bf16.msra.mxu0 %v2239
        %2763 = vmatmul.bf16.gmra.mxu0 %v1331
        %v2764 = vpop.f32.mrf.mxu0
        %v2765 = vadd.f32 %v2716, %v2764
        %v2766 = vpop.f32.mrf.mxu0
        %v2767 = vadd.f32 %v2718, %v2766
        %2768 = vmatmul.bf16.gmra.mxu0 %v1338
        %v2769 = vpop.f32.mrf.mxu0
        %v2770 = vadd.f32 %v2721, %v2769
        %v2771 = vpop.f32.mrf.mxu0
        %v2772 = vadd.f32 %v2723, %v2771
        %2773 = vmatmul.bf16.gmra.mxu0 %v1345
        %v2774 = vpop.f32.mrf.mxu0
        %v2775 = vadd.f32 %v2726, %v2774
        %v2776 = vpop.f32.mrf.mxu0
        %v2777 = vadd.f32 %v2728, %v2776
        %2778 = vmatmul.bf16.gmra.mxu0 %v1352
        %v2779 = vpop.f32.mrf.mxu0
        %v2780 = vadd.f32 %v2731, %v2779
        %v2781 = vpop.f32.mrf.mxu0
        %v2782 = vadd.f32 %v2733, %v2781
        %2783 = vmatmul.bf16.gmra.mxu0 %v1359
        %v2784 = vpop.f32.mrf.mxu0
        %v2785 = vadd.f32 %v2736, %v2784
        %v2786 = vpop.f32.mrf.mxu0
        %v2787 = vadd.f32 %v2738, %v2786
        %2788 = vmatmul.bf16.gmra.mxu0 %v1366
        %v2789 = vpop.f32.mrf.mxu0
        %v2790 = vadd.f32 %v2741, %v2789
        %v2791 = vpop.f32.mrf.mxu0
        %v2792 = vadd.f32 %v2743, %v2791
        %2793 = vmatmul.bf16.gmra.mxu0 %v1373
        %v2794 = vpop.f32.mrf.mxu0
        %v2795 = vadd.f32 %v2746, %v2794
        %v2796 = vpop.f32.mrf.mxu0
        %v2797 = vadd.f32 %v2748, %v2796
        %2798 = vmatmul.bf16.gmra.mxu0 %v1380
        %v2799 = vpop.f32.mrf.mxu0
        %v2800 = vadd.f32 %v2751, %v2799
        %v2801 = vpop.f32.mrf.mxu0
        %v2802 = vadd.f32 %v2753, %v2801
        %2803 = vdwg.mxu0
        %2804 = vmatpush.bf16.msra.mxu0 %v2299
        %2805 = vmatpush.bf16.msra.mxu0 %v2295
        %2806 = vmatpush.bf16.msra.mxu0 %v2291
        %2807 = vmatpush.bf16.msra.mxu0 %v2287
        %2808 = vmatpush.bf16.msra.mxu0 %v2283
        %2809 = vmatpush.bf16.msra.mxu0 %v2279
        %2810 = vmatpush.bf16.msra.mxu0 %v2275
        %2811 = vmatpush.bf16.msra.mxu0 %v2271
        %2812 = vmatmul.bf16.gmra.mxu0 %v1332
        %v2813 = vpop.f32.mrf.mxu0
        %v2814 = vadd.f32 %v2765, %v2813
        %v2815 = vpop.f32.mrf.mxu0
        %v2816 = vadd.f32 %v2767, %v2815
        %2817 = vmatmul.bf16.gmra.mxu0 %v1339
        %v2818 = vpop.f32.mrf.mxu0
        %v2819 = vadd.f32 %v2770, %v2818
        %v2820 = vpop.f32.mrf.mxu0
        %v2821 = vadd.f32 %v2772, %v2820
        %2822 = vmatmul.bf16.gmra.mxu0 %v1346
        %v2823 = vpop.f32.mrf.mxu0
        %v2824 = vadd.f32 %v2775, %v2823
        %v2825 = vpop.f32.mrf.mxu0
        %v2826 = vadd.f32 %v2777, %v2825
        %2827 = vmatmul.bf16.gmra.mxu0 %v1353
        %v2828 = vpop.f32.mrf.mxu0
        %v2829 = vadd.f32 %v2780, %v2828
        %v2830 = vpop.f32.mrf.mxu0
        %v2831 = vadd.f32 %v2782, %v2830
        %2832 = vmatmul.bf16.gmra.mxu0 %v1360
        %v2833 = vpop.f32.mrf.mxu0
        %v2834 = vadd.f32 %v2785, %v2833
        %v2835 = vpop.f32.mrf.mxu0
        %v2836 = vadd.f32 %v2787, %v2835
        %2837 = vmatmul.bf16.gmra.mxu0 %v1367
        %v2838 = vpop.f32.mrf.mxu0
        %v2839 = vadd.f32 %v2790, %v2838
        %v2840 = vpop.f32.mrf.mxu0
        %v2841 = vadd.f32 %v2792, %v2840
        %2842 = vmatmul.bf16.gmra.mxu0 %v1374
        %v2843 = vpop.f32.mrf.mxu0
        %v2844 = vadd.f32 %v2795, %v2843
        %v2845 = vpop.f32.mrf.mxu0
        %v2846 = vadd.f32 %v2797, %v2845
        %2847 = vmatmul.bf16.gmra.mxu0 %v1381
        %v2848 = vpop.f32.mrf.mxu0
        %v2849 = vadd.f32 %v2800, %v2848
        %v2850 = vpop.f32.mrf.mxu0
        %v2851 = vadd.f32 %v2802, %v2850
        %2852 = vdwg.mxu0
        %2853 = vmatpush.bf16.msra.mxu0 %v2331
        %2854 = vmatpush.bf16.msra.mxu0 %v2327
        %2855 = vmatpush.bf16.msra.mxu0 %v2323
        %2856 = vmatpush.bf16.msra.mxu0 %v2319
        %2857 = vmatpush.bf16.msra.mxu0 %v2315
        %2858 = vmatpush.bf16.msra.mxu0 %v2311
        %2859 = vmatpush.bf16.msra.mxu0 %v2307
        %2860 = vmatpush.bf16.msra.mxu0 %v2303
        %2861 = vmatmul.bf16.gmra.mxu0 %v1333
        %v2862 = vpop.f32.mrf.mxu0
        %v2863 = vadd.f32 %v2814, %v2862
        %v2864 = vpop.f32.mrf.mxu0
        %v2865 = vadd.f32 %v2816, %v2864
        %2866 = vmatmul.bf16.gmra.mxu0 %v1340
        %v2867 = vpop.f32.mrf.mxu0
        %v2868 = vadd.f32 %v2819, %v2867
        %v2869 = vpop.f32.mrf.mxu0
        %v2870 = vadd.f32 %v2821, %v2869
        %2871 = vmatmul.bf16.gmra.mxu0 %v1347
        %v2872 = vpop.f32.mrf.mxu0
        %v2873 = vadd.f32 %v2824, %v2872
        %v2874 = vpop.f32.mrf.mxu0
        %v2875 = vadd.f32 %v2826, %v2874
        %2876 = vmatmul.bf16.gmra.mxu0 %v1354
        %v2877 = vpop.f32.mrf.mxu0
        %v2878 = vadd.f32 %v2829, %v2877
        %v2879 = vpop.f32.mrf.mxu0
        %v2880 = vadd.f32 %v2831, %v2879
        %2881 = vmatmul.bf16.gmra.mxu0 %v1361
        %v2882 = vpop.f32.mrf.mxu0
        %v2883 = vadd.f32 %v2834, %v2882
        %v2884 = vpop.f32.mrf.mxu0
        %v2885 = vadd.f32 %v2836, %v2884
        %2886 = vmatmul.bf16.gmra.mxu0 %v1368
        %v2887 = vpop.f32.mrf.mxu0
        %v2888 = vadd.f32 %v2839, %v2887
        %v2889 = vpop.f32.mrf.mxu0
        %v2890 = vadd.f32 %v2841, %v2889
        %2891 = vmatmul.bf16.gmra.mxu0 %v1375
        %v2892 = vpop.f32.mrf.mxu0
        %v2893 = vadd.f32 %v2844, %v2892
        %v2894 = vpop.f32.mrf.mxu0
        %v2895 = vadd.f32 %v2846, %v2894
        %2896 = vmatmul.bf16.gmra.mxu0 %v1382
        %v2897 = vpop.f32.mrf.mxu0
        %v2898 = vadd.f32 %v2849, %v2897
        %v2899 = vpop.f32.mrf.mxu0
        %v2900 = vadd.f32 %v2851, %v2899
        %2901 = vdwg.mxu0
        %2902 = vmatpush.bf16.msra.mxu0 %v2140
        %2903 = vmatpush.bf16.msra.mxu0 %v2136
        %2904 = vmatpush.bf16.msra.mxu0 %v2132
        %2905 = vmatpush.bf16.msra.mxu0 %v2128
        %2906 = vmatpush.bf16.msra.mxu0 %v2124
        %2907 = vmatpush.bf16.msra.mxu0 %v2120
        %2908 = vmatpush.bf16.msra.mxu0 %v2116
        %2909 = vmatpush.bf16.msra.mxu0 %v2112
        %2910 = vmatmul.bf16.gmra.mxu0 %v1327
        %v2911 = vpop.f32.mrf.mxu0
        %v2912 = vadd.f32 0.0, %v2911
        %v2913 = vpop.f32.mrf.mxu0
        %v2914 = vadd.f32 0.0, %v2913
        %2915 = vmatmul.bf16.gmra.mxu0 %v1334
        %v2916 = vpop.f32.mrf.mxu0
        %v2917 = vadd.f32 0.0, %v2916
        %v2918 = vpop.f32.mrf.mxu0
        %v2919 = vadd.f32 0.0, %v2918
        %2920 = vmatmul.bf16.gmra.mxu0 %v1341
        %v2921 = vpop.f32.mrf.mxu0
        %v2922 = vadd.f32 0.0, %v2921
        %v2923 = vpop.f32.mrf.mxu0
        %v2924 = vadd.f32 0.0, %v2923
        %2925 = vmatmul.bf16.gmra.mxu0 %v1348
        %v2926 = vpop.f32.mrf.mxu0
        %v2927 = vadd.f32 0.0, %v2926
        %v2928 = vpop.f32.mrf.mxu0
        %v2929 = vadd.f32 0.0, %v2928
        %2930 = vmatmul.bf16.gmra.mxu0 %v1355
        %v2931 = vpop.f32.mrf.mxu0
        %v2932 = vadd.f32 0.0, %v2931
        %v2933 = vpop.f32.mrf.mxu0
        %v2934 = vadd.f32 0.0, %v2933
        %2935 = vmatmul.bf16.gmra.mxu0 %v1362
        %v2936 = vpop.f32.mrf.mxu0
        %v2937 = vadd.f32 0.0, %v2936
        %v2938 = vpop.f32.mrf.mxu0
        %v2939 = vadd.f32 0.0, %v2938
        %2940 = vmatmul.bf16.gmra.mxu0 %v1369
        %v2941 = vpop.f32.mrf.mxu0
        %v2942 = vadd.f32 0.0, %v2941
        %v2943 = vpop.f32.mrf.mxu0
        %v2944 = vadd.f32 0.0, %v2943
        %2945 = vmatmul.bf16.gmra.mxu0 %v1376
        %v2946 = vpop.f32.mrf.mxu0
        %v2947 = vadd.f32 0.0, %v2946
        %v2948 = vpop.f32.mrf.mxu0
        %v2949 = vadd.f32 0.0, %v2948
        %2950 = vdwg.mxu0
        %2951 = vmatpush.bf16.msra.mxu0 %v2172
        %2952 = vmatpush.bf16.msra.mxu0 %v2168
        %2953 = vmatpush.bf16.msra.mxu0 %v2164
        %2954 = vmatpush.bf16.msra.mxu0 %v2160
        %2955 = vmatpush.bf16.msra.mxu0 %v2156
        %2956 = vmatpush.bf16.msra.mxu0 %v2152
        %2957 = vmatpush.bf16.msra.mxu0 %v2148
        %2958 = vmatpush.bf16.msra.mxu0 %v2144
        %2959 = vmatmul.bf16.gmra.mxu0 %v1328
        %v2960 = vpop.f32.mrf.mxu0
        %v2961 = vadd.f32 %v2912, %v2960
        %v2962 = vpop.f32.mrf.mxu0
        %v2963 = vadd.f32 %v2914, %v2962
        %2964 = vmatmul.bf16.gmra.mxu0 %v1335
        %v2965 = vpop.f32.mrf.mxu0
        %v2966 = vadd.f32 %v2917, %v2965
        %v2967 = vpop.f32.mrf.mxu0
        %v2968 = vadd.f32 %v2919, %v2967
        %2969 = vmatmul.bf16.gmra.mxu0 %v1342
        %v2970 = vpop.f32.mrf.mxu0
        %v2971 = vadd.f32 %v2922, %v2970
        %v2972 = vpop.f32.mrf.mxu0
        %v2973 = vadd.f32 %v2924, %v2972
        %2974 = vmatmul.bf16.gmra.mxu0 %v1349
        %v2975 = vpop.f32.mrf.mxu0
        %v2976 = vadd.f32 %v2927, %v2975
        %v2977 = vpop.f32.mrf.mxu0
        %v2978 = vadd.f32 %v2929, %v2977
        %2979 = vmatmul.bf16.gmra.mxu0 %v1356
        %v2980 = vpop.f32.mrf.mxu0
        %v2981 = vadd.f32 %v2932, %v2980
        %v2982 = vpop.f32.mrf.mxu0
        %v2983 = vadd.f32 %v2934, %v2982
        %2984 = vmatmul.bf16.gmra.mxu0 %v1363
        %v2985 = vpop.f32.mrf.mxu0
        %v2986 = vadd.f32 %v2937, %v2985
        %v2987 = vpop.f32.mrf.mxu0
        %v2988 = vadd.f32 %v2939, %v2987
        %2989 = vmatmul.bf16.gmra.mxu0 %v1370
        %v2990 = vpop.f32.mrf.mxu0
        %v2991 = vadd.f32 %v2942, %v2990
        %v2992 = vpop.f32.mrf.mxu0
        %v2993 = vadd.f32 %v2944, %v2992
        %2994 = vmatmul.bf16.gmra.mxu0 %v1377
        %v2995 = vpop.f32.mrf.mxu0
        %v2996 = vadd.f32 %v2947, %v2995
        %v2997 = vpop.f32.mrf.mxu0
        %v2998 = vadd.f32 %v2949, %v2997
        %2999 = vdwg.mxu0
        %3000 = vmatpush.bf16.msra.mxu0 %v2204
        %3001 = vmatpush.bf16.msra.mxu0 %v2200
        %3002 = vmatpush.bf16.msra.mxu0 %v2196
        %3003 = vmatpush.bf16.msra.mxu0 %v2192
        %3004 = vmatpush.bf16.msra.mxu0 %v2188
        %3005 = vmatpush.bf16.msra.mxu0 %v2184
        %3006 = vmatpush.bf16.msra.mxu0 %v2180
        %3007 = vmatpush.bf16.msra.mxu0 %v2176
        %3008 = vmatmul.bf16.gmra.mxu0 %v1329
        %v3009 = vpop.f32.mrf.mxu0
        %v3010 = vadd.f32 %v2961, %v3009
        %v3011 = vpop.f32.mrf.mxu0
        %v3012 = vadd.f32 %v2963, %v3011
        %3013 = vmatmul.bf16.gmra.mxu0 %v1336
        %v3014 = vpop.f32.mrf.mxu0
        %v3015 = vadd.f32 %v2966, %v3014
        %v3016 = vpop.f32.mrf.mxu0
        %v3017 = vadd.f32 %v2968, %v3016
        %3018 = vmatmul.bf16.gmra.mxu0 %v1343
        %v3019 = vpop.f32.mrf.mxu0
        %v3020 = vadd.f32 %v2971, %v3019
        %v3021 = vpop.f32.mrf.mxu0
        %v3022 = vadd.f32 %v2973, %v3021
        %3023 = vmatmul.bf16.gmra.mxu0 %v1350
        %v3024 = vpop.f32.mrf.mxu0
        %v3025 = vadd.f32 %v2976, %v3024
        %v3026 = vpop.f32.mrf.mxu0
        %v3027 = vadd.f32 %v2978, %v3026
        %3028 = vmatmul.bf16.gmra.mxu0 %v1357
        %v3029 = vpop.f32.mrf.mxu0
        %v3030 = vadd.f32 %v2981, %v3029
        %v3031 = vpop.f32.mrf.mxu0
        %v3032 = vadd.f32 %v2983, %v3031
        %3033 = vmatmul.bf16.gmra.mxu0 %v1364
        %v3034 = vpop.f32.mrf.mxu0
        %v3035 = vadd.f32 %v2986, %v3034
        %v3036 = vpop.f32.mrf.mxu0
        %v3037 = vadd.f32 %v2988, %v3036
        %3038 = vmatmul.bf16.gmra.mxu0 %v1371
        %v3039 = vpop.f32.mrf.mxu0
        %v3040 = vadd.f32 %v2991, %v3039
        %v3041 = vpop.f32.mrf.mxu0
        %v3042 = vadd.f32 %v2993, %v3041
        %3043 = vmatmul.bf16.gmra.mxu0 %v1378
        %v3044 = vpop.f32.mrf.mxu0
        %v3045 = vadd.f32 %v2996, %v3044
        %v3046 = vpop.f32.mrf.mxu0
        %v3047 = vadd.f32 %v2998, %v3046
        %3048 = vdwg.mxu0
        %3049 = vmatpush.bf16.msra.mxu0 %v2236
        %3050 = vmatpush.bf16.msra.mxu0 %v2232
        %3051 = vmatpush.bf16.msra.mxu0 %v2228
        %3052 = vmatpush.bf16.msra.mxu0 %v2224
        %3053 = vmatpush.bf16.msra.mxu0 %v2220
        %3054 = vmatpush.bf16.msra.mxu0 %v2216
        %3055 = vmatpush.bf16.msra.mxu0 %v2212
        %3056 = vmatpush.bf16.msra.mxu0 %v2208
        %3057 = vmatmul.bf16.gmra.mxu0 %v1330
        %v3058 = vpop.f32.mrf.mxu0
        %v3059 = vadd.f32 %v3010, %v3058
        %v3060 = vpop.f32.mrf.mxu0
        %v3061 = vadd.f32 %v3012, %v3060
        %3062 = vmatmul.bf16.gmra.mxu0 %v1337
        %v3063 = vpop.f32.mrf.mxu0
        %v3064 = vadd.f32 %v3015, %v3063
        %v3065 = vpop.f32.mrf.mxu0
        %v3066 = vadd.f32 %v3017, %v3065
        %3067 = vmatmul.bf16.gmra.mxu0 %v1344
        %v3068 = vpop.f32.mrf.mxu0
        %v3069 = vadd.f32 %v3020, %v3068
        %v3070 = vpop.f32.mrf.mxu0
        %v3071 = vadd.f32 %v3022, %v3070
        %3072 = vmatmul.bf16.gmra.mxu0 %v1351
        %v3073 = vpop.f32.mrf.mxu0
        %v3074 = vadd.f32 %v3025, %v3073
        %v3075 = vpop.f32.mrf.mxu0
        %v3076 = vadd.f32 %v3027, %v3075
        %3077 = vmatmul.bf16.gmra.mxu0 %v1358
        %v3078 = vpop.f32.mrf.mxu0
        %v3079 = vadd.f32 %v3030, %v3078
        %v3080 = vpop.f32.mrf.mxu0
        %v3081 = vadd.f32 %v3032, %v3080
        %3082 = vmatmul.bf16.gmra.mxu0 %v1365
        %v3083 = vpop.f32.mrf.mxu0
        %v3084 = vadd.f32 %v3035, %v3083
        %v3085 = vpop.f32.mrf.mxu0
        %v3086 = vadd.f32 %v3037, %v3085
        %3087 = vmatmul.bf16.gmra.mxu0 %v1372
        %v3088 = vpop.f32.mrf.mxu0
        %v3089 = vadd.f32 %v3040, %v3088
        %v3090 = vpop.f32.mrf.mxu0
        %v3091 = vadd.f32 %v3042, %v3090
        %3092 = vmatmul.bf16.gmra.mxu0 %v1379
        %v3093 = vpop.f32.mrf.mxu0
        %v3094 = vadd.f32 %v3045, %v3093
        %v3095 = vpop.f32.mrf.mxu0
        %v3096 = vadd.f32 %v3047, %v3095
        %3097 = vdwg.mxu0
        %3098 = vmatpush.bf16.msra.mxu0 %v2268
        %3099 = vmatpush.bf16.msra.mxu0 %v2264
        %3100 = vmatpush.bf16.msra.mxu0 %v2260
        %3101 = vmatpush.bf16.msra.mxu0 %v2256
        %3102 = vmatpush.bf16.msra.mxu0 %v2252
        %3103 = vmatpush.bf16.msra.mxu0 %v2248
        %3104 = vmatpush.bf16.msra.mxu0 %v2244
        %3105 = vmatpush.bf16.msra.mxu0 %v2240
        %3106 = vmatmul.bf16.gmra.mxu0 %v1331
        %v3107 = vpop.f32.mrf.mxu0
        %v3108 = vadd.f32 %v3059, %v3107
        %v3109 = vpop.f32.mrf.mxu0
        %v3110 = vadd.f32 %v3061, %v3109
        %3111 = vmatmul.bf16.gmra.mxu0 %v1338
        %v3112 = vpop.f32.mrf.mxu0
        %v3113 = vadd.f32 %v3064, %v3112
        %v3114 = vpop.f32.mrf.mxu0
        %v3115 = vadd.f32 %v3066, %v3114
        %3116 = vmatmul.bf16.gmra.mxu0 %v1345
        %v3117 = vpop.f32.mrf.mxu0
        %v3118 = vadd.f32 %v3069, %v3117
        %v3119 = vpop.f32.mrf.mxu0
        %v3120 = vadd.f32 %v3071, %v3119
        %3121 = vmatmul.bf16.gmra.mxu0 %v1352
        %v3122 = vpop.f32.mrf.mxu0
        %v3123 = vadd.f32 %v3074, %v3122
        %v3124 = vpop.f32.mrf.mxu0
        %v3125 = vadd.f32 %v3076, %v3124
        %3126 = vmatmul.bf16.gmra.mxu0 %v1359
        %v3127 = vpop.f32.mrf.mxu0
        %v3128 = vadd.f32 %v3079, %v3127
        %v3129 = vpop.f32.mrf.mxu0
        %v3130 = vadd.f32 %v3081, %v3129
        %3131 = vmatmul.bf16.gmra.mxu0 %v1366
        %v3132 = vpop.f32.mrf.mxu0
        %v3133 = vadd.f32 %v3084, %v3132
        %v3134 = vpop.f32.mrf.mxu0
        %v3135 = vadd.f32 %v3086, %v3134
        %3136 = vmatmul.bf16.gmra.mxu0 %v1373
        %v3137 = vpop.f32.mrf.mxu0
        %v3138 = vadd.f32 %v3089, %v3137
        %v3139 = vpop.f32.mrf.mxu0
        %v3140 = vadd.f32 %v3091, %v3139
        %3141 = vmatmul.bf16.gmra.mxu0 %v1380
        %v3142 = vpop.f32.mrf.mxu0
        %v3143 = vadd.f32 %v3094, %v3142
        %v3144 = vpop.f32.mrf.mxu0
        %v3145 = vadd.f32 %v3096, %v3144
        %3146 = vdwg.mxu0
        %3147 = vmatpush.bf16.msra.mxu0 %v2300
        %3148 = vmatpush.bf16.msra.mxu0 %v2296
        %3149 = vmatpush.bf16.msra.mxu0 %v2292
        %3150 = vmatpush.bf16.msra.mxu0 %v2288
        %3151 = vmatpush.bf16.msra.mxu0 %v2284
        %3152 = vmatpush.bf16.msra.mxu0 %v2280
        %3153 = vmatpush.bf16.msra.mxu0 %v2276
        %3154 = vmatpush.bf16.msra.mxu0 %v2272
        %3155 = vmatmul.bf16.gmra.mxu0 %v1332
        %v3156 = vpop.f32.mrf.mxu0
        %v3157 = vadd.f32 %v3108, %v3156
        %v3158 = vpop.f32.mrf.mxu0
        %v3159 = vadd.f32 %v3110, %v3158
        %3160 = vmatmul.bf16.gmra.mxu0 %v1339
        %v3161 = vpop.f32.mrf.mxu0
        %v3162 = vadd.f32 %v3113, %v3161
        %v3163 = vpop.f32.mrf.mxu0
        %v3164 = vadd.f32 %v3115, %v3163
        %3165 = vmatmul.bf16.gmra.mxu0 %v1346
        %v3166 = vpop.f32.mrf.mxu0
        %v3167 = vadd.f32 %v3118, %v3166
        %v3168 = vpop.f32.mrf.mxu0
        %v3169 = vadd.f32 %v3120, %v3168
        %3170 = vmatmul.bf16.gmra.mxu0 %v1353
        %v3171 = vpop.f32.mrf.mxu0
        %v3172 = vadd.f32 %v3123, %v3171
        %v3173 = vpop.f32.mrf.mxu0
        %v3174 = vadd.f32 %v3125, %v3173
        %3175 = vmatmul.bf16.gmra.mxu0 %v1360
        %v3176 = vpop.f32.mrf.mxu0
        %v3177 = vadd.f32 %v3128, %v3176
        %v3178 = vpop.f32.mrf.mxu0
        %v3179 = vadd.f32 %v3130, %v3178
        %3180 = vmatmul.bf16.gmra.mxu0 %v1367
        %v3181 = vpop.f32.mrf.mxu0
        %v3182 = vadd.f32 %v3133, %v3181
        %v3183 = vpop.f32.mrf.mxu0
        %v3184 = vadd.f32 %v3135, %v3183
        %3185 = vmatmul.bf16.gmra.mxu0 %v1374
        %v3186 = vpop.f32.mrf.mxu0
        %v3187 = vadd.f32 %v3138, %v3186
        %v3188 = vpop.f32.mrf.mxu0
        %v3189 = vadd.f32 %v3140, %v3188
        %3190 = vmatmul.bf16.gmra.mxu0 %v1381
        %v3191 = vpop.f32.mrf.mxu0
        %v3192 = vadd.f32 %v3143, %v3191
        %v3193 = vpop.f32.mrf.mxu0
        %v3194 = vadd.f32 %v3145, %v3193
        %3195 = vdwg.mxu0
        %3196 = vmatpush.bf16.msra.mxu0 %v2332
        %3197 = vmatpush.bf16.msra.mxu0 %v2328
        %3198 = vmatpush.bf16.msra.mxu0 %v2324
        %3199 = vmatpush.bf16.msra.mxu0 %v2320
        %3200 = vmatpush.bf16.msra.mxu0 %v2316
        %3201 = vmatpush.bf16.msra.mxu0 %v2312
        %3202 = vmatpush.bf16.msra.mxu0 %v2308
        %3203 = vmatpush.bf16.msra.mxu0 %v2304
        %3204 = vmatmul.bf16.gmra.mxu0 %v1333
        %v3205 = vpop.f32.mrf.mxu0
        %v3206 = vadd.f32 %v3157, %v3205
        %v3207 = vpop.f32.mrf.mxu0
        %v3208 = vadd.f32 %v3159, %v3207
        %3209 = vmatmul.bf16.gmra.mxu0 %v1340
        %v3210 = vpop.f32.mrf.mxu0
        %v3211 = vadd.f32 %v3162, %v3210
        %v3212 = vpop.f32.mrf.mxu0
        %v3213 = vadd.f32 %v3164, %v3212
        %3214 = vmatmul.bf16.gmra.mxu0 %v1347
        %v3215 = vpop.f32.mrf.mxu0
        %v3216 = vadd.f32 %v3167, %v3215
        %v3217 = vpop.f32.mrf.mxu0
        %v3218 = vadd.f32 %v3169, %v3217
        %3219 = vmatmul.bf16.gmra.mxu0 %v1354
        %v3220 = vpop.f32.mrf.mxu0
        %v3221 = vadd.f32 %v3172, %v3220
        %v3222 = vpop.f32.mrf.mxu0
        %v3223 = vadd.f32 %v3174, %v3222
        %3224 = vmatmul.bf16.gmra.mxu0 %v1361
        %v3225 = vpop.f32.mrf.mxu0
        %v3226 = vadd.f32 %v3177, %v3225
        %v3227 = vpop.f32.mrf.mxu0
        %v3228 = vadd.f32 %v3179, %v3227
        %3229 = vmatmul.bf16.gmra.mxu0 %v1368
        %v3230 = vpop.f32.mrf.mxu0
        %v3231 = vadd.f32 %v3182, %v3230
        %v3232 = vpop.f32.mrf.mxu0
        %v3233 = vadd.f32 %v3184, %v3232
        %3234 = vmatmul.bf16.gmra.mxu0 %v1375
        %v3235 = vpop.f32.mrf.mxu0
        %v3236 = vadd.f32 %v3187, %v3235
        %v3237 = vpop.f32.mrf.mxu0
        %v3238 = vadd.f32 %v3189, %v3237
        %3239 = vmatmul.bf16.gmra.mxu0 %v1382
        %v3240 = vpop.f32.mrf.mxu0
        %v3241 = vadd.f32 %v3192, %v3240
        %v3242 = vpop.f32.mrf.mxu0
        %v3243 = vadd.f32 %v3194, %v3242
        %3244 = vdwg.mxu0
        %3245 = vmatpush.bf16.msra.mxu0 %v2141
        %3246 = vmatpush.bf16.msra.mxu0 %v2137
        %3247 = vmatpush.bf16.msra.mxu0 %v2133
        %3248 = vmatpush.bf16.msra.mxu0 %v2129
        %3249 = vmatpush.bf16.msra.mxu0 %v2125
        %3250 = vmatpush.bf16.msra.mxu0 %v2121
        %3251 = vmatpush.bf16.msra.mxu0 %v2117
        %3252 = vmatpush.bf16.msra.mxu0 %v2113
        %3253 = vmatmul.bf16.gmra.mxu0 %v1327
        %v3254 = vpop.f32.mrf.mxu0
        %v3255 = vadd.f32 0.0, %v3254
        %v3256 = vpop.f32.mrf.mxu0
        %v3257 = vadd.f32 0.0, %v3256
        %3258 = vmatmul.bf16.gmra.mxu0 %v1334
        %v3259 = vpop.f32.mrf.mxu0
        %v3260 = vadd.f32 0.0, %v3259
        %v3261 = vpop.f32.mrf.mxu0
        %v3262 = vadd.f32 0.0, %v3261
        %3263 = vmatmul.bf16.gmra.mxu0 %v1341
        %v3264 = vpop.f32.mrf.mxu0
        %v3265 = vadd.f32 0.0, %v3264
        %v3266 = vpop.f32.mrf.mxu0
        %v3267 = vadd.f32 0.0, %v3266
        %3268 = vmatmul.bf16.gmra.mxu0 %v1348
        %v3269 = vpop.f32.mrf.mxu0
        %v3270 = vadd.f32 0.0, %v3269
        %v3271 = vpop.f32.mrf.mxu0
        %v3272 = vadd.f32 0.0, %v3271
        %3273 = vmatmul.bf16.gmra.mxu0 %v1355
        %v3274 = vpop.f32.mrf.mxu0
        %v3275 = vadd.f32 0.0, %v3274
        %v3276 = vpop.f32.mrf.mxu0
        %v3277 = vadd.f32 0.0, %v3276
        %3278 = vmatmul.bf16.gmra.mxu0 %v1362
        %v3279 = vpop.f32.mrf.mxu0
        %v3280 = vadd.f32 0.0, %v3279
        %v3281 = vpop.f32.mrf.mxu0
        %v3282 = vadd.f32 0.0, %v3281
        %3283 = vmatmul.bf16.gmra.mxu0 %v1369
        %v3284 = vpop.f32.mrf.mxu0
        %v3285 = vadd.f32 0.0, %v3284
        %v3286 = vpop.f32.mrf.mxu0
        %v3287 = vadd.f32 0.0, %v3286
        %3288 = vmatmul.bf16.gmra.mxu0 %v1376
        %v3289 = vpop.f32.mrf.mxu0
        %v3290 = vadd.f32 0.0, %v3289
        %v3291 = vpop.f32.mrf.mxu0
        %v3292 = vadd.f32 0.0, %v3291
        %3293 = vdwg.mxu0
        %3294 = vmatpush.bf16.msra.mxu0 %v2173
        %3295 = vmatpush.bf16.msra.mxu0 %v2169
        %3296 = vmatpush.bf16.msra.mxu0 %v2165
        %3297 = vmatpush.bf16.msra.mxu0 %v2161
        %3298 = vmatpush.bf16.msra.mxu0 %v2157
        %3299 = vmatpush.bf16.msra.mxu0 %v2153
        %3300 = vmatpush.bf16.msra.mxu0 %v2149
        %3301 = vmatpush.bf16.msra.mxu0 %v2145
        %3302 = vmatmul.bf16.gmra.mxu0 %v1328
        %v3303 = vpop.f32.mrf.mxu0
        %v3304 = vadd.f32 %v3255, %v3303
        %v3305 = vpop.f32.mrf.mxu0
        %v3306 = vadd.f32 %v3257, %v3305
        %3307 = vmatmul.bf16.gmra.mxu0 %v1335
        %v3308 = vpop.f32.mrf.mxu0
        %v3309 = vadd.f32 %v3260, %v3308
        %v3310 = vpop.f32.mrf.mxu0
        %v3311 = vadd.f32 %v3262, %v3310
        %3312 = vmatmul.bf16.gmra.mxu0 %v1342
        %v3313 = vpop.f32.mrf.mxu0
        %v3314 = vadd.f32 %v3265, %v3313
        %v3315 = vpop.f32.mrf.mxu0
        %v3316 = vadd.f32 %v3267, %v3315
        %3317 = vmatmul.bf16.gmra.mxu0 %v1349
        %v3318 = vpop.f32.mrf.mxu0
        %v3319 = vadd.f32 %v3270, %v3318
        %v3320 = vpop.f32.mrf.mxu0
        %v3321 = vadd.f32 %v3272, %v3320
        %3322 = vmatmul.bf16.gmra.mxu0 %v1356
        %v3323 = vpop.f32.mrf.mxu0
        %v3324 = vadd.f32 %v3275, %v3323
        %v3325 = vpop.f32.mrf.mxu0
        %v3326 = vadd.f32 %v3277, %v3325
        %3327 = vmatmul.bf16.gmra.mxu0 %v1363
        %v3328 = vpop.f32.mrf.mxu0
        %v3329 = vadd.f32 %v3280, %v3328
        %v3330 = vpop.f32.mrf.mxu0
        %v3331 = vadd.f32 %v3282, %v3330
        %3332 = vmatmul.bf16.gmra.mxu0 %v1370
        %v3333 = vpop.f32.mrf.mxu0
        %v3334 = vadd.f32 %v3285, %v3333
        %v3335 = vpop.f32.mrf.mxu0
        %v3336 = vadd.f32 %v3287, %v3335
        %3337 = vmatmul.bf16.gmra.mxu0 %v1377
        %v3338 = vpop.f32.mrf.mxu0
        %v3339 = vadd.f32 %v3290, %v3338
        %v3340 = vpop.f32.mrf.mxu0
        %v3341 = vadd.f32 %v3292, %v3340
        %3342 = vdwg.mxu0
        %3343 = vmatpush.bf16.msra.mxu0 %v2205
        %3344 = vmatpush.bf16.msra.mxu0 %v2201
        %3345 = vmatpush.bf16.msra.mxu0 %v2197
        %3346 = vmatpush.bf16.msra.mxu0 %v2193
        %3347 = vmatpush.bf16.msra.mxu0 %v2189
        %3348 = vmatpush.bf16.msra.mxu0 %v2185
        %3349 = vmatpush.bf16.msra.mxu0 %v2181
        %3350 = vmatpush.bf16.msra.mxu0 %v2177
        %3351 = vmatmul.bf16.gmra.mxu0 %v1329
        %v3352 = vpop.f32.mrf.mxu0
        %v3353 = vadd.f32 %v3304, %v3352
        %v3354 = vpop.f32.mrf.mxu0
        %v3355 = vadd.f32 %v3306, %v3354
        %3356 = vmatmul.bf16.gmra.mxu0 %v1336
        %v3357 = vpop.f32.mrf.mxu0
        %v3358 = vadd.f32 %v3309, %v3357
        %v3359 = vpop.f32.mrf.mxu0
        %v3360 = vadd.f32 %v3311, %v3359
        %3361 = vmatmul.bf16.gmra.mxu0 %v1343
        %v3362 = vpop.f32.mrf.mxu0
        %v3363 = vadd.f32 %v3314, %v3362
        %v3364 = vpop.f32.mrf.mxu0
        %v3365 = vadd.f32 %v3316, %v3364
        %3366 = vmatmul.bf16.gmra.mxu0 %v1350
        %v3367 = vpop.f32.mrf.mxu0
        %v3368 = vadd.f32 %v3319, %v3367
        %v3369 = vpop.f32.mrf.mxu0
        %v3370 = vadd.f32 %v3321, %v3369
        %3371 = vmatmul.bf16.gmra.mxu0 %v1357
        %v3372 = vpop.f32.mrf.mxu0
        %v3373 = vadd.f32 %v3324, %v3372
        %v3374 = vpop.f32.mrf.mxu0
        %v3375 = vadd.f32 %v3326, %v3374
        %3376 = vmatmul.bf16.gmra.mxu0 %v1364
        %v3377 = vpop.f32.mrf.mxu0
        %v3378 = vadd.f32 %v3329, %v3377
        %v3379 = vpop.f32.mrf.mxu0
        %v3380 = vadd.f32 %v3331, %v3379
        %3381 = vmatmul.bf16.gmra.mxu0 %v1371
        %v3382 = vpop.f32.mrf.mxu0
        %v3383 = vadd.f32 %v3334, %v3382
        %v3384 = vpop.f32.mrf.mxu0
        %v3385 = vadd.f32 %v3336, %v3384
        %3386 = vmatmul.bf16.gmra.mxu0 %v1378
        %v3387 = vpop.f32.mrf.mxu0
        %v3388 = vadd.f32 %v3339, %v3387
        %v3389 = vpop.f32.mrf.mxu0
        %v3390 = vadd.f32 %v3341, %v3389
        %3391 = vdwg.mxu0
        %3392 = vmatpush.bf16.msra.mxu0 %v2237
        %3393 = vmatpush.bf16.msra.mxu0 %v2233
        %3394 = vmatpush.bf16.msra.mxu0 %v2229
        %3395 = vmatpush.bf16.msra.mxu0 %v2225
        %3396 = vmatpush.bf16.msra.mxu0 %v2221
        %3397 = vmatpush.bf16.msra.mxu0 %v2217
        %3398 = vmatpush.bf16.msra.mxu0 %v2213
        %3399 = vmatpush.bf16.msra.mxu0 %v2209
        %3400 = vmatmul.bf16.gmra.mxu0 %v1330
        %v3401 = vpop.f32.mrf.mxu0
        %v3402 = vadd.f32 %v3353, %v3401
        %v3403 = vpop.f32.mrf.mxu0
        %v3404 = vadd.f32 %v3355, %v3403
        %3405 = vmatmul.bf16.gmra.mxu0 %v1337
        %v3406 = vpop.f32.mrf.mxu0
        %v3407 = vadd.f32 %v3358, %v3406
        %v3408 = vpop.f32.mrf.mxu0
        %v3409 = vadd.f32 %v3360, %v3408
        %3410 = vmatmul.bf16.gmra.mxu0 %v1344
        %v3411 = vpop.f32.mrf.mxu0
        %v3412 = vadd.f32 %v3363, %v3411
        %v3413 = vpop.f32.mrf.mxu0
        %v3414 = vadd.f32 %v3365, %v3413
        %3415 = vmatmul.bf16.gmra.mxu0 %v1351
        %v3416 = vpop.f32.mrf.mxu0
        %v3417 = vadd.f32 %v3368, %v3416
        %v3418 = vpop.f32.mrf.mxu0
        %v3419 = vadd.f32 %v3370, %v3418
        %3420 = vmatmul.bf16.gmra.mxu0 %v1358
        %v3421 = vpop.f32.mrf.mxu0
        %v3422 = vadd.f32 %v3373, %v3421
        %v3423 = vpop.f32.mrf.mxu0
        %v3424 = vadd.f32 %v3375, %v3423
        %3425 = vmatmul.bf16.gmra.mxu0 %v1365
        %v3426 = vpop.f32.mrf.mxu0
        %v3427 = vadd.f32 %v3378, %v3426
        %v3428 = vpop.f32.mrf.mxu0
        %v3429 = vadd.f32 %v3380, %v3428
        %3430 = vmatmul.bf16.gmra.mxu0 %v1372
        %v3431 = vpop.f32.mrf.mxu0
        %v3432 = vadd.f32 %v3383, %v3431
        %v3433 = vpop.f32.mrf.mxu0
        %v3434 = vadd.f32 %v3385, %v3433
        %3435 = vmatmul.bf16.gmra.mxu0 %v1379
        %v3436 = vpop.f32.mrf.mxu0
        %v3437 = vadd.f32 %v3388, %v3436
        %v3438 = vpop.f32.mrf.mxu0
        %v3439 = vadd.f32 %v3390, %v3438
        %3440 = vdwg.mxu0
        %3441 = vmatpush.bf16.msra.mxu0 %v2269
        %3442 = vmatpush.bf16.msra.mxu0 %v2265
        %3443 = vmatpush.bf16.msra.mxu0 %v2261
        %3444 = vmatpush.bf16.msra.mxu0 %v2257
        %3445 = vmatpush.bf16.msra.mxu0 %v2253
        %3446 = vmatpush.bf16.msra.mxu0 %v2249
        %3447 = vmatpush.bf16.msra.mxu0 %v2245
        %3448 = vmatpush.bf16.msra.mxu0 %v2241
        %3449 = vmatmul.bf16.gmra.mxu0 %v1331
        %v3450 = vpop.f32.mrf.mxu0
        %v3451 = vadd.f32 %v3402, %v3450
        %v3452 = vpop.f32.mrf.mxu0
        %v3453 = vadd.f32 %v3404, %v3452
        %3454 = vmatmul.bf16.gmra.mxu0 %v1338
        %v3455 = vpop.f32.mrf.mxu0
        %v3456 = vadd.f32 %v3407, %v3455
        %v3457 = vpop.f32.mrf.mxu0
        %v3458 = vadd.f32 %v3409, %v3457
        %3459 = vmatmul.bf16.gmra.mxu0 %v1345
        %v3460 = vpop.f32.mrf.mxu0
        %v3461 = vadd.f32 %v3412, %v3460
        %v3462 = vpop.f32.mrf.mxu0
        %v3463 = vadd.f32 %v3414, %v3462
        %3464 = vmatmul.bf16.gmra.mxu0 %v1352
        %v3465 = vpop.f32.mrf.mxu0
        %v3466 = vadd.f32 %v3417, %v3465
        %v3467 = vpop.f32.mrf.mxu0
        %v3468 = vadd.f32 %v3419, %v3467
        %3469 = vmatmul.bf16.gmra.mxu0 %v1359
        %v3470 = vpop.f32.mrf.mxu0
        %v3471 = vadd.f32 %v3422, %v3470
        %v3472 = vpop.f32.mrf.mxu0
        %v3473 = vadd.f32 %v3424, %v3472
        %3474 = vmatmul.bf16.gmra.mxu0 %v1366
        %v3475 = vpop.f32.mrf.mxu0
        %v3476 = vadd.f32 %v3427, %v3475
        %v3477 = vpop.f32.mrf.mxu0
        %v3478 = vadd.f32 %v3429, %v3477
        %3479 = vmatmul.bf16.gmra.mxu0 %v1373
        %v3480 = vpop.f32.mrf.mxu0
        %v3481 = vadd.f32 %v3432, %v3480
        %v3482 = vpop.f32.mrf.mxu0
        %v3483 = vadd.f32 %v3434, %v3482
        %3484 = vmatmul.bf16.gmra.mxu0 %v1380
        %v3485 = vpop.f32.mrf.mxu0
        %v3486 = vadd.f32 %v3437, %v3485
        %v3487 = vpop.f32.mrf.mxu0
        %v3488 = vadd.f32 %v3439, %v3487
        %3489 = vdwg.mxu0
        %3490 = vmatpush.bf16.msra.mxu0 %v2301
        %3491 = vmatpush.bf16.msra.mxu0 %v2297
        %3492 = vmatpush.bf16.msra.mxu0 %v2293
        %3493 = vmatpush.bf16.msra.mxu0 %v2289
        %3494 = vmatpush.bf16.msra.mxu0 %v2285
        %3495 = vmatpush.bf16.msra.mxu0 %v2281
        %3496 = vmatpush.bf16.msra.mxu0 %v2277
        %3497 = vmatpush.bf16.msra.mxu0 %v2273
        %3498 = vmatmul.bf16.gmra.mxu0 %v1332
        %v3499 = vpop.f32.mrf.mxu0
        %v3500 = vadd.f32 %v3451, %v3499
        %v3501 = vpop.f32.mrf.mxu0
        %v3502 = vadd.f32 %v3453, %v3501
        %3503 = vmatmul.bf16.gmra.mxu0 %v1339
        %v3504 = vpop.f32.mrf.mxu0
        %v3505 = vadd.f32 %v3456, %v3504
        %v3506 = vpop.f32.mrf.mxu0
        %v3507 = vadd.f32 %v3458, %v3506
        %3508 = vmatmul.bf16.gmra.mxu0 %v1346
        %v3509 = vpop.f32.mrf.mxu0
        %v3510 = vadd.f32 %v3461, %v3509
        %v3511 = vpop.f32.mrf.mxu0
        %v3512 = vadd.f32 %v3463, %v3511
        %3513 = vmatmul.bf16.gmra.mxu0 %v1353
        %v3514 = vpop.f32.mrf.mxu0
        %v3515 = vadd.f32 %v3466, %v3514
        %v3516 = vpop.f32.mrf.mxu0
        %v3517 = vadd.f32 %v3468, %v3516
        %3518 = vmatmul.bf16.gmra.mxu0 %v1360
        %v3519 = vpop.f32.mrf.mxu0
        %v3520 = vadd.f32 %v3471, %v3519
        %v3521 = vpop.f32.mrf.mxu0
        %v3522 = vadd.f32 %v3473, %v3521
        %3523 = vmatmul.bf16.gmra.mxu0 %v1367
        %v3524 = vpop.f32.mrf.mxu0
        %v3525 = vadd.f32 %v3476, %v3524
        %v3526 = vpop.f32.mrf.mxu0
        %v3527 = vadd.f32 %v3478, %v3526
        %3528 = vmatmul.bf16.gmra.mxu0 %v1374
        %v3529 = vpop.f32.mrf.mxu0
        %v3530 = vadd.f32 %v3481, %v3529
        %v3531 = vpop.f32.mrf.mxu0
        %v3532 = vadd.f32 %v3483, %v3531
        %3533 = vmatmul.bf16.gmra.mxu0 %v1381
        %v3534 = vpop.f32.mrf.mxu0
        %v3535 = vadd.f32 %v3486, %v3534
        %v3536 = vpop.f32.mrf.mxu0
        %v3537 = vadd.f32 %v3488, %v3536
        %3538 = vdwg.mxu0
        %3539 = vmatpush.bf16.msra.mxu0 %v2333
        %3540 = vmatpush.bf16.msra.mxu0 %v2329
        %3541 = vmatpush.bf16.msra.mxu0 %v2325
        %3542 = vmatpush.bf16.msra.mxu0 %v2321
        %3543 = vmatpush.bf16.msra.mxu0 %v2317
        %3544 = vmatpush.bf16.msra.mxu0 %v2313
        %3545 = vmatpush.bf16.msra.mxu0 %v2309
        %3546 = vmatpush.bf16.msra.mxu0 %v2305
        %3547 = vmatmul.bf16.gmra.mxu0 %v1333
        %v3548 = vpop.f32.mrf.mxu0
        %v3549 = vadd.f32 %v3500, %v3548
        %v3550 = vpop.f32.mrf.mxu0
        %v3551 = vadd.f32 %v3502, %v3550
        %3552 = vmatmul.bf16.gmra.mxu0 %v1340
        %v3553 = vpop.f32.mrf.mxu0
        %v3554 = vadd.f32 %v3505, %v3553
        %v3555 = vpop.f32.mrf.mxu0
        %v3556 = vadd.f32 %v3507, %v3555
        %3557 = vmatmul.bf16.gmra.mxu0 %v1347
        %v3558 = vpop.f32.mrf.mxu0
        %v3559 = vadd.f32 %v3510, %v3558
        %v3560 = vpop.f32.mrf.mxu0
        %v3561 = vadd.f32 %v3512, %v3560
        %3562 = vmatmul.bf16.gmra.mxu0 %v1354
        %v3563 = vpop.f32.mrf.mxu0
        %v3564 = vadd.f32 %v3515, %v3563
        %v3565 = vpop.f32.mrf.mxu0
        %v3566 = vadd.f32 %v3517, %v3565
        %3567 = vmatmul.bf16.gmra.mxu0 %v1361
        %v3568 = vpop.f32.mrf.mxu0
        %v3569 = vadd.f32 %v3520, %v3568
        %v3570 = vpop.f32.mrf.mxu0
        %v3571 = vadd.f32 %v3522, %v3570
        %3572 = vmatmul.bf16.gmra.mxu0 %v1368
        %v3573 = vpop.f32.mrf.mxu0
        %v3574 = vadd.f32 %v3525, %v3573
        %v3575 = vpop.f32.mrf.mxu0
        %v3576 = vadd.f32 %v3527, %v3575
        %3577 = vmatmul.bf16.gmra.mxu0 %v1375
        %v3578 = vpop.f32.mrf.mxu0
        %v3579 = vadd.f32 %v3530, %v3578
        %v3580 = vpop.f32.mrf.mxu0
        %v3581 = vadd.f32 %v3532, %v3580
        %3582 = vmatmul.bf16.gmra.mxu0 %v1382
        %v3583 = vpop.f32.mrf.mxu0
        %v3584 = vadd.f32 %v3535, %v3583
        %v3585 = vpop.f32.mrf.mxu0
        %v3586 = vadd.f32 %v3537, %v3585
        %3587 = vdwg.mxu0
        %3588 = vmatpush.bf16.msra.mxu0 %v2142
        %3589 = vmatpush.bf16.msra.mxu0 %v2138
        %3590 = vmatpush.bf16.msra.mxu0 %v2134
        %3591 = vmatpush.bf16.msra.mxu0 %v2130
        %3592 = vmatpush.bf16.msra.mxu0 %v2126
        %3593 = vmatpush.bf16.msra.mxu0 %v2122
        %3594 = vmatpush.bf16.msra.mxu0 %v2118
        %3595 = vmatpush.bf16.msra.mxu0 %v2114
        %3596 = vmatmul.bf16.gmra.mxu0 %v1327
        %v3597 = vpop.f32.mrf.mxu0
        %v3598 = vadd.f32 0.0, %v3597
        %v3599 = vpop.f32.mrf.mxu0
        %v3600 = vadd.f32 0.0, %v3599
        %3601 = vmatmul.bf16.gmra.mxu0 %v1334
        %v3602 = vpop.f32.mrf.mxu0
        %v3603 = vadd.f32 0.0, %v3602
        %v3604 = vpop.f32.mrf.mxu0
        %v3605 = vadd.f32 0.0, %v3604
        %3606 = vmatmul.bf16.gmra.mxu0 %v1341
        %v3607 = vpop.f32.mrf.mxu0
        %v3608 = vadd.f32 0.0, %v3607
        %v3609 = vpop.f32.mrf.mxu0
        %v3610 = vadd.f32 0.0, %v3609
        %3611 = vmatmul.bf16.gmra.mxu0 %v1348
        %v3612 = vpop.f32.mrf.mxu0
        %v3613 = vadd.f32 0.0, %v3612
        %v3614 = vpop.f32.mrf.mxu0
        %v3615 = vadd.f32 0.0, %v3614
        %3616 = vmatmul.bf16.gmra.mxu0 %v1355
        %v3617 = vpop.f32.mrf.mxu0
        %v3618 = vadd.f32 0.0, %v3617
        %v3619 = vpop.f32.mrf.mxu0
        %v3620 = vadd.f32 0.0, %v3619
        %3621 = vmatmul.bf16.gmra.mxu0 %v1362
        %v3622 = vpop.f32.mrf.mxu0
        %v3623 = vadd.f32 0.0, %v3622
        %v3624 = vpop.f32.mrf.mxu0
        %v3625 = vadd.f32 0.0, %v3624
        %3626 = vmatmul.bf16.gmra.mxu0 %v1369
        %v3627 = vpop.f32.mrf.mxu0
        %v3628 = vadd.f32 0.0, %v3627
        %v3629 = vpop.f32.mrf.mxu0
        %v3630 = vadd.f32 0.0, %v3629
        %3631 = vmatmul.bf16.gmra.mxu0 %v1376
        %v3632 = vpop.f32.mrf.mxu0
        %v3633 = vadd.f32 0.0, %v3632
        %v3634 = vpop.f32.mrf.mxu0
        %v3635 = vadd.f32 0.0, %v3634
        %3636 = vdwg.mxu0
        %3637 = vmatpush.bf16.msra.mxu0 %v2174
        %3638 = vmatpush.bf16.msra.mxu0 %v2170
        %3639 = vmatpush.bf16.msra.mxu0 %v2166
        %3640 = vmatpush.bf16.msra.mxu0 %v2162
        %3641 = vmatpush.bf16.msra.mxu0 %v2158
        %3642 = vmatpush.bf16.msra.mxu0 %v2154
        %3643 = vmatpush.bf16.msra.mxu0 %v2150
        %3644 = vmatpush.bf16.msra.mxu0 %v2146
        %3645 = vmatmul.bf16.gmra.mxu0 %v1328
        %v3646 = vpop.f32.mrf.mxu0
        %v3647 = vadd.f32 %v3598, %v3646
        %v3648 = vpop.f32.mrf.mxu0
        %v3649 = vadd.f32 %v3600, %v3648
        %3650 = vmatmul.bf16.gmra.mxu0 %v1335
        %v3651 = vpop.f32.mrf.mxu0
        %v3652 = vadd.f32 %v3603, %v3651
        %v3653 = vpop.f32.mrf.mxu0
        %v3654 = vadd.f32 %v3605, %v3653
        %3655 = vmatmul.bf16.gmra.mxu0 %v1342
        %v3656 = vpop.f32.mrf.mxu0
        %v3657 = vadd.f32 %v3608, %v3656
        %v3658 = vpop.f32.mrf.mxu0
        %v3659 = vadd.f32 %v3610, %v3658
        %3660 = vmatmul.bf16.gmra.mxu0 %v1349
        %v3661 = vpop.f32.mrf.mxu0
        %v3662 = vadd.f32 %v3613, %v3661
        %v3663 = vpop.f32.mrf.mxu0
        %v3664 = vadd.f32 %v3615, %v3663
        %3665 = vmatmul.bf16.gmra.mxu0 %v1356
        %v3666 = vpop.f32.mrf.mxu0
        %v3667 = vadd.f32 %v3618, %v3666
        %v3668 = vpop.f32.mrf.mxu0
        %v3669 = vadd.f32 %v3620, %v3668
        %3670 = vmatmul.bf16.gmra.mxu0 %v1363
        %v3671 = vpop.f32.mrf.mxu0
        %v3672 = vadd.f32 %v3623, %v3671
        %v3673 = vpop.f32.mrf.mxu0
        %v3674 = vadd.f32 %v3625, %v3673
        %3675 = vmatmul.bf16.gmra.mxu0 %v1370
        %v3676 = vpop.f32.mrf.mxu0
        %v3677 = vadd.f32 %v3628, %v3676
        %v3678 = vpop.f32.mrf.mxu0
        %v3679 = vadd.f32 %v3630, %v3678
        %3680 = vmatmul.bf16.gmra.mxu0 %v1377
        %v3681 = vpop.f32.mrf.mxu0
        %v3682 = vadd.f32 %v3633, %v3681
        %v3683 = vpop.f32.mrf.mxu0
        %v3684 = vadd.f32 %v3635, %v3683
        %3685 = vdwg.mxu0
        %3686 = vmatpush.bf16.msra.mxu0 %v2206
        %3687 = vmatpush.bf16.msra.mxu0 %v2202
        %3688 = vmatpush.bf16.msra.mxu0 %v2198
        %3689 = vmatpush.bf16.msra.mxu0 %v2194
        %3690 = vmatpush.bf16.msra.mxu0 %v2190
        %3691 = vmatpush.bf16.msra.mxu0 %v2186
        %3692 = vmatpush.bf16.msra.mxu0 %v2182
        %3693 = vmatpush.bf16.msra.mxu0 %v2178
        %3694 = vmatmul.bf16.gmra.mxu0 %v1329
        %v3695 = vpop.f32.mrf.mxu0
        %v3696 = vadd.f32 %v3647, %v3695
        %v3697 = vpop.f32.mrf.mxu0
        %v3698 = vadd.f32 %v3649, %v3697
        %3699 = vmatmul.bf16.gmra.mxu0 %v1336
        %v3700 = vpop.f32.mrf.mxu0
        %v3701 = vadd.f32 %v3652, %v3700
        %v3702 = vpop.f32.mrf.mxu0
        %v3703 = vadd.f32 %v3654, %v3702
        %3704 = vmatmul.bf16.gmra.mxu0 %v1343
        %v3705 = vpop.f32.mrf.mxu0
        %v3706 = vadd.f32 %v3657, %v3705
        %v3707 = vpop.f32.mrf.mxu0
        %v3708 = vadd.f32 %v3659, %v3707
        %3709 = vmatmul.bf16.gmra.mxu0 %v1350
        %v3710 = vpop.f32.mrf.mxu0
        %v3711 = vadd.f32 %v3662, %v3710
        %v3712 = vpop.f32.mrf.mxu0
        %v3713 = vadd.f32 %v3664, %v3712
        %3714 = vmatmul.bf16.gmra.mxu0 %v1357
        %v3715 = vpop.f32.mrf.mxu0
        %v3716 = vadd.f32 %v3667, %v3715
        %v3717 = vpop.f32.mrf.mxu0
        %v3718 = vadd.f32 %v3669, %v3717
        %3719 = vmatmul.bf16.gmra.mxu0 %v1364
        %v3720 = vpop.f32.mrf.mxu0
        %v3721 = vadd.f32 %v3672, %v3720
        %v3722 = vpop.f32.mrf.mxu0
        %v3723 = vadd.f32 %v3674, %v3722
        %3724 = vmatmul.bf16.gmra.mxu0 %v1371
        %v3725 = vpop.f32.mrf.mxu0
        %v3726 = vadd.f32 %v3677, %v3725
        %v3727 = vpop.f32.mrf.mxu0
        %v3728 = vadd.f32 %v3679, %v3727
        %3729 = vmatmul.bf16.gmra.mxu0 %v1378
        %v3730 = vpop.f32.mrf.mxu0
        %v3731 = vadd.f32 %v3682, %v3730
        %v3732 = vpop.f32.mrf.mxu0
        %v3733 = vadd.f32 %v3684, %v3732
        %3734 = vdwg.mxu0
        %3735 = vmatpush.bf16.msra.mxu0 %v2238
        %3736 = vmatpush.bf16.msra.mxu0 %v2234
        %3737 = vmatpush.bf16.msra.mxu0 %v2230
        %3738 = vmatpush.bf16.msra.mxu0 %v2226
        %3739 = vmatpush.bf16.msra.mxu0 %v2222
        %3740 = vmatpush.bf16.msra.mxu0 %v2218
        %3741 = vmatpush.bf16.msra.mxu0 %v2214
        %3742 = vmatpush.bf16.msra.mxu0 %v2210
        %3743 = vmatmul.bf16.gmra.mxu0 %v1330
        %v3744 = vpop.f32.mrf.mxu0
        %v3745 = vadd.f32 %v3696, %v3744
        %v3746 = vpop.f32.mrf.mxu0
        %v3747 = vadd.f32 %v3698, %v3746
        %3748 = vmatmul.bf16.gmra.mxu0 %v1337
        %v3749 = vpop.f32.mrf.mxu0
        %v3750 = vadd.f32 %v3701, %v3749
        %v3751 = vpop.f32.mrf.mxu0
        %v3752 = vadd.f32 %v3703, %v3751
        %3753 = vmatmul.bf16.gmra.mxu0 %v1344
        %v3754 = vpop.f32.mrf.mxu0
        %v3755 = vadd.f32 %v3706, %v3754
        %v3756 = vpop.f32.mrf.mxu0
        %v3757 = vadd.f32 %v3708, %v3756
        %3758 = vmatmul.bf16.gmra.mxu0 %v1351
        %v3759 = vpop.f32.mrf.mxu0
        %v3760 = vadd.f32 %v3711, %v3759
        %v3761 = vpop.f32.mrf.mxu0
        %v3762 = vadd.f32 %v3713, %v3761
        %3763 = vmatmul.bf16.gmra.mxu0 %v1358
        %v3764 = vpop.f32.mrf.mxu0
        %v3765 = vadd.f32 %v3716, %v3764
        %v3766 = vpop.f32.mrf.mxu0
        %v3767 = vadd.f32 %v3718, %v3766
        %3768 = vmatmul.bf16.gmra.mxu0 %v1365
        %v3769 = vpop.f32.mrf.mxu0
        %v3770 = vadd.f32 %v3721, %v3769
        %v3771 = vpop.f32.mrf.mxu0
        %v3772 = vadd.f32 %v3723, %v3771
        %3773 = vmatmul.bf16.gmra.mxu0 %v1372
        %v3774 = vpop.f32.mrf.mxu0
        %v3775 = vadd.f32 %v3726, %v3774
        %v3776 = vpop.f32.mrf.mxu0
        %v3777 = vadd.f32 %v3728, %v3776
        %3778 = vmatmul.bf16.gmra.mxu0 %v1379
        %v3779 = vpop.f32.mrf.mxu0
        %v3780 = vadd.f32 %v3731, %v3779
        %v3781 = vpop.f32.mrf.mxu0
        %v3782 = vadd.f32 %v3733, %v3781
        %3783 = vdwg.mxu0
        %3784 = vmatpush.bf16.msra.mxu0 %v2270
        %3785 = vmatpush.bf16.msra.mxu0 %v2266
        %3786 = vmatpush.bf16.msra.mxu0 %v2262
        %3787 = vmatpush.bf16.msra.mxu0 %v2258
        %3788 = vmatpush.bf16.msra.mxu0 %v2254
        %3789 = vmatpush.bf16.msra.mxu0 %v2250
        %3790 = vmatpush.bf16.msra.mxu0 %v2246
        %3791 = vmatpush.bf16.msra.mxu0 %v2242
        %3792 = vmatmul.bf16.gmra.mxu0 %v1331
        %v3793 = vpop.f32.mrf.mxu0
        %v3794 = vadd.f32 %v3745, %v3793
        %v3795 = vpop.f32.mrf.mxu0
        %v3796 = vadd.f32 %v3747, %v3795
        %3797 = vmatmul.bf16.gmra.mxu0 %v1338
        %v3798 = vpop.f32.mrf.mxu0
        %v3799 = vadd.f32 %v3750, %v3798
        %v3800 = vpop.f32.mrf.mxu0
        %v3801 = vadd.f32 %v3752, %v3800
        %3802 = vmatmul.bf16.gmra.mxu0 %v1345
        %v3803 = vpop.f32.mrf.mxu0
        %v3804 = vadd.f32 %v3755, %v3803
        %v3805 = vpop.f32.mrf.mxu0
        %v3806 = vadd.f32 %v3757, %v3805
        %3807 = vmatmul.bf16.gmra.mxu0 %v1352
        %v3808 = vpop.f32.mrf.mxu0
        %v3809 = vadd.f32 %v3760, %v3808
        %v3810 = vpop.f32.mrf.mxu0
        %v3811 = vadd.f32 %v3762, %v3810
        %3812 = vmatmul.bf16.gmra.mxu0 %v1359
        %v3813 = vpop.f32.mrf.mxu0
        %v3814 = vadd.f32 %v3765, %v3813
        %v3815 = vpop.f32.mrf.mxu0
        %v3816 = vadd.f32 %v3767, %v3815
        %3817 = vmatmul.bf16.gmra.mxu0 %v1366
        %v3818 = vpop.f32.mrf.mxu0
        %v3819 = vadd.f32 %v3770, %v3818
        %v3820 = vpop.f32.mrf.mxu0
        %v3821 = vadd.f32 %v3772, %v3820
        %3822 = vmatmul.bf16.gmra.mxu0 %v1373
        %v3823 = vpop.f32.mrf.mxu0
        %v3824 = vadd.f32 %v3775, %v3823
        %v3825 = vpop.f32.mrf.mxu0
        %v3826 = vadd.f32 %v3777, %v3825
        %3827 = vmatmul.bf16.gmra.mxu0 %v1380
        %v3828 = vpop.f32.mrf.mxu0
        %v3829 = vadd.f32 %v3780, %v3828
        %v3830 = vpop.f32.mrf.mxu0
        %v3831 = vadd.f32 %v3782, %v3830
        %3832 = vdwg.mxu0
        %3833 = vmatpush.bf16.msra.mxu0 %v2302
        %3834 = vmatpush.bf16.msra.mxu0 %v2298
        %3835 = vmatpush.bf16.msra.mxu0 %v2294
        %3836 = vmatpush.bf16.msra.mxu0 %v2290
        %3837 = vmatpush.bf16.msra.mxu0 %v2286
        %3838 = vmatpush.bf16.msra.mxu0 %v2282
        %3839 = vmatpush.bf16.msra.mxu0 %v2278
        %3840 = vmatpush.bf16.msra.mxu0 %v2274
        %3841 = vmatmul.bf16.gmra.mxu0 %v1332
        %v3842 = vpop.f32.mrf.mxu0
        %v3843 = vadd.f32 %v3794, %v3842
        %v3844 = vpop.f32.mrf.mxu0
        %v3845 = vadd.f32 %v3796, %v3844
        %3846 = vmatmul.bf16.gmra.mxu0 %v1339
        %v3847 = vpop.f32.mrf.mxu0
        %v3848 = vadd.f32 %v3799, %v3847
        %v3849 = vpop.f32.mrf.mxu0
        %v3850 = vadd.f32 %v3801, %v3849
        %3851 = vmatmul.bf16.gmra.mxu0 %v1346
        %v3852 = vpop.f32.mrf.mxu0
        %v3853 = vadd.f32 %v3804, %v3852
        %v3854 = vpop.f32.mrf.mxu0
        %v3855 = vadd.f32 %v3806, %v3854
        %3856 = vmatmul.bf16.gmra.mxu0 %v1353
        %v3857 = vpop.f32.mrf.mxu0
        %v3858 = vadd.f32 %v3809, %v3857
        %v3859 = vpop.f32.mrf.mxu0
        %v3860 = vadd.f32 %v3811, %v3859
        %3861 = vmatmul.bf16.gmra.mxu0 %v1360
        %v3862 = vpop.f32.mrf.mxu0
        %v3863 = vadd.f32 %v3814, %v3862
        %v3864 = vpop.f32.mrf.mxu0
        %v3865 = vadd.f32 %v3816, %v3864
        %3866 = vmatmul.bf16.gmra.mxu0 %v1367
        %v3867 = vpop.f32.mrf.mxu0
        %v3868 = vadd.f32 %v3819, %v3867
        %v3869 = vpop.f32.mrf.mxu0
        %v3870 = vadd.f32 %v3821, %v3869
        %3871 = vmatmul.bf16.gmra.mxu0 %v1374
        %v3872 = vpop.f32.mrf.mxu0
        %v3873 = vadd.f32 %v3824, %v3872
        %v3874 = vpop.f32.mrf.mxu0
        %v3875 = vadd.f32 %v3826, %v3874
        %3876 = vmatmul.bf16.gmra.mxu0 %v1381
        %v3877 = vpop.f32.mrf.mxu0
        %v3878 = vadd.f32 %v3829, %v3877
        %v3879 = vpop.f32.mrf.mxu0
        %v3880 = vadd.f32 %v3831, %v3879
        %3881 = vdwg.mxu0
        %3882 = vmatpush.bf16.msra.mxu0 %v2334
        %3883 = vmatpush.bf16.msra.mxu0 %v2330
        %3884 = vmatpush.bf16.msra.mxu0 %v2326
        %3885 = vmatpush.bf16.msra.mxu0 %v2322
        %3886 = vmatpush.bf16.msra.mxu0 %v2318
        %3887 = vmatpush.bf16.msra.mxu0 %v2314
        %3888 = vmatpush.bf16.msra.mxu0 %v2310
        %3889 = vmatpush.bf16.msra.mxu0 %v2306
        %3890 = vmatmul.bf16.gmra.mxu0 %v1333
        %v3891 = vpop.f32.mrf.mxu0
        %v3892 = vadd.f32 %v3843, %v3891
        %v3893 = vpop.f32.mrf.mxu0
        %v3894 = vadd.f32 %v3845, %v3893
        %3895 = vmatmul.bf16.gmra.mxu0 %v1340
        %v3896 = vpop.f32.mrf.mxu0
        %v3897 = vadd.f32 %v3848, %v3896
        %v3898 = vpop.f32.mrf.mxu0
        %v3899 = vadd.f32 %v3850, %v3898
        %3900 = vmatmul.bf16.gmra.mxu0 %v1347
        %v3901 = vpop.f32.mrf.mxu0
        %v3902 = vadd.f32 %v3853, %v3901
        %v3903 = vpop.f32.mrf.mxu0
        %v3904 = vadd.f32 %v3855, %v3903
        %3905 = vmatmul.bf16.gmra.mxu0 %v1354
        %v3906 = vpop.f32.mrf.mxu0
        %v3907 = vadd.f32 %v3858, %v3906
        %v3908 = vpop.f32.mrf.mxu0
        %v3909 = vadd.f32 %v3860, %v3908
        %3910 = vmatmul.bf16.gmra.mxu0 %v1361
        %v3911 = vpop.f32.mrf.mxu0
        %v3912 = vadd.f32 %v3863, %v3911
        %v3913 = vpop.f32.mrf.mxu0
        %v3914 = vadd.f32 %v3865, %v3913
        %3915 = vmatmul.bf16.gmra.mxu0 %v1368
        %v3916 = vpop.f32.mrf.mxu0
        %v3917 = vadd.f32 %v3868, %v3916
        %v3918 = vpop.f32.mrf.mxu0
        %v3919 = vadd.f32 %v3870, %v3918
        %3920 = vmatmul.bf16.gmra.mxu0 %v1375
        %v3921 = vpop.f32.mrf.mxu0
        %v3922 = vadd.f32 %v3873, %v3921
        %v3923 = vpop.f32.mrf.mxu0
        %v3924 = vadd.f32 %v3875, %v3923
        %3925 = vmatmul.bf16.gmra.mxu0 %v1382
        %v3926 = vpop.f32.mrf.mxu0
        %v3927 = vadd.f32 %v3878, %v3926
        %v3928 = vpop.f32.mrf.mxu0
        %v3929 = vadd.f32 %v3880, %v3928
        %3930 = vdwg.mxu0
        %v3931 = vpack.c.bf16 %v3206, %v2863
        %v3932 = vpack.c.bf16 %v3892, %v3549
        %v3933 = vpack.c.bf16 %v3208, %v2865
        %v3934 = vpack.c.bf16 %v3894, %v3551
        %v3935 = vpack.c.bf16 %v3211, %v2868
        %v3936 = vpack.c.bf16 %v3897, %v3554
        %v3937 = vpack.c.bf16 %v3213, %v2870
        %v3938 = vpack.c.bf16 %v3899, %v3556
        %v3939 = vpack.c.bf16 %v3216, %v2873
        %v3940 = vpack.c.bf16 %v3902, %v3559
        %v3941 = vpack.c.bf16 %v3218, %v2875
        %v3942 = vpack.c.bf16 %v3904, %v3561
        %v3943 = vpack.c.bf16 %v3221, %v2878
        %v3944 = vpack.c.bf16 %v3907, %v3564
        %v3945 = vpack.c.bf16 %v3223, %v2880
        %v3946 = vpack.c.bf16 %v3909, %v3566
        %v3947 = vpack.c.bf16 %v3226, %v2883
        %v3948 = vpack.c.bf16 %v3912, %v3569
        %v3949 = vpack.c.bf16 %v3228, %v2885
        %v3950 = vpack.c.bf16 %v3914, %v3571
        %v3951 = vpack.c.bf16 %v3231, %v2888
        %v3952 = vpack.c.bf16 %v3917, %v3574
        %v3953 = vpack.c.bf16 %v3233, %v2890
        %v3954 = vpack.c.bf16 %v3919, %v3576
        %v3955 = vpack.c.bf16 %v3236, %v2893
        %v3956 = vpack.c.bf16 %v3922, %v3579
        %v3957 = vpack.c.bf16 %v3238, %v2895
        %v3958 = vpack.c.bf16 %v3924, %v3581
        %v3959 = vpack.c.bf16 %v3241, %v2898
        %v3960 = vpack.c.bf16 %v3927, %v3584
        %v3961 = vpack.c.bf16 %v3243, %v2900
        %v3962 = vpack.c.bf16 %v3929, %v3586
        %3964 = vst [vmem:[#allocation1] ss:$9 sm:$0xff] %v1150
        %v3965 = vld [vmem:[#allocation1] sm:$0xff]
        %v3966 = vld [vmem:[#allocation1 + $0x9] sm:$0xff]
        %v3967 = vld [vmem:[#allocation1 + $0x12] sm:$0xff]
        %v3968 = vld [vmem:[#allocation1 + $0x1b] sm:$0xff]
        %v3969 = vpack.i.b16 %v3965, %v3965
        %v3971 = vperm.slane %v3969, 0
        %v3972 = vpack.i.b16 %v3966, %v3966
        %v3974 = vperm.slane %v3972, 0
        %v3975 = vpack.i.b16 %v3967, %v3967
        %v3977 = vperm.slane %v3975, 0
        %v3978 = vpack.i.b16 %v3968, %v3968
        %v3980 = vperm.slane %v3978, 0
        %v3981 = vunpack.c.l.bf16 %v3931
        %v3982 = vunpack.c.h.bf16 %v3931
        %v3983 = vunpack.c.l.bf16 %v3932
        %v3984 = vunpack.c.h.bf16 %v3932
        %v3985 = vunpack.c.l.bf16 %v3933
        %v3986 = vunpack.c.h.bf16 %v3933
        %v3987 = vunpack.c.l.bf16 %v3934
        %v3988 = vunpack.c.h.bf16 %v3934
        %v3989 = vunpack.c.l.bf16 %v3935
        %v3990 = vunpack.c.h.bf16 %v3935
        %v3991 = vunpack.c.l.bf16 %v3936
        %v3992 = vunpack.c.h.bf16 %v3936
        %v3993 = vunpack.c.l.bf16 %v3937
        %v3994 = vunpack.c.h.bf16 %v3937
        %v3995 = vunpack.c.l.bf16 %v3938
        %v3996 = vunpack.c.h.bf16 %v3938
        %v3997 = vunpack.c.l.bf16 %v3939
        %v3998 = vunpack.c.h.bf16 %v3939
        %v3999 = vunpack.c.l.bf16 %v3940
        %v4000 = vunpack.c.h.bf16 %v3940
        %v4001 = vunpack.c.l.bf16 %v3941
        %v4002 = vunpack.c.h.bf16 %v3941
        %v4003 = vunpack.c.l.bf16 %v3942
        %v4004 = vunpack.c.h.bf16 %v3942
        %v4005 = vunpack.c.l.bf16 %v3943
        %v4006 = vunpack.c.h.bf16 %v3943
        %v4007 = vunpack.c.l.bf16 %v3944
        %v4008 = vunpack.c.h.bf16 %v3944
        %v4009 = vunpack.c.l.bf16 %v3945
        %v4010 = vunpack.c.h.bf16 %v3945
        %v4011 = vunpack.c.l.bf16 %v3946
        %v4012 = vunpack.c.h.bf16 %v3946
        %v4013 = vunpack.c.l.bf16 %v3947
        %v4014 = vunpack.c.h.bf16 %v3947
        %v4015 = vunpack.c.l.bf16 %v3948
        %v4016 = vunpack.c.h.bf16 %v3948
        %v4017 = vunpack.c.l.bf16 %v3949
        %v4018 = vunpack.c.h.bf16 %v3949
        %v4019 = vunpack.c.l.bf16 %v3950
        %v4020 = vunpack.c.h.bf16 %v3950
        %v4021 = vunpack.c.l.bf16 %v3951
        %v4022 = vunpack.c.h.bf16 %v3951
        %v4023 = vunpack.c.l.bf16 %v3952
        %v4024 = vunpack.c.h.bf16 %v3952
        %v4025 = vunpack.c.l.bf16 %v3953
        %v4026 = vunpack.c.h.bf16 %v3953
        %v4027 = vunpack.c.l.bf16 %v3954
        %v4028 = vunpack.c.h.bf16 %v3954
        %v4029 = vunpack.c.l.bf16 %v3955
        %v4030 = vunpack.c.h.bf16 %v3955
        %v4031 = vunpack.c.l.bf16 %v3956
        %v4032 = vunpack.c.h.bf16 %v3956
        %v4033 = vunpack.c.l.bf16 %v3957
        %v4034 = vunpack.c.h.bf16 %v3957
        %v4035 = vunpack.c.l.bf16 %v3958
        %v4036 = vunpack.c.h.bf16 %v3958
        %v4037 = vunpack.c.l.bf16 %v3959
        %v4038 = vunpack.c.h.bf16 %v3959
        %v4039 = vunpack.c.l.bf16 %v3960
        %v4040 = vunpack.c.h.bf16 %v3960
        %v4041 = vunpack.c.l.bf16 %v3961
        %v4042 = vunpack.c.h.bf16 %v3961
        %v4043 = vunpack.c.l.bf16 %v3962
        %v4044 = vunpack.c.h.bf16 %v3962
        %v4045 = vunpack.c.l.bf16 %v3971
        %v4046 = vunpack.c.l.bf16 %v3974
        %v4047 = vunpack.c.l.bf16 %v3977
        %v4048 = vunpack.c.l.bf16 %v3980
        %v4049 = vadd.f32 %v3981, %v4045
        %v4050 = vadd.f32 %v3982, %v4046
        %v4051 = vadd.f32 %v3983, %v4047
        %v4052 = vadd.f32 %v3984, %v4048
        %v4053 = vadd.f32 %v3985, %v4045
        %v4054 = vadd.f32 %v3986, %v4046
        %v4055 = vadd.f32 %v3987, %v4047
        %v4056 = vadd.f32 %v3988, %v4048
        %v4057 = vadd.f32 %v3989, %v4045
        %v4058 = vadd.f32 %v3990, %v4046
        %v4059 = vadd.f32 %v3991, %v4047
        %v4060 = vadd.f32 %v3992, %v4048
        %v4061 = vadd.f32 %v3993, %v4045
        %v4062 = vadd.f32 %v3994, %v4046
        %v4063 = vadd.f32 %v3995, %v4047
        %v4064 = vadd.f32 %v3996, %v4048
        %v4065 = vadd.f32 %v3997, %v4045
        %v4066 = vadd.f32 %v3998, %v4046
        %v4067 = vadd.f32 %v3999, %v4047
        %v4068 = vadd.f32 %v4000, %v4048
        %v4069 = vadd.f32 %v4001, %v4045
        %v4070 = vadd.f32 %v4002, %v4046
        %v4071 = vadd.f32 %v4003, %v4047
        %v4072 = vadd.f32 %v4004, %v4048
        %v4073 = vadd.f32 %v4005, %v4045
        %v4074 = vadd.f32 %v4006, %v4046
        %v4075 = vadd.f32 %v4007, %v4047
        %v4076 = vadd.f32 %v4008, %v4048
        %v4077 = vadd.f32 %v4009, %v4045
        %v4078 = vadd.f32 %v4010, %v4046
        %v4079 = vadd.f32 %v4011, %v4047
        %v4080 = vadd.f32 %v4012, %v4048
        %v4081 = vadd.f32 %v4013, %v4045
        %v4082 = vadd.f32 %v4014, %v4046
        %v4083 = vadd.f32 %v4015, %v4047
        %v4084 = vadd.f32 %v4016, %v4048
        %v4085 = vadd.f32 %v4017, %v4045
        %v4086 = vadd.f32 %v4018, %v4046
        %v4087 = vadd.f32 %v4019, %v4047
        %v4088 = vadd.f32 %v4020, %v4048
        %v4089 = vadd.f32 %v4021, %v4045
        %v4090 = vadd.f32 %v4022, %v4046
        %v4091 = vadd.f32 %v4023, %v4047
        %v4092 = vadd.f32 %v4024, %v4048
        %v4093 = vadd.f32 %v4025, %v4045
        %v4094 = vadd.f32 %v4026, %v4046
        %v4095 = vadd.f32 %v4027, %v4047
        %v4096 = vadd.f32 %v4028, %v4048
        %v4097 = vadd.f32 %v4029, %v4045
        %v4098 = vadd.f32 %v4030, %v4046
        %v4099 = vadd.f32 %v4031, %v4047
        %v4100 = vadd.f32 %v4032, %v4048
        %v4101 = vadd.f32 %v4033, %v4045
        %v4102 = vadd.f32 %v4034, %v4046
        %v4103 = vadd.f32 %v4035, %v4047
        %v4104 = vadd.f32 %v4036, %v4048
        %v4105 = vadd.f32 %v4037, %v4045
        %v4106 = vadd.f32 %v4038, %v4046
        %v4107 = vadd.f32 %v4039, %v4047
        %v4108 = vadd.f32 %v4040, %v4048
        %v4109 = vadd.f32 %v4041, %v4045
        %v4110 = vadd.f32 %v4042, %v4046
        %v4111 = vadd.f32 %v4043, %v4047
        %v4112 = vadd.f32 %v4044, %v4048
        %v4113 = vpack.c.bf16 %v4050, %v4049
        %v4114 = vpack.c.bf16 %v4052, %v4051
        %v4115 = vpack.c.bf16 %v4054, %v4053
        %v4116 = vpack.c.bf16 %v4056, %v4055
        %v4117 = vpack.c.bf16 %v4058, %v4057
        %v4118 = vpack.c.bf16 %v4060, %v4059
        %v4119 = vpack.c.bf16 %v4062, %v4061
        %v4120 = vpack.c.bf16 %v4064, %v4063
        %v4121 = vpack.c.bf16 %v4066, %v4065
        %v4122 = vpack.c.bf16 %v4068, %v4067
        %v4123 = vpack.c.bf16 %v4070, %v4069
        %v4124 = vpack.c.bf16 %v4072, %v4071
        %v4125 = vpack.c.bf16 %v4074, %v4073
        %v4126 = vpack.c.bf16 %v4076, %v4075
        %v4127 = vpack.c.bf16 %v4078, %v4077
        %v4128 = vpack.c.bf16 %v4080, %v4079
        %v4129 = vpack.c.bf16 %v4082, %v4081
        %v4130 = vpack.c.bf16 %v4084, %v4083
        %v4131 = vpack.c.bf16 %v4086, %v4085
        %v4132 = vpack.c.bf16 %v4088, %v4087
        %v4133 = vpack.c.bf16 %v4090, %v4089
        %v4134 = vpack.c.bf16 %v4092, %v4091
        %v4135 = vpack.c.bf16 %v4094, %v4093
        %v4136 = vpack.c.bf16 %v4096, %v4095
        %v4137 = vpack.c.bf16 %v4098, %v4097
        %v4138 = vpack.c.bf16 %v4100, %v4099
        %v4139 = vpack.c.bf16 %v4102, %v4101
        %v4140 = vpack.c.bf16 %v4104, %v4103
        %v4141 = vpack.c.bf16 %v4106, %v4105
        %v4142 = vpack.c.bf16 %v4108, %v4107
        %v4143 = vpack.c.bf16 %v4110, %v4109
        %v4144 = vpack.c.bf16 %v4112, %v4111
        %v4145 = vunpack.c.l.bf16 %v4113
        %v4146 = vunpack.c.h.bf16 %v4113
        %v4147 = vunpack.c.l.bf16 %v4114
        %v4148 = vunpack.c.h.bf16 %v4114
        %v4149 = vunpack.c.l.bf16 %v4115
        %v4150 = vunpack.c.h.bf16 %v4115
        %v4151 = vunpack.c.l.bf16 %v4116
        %v4152 = vunpack.c.h.bf16 %v4116
        %v4153 = vunpack.c.l.bf16 %v4117
        %v4154 = vunpack.c.h.bf16 %v4117
        %v4155 = vunpack.c.l.bf16 %v4118
        %v4156 = vunpack.c.h.bf16 %v4118
        %v4157 = vunpack.c.l.bf16 %v4119
        %v4158 = vunpack.c.h.bf16 %v4119
        %v4159 = vunpack.c.l.bf16 %v4120
        %v4160 = vunpack.c.h.bf16 %v4120
        %v4161 = vunpack.c.l.bf16 %v4121
        %v4162 = vunpack.c.h.bf16 %v4121
        %v4163 = vunpack.c.l.bf16 %v4122
        %v4164 = vunpack.c.h.bf16 %v4122
        %v4165 = vunpack.c.l.bf16 %v4123
        %v4166 = vunpack.c.h.bf16 %v4123
        %v4167 = vunpack.c.l.bf16 %v4124
        %v4168 = vunpack.c.h.bf16 %v4124
        %v4169 = vunpack.c.l.bf16 %v4125
        %v4170 = vunpack.c.h.bf16 %v4125
        %v4171 = vunpack.c.l.bf16 %v4126
        %v4172 = vunpack.c.h.bf16 %v4126
        %v4173 = vunpack.c.l.bf16 %v4127
        %v4174 = vunpack.c.h.bf16 %v4127
        %v4175 = vunpack.c.l.bf16 %v4128
        %v4176 = vunpack.c.h.bf16 %v4128
        %v4177 = vunpack.c.l.bf16 %v4129
        %v4178 = vunpack.c.h.bf16 %v4129
        %v4179 = vunpack.c.l.bf16 %v4130
        %v4180 = vunpack.c.h.bf16 %v4130
        %v4181 = vunpack.c.l.bf16 %v4131
        %v4182 = vunpack.c.h.bf16 %v4131
        %v4183 = vunpack.c.l.bf16 %v4132
        %v4184 = vunpack.c.h.bf16 %v4132
        %v4185 = vunpack.c.l.bf16 %v4133
        %v4186 = vunpack.c.h.bf16 %v4133
        %v4187 = vunpack.c.l.bf16 %v4134
        %v4188 = vunpack.c.h.bf16 %v4134
        %v4189 = vunpack.c.l.bf16 %v4135
        %v4190 = vunpack.c.h.bf16 %v4135
        %v4191 = vunpack.c.l.bf16 %v4136
        %v4192 = vunpack.c.h.bf16 %v4136
        %v4193 = vunpack.c.l.bf16 %v4137
        %v4194 = vunpack.c.h.bf16 %v4137
        %v4195 = vunpack.c.l.bf16 %v4138
        %v4196 = vunpack.c.h.bf16 %v4138
        %v4197 = vunpack.c.l.bf16 %v4139
        %v4198 = vunpack.c.h.bf16 %v4139
        %v4199 = vunpack.c.l.bf16 %v4140
        %v4200 = vunpack.c.h.bf16 %v4140
        %v4201 = vunpack.c.l.bf16 %v4141
        %v4202 = vunpack.c.h.bf16 %v4141
        %v4203 = vunpack.c.l.bf16 %v4142
        %v4204 = vunpack.c.h.bf16 %v4142
        %v4205 = vunpack.c.l.bf16 %v4143
        %v4206 = vunpack.c.h.bf16 %v4143
        %v4207 = vunpack.c.l.bf16 %v4144
        %v4208 = vunpack.c.h.bf16 %v4144
        %v4209 = vmax.f32 %v4145, 0.0
        %v4210 = vmax.f32 %v4146, 0.0
        %v4211 = vmax.f32 %v4147, 0.0
        %v4212 = vmax.f32 %v4148, 0.0
        %v4213 = vmax.f32 %v4149, 0.0
        %v4214 = vmax.f32 %v4150, 0.0
        %v4215 = vmax.f32 %v4151, 0.0
        %v4216 = vmax.f32 %v4152, 0.0
        %v4217 = vmax.f32 %v4153, 0.0
        %v4218 = vmax.f32 %v4154, 0.0
        %v4219 = vmax.f32 %v4155, 0.0
        %v4220 = vmax.f32 %v4156, 0.0
        %v4221 = vmax.f32 %v4157, 0.0
        %v4222 = vmax.f32 %v4158, 0.0
        %v4223 = vmax.f32 %v4159, 0.0
        %v4224 = vmax.f32 %v4160, 0.0
        %v4225 = vmax.f32 %v4161, 0.0
        %v4226 = vmax.f32 %v4162, 0.0
        %v4227 = vmax.f32 %v4163, 0.0
        %v4228 = vmax.f32 %v4164, 0.0
        %v4229 = vmax.f32 %v4165, 0.0
        %v4230 = vmax.f32 %v4166, 0.0
        %v4231 = vmax.f32 %v4167, 0.0
        %v4232 = vmax.f32 %v4168, 0.0
        %v4233 = vmax.f32 %v4169, 0.0
        %v4234 = vmax.f32 %v4170, 0.0
        %v4235 = vmax.f32 %v4171, 0.0
        %v4236 = vmax.f32 %v4172, 0.0
        %v4237 = vmax.f32 %v4173, 0.0
        %v4238 = vmax.f32 %v4174, 0.0
        %v4239 = vmax.f32 %v4175, 0.0
        %v4240 = vmax.f32 %v4176, 0.0
        %v4241 = vmax.f32 %v4177, 0.0
        %v4242 = vmax.f32 %v4178, 0.0
        %v4243 = vmax.f32 %v4179, 0.0
        %v4244 = vmax.f32 %v4180, 0.0
        %v4245 = vmax.f32 %v4181, 0.0
        %v4246 = vmax.f32 %v4182, 0.0
        %v4247 = vmax.f32 %v4183, 0.0
        %v4248 = vmax.f32 %v4184, 0.0
        %v4249 = vmax.f32 %v4185, 0.0
        %v4250 = vmax.f32 %v4186, 0.0
        %v4251 = vmax.f32 %v4187, 0.0
        %v4252 = vmax.f32 %v4188, 0.0
        %v4253 = vmax.f32 %v4189, 0.0
        %v4254 = vmax.f32 %v4190, 0.0
        %v4255 = vmax.f32 %v4191, 0.0
        %v4256 = vmax.f32 %v4192, 0.0
        %v4257 = vmax.f32 %v4193, 0.0
        %v4258 = vmax.f32 %v4194, 0.0
        %v4259 = vmax.f32 %v4195, 0.0
        %v4260 = vmax.f32 %v4196, 0.0
        %v4261 = vmax.f32 %v4197, 0.0
        %v4262 = vmax.f32 %v4198, 0.0
        %v4263 = vmax.f32 %v4199, 0.0
        %v4264 = vmax.f32 %v4200, 0.0
        %v4265 = vmax.f32 %v4201, 0.0
        %v4266 = vmax.f32 %v4202, 0.0
        %v4267 = vmax.f32 %v4203, 0.0
        %v4268 = vmax.f32 %v4204, 0.0
        %v4269 = vmax.f32 %v4205, 0.0
        %v4270 = vmax.f32 %v4206, 0.0
        %v4271 = vmax.f32 %v4207, 0.0
        %v4272 = vmax.f32 %v4208, 0.0
        %v4273 = vpack.c.bf16 %v4213, %v4209
        %v4274 = vpack.c.bf16 %v4214, %v4210
        %v4275 = vpack.c.bf16 %v4215, %v4211
        %v4276 = vpack.c.bf16 %v4216, %v4212
        %v4277 = vpack.c.bf16 %v4221, %v4217
        %v4278 = vpack.c.bf16 %v4222, %v4218
        %v4279 = vpack.c.bf16 %v4223, %v4219
        %v4280 = vpack.c.bf16 %v4224, %v4220
        %v4281 = vpack.c.bf16 %v4229, %v4225
        %v4282 = vpack.c.bf16 %v4230, %v4226
        %v4283 = vpack.c.bf16 %v4231, %v4227
        %v4284 = vpack.c.bf16 %v4232, %v4228
        %v4285 = vpack.c.bf16 %v4237, %v4233
        %v4286 = vpack.c.bf16 %v4238, %v4234
        %v4287 = vpack.c.bf16 %v4239, %v4235
        %v4288 = vpack.c.bf16 %v4240, %v4236
        %v4289 = vpack.c.bf16 %v4245, %v4241
        %v4290 = vpack.c.bf16 %v4246, %v4242
        %v4291 = vpack.c.bf16 %v4247, %v4243
        %v4292 = vpack.c.bf16 %v4248, %v4244
        %v4293 = vpack.c.bf16 %v4253, %v4249
        %v4294 = vpack.c.bf16 %v4254, %v4250
        %v4295 = vpack.c.bf16 %v4255, %v4251
        %v4296 = vpack.c.bf16 %v4256, %v4252
        %v4297 = vpack.c.bf16 %v4261, %v4257
        %v4298 = vpack.c.bf16 %v4262, %v4258
        %v4299 = vpack.c.bf16 %v4263, %v4259
        %v4300 = vpack.c.bf16 %v4264, %v4260
        %v4301 = vpack.c.bf16 %v4269, %v4265
        %v4302 = vpack.c.bf16 %v4270, %v4266
        %v4303 = vpack.c.bf16 %v4271, %v4267
        %v4304 = vpack.c.bf16 %v4272, %v4268
        %v4305 = vld [vmem:[#allocation7] sm:$0xff]
        %v4306 = vld [vmem:[#allocation7 + $0x8] sm:$0xff]
        %v4307 = vld [vmem:[#allocation7 + $0x10] sm:$0xff]
        %v4308 = vld [vmem:[#allocation7 + $0x18] sm:$0xff]
        %v4309 = vld [vmem:[#allocation7 + $0x20] sm:$0xff]
        %v4310 = vld [vmem:[#allocation7 + $0x28] sm:$0xff]
        %v4311 = vld [vmem:[#allocation7 + $0x30] sm:$0xff]
        %v4312 = vld [vmem:[#allocation7 + $0x38] sm:$0xff]
        %v4313 = vld [vmem:[#allocation7 + $0x40] sm:$0xff]
        %v4314 = vld [vmem:[#allocation7 + $0x48] sm:$0xff]
        %v4315 = vld [vmem:[#allocation7 + $0x50] sm:$0xff]
        %v4316 = vld [vmem:[#allocation7 + $0x58] sm:$0xff]
        %v4317 = vld [vmem:[#allocation7 + $0x60] sm:$0xff]
        %v4318 = vld [vmem:[#allocation7 + $0x68] sm:$0xff]
        %v4319 = vld [vmem:[#allocation7 + $0x70] sm:$0xff]
        %v4320 = vld [vmem:[#allocation7 + $0x78] sm:$0xff]
        %v4321 = vld [vmem:[#allocation7 + $0x80] sm:$0xff]
        %v4322 = vld [vmem:[#allocation7 + $0x88] sm:$0xff]
        %v4323 = vld [vmem:[#allocation7 + $0x90] sm:$0xff]
        %v4324 = vld [vmem:[#allocation7 + $0x98] sm:$0xff]
        %v4325 = vld [vmem:[#allocation7 + $0xa0] sm:$0xff]
        %v4326 = vld [vmem:[#allocation7 + $0xa8] sm:$0xff]
        %v4327 = vld [vmem:[#allocation7 + $0xb0] sm:$0xff]
        %v4328 = vld [vmem:[#allocation7 + $0xb8] sm:$0xff]
        %v4329 = vld [vmem:[#allocation7 + $0xc0] sm:$0xff]
        %v4330 = vld [vmem:[#allocation7 + $0xc8] sm:$0xff]
        %v4331 = vld [vmem:[#allocation7 + $0xd0] sm:$0xff]
        %v4332 = vld [vmem:[#allocation7 + $0xd8] sm:$0xff]
        %v4333 = vld [vmem:[#allocation7 + $0xe0] sm:$0xff]
        %v4334 = vld [vmem:[#allocation7 + $0xe8] sm:$0xff]
        %v4335 = vld [vmem:[#allocation7 + $0xf0] sm:$0xff]
        %v4336 = vld [vmem:[#allocation7 + $0xf8] sm:$0xff]
        %v4337 = vld [vmem:[#allocation7 + $0x100] sm:$0xff]
        %v4338 = vld [vmem:[#allocation7 + $0x108] sm:$0xff]
        %v4339 = vld [vmem:[#allocation7 + $0x110] sm:$0xff]
        %v4340 = vld [vmem:[#allocation7 + $0x118] sm:$0xff]
        %v4341 = vld [vmem:[#allocation7 + $0x120] sm:$0xff]
        %v4342 = vld [vmem:[#allocation7 + $0x128] sm:$0xff]
        %v4343 = vld [vmem:[#allocation7 + $0x130] sm:$0xff]
        %v4344 = vld [vmem:[#allocation7 + $0x138] sm:$0xff]
        %v4345 = vld [vmem:[#allocation7 + $0x140] sm:$0xff]
        %v4346 = vld [vmem:[#allocation7 + $0x148] sm:$0xff]
        %v4347 = vld [vmem:[#allocation7 + $0x150] sm:$0xff]
        %v4348 = vld [vmem:[#allocation7 + $0x158] sm:$0xff]
        %v4349 = vld [vmem:[#allocation7 + $0x160] sm:$0xff]
        %v4350 = vld [vmem:[#allocation7 + $0x168] sm:$0xff]
        %v4351 = vld [vmem:[#allocation7 + $0x170] sm:$0xff]
        %v4352 = vld [vmem:[#allocation7 + $0x178] sm:$0xff]
        %v4353 = vld [vmem:[#allocation7 + $0x180] sm:$0xff]
        %v4354 = vld [vmem:[#allocation7 + $0x188] sm:$0xff]
        %v4355 = vld [vmem:[#allocation7 + $0x190] sm:$0xff]
        %v4356 = vld [vmem:[#allocation7 + $0x198] sm:$0xff]
        %v4357 = vld [vmem:[#allocation7 + $0x1a0] sm:$0xff]
        %v4358 = vld [vmem:[#allocation7 + $0x1a8] sm:$0xff]
        %v4359 = vld [vmem:[#allocation7 + $0x1b0] sm:$0xff]
        %v4360 = vld [vmem:[#allocation7 + $0x1b8] sm:$0xff]
        %v4361 = vld [vmem:[#allocation7 + $0x1c0] sm:$0xff]
        %v4362 = vld [vmem:[#allocation7 + $0x1c8] sm:$0xff]
        %v4363 = vld [vmem:[#allocation7 + $0x1d0] sm:$0xff]
        %v4364 = vld [vmem:[#allocation7 + $0x1d8] sm:$0xff]
        %v4365 = vld [vmem:[#allocation7 + $0x1e0] sm:$0xff]
        %v4366 = vld [vmem:[#allocation7 + $0x1e8] sm:$0xff]
        %v4367 = vld [vmem:[#allocation7 + $0x1f0] sm:$0xff]
        %v4368 = vld [vmem:[#allocation7 + $0x1f8] sm:$0xff]
        %v4369 = vld [vmem:[#allocation8] sm:$0x3]
        %v4434 = vunpack.c.l.b16 %v4305
        %v4435 = vunpack.c.h.b16 %v4305
        %v4436 = vunpack.c.l.b16 %v4306
        %v4437 = vunpack.c.h.b16 %v4306
        %v4438 = vunpack.c.l.b16 %v4307
        %v4439 = vunpack.c.h.b16 %v4307
        %v4440 = vunpack.c.l.b16 %v4308
        %v4441 = vunpack.c.h.b16 %v4308
        %v4442 = vunpack.c.l.b16 %v4309
        %v4443 = vunpack.c.h.b16 %v4309
        %v4444 = vunpack.c.l.b16 %v4310
        %v4445 = vunpack.c.h.b16 %v4310
        %v4446 = vunpack.c.l.b16 %v4311
        %v4447 = vunpack.c.h.b16 %v4311
        %v4448 = vunpack.c.l.b16 %v4312
        %v4449 = vunpack.c.h.b16 %v4312
        %v4450 = vunpack.c.l.b16 %v4313
        %v4451 = vunpack.c.h.b16 %v4313
        %v4452 = vunpack.c.l.b16 %v4314
        %v4453 = vunpack.c.h.b16 %v4314
        %v4454 = vunpack.c.l.b16 %v4315
        %v4455 = vunpack.c.h.b16 %v4315
        %v4456 = vunpack.c.l.b16 %v4316
        %v4457 = vunpack.c.h.b16 %v4316
        %v4458 = vunpack.c.l.b16 %v4317
        %v4459 = vunpack.c.h.b16 %v4317
        %v4460 = vunpack.c.l.b16 %v4318
        %v4461 = vunpack.c.h.b16 %v4318
        %v4462 = vunpack.c.l.b16 %v4319
        %v4463 = vunpack.c.h.b16 %v4319
        %v4464 = vunpack.c.l.b16 %v4320
        %v4465 = vunpack.c.h.b16 %v4320
        %v4466 = vunpack.c.l.b16 %v4321
        %v4467 = vunpack.c.h.b16 %v4321
        %v4468 = vunpack.c.l.b16 %v4322
        %v4469 = vunpack.c.h.b16 %v4322
        %v4470 = vunpack.c.l.b16 %v4323
        %v4471 = vunpack.c.h.b16 %v4323
        %v4472 = vunpack.c.l.b16 %v4324
        %v4473 = vunpack.c.h.b16 %v4324
        %v4474 = vunpack.c.l.b16 %v4325
        %v4475 = vunpack.c.h.b16 %v4325
        %v4476 = vunpack.c.l.b16 %v4326
        %v4477 = vunpack.c.h.b16 %v4326
        %v4478 = vunpack.c.l.b16 %v4327
        %v4479 = vunpack.c.h.b16 %v4327
        %v4480 = vunpack.c.l.b16 %v4328
        %v4481 = vunpack.c.h.b16 %v4328
        %v4482 = vunpack.c.l.b16 %v4329
        %v4483 = vunpack.c.h.b16 %v4329
        %v4484 = vunpack.c.l.b16 %v4330
        %v4485 = vunpack.c.h.b16 %v4330
        %v4486 = vunpack.c.l.b16 %v4331
        %v4487 = vunpack.c.h.b16 %v4331
        %v4488 = vunpack.c.l.b16 %v4332
        %v4489 = vunpack.c.h.b16 %v4332
        %v4490 = vunpack.c.l.b16 %v4333
        %v4491 = vunpack.c.h.b16 %v4333
        %v4492 = vunpack.c.l.b16 %v4334
        %v4493 = vunpack.c.h.b16 %v4334
        %v4494 = vunpack.c.l.b16 %v4335
        %v4495 = vunpack.c.h.b16 %v4335
        %v4496 = vunpack.c.l.b16 %v4336
        %v4497 = vunpack.c.h.b16 %v4336
        %v4498 = vunpack.c.l.b16 %v4337
        %v4499 = vunpack.c.h.b16 %v4337
        %v4500 = vunpack.c.l.b16 %v4338
        %v4501 = vunpack.c.h.b16 %v4338
        %v4502 = vunpack.c.l.b16 %v4339
        %v4503 = vunpack.c.h.b16 %v4339
        %v4504 = vunpack.c.l.b16 %v4340
        %v4505 = vunpack.c.h.b16 %v4340
        %v4506 = vunpack.c.l.b16 %v4341
        %v4507 = vunpack.c.h.b16 %v4341
        %v4508 = vunpack.c.l.b16 %v4342
        %v4509 = vunpack.c.h.b16 %v4342
        %v4510 = vunpack.c.l.b16 %v4343
        %v4511 = vunpack.c.h.b16 %v4343
        %v4512 = vunpack.c.l.b16 %v4344
        %v4513 = vunpack.c.h.b16 %v4344
        %v4514 = vunpack.c.l.b16 %v4345
        %v4515 = vunpack.c.h.b16 %v4345
        %v4516 = vunpack.c.l.b16 %v4346
        %v4517 = vunpack.c.h.b16 %v4346
        %v4518 = vunpack.c.l.b16 %v4347
        %v4519 = vunpack.c.h.b16 %v4347
        %v4520 = vunpack.c.l.b16 %v4348
        %v4521 = vunpack.c.h.b16 %v4348
        %v4522 = vunpack.c.l.b16 %v4349
        %v4523 = vunpack.c.h.b16 %v4349
        %v4524 = vunpack.c.l.b16 %v4350
        %v4525 = vunpack.c.h.b16 %v4350
        %v4526 = vunpack.c.l.b16 %v4351
        %v4527 = vunpack.c.h.b16 %v4351
        %v4528 = vunpack.c.l.b16 %v4352
        %v4529 = vunpack.c.h.b16 %v4352
        %v4530 = vunpack.c.l.b16 %v4353
        %v4531 = vunpack.c.h.b16 %v4353
        %v4532 = vunpack.c.l.b16 %v4354
        %v4533 = vunpack.c.h.b16 %v4354
        %v4534 = vunpack.c.l.b16 %v4355
        %v4535 = vunpack.c.h.b16 %v4355
        %v4536 = vunpack.c.l.b16 %v4356
        %v4537 = vunpack.c.h.b16 %v4356
        %v4538 = vunpack.c.l.b16 %v4357
        %v4539 = vunpack.c.h.b16 %v4357
        %v4540 = vunpack.c.l.b16 %v4358
        %v4541 = vunpack.c.h.b16 %v4358
        %v4542 = vunpack.c.l.b16 %v4359
        %v4543 = vunpack.c.h.b16 %v4359
        %v4544 = vunpack.c.l.b16 %v4360
        %v4545 = vunpack.c.h.b16 %v4360
        %v4546 = vunpack.c.l.b16 %v4361
        %v4547 = vunpack.c.h.b16 %v4361
        %v4548 = vunpack.c.l.b16 %v4362
        %v4549 = vunpack.c.h.b16 %v4362
        %v4550 = vunpack.c.l.b16 %v4363
        %v4551 = vunpack.c.h.b16 %v4363
        %v4552 = vunpack.c.l.b16 %v4364
        %v4553 = vunpack.c.h.b16 %v4364
        %v4554 = vunpack.c.l.b16 %v4365
        %v4555 = vunpack.c.h.b16 %v4365
        %v4556 = vunpack.c.l.b16 %v4366
        %v4557 = vunpack.c.h.b16 %v4366
        %v4558 = vunpack.c.l.b16 %v4367
        %v4559 = vunpack.c.h.b16 %v4367
        %v4560 = vunpack.c.l.b16 %v4368
        %v4561 = vunpack.c.h.b16 %v4368
        %v4562 = vpack.c.b16 %v4436, %v4434
        %v4563 = vpack.c.b16 %v4437, %v4435
        %v4564 = vpack.c.b16 %v4440, %v4438
        %v4565 = vpack.c.b16 %v4441, %v4439
        %v4566 = vpack.c.b16 %v4444, %v4442
        %v4567 = vpack.c.b16 %v4445, %v4443
        %v4568 = vpack.c.b16 %v4448, %v4446
        %v4569 = vpack.c.b16 %v4449, %v4447
        %v4570 = vpack.c.b16 %v4452, %v4450
        %v4571 = vpack.c.b16 %v4453, %v4451
        %v4572 = vpack.c.b16 %v4456, %v4454
        %v4573 = vpack.c.b16 %v4457, %v4455
        %v4574 = vpack.c.b16 %v4460, %v4458
        %v4575 = vpack.c.b16 %v4461, %v4459
        %v4576 = vpack.c.b16 %v4464, %v4462
        %v4577 = vpack.c.b16 %v4465, %v4463
        %v4578 = vpack.c.b16 %v4468, %v4466
        %v4579 = vpack.c.b16 %v4469, %v4467
        %v4580 = vpack.c.b16 %v4472, %v4470
        %v4581 = vpack.c.b16 %v4473, %v4471
        %v4582 = vpack.c.b16 %v4476, %v4474
        %v4583 = vpack.c.b16 %v4477, %v4475
        %v4584 = vpack.c.b16 %v4480, %v4478
        %v4585 = vpack.c.b16 %v4481, %v4479
        %v4586 = vpack.c.b16 %v4484, %v4482
        %v4587 = vpack.c.b16 %v4485, %v4483
        %v4588 = vpack.c.b16 %v4488, %v4486
        %v4589 = vpack.c.b16 %v4489, %v4487
        %v4590 = vpack.c.b16 %v4492, %v4490
        %v4591 = vpack.c.b16 %v4493, %v4491
        %v4592 = vpack.c.b16 %v4496, %v4494
        %v4593 = vpack.c.b16 %v4497, %v4495
        %v4594 = vpack.c.b16 %v4500, %v4498
        %v4595 = vpack.c.b16 %v4501, %v4499
        %v4596 = vpack.c.b16 %v4504, %v4502
        %v4597 = vpack.c.b16 %v4505, %v4503
        %v4598 = vpack.c.b16 %v4508, %v4506
        %v4599 = vpack.c.b16 %v4509, %v4507
        %v4600 = vpack.c.b16 %v4512, %v4510
        %v4601 = vpack.c.b16 %v4513, %v4511
        %v4602 = vpack.c.b16 %v4516, %v4514
        %v4603 = vpack.c.b16 %v4517, %v4515
        %v4604 = vpack.c.b16 %v4520, %v4518
        %v4605 = vpack.c.b16 %v4521, %v4519
        %v4606 = vpack.c.b16 %v4524, %v4522
        %v4607 = vpack.c.b16 %v4525, %v4523
        %v4608 = vpack.c.b16 %v4528, %v4526
        %v4609 = vpack.c.b16 %v4529, %v4527
        %v4610 = vpack.c.b16 %v4532, %v4530
        %v4611 = vpack.c.b16 %v4533, %v4531
        %v4612 = vpack.c.b16 %v4536, %v4534
        %v4613 = vpack.c.b16 %v4537, %v4535
        %v4614 = vpack.c.b16 %v4540, %v4538
        %v4615 = vpack.c.b16 %v4541, %v4539
        %v4616 = vpack.c.b16 %v4544, %v4542
        %v4617 = vpack.c.b16 %v4545, %v4543
        %v4618 = vpack.c.b16 %v4548, %v4546
        %v4619 = vpack.c.b16 %v4549, %v4547
        %v4620 = vpack.c.b16 %v4552, %v4550
        %v4621 = vpack.c.b16 %v4553, %v4551
        %v4622 = vpack.c.b16 %v4556, %v4554
        %v4623 = vpack.c.b16 %v4557, %v4555
        %v4624 = vpack.c.b16 %v4560, %v4558
        %v4625 = vpack.c.b16 %v4561, %v4559
        %4690 = vmatpush.bf16.msra.mxu0 %v4576
        %4691 = vmatpush.bf16.msra.mxu0 %v4574
        %4692 = vmatpush.bf16.msra.mxu0 %v4572
        %4693 = vmatpush.bf16.msra.mxu0 %v4570
        %4694 = vmatpush.bf16.msra.mxu0 %v4568
        %4695 = vmatpush.bf16.msra.mxu0 %v4566
        %4696 = vmatpush.bf16.msra.mxu0 %v4564
        %4697 = vmatpush.bf16.msra.mxu0 %v4562
        %4698 = vmatmul.bf16.gmra.mxu0 %v4273
        %v4699 = vpop.f32.mrf.mxu0
        %v4700 = vadd.f32 0.0, %v4699
        %v4701 = vpop.f32.mrf.mxu0
        %v4702 = vadd.f32 0.0, %v4701
        %4703 = vmatmul.bf16.gmra.mxu0 %v4277
        %v4704 = vpop.f32.mrf.mxu0
        %v4705 = vadd.f32 0.0, %v4704
        %v4706 = vpop.f32.mrf.mxu0
        %v4707 = vadd.f32 0.0, %v4706
        %4708 = vmatmul.bf16.gmra.mxu0 %v4281
        %v4709 = vpop.f32.mrf.mxu0
        %v4710 = vadd.f32 0.0, %v4709
        %v4711 = vpop.f32.mrf.mxu0
        %v4712 = vadd.f32 0.0, %v4711
        %4713 = vmatmul.bf16.gmra.mxu0 %v4285
        %v4714 = vpop.f32.mrf.mxu0
        %v4715 = vadd.f32 0.0, %v4714
        %v4716 = vpop.f32.mrf.mxu0
        %v4717 = vadd.f32 0.0, %v4716
        %4718 = vmatmul.bf16.gmra.mxu0 %v4289
        %v4719 = vpop.f32.mrf.mxu0
        %v4720 = vadd.f32 0.0, %v4719
        %v4721 = vpop.f32.mrf.mxu0
        %v4722 = vadd.f32 0.0, %v4721
        %4723 = vmatmul.bf16.gmra.mxu0 %v4293
        %v4724 = vpop.f32.mrf.mxu0
        %v4725 = vadd.f32 0.0, %v4724
        %v4726 = vpop.f32.mrf.mxu0
        %v4727 = vadd.f32 0.0, %v4726
        %4728 = vmatmul.bf16.gmra.mxu0 %v4297
        %v4729 = vpop.f32.mrf.mxu0
        %v4730 = vadd.f32 0.0, %v4729
        %v4731 = vpop.f32.mrf.mxu0
        %v4732 = vadd.f32 0.0, %v4731
        %4733 = vmatmul.bf16.gmra.mxu0 %v4301
        %v4734 = vpop.f32.mrf.mxu0
        %v4735 = vadd.f32 0.0, %v4734
        %v4736 = vpop.f32.mrf.mxu0
        %v4737 = vadd.f32 0.0, %v4736
        %4738 = vdwg.mxu0
        %4739 = vmatpush.bf16.msra.mxu0 %v4592
        %4740 = vmatpush.bf16.msra.mxu0 %v4590
        %4741 = vmatpush.bf16.msra.mxu0 %v4588
        %4742 = vmatpush.bf16.msra.mxu0 %v4586
        %4743 = vmatpush.bf16.msra.mxu0 %v4584
        %4744 = vmatpush.bf16.msra.mxu0 %v4582
        %4745 = vmatpush.bf16.msra.mxu0 %v4580
        %4746 = vmatpush.bf16.msra.mxu0 %v4578
        %4747 = vmatmul.bf16.gmra.mxu0 %v4274
        %v4748 = vpop.f32.mrf.mxu0
        %v4749 = vadd.f32 %v4700, %v4748
        %v4750 = vpop.f32.mrf.mxu0
        %v4751 = vadd.f32 %v4702, %v4750
        %4752 = vmatmul.bf16.gmra.mxu0 %v4278
        %v4753 = vpop.f32.mrf.mxu0
        %v4754 = vadd.f32 %v4705, %v4753
        %v4755 = vpop.f32.mrf.mxu0
        %v4756 = vadd.f32 %v4707, %v4755
        %4757 = vmatmul.bf16.gmra.mxu0 %v4282
        %v4758 = vpop.f32.mrf.mxu0
        %v4759 = vadd.f32 %v4710, %v4758
        %v4760 = vpop.f32.mrf.mxu0
        %v4761 = vadd.f32 %v4712, %v4760
        %4762 = vmatmul.bf16.gmra.mxu0 %v4286
        %v4763 = vpop.f32.mrf.mxu0
        %v4764 = vadd.f32 %v4715, %v4763
        %v4765 = vpop.f32.mrf.mxu0
        %v4766 = vadd.f32 %v4717, %v4765
        %4767 = vmatmul.bf16.gmra.mxu0 %v4290
        %v4768 = vpop.f32.mrf.mxu0
        %v4769 = vadd.f32 %v4720, %v4768
        %v4770 = vpop.f32.mrf.mxu0
        %v4771 = vadd.f32 %v4722, %v4770
        %4772 = vmatmul.bf16.gmra.mxu0 %v4294
        %v4773 = vpop.f32.mrf.mxu0
        %v4774 = vadd.f32 %v4725, %v4773
        %v4775 = vpop.f32.mrf.mxu0
        %v4776 = vadd.f32 %v4727, %v4775
        %4777 = vmatmul.bf16.gmra.mxu0 %v4298
        %v4778 = vpop.f32.mrf.mxu0
        %v4779 = vadd.f32 %v4730, %v4778
        %v4780 = vpop.f32.mrf.mxu0
        %v4781 = vadd.f32 %v4732, %v4780
        %4782 = vmatmul.bf16.gmra.mxu0 %v4302
        %v4783 = vpop.f32.mrf.mxu0
        %v4784 = vadd.f32 %v4735, %v4783
        %v4785 = vpop.f32.mrf.mxu0
        %v4786 = vadd.f32 %v4737, %v4785
        %4787 = vdwg.mxu0
        %4788 = vmatpush.bf16.msra.mxu0 %v4608
        %4789 = vmatpush.bf16.msra.mxu0 %v4606
        %4790 = vmatpush.bf16.msra.mxu0 %v4604
        %4791 = vmatpush.bf16.msra.mxu0 %v4602
        %4792 = vmatpush.bf16.msra.mxu0 %v4600
        %4793 = vmatpush.bf16.msra.mxu0 %v4598
        %4794 = vmatpush.bf16.msra.mxu0 %v4596
        %4795 = vmatpush.bf16.msra.mxu0 %v4594
        %4796 = vmatmul.bf16.gmra.mxu0 %v4275
        %v4797 = vpop.f32.mrf.mxu0
        %v4798 = vadd.f32 %v4749, %v4797
        %v4799 = vpop.f32.mrf.mxu0
        %v4800 = vadd.f32 %v4751, %v4799
        %4801 = vmatmul.bf16.gmra.mxu0 %v4279
        %v4802 = vpop.f32.mrf.mxu0
        %v4803 = vadd.f32 %v4754, %v4802
        %v4804 = vpop.f32.mrf.mxu0
        %v4805 = vadd.f32 %v4756, %v4804
        %4806 = vmatmul.bf16.gmra.mxu0 %v4283
        %v4807 = vpop.f32.mrf.mxu0
        %v4808 = vadd.f32 %v4759, %v4807
        %v4809 = vpop.f32.mrf.mxu0
        %v4810 = vadd.f32 %v4761, %v4809
        %4811 = vmatmul.bf16.gmra.mxu0 %v4287
        %v4812 = vpop.f32.mrf.mxu0
        %v4813 = vadd.f32 %v4764, %v4812
        %v4814 = vpop.f32.mrf.mxu0
        %v4815 = vadd.f32 %v4766, %v4814
        %4816 = vmatmul.bf16.gmra.mxu0 %v4291
        %v4817 = vpop.f32.mrf.mxu0
        %v4818 = vadd.f32 %v4769, %v4817
        %v4819 = vpop.f32.mrf.mxu0
        %v4820 = vadd.f32 %v4771, %v4819
        %4821 = vmatmul.bf16.gmra.mxu0 %v4295
        %v4822 = vpop.f32.mrf.mxu0
        %v4823 = vadd.f32 %v4774, %v4822
        %v4824 = vpop.f32.mrf.mxu0
        %v4825 = vadd.f32 %v4776, %v4824
        %4826 = vmatmul.bf16.gmra.mxu0 %v4299
        %v4827 = vpop.f32.mrf.mxu0
        %v4828 = vadd.f32 %v4779, %v4827
        %v4829 = vpop.f32.mrf.mxu0
        %v4830 = vadd.f32 %v4781, %v4829
        %4831 = vmatmul.bf16.gmra.mxu0 %v4303
        %v4832 = vpop.f32.mrf.mxu0
        %v4833 = vadd.f32 %v4784, %v4832
        %v4834 = vpop.f32.mrf.mxu0
        %v4835 = vadd.f32 %v4786, %v4834
        %4836 = vdwg.mxu0
        %4837 = vmatpush.bf16.msra.mxu0 %v4624
        %4838 = vmatpush.bf16.msra.mxu0 %v4622
        %4839 = vmatpush.bf16.msra.mxu0 %v4620
        %4840 = vmatpush.bf16.msra.mxu0 %v4618
        %4841 = vmatpush.bf16.msra.mxu0 %v4616
        %4842 = vmatpush.bf16.msra.mxu0 %v4614
        %4843 = vmatpush.bf16.msra.mxu0 %v4612
        %4844 = vmatpush.bf16.msra.mxu0 %v4610
        %4845 = vmatmul.bf16.gmra.mxu0 %v4276
        %v4846 = vpop.f32.mrf.mxu0
        %v4847 = vadd.f32 %v4798, %v4846
        %v4848 = vpop.f32.mrf.mxu0
        %v4849 = vadd.f32 %v4800, %v4848
        %4850 = vmatmul.bf16.gmra.mxu0 %v4280
        %v4851 = vpop.f32.mrf.mxu0
        %v4852 = vadd.f32 %v4803, %v4851
        %v4853 = vpop.f32.mrf.mxu0
        %v4854 = vadd.f32 %v4805, %v4853
        %4855 = vmatmul.bf16.gmra.mxu0 %v4284
        %v4856 = vpop.f32.mrf.mxu0
        %v4857 = vadd.f32 %v4808, %v4856
        %v4858 = vpop.f32.mrf.mxu0
        %v4859 = vadd.f32 %v4810, %v4858
        %4860 = vmatmul.bf16.gmra.mxu0 %v4288
        %v4861 = vpop.f32.mrf.mxu0
        %v4862 = vadd.f32 %v4813, %v4861
        %v4863 = vpop.f32.mrf.mxu0
        %v4864 = vadd.f32 %v4815, %v4863
        %4865 = vmatmul.bf16.gmra.mxu0 %v4292
        %v4866 = vpop.f32.mrf.mxu0
        %v4867 = vadd.f32 %v4818, %v4866
        %v4868 = vpop.f32.mrf.mxu0
        %v4869 = vadd.f32 %v4820, %v4868
        %4870 = vmatmul.bf16.gmra.mxu0 %v4296
        %v4871 = vpop.f32.mrf.mxu0
        %v4872 = vadd.f32 %v4823, %v4871
        %v4873 = vpop.f32.mrf.mxu0
        %v4874 = vadd.f32 %v4825, %v4873
        %4875 = vmatmul.bf16.gmra.mxu0 %v4300
        %v4876 = vpop.f32.mrf.mxu0
        %v4877 = vadd.f32 %v4828, %v4876
        %v4878 = vpop.f32.mrf.mxu0
        %v4879 = vadd.f32 %v4830, %v4878
        %4880 = vmatmul.bf16.gmra.mxu0 %v4304
        %v4881 = vpop.f32.mrf.mxu0
        %v4882 = vadd.f32 %v4833, %v4881
        %v4883 = vpop.f32.mrf.mxu0
        %v4884 = vadd.f32 %v4835, %v4883
        %4885 = vdwg.mxu0
        %4886 = vmatpush.bf16.msra.mxu0 %v4577
        %4887 = vmatpush.bf16.msra.mxu0 %v4575
        %4888 = vmatpush.bf16.msra.mxu0 %v4573
        %4889 = vmatpush.bf16.msra.mxu0 %v4571
        %4890 = vmatpush.bf16.msra.mxu0 %v4569
        %4891 = vmatpush.bf16.msra.mxu0 %v4567
        %4892 = vmatpush.bf16.msra.mxu0 %v4565
        %4893 = vmatpush.bf16.msra.mxu0 %v4563
        %4894 = vmatmul.bf16.gmra.mxu0 %v4273
        %v4895 = vpop.f32.mrf.mxu0
        %v4896 = vadd.f32 0.0, %v4895
        %v4897 = vpop.f32.mrf.mxu0
        %v4898 = vadd.f32 0.0, %v4897
        %4899 = vmatmul.bf16.gmra.mxu0 %v4277
        %v4900 = vpop.f32.mrf.mxu0
        %v4901 = vadd.f32 0.0, %v4900
        %v4902 = vpop.f32.mrf.mxu0
        %v4903 = vadd.f32 0.0, %v4902
        %4904 = vmatmul.bf16.gmra.mxu0 %v4281
        %v4905 = vpop.f32.mrf.mxu0
        %v4906 = vadd.f32 0.0, %v4905
        %v4907 = vpop.f32.mrf.mxu0
        %v4908 = vadd.f32 0.0, %v4907
        %4909 = vmatmul.bf16.gmra.mxu0 %v4285
        %v4910 = vpop.f32.mrf.mxu0
        %v4911 = vadd.f32 0.0, %v4910
        %v4912 = vpop.f32.mrf.mxu0
        %v4913 = vadd.f32 0.0, %v4912
        %4914 = vmatmul.bf16.gmra.mxu0 %v4289
        %v4915 = vpop.f32.mrf.mxu0
        %v4916 = vadd.f32 0.0, %v4915
        %v4917 = vpop.f32.mrf.mxu0
        %v4918 = vadd.f32 0.0, %v4917
        %4919 = vmatmul.bf16.gmra.mxu0 %v4293
        %v4920 = vpop.f32.mrf.mxu0
        %v4921 = vadd.f32 0.0, %v4920
        %v4922 = vpop.f32.mrf.mxu0
        %v4923 = vadd.f32 0.0, %v4922
        %4924 = vmatmul.bf16.gmra.mxu0 %v4297
        %v4925 = vpop.f32.mrf.mxu0
        %v4926 = vadd.f32 0.0, %v4925
        %v4927 = vpop.f32.mrf.mxu0
        %v4928 = vadd.f32 0.0, %v4927
        %4929 = vmatmul.bf16.gmra.mxu0 %v4301
        %v4930 = vpop.f32.mrf.mxu0
        %v4931 = vadd.f32 0.0, %v4930
        %v4932 = vpop.f32.mrf.mxu0
        %v4933 = vadd.f32 0.0, %v4932
        %4934 = vdwg.mxu0
        %4935 = vmatpush.bf16.msra.mxu0 %v4593
        %4936 = vmatpush.bf16.msra.mxu0 %v4591
        %4937 = vmatpush.bf16.msra.mxu0 %v4589
        %4938 = vmatpush.bf16.msra.mxu0 %v4587
        %4939 = vmatpush.bf16.msra.mxu0 %v4585
        %4940 = vmatpush.bf16.msra.mxu0 %v4583
        %4941 = vmatpush.bf16.msra.mxu0 %v4581
        %4942 = vmatpush.bf16.msra.mxu0 %v4579
        %4943 = vmatmul.bf16.gmra.mxu0 %v4274
        %v4944 = vpop.f32.mrf.mxu0
        %v4945 = vadd.f32 %v4896, %v4944
        %v4946 = vpop.f32.mrf.mxu0
        %v4947 = vadd.f32 %v4898, %v4946
        %4948 = vmatmul.bf16.gmra.mxu0 %v4278
        %v4949 = vpop.f32.mrf.mxu0
        %v4950 = vadd.f32 %v4901, %v4949
        %v4951 = vpop.f32.mrf.mxu0
        %v4952 = vadd.f32 %v4903, %v4951
        %4953 = vmatmul.bf16.gmra.mxu0 %v4282
        %v4954 = vpop.f32.mrf.mxu0
        %v4955 = vadd.f32 %v4906, %v4954
        %v4956 = vpop.f32.mrf.mxu0
        %v4957 = vadd.f32 %v4908, %v4956
        %4958 = vmatmul.bf16.gmra.mxu0 %v4286
        %v4959 = vpop.f32.mrf.mxu0
        %v4960 = vadd.f32 %v4911, %v4959
        %v4961 = vpop.f32.mrf.mxu0
        %v4962 = vadd.f32 %v4913, %v4961
        %4963 = vmatmul.bf16.gmra.mxu0 %v4290
        %v4964 = vpop.f32.mrf.mxu0
        %v4965 = vadd.f32 %v4916, %v4964
        %v4966 = vpop.f32.mrf.mxu0
        %v4967 = vadd.f32 %v4918, %v4966
        %4968 = vmatmul.bf16.gmra.mxu0 %v4294
        %v4969 = vpop.f32.mrf.mxu0
        %v4970 = vadd.f32 %v4921, %v4969
        %v4971 = vpop.f32.mrf.mxu0
        %v4972 = vadd.f32 %v4923, %v4971
        %4973 = vmatmul.bf16.gmra.mxu0 %v4298
        %v4974 = vpop.f32.mrf.mxu0
        %v4975 = vadd.f32 %v4926, %v4974
        %v4976 = vpop.f32.mrf.mxu0
        %v4977 = vadd.f32 %v4928, %v4976
        %4978 = vmatmul.bf16.gmra.mxu0 %v4302
        %v4979 = vpop.f32.mrf.mxu0
        %v4980 = vadd.f32 %v4931, %v4979
        %v4981 = vpop.f32.mrf.mxu0
        %v4982 = vadd.f32 %v4933, %v4981
        %4983 = vdwg.mxu0
        %4984 = vmatpush.bf16.msra.mxu0 %v4609
        %4985 = vmatpush.bf16.msra.mxu0 %v4607
        %4986 = vmatpush.bf16.msra.mxu0 %v4605
        %4987 = vmatpush.bf16.msra.mxu0 %v4603
        %4988 = vmatpush.bf16.msra.mxu0 %v4601
        %4989 = vmatpush.bf16.msra.mxu0 %v4599
        %4990 = vmatpush.bf16.msra.mxu0 %v4597
        %4991 = vmatpush.bf16.msra.mxu0 %v4595
        %4992 = vmatmul.bf16.gmra.mxu0 %v4275
        %v4993 = vpop.f32.mrf.mxu0
        %v4994 = vadd.f32 %v4945, %v4993
        %v4995 = vpop.f32.mrf.mxu0
        %v4996 = vadd.f32 %v4947, %v4995
        %4997 = vmatmul.bf16.gmra.mxu0 %v4279
        %v4998 = vpop.f32.mrf.mxu0
        %v4999 = vadd.f32 %v4950, %v4998
        %v5000 = vpop.f32.mrf.mxu0
        %v5001 = vadd.f32 %v4952, %v5000
        %5002 = vmatmul.bf16.gmra.mxu0 %v4283
        %v5003 = vpop.f32.mrf.mxu0
        %v5004 = vadd.f32 %v4955, %v5003
        %v5005 = vpop.f32.mrf.mxu0
        %v5006 = vadd.f32 %v4957, %v5005
        %5007 = vmatmul.bf16.gmra.mxu0 %v4287
        %v5008 = vpop.f32.mrf.mxu0
        %v5009 = vadd.f32 %v4960, %v5008
        %v5010 = vpop.f32.mrf.mxu0
        %v5011 = vadd.f32 %v4962, %v5010
        %5012 = vmatmul.bf16.gmra.mxu0 %v4291
        %v5013 = vpop.f32.mrf.mxu0
        %v5014 = vadd.f32 %v4965, %v5013
        %v5015 = vpop.f32.mrf.mxu0
        %v5016 = vadd.f32 %v4967, %v5015
        %5017 = vmatmul.bf16.gmra.mxu0 %v4295
        %v5018 = vpop.f32.mrf.mxu0
        %v5019 = vadd.f32 %v4970, %v5018
        %v5020 = vpop.f32.mrf.mxu0
        %v5021 = vadd.f32 %v4972, %v5020
        %5022 = vmatmul.bf16.gmra.mxu0 %v4299
        %v5023 = vpop.f32.mrf.mxu0
        %v5024 = vadd.f32 %v4975, %v5023
        %v5025 = vpop.f32.mrf.mxu0
        %v5026 = vadd.f32 %v4977, %v5025
        %5027 = vmatmul.bf16.gmra.mxu0 %v4303
        %v5028 = vpop.f32.mrf.mxu0
        %v5029 = vadd.f32 %v4980, %v5028
        %v5030 = vpop.f32.mrf.mxu0
        %v5031 = vadd.f32 %v4982, %v5030
        %5032 = vdwg.mxu0
        %5033 = vmatpush.bf16.msra.mxu0 %v4625
        %5034 = vmatpush.bf16.msra.mxu0 %v4623
        %5035 = vmatpush.bf16.msra.mxu0 %v4621
        %5036 = vmatpush.bf16.msra.mxu0 %v4619
        %5037 = vmatpush.bf16.msra.mxu0 %v4617
        %5038 = vmatpush.bf16.msra.mxu0 %v4615
        %5039 = vmatpush.bf16.msra.mxu0 %v4613
        %5040 = vmatpush.bf16.msra.mxu0 %v4611
        %5041 = vmatmul.bf16.gmra.mxu0 %v4276
        %v5042 = vpop.f32.mrf.mxu0
        %v5043 = vadd.f32 %v4994, %v5042
        %v5044 = vpop.f32.mrf.mxu0
        %v5045 = vadd.f32 %v4996, %v5044
        %5046 = vmatmul.bf16.gmra.mxu0 %v4280
        %v5047 = vpop.f32.mrf.mxu0
        %v5048 = vadd.f32 %v4999, %v5047
        %v5049 = vpop.f32.mrf.mxu0
        %v5050 = vadd.f32 %v5001, %v5049
        %5051 = vmatmul.bf16.gmra.mxu0 %v4284
        %v5052 = vpop.f32.mrf.mxu0
        %v5053 = vadd.f32 %v5004, %v5052
        %v5054 = vpop.f32.mrf.mxu0
        %v5055 = vadd.f32 %v5006, %v5054
        %5056 = vmatmul.bf16.gmra.mxu0 %v4288
        %v5057 = vpop.f32.mrf.mxu0
        %v5058 = vadd.f32 %v5009, %v5057
        %v5059 = vpop.f32.mrf.mxu0
        %v5060 = vadd.f32 %v5011, %v5059
        %5061 = vmatmul.bf16.gmra.mxu0 %v4292
        %v5062 = vpop.f32.mrf.mxu0
        %v5063 = vadd.f32 %v5014, %v5062
        %v5064 = vpop.f32.mrf.mxu0
        %v5065 = vadd.f32 %v5016, %v5064
        %5066 = vmatmul.bf16.gmra.mxu0 %v4296
        %v5067 = vpop.f32.mrf.mxu0
        %v5068 = vadd.f32 %v5019, %v5067
        %v5069 = vpop.f32.mrf.mxu0
        %v5070 = vadd.f32 %v5021, %v5069
        %5071 = vmatmul.bf16.gmra.mxu0 %v4300
        %v5072 = vpop.f32.mrf.mxu0
        %v5073 = vadd.f32 %v5024, %v5072
        %v5074 = vpop.f32.mrf.mxu0
        %v5075 = vadd.f32 %v5026, %v5074
        %5076 = vmatmul.bf16.gmra.mxu0 %v4304
        %v5077 = vpop.f32.mrf.mxu0
        %v5078 = vadd.f32 %v5029, %v5077
        %v5079 = vpop.f32.mrf.mxu0
        %v5080 = vadd.f32 %v5031, %v5079
        %5081 = vdwg.mxu0
        %v5082 = vpack.c.bf16 %v5043, %v4847
        %v5083 = vpack.c.bf16 %v5045, %v4849
        %v5084 = vpack.c.bf16 %v5048, %v4852
        %v5085 = vpack.c.bf16 %v5050, %v4854
        %v5086 = vpack.c.bf16 %v5053, %v4857
        %v5087 = vpack.c.bf16 %v5055, %v4859
        %v5088 = vpack.c.bf16 %v5058, %v4862
        %v5089 = vpack.c.bf16 %v5060, %v4864
        %v5090 = vpack.c.bf16 %v5063, %v4867
        %v5091 = vpack.c.bf16 %v5065, %v4869
        %v5092 = vpack.c.bf16 %v5068, %v4872
        %v5093 = vpack.c.bf16 %v5070, %v4874
        %v5094 = vpack.c.bf16 %v5073, %v4877
        %v5095 = vpack.c.bf16 %v5075, %v4879
        %v5096 = vpack.c.bf16 %v5078, %v4882
        %v5097 = vpack.c.bf16 %v5080, %v4884
        %5099 = vst [vmem:[#allocation1] ss:$9 sm:$0xff] %v4369
        %v5100 = vld [vmem:[#allocation1] sm:$0xff]
        %v5101 = vld [vmem:[#allocation1 + $0x9] sm:$0xff]
        %v5102 = vpack.i.b16 %v5100, %v5100
        %v5104 = vperm.slane %v5102, 0
        %v5105 = vpack.i.b16 %v5101, %v5101
        %v5107 = vperm.slane %v5105, 0
        %v5108 = vunpack.c.l.bf16 %v5082
        %v5109 = vunpack.c.h.bf16 %v5082
        %v5110 = vunpack.c.l.bf16 %v5083
        %v5111 = vunpack.c.h.bf16 %v5083
        %v5112 = vunpack.c.l.bf16 %v5084
        %v5113 = vunpack.c.h.bf16 %v5084
        %v5114 = vunpack.c.l.bf16 %v5085
        %v5115 = vunpack.c.h.bf16 %v5085
        %v5116 = vunpack.c.l.bf16 %v5086
        %v5117 = vunpack.c.h.bf16 %v5086
        %v5118 = vunpack.c.l.bf16 %v5087
        %v5119 = vunpack.c.h.bf16 %v5087
        %v5120 = vunpack.c.l.bf16 %v5088
        %v5121 = vunpack.c.h.bf16 %v5088
        %v5122 = vunpack.c.l.bf16 %v5089
        %v5123 = vunpack.c.h.bf16 %v5089
        %v5124 = vunpack.c.l.bf16 %v5090
        %v5125 = vunpack.c.h.bf16 %v5090
        %v5126 = vunpack.c.l.bf16 %v5091
        %v5127 = vunpack.c.h.bf16 %v5091
        %v5128 = vunpack.c.l.bf16 %v5092
        %v5129 = vunpack.c.h.bf16 %v5092
        %v5130 = vunpack.c.l.bf16 %v5093
        %v5131 = vunpack.c.h.bf16 %v5093
        %v5132 = vunpack.c.l.bf16 %v5094
        %v5133 = vunpack.c.h.bf16 %v5094
        %v5134 = vunpack.c.l.bf16 %v5095
        %v5135 = vunpack.c.h.bf16 %v5095
        %v5136 = vunpack.c.l.bf16 %v5096
        %v5137 = vunpack.c.h.bf16 %v5096
        %v5138 = vunpack.c.l.bf16 %v5097
        %v5139 = vunpack.c.h.bf16 %v5097
        %v5140 = vunpack.c.l.bf16 %v5104
        %v5141 = vunpack.c.l.bf16 %v5107
        %v5142 = vadd.f32 %v5108, %v5140
        %v5143 = vadd.f32 %v5109, %v5141
        %v5144 = vadd.f32 %v5110, %v5140
        %v5145 = vadd.f32 %v5111, %v5141
        %v5146 = vadd.f32 %v5112, %v5140
        %v5147 = vadd.f32 %v5113, %v5141
        %v5148 = vadd.f32 %v5114, %v5140
        %v5149 = vadd.f32 %v5115, %v5141
        %v5150 = vadd.f32 %v5116, %v5140
        %v5151 = vadd.f32 %v5117, %v5141
        %v5152 = vadd.f32 %v5118, %v5140
        %v5153 = vadd.f32 %v5119, %v5141
        %v5154 = vadd.f32 %v5120, %v5140
        %v5155 = vadd.f32 %v5121, %v5141
        %v5156 = vadd.f32 %v5122, %v5140
        %v5157 = vadd.f32 %v5123, %v5141
        %v5158 = vadd.f32 %v5124, %v5140
        %v5159 = vadd.f32 %v5125, %v5141
        %v5160 = vadd.f32 %v5126, %v5140
        %v5161 = vadd.f32 %v5127, %v5141
        %v5162 = vadd.f32 %v5128, %v5140
        %v5163 = vadd.f32 %v5129, %v5141
        %v5164 = vadd.f32 %v5130, %v5140
        %v5165 = vadd.f32 %v5131, %v5141
        %v5166 = vadd.f32 %v5132, %v5140
        %v5167 = vadd.f32 %v5133, %v5141
        %v5168 = vadd.f32 %v5134, %v5140
        %v5169 = vadd.f32 %v5135, %v5141
        %v5170 = vadd.f32 %v5136, %v5140
        %v5171 = vadd.f32 %v5137, %v5141
        %v5172 = vadd.f32 %v5138, %v5140
        %v5173 = vadd.f32 %v5139, %v5141
        %v5174 = vpack.c.bf16 %v5143, %v5142
        %v5175 = vpack.c.bf16 %v5145, %v5144
        %v5176 = vpack.c.bf16 %v5147, %v5146
        %v5177 = vpack.c.bf16 %v5149, %v5148
        %v5178 = vpack.c.bf16 %v5151, %v5150
        %v5179 = vpack.c.bf16 %v5153, %v5152
        %v5180 = vpack.c.bf16 %v5155, %v5154
        %v5181 = vpack.c.bf16 %v5157, %v5156
        %v5182 = vpack.c.bf16 %v5159, %v5158
        %v5183 = vpack.c.bf16 %v5161, %v5160
        %v5184 = vpack.c.bf16 %v5163, %v5162
        %v5185 = vpack.c.bf16 %v5165, %v5164
        %v5186 = vpack.c.bf16 %v5167, %v5166
        %v5187 = vpack.c.bf16 %v5169, %v5168
        %v5188 = vpack.c.bf16 %v5171, %v5170
        %v5189 = vpack.c.bf16 %v5173, %v5172
        %v5190 = vunpack.c.l.bf16 %v5174
        %v5191 = vunpack.c.h.bf16 %v5174
        %v5192 = vunpack.c.l.bf16 %v5175
        %v5193 = vunpack.c.h.bf16 %v5175
        %v5194 = vunpack.c.l.bf16 %v5176
        %v5195 = vunpack.c.h.bf16 %v5176
        %v5196 = vunpack.c.l.bf16 %v5177
        %v5197 = vunpack.c.h.bf16 %v5177
        %v5198 = vunpack.c.l.bf16 %v5178
        %v5199 = vunpack.c.h.bf16 %v5178
        %v5200 = vunpack.c.l.bf16 %v5179
        %v5201 = vunpack.c.h.bf16 %v5179
        %v5202 = vunpack.c.l.bf16 %v5180
        %v5203 = vunpack.c.h.bf16 %v5180
        %v5204 = vunpack.c.l.bf16 %v5181
        %v5205 = vunpack.c.h.bf16 %v5181
        %v5206 = vunpack.c.l.bf16 %v5182
        %v5207 = vunpack.c.h.bf16 %v5182
        %v5208 = vunpack.c.l.bf16 %v5183
        %v5209 = vunpack.c.h.bf16 %v5183
        %v5210 = vunpack.c.l.bf16 %v5184
        %v5211 = vunpack.c.h.bf16 %v5184
        %v5212 = vunpack.c.l.bf16 %v5185
        %v5213 = vunpack.c.h.bf16 %v5185
        %v5214 = vunpack.c.l.bf16 %v5186
        %v5215 = vunpack.c.h.bf16 %v5186
        %v5216 = vunpack.c.l.bf16 %v5187
        %v5217 = vunpack.c.h.bf16 %v5187
        %v5218 = vunpack.c.l.bf16 %v5188
        %v5219 = vunpack.c.h.bf16 %v5188
        %v5220 = vunpack.c.l.bf16 %v5189
        %v5221 = vunpack.c.h.bf16 %v5189
        %v5222 = vmax.f32 %v5190, 0.0
        %v5223 = vmax.f32 %v5191, 0.0
        %v5224 = vmax.f32 %v5192, 0.0
        %v5225 = vmax.f32 %v5193, 0.0
        %v5226 = vmax.f32 %v5194, 0.0
        %v5227 = vmax.f32 %v5195, 0.0
        %v5228 = vmax.f32 %v5196, 0.0
        %v5229 = vmax.f32 %v5197, 0.0
        %v5230 = vmax.f32 %v5198, 0.0
        %v5231 = vmax.f32 %v5199, 0.0
        %v5232 = vmax.f32 %v5200, 0.0
        %v5233 = vmax.f32 %v5201, 0.0
        %v5234 = vmax.f32 %v5202, 0.0
        %v5235 = vmax.f32 %v5203, 0.0
        %v5236 = vmax.f32 %v5204, 0.0
        %v5237 = vmax.f32 %v5205, 0.0
        %v5238 = vmax.f32 %v5206, 0.0
        %v5239 = vmax.f32 %v5207, 0.0
        %v5240 = vmax.f32 %v5208, 0.0
        %v5241 = vmax.f32 %v5209, 0.0
        %v5242 = vmax.f32 %v5210, 0.0
        %v5243 = vmax.f32 %v5211, 0.0
        %v5244 = vmax.f32 %v5212, 0.0
        %v5245 = vmax.f32 %v5213, 0.0
        %v5246 = vmax.f32 %v5214, 0.0
        %v5247 = vmax.f32 %v5215, 0.0
        %v5248 = vmax.f32 %v5216, 0.0
        %v5249 = vmax.f32 %v5217, 0.0
        %v5250 = vmax.f32 %v5218, 0.0
        %v5251 = vmax.f32 %v5219, 0.0
        %v5252 = vmax.f32 %v5220, 0.0
        %v5253 = vmax.f32 %v5221, 0.0
        %v5254 = vpack.c.bf16 %v5224, %v5222
        %v5255 = vpack.c.bf16 %v5225, %v5223
        %v5256 = vpack.c.bf16 %v5228, %v5226
        %v5257 = vpack.c.bf16 %v5229, %v5227
        %v5258 = vpack.c.bf16 %v5232, %v5230
        %v5259 = vpack.c.bf16 %v5233, %v5231
        %v5260 = vpack.c.bf16 %v5236, %v5234
        %v5261 = vpack.c.bf16 %v5237, %v5235
        %v5262 = vpack.c.bf16 %v5240, %v5238
        %v5263 = vpack.c.bf16 %v5241, %v5239
        %v5264 = vpack.c.bf16 %v5244, %v5242
        %v5265 = vpack.c.bf16 %v5245, %v5243
        %v5266 = vpack.c.bf16 %v5248, %v5246
        %v5267 = vpack.c.bf16 %v5249, %v5247
        %v5268 = vpack.c.bf16 %v5252, %v5250
        %v5269 = vpack.c.bf16 %v5253, %v5251
        %v5270 = vld [vmem:[#allocation10] sm:$0xf]
        %v5271 = vld [vmem:[#allocation10 + $0x4] sm:$0xf]
        %v5272 = vld [vmem:[#allocation10 + $0x8] sm:$0xf]
        %v5273 = vld [vmem:[#allocation10 + $0xc] sm:$0xf]
        %v5274 = vld [vmem:[#allocation10 + $0x10] sm:$0xf]
        %v5275 = vld [vmem:[#allocation10 + $0x14] sm:$0xf]
        %v5276 = vld [vmem:[#allocation10 + $0x18] sm:$0xf]
        %v5277 = vld [vmem:[#allocation10 + $0x1c] sm:$0xf]
        %v5278 = vld [vmem:[#allocation10 + $0x20] sm:$0xf]
        %v5279 = vld [vmem:[#allocation10 + $0x24] sm:$0xf]
        %v5280 = vld [vmem:[#allocation10 + $0x28] sm:$0xf]
        %v5281 = vld [vmem:[#allocation10 + $0x2c] sm:$0xf]
        %v5282 = vld [vmem:[#allocation10 + $0x30] sm:$0xf]
        %v5283 = vld [vmem:[#allocation10 + $0x34] sm:$0xf]
        %v5284 = vld [vmem:[#allocation10 + $0x38] sm:$0xf]
        %v5285 = vld [vmem:[#allocation10 + $0x3c] sm:$0xf]
        %v5286 = vld [vmem:[#allocation10 + $0x40] sm:$0xf]
        %v5287 = vld [vmem:[#allocation10 + $0x44] sm:$0xf]
        %v5288 = vld [vmem:[#allocation10 + $0x48] sm:$0xf]
        %v5289 = vld [vmem:[#allocation10 + $0x4c] sm:$0xf]
        %v5290 = vld [vmem:[#allocation10 + $0x50] sm:$0xf]
        %v5291 = vld [vmem:[#allocation10 + $0x54] sm:$0xf]
        %v5292 = vld [vmem:[#allocation10 + $0x58] sm:$0xf]
        %v5293 = vld [vmem:[#allocation10 + $0x5c] sm:$0xf]
        %v5294 = vld [vmem:[#allocation10 + $0x60] sm:$0xf]
        %v5295 = vld [vmem:[#allocation10 + $0x64] sm:$0xf]
        %v5296 = vld [vmem:[#allocation10 + $0x68] sm:$0xf]
        %v5297 = vld [vmem:[#allocation10 + $0x6c] sm:$0xf]
        %v5298 = vld [vmem:[#allocation10 + $0x70] sm:$0xf]
        %v5299 = vld [vmem:[#allocation10 + $0x74] sm:$0xf]
        %v5300 = vld [vmem:[#allocation10 + $0x78] sm:$0xf]
        %v5301 = vld [vmem:[#allocation10 + $0x7c] sm:$0xf]
        %v5302 = vld [vmem:[#allocation11] sm:$0x1]
        %v5335 = vunpack.c.l.b16 %v5270
        %v5336 = vunpack.c.l.b16 %v5271
        %v5337 = vunpack.c.l.b16 %v5272
        %v5338 = vunpack.c.l.b16 %v5273
        %v5339 = vunpack.c.l.b16 %v5274
        %v5340 = vunpack.c.l.b16 %v5275
        %v5341 = vunpack.c.l.b16 %v5276
        %v5342 = vunpack.c.l.b16 %v5277
        %v5343 = vunpack.c.l.b16 %v5278
        %v5344 = vunpack.c.l.b16 %v5279
        %v5345 = vunpack.c.l.b16 %v5280
        %v5346 = vunpack.c.l.b16 %v5281
        %v5347 = vunpack.c.l.b16 %v5282
        %v5348 = vunpack.c.l.b16 %v5283
        %v5349 = vunpack.c.l.b16 %v5284
        %v5350 = vunpack.c.l.b16 %v5285
        %v5351 = vunpack.c.l.b16 %v5286
        %v5352 = vunpack.c.l.b16 %v5287
        %v5353 = vunpack.c.l.b16 %v5288
        %v5354 = vunpack.c.l.b16 %v5289
        %v5355 = vunpack.c.l.b16 %v5290
        %v5356 = vunpack.c.l.b16 %v5291
        %v5357 = vunpack.c.l.b16 %v5292
        %v5358 = vunpack.c.l.b16 %v5293
        %v5359 = vunpack.c.l.b16 %v5294
        %v5360 = vunpack.c.l.b16 %v5295
        %v5361 = vunpack.c.l.b16 %v5296
        %v5362 = vunpack.c.l.b16 %v5297
        %v5363 = vunpack.c.l.b16 %v5298
        %v5364 = vunpack.c.l.b16 %v5299
        %v5365 = vunpack.c.l.b16 %v5300
        %v5366 = vunpack.c.l.b16 %v5301
        %v5367 = vpack.c.b16 %v5336, %v5335
        %v5368 = vpack.c.b16 %v5338, %v5337
        %v5369 = vpack.c.b16 %v5340, %v5339
        %v5370 = vpack.c.b16 %v5342, %v5341
        %v5371 = vpack.c.b16 %v5344, %v5343
        %v5372 = vpack.c.b16 %v5346, %v5345
        %v5373 = vpack.c.b16 %v5348, %v5347
        %v5374 = vpack.c.b16 %v5350, %v5349
        %v5375 = vpack.c.b16 %v5352, %v5351
        %v5376 = vpack.c.b16 %v5354, %v5353
        %v5377 = vpack.c.b16 %v5356, %v5355
        %v5378 = vpack.c.b16 %v5358, %v5357
        %v5379 = vpack.c.b16 %v5360, %v5359
        %v5380 = vpack.c.b16 %v5362, %v5361
        %v5381 = vpack.c.b16 %v5364, %v5363
        %v5382 = vpack.c.b16 %v5366, %v5365
        %5399 = vmatpush.bf16.msra.mxu0 %v5374
        %5400 = vmatpush.bf16.msra.mxu0 %v5373
        %5401 = vmatpush.bf16.msra.mxu0 %v5372
        %5402 = vmatpush.bf16.msra.mxu0 %v5371
        %5403 = vmatpush.bf16.msra.mxu0 %v5370
        %5404 = vmatpush.bf16.msra.mxu0 %v5369
        %5405 = vmatpush.bf16.msra.mxu0 %v5368
        %5406 = vmatpush.bf16.msra.mxu0 %v5367
        %5407 = vmatmul.bf16.gmra.mxu0 %v5254
        %v5408 = vpop.f32.mrf.mxu0
        %v5409 = vadd.f32 0.0, %v5408
        %v5410 = vpop.f32.mrf.mxu0
        %v5411 = vadd.f32 0.0, %v5410
        %5412 = vmatmul.bf16.gmra.mxu0 %v5256
        %v5413 = vpop.f32.mrf.mxu0
        %v5414 = vadd.f32 0.0, %v5413
        %v5415 = vpop.f32.mrf.mxu0
        %v5416 = vadd.f32 0.0, %v5415
        %5417 = vmatmul.bf16.gmra.mxu0 %v5258
        %v5418 = vpop.f32.mrf.mxu0
        %v5419 = vadd.f32 0.0, %v5418
        %v5420 = vpop.f32.mrf.mxu0
        %v5421 = vadd.f32 0.0, %v5420
        %5422 = vmatmul.bf16.gmra.mxu0 %v5260
        %v5423 = vpop.f32.mrf.mxu0
        %v5424 = vadd.f32 0.0, %v5423
        %v5425 = vpop.f32.mrf.mxu0
        %v5426 = vadd.f32 0.0, %v5425
        %5427 = vmatmul.bf16.gmra.mxu0 %v5262
        %v5428 = vpop.f32.mrf.mxu0
        %v5429 = vadd.f32 0.0, %v5428
        %v5430 = vpop.f32.mrf.mxu0
        %v5431 = vadd.f32 0.0, %v5430
        %5432 = vmatmul.bf16.gmra.mxu0 %v5264
        %v5433 = vpop.f32.mrf.mxu0
        %v5434 = vadd.f32 0.0, %v5433
        %v5435 = vpop.f32.mrf.mxu0
        %v5436 = vadd.f32 0.0, %v5435
        %5437 = vmatmul.bf16.gmra.mxu0 %v5266
        %v5438 = vpop.f32.mrf.mxu0
        %v5439 = vadd.f32 0.0, %v5438
        %v5440 = vpop.f32.mrf.mxu0
        %v5441 = vadd.f32 0.0, %v5440
        %5442 = vmatmul.bf16.gmra.mxu0 %v5268
        %v5443 = vpop.f32.mrf.mxu0
        %v5444 = vadd.f32 0.0, %v5443
        %v5445 = vpop.f32.mrf.mxu0
        %v5446 = vadd.f32 0.0, %v5445
        %5447 = vdwg.mxu0
        %5448 = vmatpush.bf16.msra.mxu0 %v5382
        %5449 = vmatpush.bf16.msra.mxu0 %v5381
        %5450 = vmatpush.bf16.msra.mxu0 %v5380
        %5451 = vmatpush.bf16.msra.mxu0 %v5379
        %5452 = vmatpush.bf16.msra.mxu0 %v5378
        %5453 = vmatpush.bf16.msra.mxu0 %v5377
        %5454 = vmatpush.bf16.msra.mxu0 %v5376
        %5455 = vmatpush.bf16.msra.mxu0 %v5375
        %5456 = vmatmul.bf16.gmra.mxu0 %v5255
        %v5457 = vpop.f32.mrf.mxu0
        %v5458 = vadd.f32 %v5409, %v5457
        %v5459 = vpop.f32.mrf.mxu0
        %v5460 = vadd.f32 %v5411, %v5459
        %5461 = vmatmul.bf16.gmra.mxu0 %v5257
        %v5462 = vpop.f32.mrf.mxu0
        %v5463 = vadd.f32 %v5414, %v5462
        %v5464 = vpop.f32.mrf.mxu0
        %v5465 = vadd.f32 %v5416, %v5464
        %5466 = vmatmul.bf16.gmra.mxu0 %v5259
        %v5467 = vpop.f32.mrf.mxu0
        %v5468 = vadd.f32 %v5419, %v5467
        %v5469 = vpop.f32.mrf.mxu0
        %v5470 = vadd.f32 %v5421, %v5469
        %5471 = vmatmul.bf16.gmra.mxu0 %v5261
        %v5472 = vpop.f32.mrf.mxu0
        %v5473 = vadd.f32 %v5424, %v5472
        %v5474 = vpop.f32.mrf.mxu0
        %v5475 = vadd.f32 %v5426, %v5474
        %5476 = vmatmul.bf16.gmra.mxu0 %v5263
        %v5477 = vpop.f32.mrf.mxu0
        %v5478 = vadd.f32 %v5429, %v5477
        %v5479 = vpop.f32.mrf.mxu0
        %v5480 = vadd.f32 %v5431, %v5479
        %5481 = vmatmul.bf16.gmra.mxu0 %v5265
        %v5482 = vpop.f32.mrf.mxu0
        %v5483 = vadd.f32 %v5434, %v5482
        %v5484 = vpop.f32.mrf.mxu0
        %v5485 = vadd.f32 %v5436, %v5484
        %5486 = vmatmul.bf16.gmra.mxu0 %v5267
        %v5487 = vpop.f32.mrf.mxu0
        %v5488 = vadd.f32 %v5439, %v5487
        %v5489 = vpop.f32.mrf.mxu0
        %v5490 = vadd.f32 %v5441, %v5489
        %5491 = vmatmul.bf16.gmra.mxu0 %v5269
        %v5492 = vpop.f32.mrf.mxu0
        %v5493 = vadd.f32 %v5444, %v5492
        %v5494 = vpop.f32.mrf.mxu0
        %v5495 = vadd.f32 %v5446, %v5494
        %5496 = vdwg.mxu0
        %v5497 = vpack.c.bf16 %v5458, %v5458
        %v5498 = vpack.c.bf16 %v5460, %v5460
        %v5499 = vpack.c.bf16 %v5463, %v5463
        %v5500 = vpack.c.bf16 %v5465, %v5465
        %v5501 = vpack.c.bf16 %v5468, %v5468
        %v5502 = vpack.c.bf16 %v5470, %v5470
        %v5503 = vpack.c.bf16 %v5473, %v5473
        %v5504 = vpack.c.bf16 %v5475, %v5475
        %v5505 = vpack.c.bf16 %v5478, %v5478
        %v5506 = vpack.c.bf16 %v5480, %v5480
        %v5507 = vpack.c.bf16 %v5483, %v5483
        %v5508 = vpack.c.bf16 %v5485, %v5485
        %v5509 = vpack.c.bf16 %v5488, %v5488
        %v5510 = vpack.c.bf16 %v5490, %v5490
        %v5511 = vpack.c.bf16 %v5493, %v5493
        %v5512 = vpack.c.bf16 %v5495, %v5495
        %v5514 = vpack.i.b16 %v5302, %v5302
        %v5516 = vperm.slane %v5514, 0
        %v5517 = vunpack.c.l.bf16 %v5497
        %v5518 = vunpack.c.l.bf16 %v5498
        %v5519 = vunpack.c.l.bf16 %v5499
        %v5520 = vunpack.c.l.bf16 %v5500
        %v5521 = vunpack.c.l.bf16 %v5501
        %v5522 = vunpack.c.l.bf16 %v5502
        %v5523 = vunpack.c.l.bf16 %v5503
        %v5524 = vunpack.c.l.bf16 %v5504
        %v5525 = vunpack.c.l.bf16 %v5505
        %v5526 = vunpack.c.l.bf16 %v5506
        %v5527 = vunpack.c.l.bf16 %v5507
        %v5528 = vunpack.c.l.bf16 %v5508
        %v5529 = vunpack.c.l.bf16 %v5509
        %v5530 = vunpack.c.l.bf16 %v5510
        %v5531 = vunpack.c.l.bf16 %v5511
        %v5532 = vunpack.c.l.bf16 %v5512
        %v5533 = vunpack.c.l.bf16 %v5516
        %v5534 = vadd.f32 %v5517, %v5533
        %v5535 = vadd.f32 %v5518, %v5533
        %v5536 = vadd.f32 %v5519, %v5533
        %v5537 = vadd.f32 %v5520, %v5533
        %v5538 = vadd.f32 %v5521, %v5533
        %v5539 = vadd.f32 %v5522, %v5533
        %v5540 = vadd.f32 %v5523, %v5533
        %v5541 = vadd.f32 %v5524, %v5533
        %v5542 = vadd.f32 %v5525, %v5533
        %v5543 = vadd.f32 %v5526, %v5533
        %v5544 = vadd.f32 %v5527, %v5533
        %v5545 = vadd.f32 %v5528, %v5533
        %v5546 = vadd.f32 %v5529, %v5533
        %v5547 = vadd.f32 %v5530, %v5533
        %v5548 = vadd.f32 %v5531, %v5533
        %v5549 = vadd.f32 %v5532, %v5533
        %v5550 = vpack.c.bf16 %v5534, %v5534
        %v5551 = vpack.c.bf16 %v5535, %v5535
        %v5552 = vpack.c.bf16 %v5536, %v5536
        %v5553 = vpack.c.bf16 %v5537, %v5537
        %v5554 = vpack.c.bf16 %v5538, %v5538
        %v5555 = vpack.c.bf16 %v5539, %v5539
        %v5556 = vpack.c.bf16 %v5540, %v5540
        %v5557 = vpack.c.bf16 %v5541, %v5541
        %v5558 = vpack.c.bf16 %v5542, %v5542
        %v5559 = vpack.c.bf16 %v5543, %v5543
        %v5560 = vpack.c.bf16 %v5544, %v5544
        %v5561 = vpack.c.bf16 %v5545, %v5545
        %v5562 = vpack.c.bf16 %v5546, %v5546
        %v5563 = vpack.c.bf16 %v5547, %v5547
        %v5564 = vpack.c.bf16 %v5548, %v5548
        %v5565 = vpack.c.bf16 %v5549, %v5549
        %v5566 = vunpack.c.l.bf16 %v5550
        %v5567 = vunpack.c.l.bf16 %v5551
        %v5568 = vunpack.c.l.bf16 %v5552
        %v5569 = vunpack.c.l.bf16 %v5553
        %v5570 = vunpack.c.l.bf16 %v5554
        %v5571 = vunpack.c.l.bf16 %v5555
        %v5572 = vunpack.c.l.bf16 %v5556
        %v5573 = vunpack.c.l.bf16 %v5557
        %v5574 = vunpack.c.l.bf16 %v5558
        %v5575 = vunpack.c.l.bf16 %v5559
        %v5576 = vunpack.c.l.bf16 %v5560
        %v5577 = vunpack.c.l.bf16 %v5561
        %v5578 = vunpack.c.l.bf16 %v5562
        %v5579 = vunpack.c.l.bf16 %v5563
        %v5580 = vunpack.c.l.bf16 %v5564
        %v5581 = vunpack.c.l.bf16 %v5565
        %v5582 = vmax.f32 %v5566, 0.0
        %v5583 = vmax.f32 %v5567, 0.0
        %v5584 = vmax.f32 %v5568, 0.0
        %v5585 = vmax.f32 %v5569, 0.0
        %v5586 = vmax.f32 %v5570, 0.0
        %v5587 = vmax.f32 %v5571, 0.0
        %v5588 = vmax.f32 %v5572, 0.0
        %v5589 = vmax.f32 %v5573, 0.0
        %v5590 = vmax.f32 %v5574, 0.0
        %v5591 = vmax.f32 %v5575, 0.0
        %v5592 = vmax.f32 %v5576, 0.0
        %v5593 = vmax.f32 %v5577, 0.0
        %v5594 = vmax.f32 %v5578, 0.0
        %v5595 = vmax.f32 %v5579, 0.0
        %v5596 = vmax.f32 %v5580, 0.0
        %v5597 = vmax.f32 %v5581, 0.0
        %v5598 = vpack.c.bf16 %v5583, %v5582
        %v5599 = vpack.c.bf16 %v5585, %v5584
        %v5600 = vpack.c.bf16 %v5587, %v5586
        %v5601 = vpack.c.bf16 %v5589, %v5588
        %v5602 = vpack.c.bf16 %v5591, %v5590
        %v5603 = vpack.c.bf16 %v5593, %v5592
        %v5604 = vpack.c.bf16 %v5595, %v5594
        %v5605 = vpack.c.bf16 %v5597, %v5596
        %v5606 = vld [vmem:[#allocation13] sm:$0xf]
        %v5607 = vld [vmem:[#allocation13 + $0x4] sm:$0xf]
        %v5608 = vld [vmem:[#allocation13 + $0x8] sm:$0xf]
        %v5609 = vld [vmem:[#allocation13 + $0xc] sm:$0xf]
        %v5610 = vld [vmem:[#allocation13 + $0x10] sm:$0xf]
        %v5611 = vld [vmem:[#allocation13 + $0x14] sm:$0xf]
        %v5612 = vld [vmem:[#allocation13 + $0x18] sm:$0xf]
        %v5613 = vld [vmem:[#allocation13 + $0x1c] sm:$0xf]
        %v5614 = vld [vmem:[#allocation13 + $0x20] sm:$0xf]
        %v5615 = vld [vmem:[#allocation13 + $0x24] sm:$0xf]
        %v5616 = vld [vmem:[#allocation13 + $0x28] sm:$0xf]
        %v5617 = vld [vmem:[#allocation13 + $0x2c] sm:$0xf]
        %v5618 = vld [vmem:[#allocation13 + $0x30] sm:$0xf]
        %v5619 = vld [vmem:[#allocation13 + $0x34] sm:$0xf]
        %v5620 = vld [vmem:[#allocation13 + $0x38] sm:$0xf]
        %v5621 = vld [vmem:[#allocation13 + $0x3c] sm:$0xf]
        %v5622 = vld [vmem:[#allocation14] sm:$0x1]
        %v5639 = vunpack.c.l.b16 %v5606
        %v5640 = vunpack.c.l.b16 %v5607
        %v5641 = vunpack.c.l.b16 %v5608
        %v5642 = vunpack.c.l.b16 %v5609
        %v5643 = vunpack.c.l.b16 %v5610
        %v5644 = vunpack.c.l.b16 %v5611
        %v5645 = vunpack.c.l.b16 %v5612
        %v5646 = vunpack.c.l.b16 %v5613
        %v5647 = vunpack.c.l.b16 %v5614
        %v5648 = vunpack.c.l.b16 %v5615
        %v5649 = vunpack.c.l.b16 %v5616
        %v5650 = vunpack.c.l.b16 %v5617
        %v5651 = vunpack.c.l.b16 %v5618
        %v5652 = vunpack.c.l.b16 %v5619
        %v5653 = vunpack.c.l.b16 %v5620
        %v5654 = vunpack.c.l.b16 %v5621
        %v5655 = vpack.c.b16 %v5640, %v5639
        %v5656 = vpack.c.b16 %v5642, %v5641
        %v5657 = vpack.c.b16 %v5644, %v5643
        %v5658 = vpack.c.b16 %v5646, %v5645
        %v5659 = vpack.c.b16 %v5648, %v5647
        %v5660 = vpack.c.b16 %v5650, %v5649
        %v5661 = vpack.c.b16 %v5652, %v5651
        %v5662 = vpack.c.b16 %v5654, %v5653
        %5671 = vmatpush.bf16.msra.mxu0 %v5662
        %5672 = vmatpush.bf16.msra.mxu0 %v5661
        %5673 = vmatpush.bf16.msra.mxu0 %v5660
        %5674 = vmatpush.bf16.msra.mxu0 %v5659
        %5675 = vmatpush.bf16.msra.mxu0 %v5658
        %5676 = vmatpush.bf16.msra.mxu0 %v5657
        %5677 = vmatpush.bf16.msra.mxu0 %v5656
        %5678 = vmatpush.bf16.msra.mxu0 %v5655
        %5679 = vmatmul.bf16.gmra.mxu0 %v5598
        %v5680 = vpop.f32.mrf.mxu0
        %v5681 = vadd.f32 0.0, %v5680
        %v5682 = vpop.f32.mrf.mxu0
        %v5683 = vadd.f32 0.0, %v5682
        %5684 = vmatmul.bf16.gmra.mxu0 %v5599
        %v5685 = vpop.f32.mrf.mxu0
        %v5686 = vadd.f32 0.0, %v5685
        %v5687 = vpop.f32.mrf.mxu0
        %v5688 = vadd.f32 0.0, %v5687
        %5689 = vmatmul.bf16.gmra.mxu0 %v5600
        %v5690 = vpop.f32.mrf.mxu0
        %v5691 = vadd.f32 0.0, %v5690
        %v5692 = vpop.f32.mrf.mxu0
        %v5693 = vadd.f32 0.0, %v5692
        %5694 = vmatmul.bf16.gmra.mxu0 %v5601
        %v5695 = vpop.f32.mrf.mxu0
        %v5696 = vadd.f32 0.0, %v5695
        %v5697 = vpop.f32.mrf.mxu0
        %v5698 = vadd.f32 0.0, %v5697
        %5699 = vmatmul.bf16.gmra.mxu0 %v5602
        %v5700 = vpop.f32.mrf.mxu0
        %v5701 = vadd.f32 0.0, %v5700
        %v5702 = vpop.f32.mrf.mxu0
        %v5703 = vadd.f32 0.0, %v5702
        %5704 = vmatmul.bf16.gmra.mxu0 %v5603
        %v5705 = vpop.f32.mrf.mxu0
        %v5706 = vadd.f32 0.0, %v5705
        %v5707 = vpop.f32.mrf.mxu0
        %v5708 = vadd.f32 0.0, %v5707
        %5709 = vmatmul.bf16.gmra.mxu0 %v5604
        %v5710 = vpop.f32.mrf.mxu0
        %v5711 = vadd.f32 0.0, %v5710
        %v5712 = vpop.f32.mrf.mxu0
        %v5713 = vadd.f32 0.0, %v5712
        %5714 = vmatmul.bf16.gmra.mxu0 %v5605
        %v5715 = vpop.f32.mrf.mxu0
        %v5716 = vadd.f32 0.0, %v5715
        %v5717 = vpop.f32.mrf.mxu0
        %v5718 = vadd.f32 0.0, %v5717
        %5719 = vdwg.mxu0
        %v5720 = vpack.c.bf16 %v5681, %v5681
        %v5721 = vpack.c.bf16 %v5683, %v5683
        %v5722 = vpack.c.bf16 %v5686, %v5686
        %v5723 = vpack.c.bf16 %v5688, %v5688
        %v5724 = vpack.c.bf16 %v5691, %v5691
        %v5725 = vpack.c.bf16 %v5693, %v5693
        %v5726 = vpack.c.bf16 %v5696, %v5696
        %v5727 = vpack.c.bf16 %v5698, %v5698
        %v5728 = vpack.c.bf16 %v5701, %v5701
        %v5729 = vpack.c.bf16 %v5703, %v5703
        %v5730 = vpack.c.bf16 %v5706, %v5706
        %v5731 = vpack.c.bf16 %v5708, %v5708
        %v5732 = vpack.c.bf16 %v5711, %v5711
        %v5733 = vpack.c.bf16 %v5713, %v5713
        %v5734 = vpack.c.bf16 %v5716, %v5716
        %v5735 = vpack.c.bf16 %v5718, %v5718
        %v5737 = vpack.i.b16 %v5622, %v5622
        %v5739 = vperm.slane %v5737, 0
        %v5740 = vunpack.c.l.bf16 %v5720
        %v5741 = vunpack.c.l.bf16 %v5721
        %v5742 = vunpack.c.l.bf16 %v5722
        %v5743 = vunpack.c.l.bf16 %v5723
        %v5744 = vunpack.c.l.bf16 %v5724
        %v5745 = vunpack.c.l.bf16 %v5725
        %v5746 = vunpack.c.l.bf16 %v5726
        %v5747 = vunpack.c.l.bf16 %v5727
        %v5748 = vunpack.c.l.bf16 %v5728
        %v5749 = vunpack.c.l.bf16 %v5729
        %v5750 = vunpack.c.l.bf16 %v5730
        %v5751 = vunpack.c.l.bf16 %v5731
        %v5752 = vunpack.c.l.bf16 %v5732
        %v5753 = vunpack.c.l.bf16 %v5733
        %v5754 = vunpack.c.l.bf16 %v5734
        %v5755 = vunpack.c.l.bf16 %v5735
        %v5756 = vunpack.c.l.bf16 %v5739
        %v5757 = vadd.f32 %v5740, %v5756
        %v5758 = vadd.f32 %v5741, %v5756
        %v5759 = vadd.f32 %v5742, %v5756
        %v5760 = vadd.f32 %v5743, %v5756
        %v5761 = vadd.f32 %v5744, %v5756
        %v5762 = vadd.f32 %v5745, %v5756
        %v5763 = vadd.f32 %v5746, %v5756
        %v5764 = vadd.f32 %v5747, %v5756
        %v5765 = vadd.f32 %v5748, %v5756
        %v5766 = vadd.f32 %v5749, %v5756
        %v5767 = vadd.f32 %v5750, %v5756
        %v5768 = vadd.f32 %v5751, %v5756
        %v5769 = vadd.f32 %v5752, %v5756
        %v5770 = vadd.f32 %v5753, %v5756
        %v5771 = vadd.f32 %v5754, %v5756
        %v5772 = vadd.f32 %v5755, %v5756
        %v5773 = vpack.c.bf16 %v5757, %v5757
        %v5774 = vpack.c.bf16 %v5758, %v5758
        %v5775 = vpack.c.bf16 %v5759, %v5759
        %v5776 = vpack.c.bf16 %v5760, %v5760
        %v5777 = vpack.c.bf16 %v5761, %v5761
        %v5778 = vpack.c.bf16 %v5762, %v5762
        %v5779 = vpack.c.bf16 %v5763, %v5763
        %v5780 = vpack.c.bf16 %v5764, %v5764
        %v5781 = vpack.c.bf16 %v5765, %v5765
        %v5782 = vpack.c.bf16 %v5766, %v5766
        %v5783 = vpack.c.bf16 %v5767, %v5767
        %v5784 = vpack.c.bf16 %v5768, %v5768
        %v5785 = vpack.c.bf16 %v5769, %v5769
        %v5786 = vpack.c.bf16 %v5770, %v5770
        %v5787 = vpack.c.bf16 %v5771, %v5771
        %v5788 = vpack.c.bf16 %v5772, %v5772
        %v5789 = vunpack.c.l.bf16 %v5773
        %v5790 = vunpack.c.l.bf16 %v5774
        %v5791 = vunpack.c.l.bf16 %v5775
        %v5792 = vunpack.c.l.bf16 %v5776
        %v5793 = vunpack.c.l.bf16 %v5777
        %v5794 = vunpack.c.l.bf16 %v5778
        %v5795 = vunpack.c.l.bf16 %v5779
        %v5796 = vunpack.c.l.bf16 %v5780
        %v5797 = vunpack.c.l.bf16 %v5781
        %v5798 = vunpack.c.l.bf16 %v5782
        %v5799 = vunpack.c.l.bf16 %v5783
        %v5800 = vunpack.c.l.bf16 %v5784
        %v5801 = vunpack.c.l.bf16 %v5785
        %v5802 = vunpack.c.l.bf16 %v5786
        %v5803 = vunpack.c.l.bf16 %v5787
        %v5804 = vunpack.c.l.bf16 %v5788
        %v5805 = vmax.f32 %v5789, 0.0
        %v5806 = vmax.f32 %v5790, 0.0
        %v5807 = vmax.f32 %v5791, 0.0
        %v5808 = vmax.f32 %v5792, 0.0
        %v5809 = vmax.f32 %v5793, 0.0
        %v5810 = vmax.f32 %v5794, 0.0
        %v5811 = vmax.f32 %v5795, 0.0
        %v5812 = vmax.f32 %v5796, 0.0
        %v5813 = vmax.f32 %v5797, 0.0
        %v5814 = vmax.f32 %v5798, 0.0
        %v5815 = vmax.f32 %v5799, 0.0
        %v5816 = vmax.f32 %v5800, 0.0
        %v5817 = vmax.f32 %v5801, 0.0
        %v5818 = vmax.f32 %v5802, 0.0
        %v5819 = vmax.f32 %v5803, 0.0
        %v5820 = vmax.f32 %v5804, 0.0
        %v5821 = vpack.c.bf16 %v5806, %v5805
        %v5822 = vpack.c.bf16 %v5808, %v5807
        %v5823 = vpack.c.bf16 %v5810, %v5809
        %v5824 = vpack.c.bf16 %v5812, %v5811
        %v5825 = vpack.c.bf16 %v5814, %v5813
        %v5826 = vpack.c.bf16 %v5816, %v5815
        %v5827 = vpack.c.bf16 %v5818, %v5817
        %v5828 = vpack.c.bf16 %v5820, %v5819
        %v5829 = vld [vmem:[#allocation16] sm:$0xf]
        %v5830 = vld [vmem:[#allocation16 + $0x4] sm:$0xf]
        %v5831 = vld [vmem:[#allocation16 + $0x8] sm:$0xf]
        %v5832 = vld [vmem:[#allocation16 + $0xc] sm:$0xf]
        %v5833 = vld [vmem:[#allocation16 + $0x10] sm:$0xf]
        %v5834 = vld [vmem:[#allocation16 + $0x14] sm:$0xf]
        %v5835 = vld [vmem:[#allocation16 + $0x18] sm:$0xf]
        %v5836 = vld [vmem:[#allocation16 + $0x1c] sm:$0xf]
        %v5837 = vld [vmem:[#allocation16 + $0x20] sm:$0xf]
        %v5838 = vld [vmem:[#allocation16 + $0x24] sm:$0xf]
        %v5839 = vld [vmem:[#allocation16 + $0x28] sm:$0xf]
        %v5840 = vld [vmem:[#allocation16 + $0x2c] sm:$0xf]
        %v5841 = vld [vmem:[#allocation16 + $0x30] sm:$0xf]
        %v5842 = vld [vmem:[#allocation16 + $0x34] sm:$0xf]
        %v5843 = vld [vmem:[#allocation16 + $0x38] sm:$0xf]
        %v5844 = vld [vmem:[#allocation16 + $0x3c] sm:$0xf]
        %v5845 = vld [vmem:[#allocation17] sm:$0x1]
        %v5862 = vunpack.c.l.b16 %v5829
        %v5863 = vunpack.c.l.b16 %v5830
        %v5864 = vunpack.c.l.b16 %v5831
        %v5865 = vunpack.c.l.b16 %v5832
        %v5866 = vunpack.c.l.b16 %v5833
        %v5867 = vunpack.c.l.b16 %v5834
        %v5868 = vunpack.c.l.b16 %v5835
        %v5869 = vunpack.c.l.b16 %v5836
        %v5870 = vunpack.c.l.b16 %v5837
        %v5871 = vunpack.c.l.b16 %v5838
        %v5872 = vunpack.c.l.b16 %v5839
        %v5873 = vunpack.c.l.b16 %v5840
        %v5874 = vunpack.c.l.b16 %v5841
        %v5875 = vunpack.c.l.b16 %v5842
        %v5876 = vunpack.c.l.b16 %v5843
        %v5877 = vunpack.c.l.b16 %v5844
        %v5878 = vpack.c.b16 %v5863, %v5862
        %v5879 = vpack.c.b16 %v5865, %v5864
        %v5880 = vpack.c.b16 %v5867, %v5866
        %v5881 = vpack.c.b16 %v5869, %v5868
        %v5882 = vpack.c.b16 %v5871, %v5870
        %v5883 = vpack.c.b16 %v5873, %v5872
        %v5884 = vpack.c.b16 %v5875, %v5874
        %v5885 = vpack.c.b16 %v5877, %v5876
        %5894 = vmatpush.bf16.msra.mxu0 %v5885
        %5895 = vmatpush.bf16.msra.mxu0 %v5884
        %5896 = vmatpush.bf16.msra.mxu0 %v5883
        %5897 = vmatpush.bf16.msra.mxu0 %v5882
        %5898 = vmatpush.bf16.msra.mxu0 %v5881
        %5899 = vmatpush.bf16.msra.mxu0 %v5880
        %5900 = vmatpush.bf16.msra.mxu0 %v5879
        %5901 = vmatpush.bf16.msra.mxu0 %v5878
        %5902 = vmatmul.bf16.gmra.mxu0 %v5821
        %v5903 = vpop.f32.mrf.mxu0
        %v5904 = vadd.f32 0.0, %v5903
        %v5905 = vpop.f32.mrf.mxu0
        %v5906 = vadd.f32 0.0, %v5905
        %5907 = vmatmul.bf16.gmra.mxu0 %v5822
        %v5908 = vpop.f32.mrf.mxu0
        %v5909 = vadd.f32 0.0, %v5908
        %v5910 = vpop.f32.mrf.mxu0
        %v5911 = vadd.f32 0.0, %v5910
        %5912 = vmatmul.bf16.gmra.mxu0 %v5823
        %v5913 = vpop.f32.mrf.mxu0
        %v5914 = vadd.f32 0.0, %v5913
        %v5915 = vpop.f32.mrf.mxu0
        %v5916 = vadd.f32 0.0, %v5915
        %5917 = vmatmul.bf16.gmra.mxu0 %v5824
        %v5918 = vpop.f32.mrf.mxu0
        %v5919 = vadd.f32 0.0, %v5918
        %v5920 = vpop.f32.mrf.mxu0
        %v5921 = vadd.f32 0.0, %v5920
        %5922 = vmatmul.bf16.gmra.mxu0 %v5825
        %v5923 = vpop.f32.mrf.mxu0
        %v5924 = vadd.f32 0.0, %v5923
        %v5925 = vpop.f32.mrf.mxu0
        %v5926 = vadd.f32 0.0, %v5925
        %5927 = vmatmul.bf16.gmra.mxu0 %v5826
        %v5928 = vpop.f32.mrf.mxu0
        %v5929 = vadd.f32 0.0, %v5928
        %v5930 = vpop.f32.mrf.mxu0
        %v5931 = vadd.f32 0.0, %v5930
        %5932 = vmatmul.bf16.gmra.mxu0 %v5827
        %v5933 = vpop.f32.mrf.mxu0
        %v5934 = vadd.f32 0.0, %v5933
        %v5935 = vpop.f32.mrf.mxu0
        %v5936 = vadd.f32 0.0, %v5935
        %5937 = vmatmul.bf16.gmra.mxu0 %v5828
        %v5938 = vpop.f32.mrf.mxu0
        %v5939 = vadd.f32 0.0, %v5938
        %v5940 = vpop.f32.mrf.mxu0
        %v5941 = vadd.f32 0.0, %v5940
        %5942 = vdwg.mxu0
        %v5943 = vpack.c.bf16 %v5904, %v5904
        %v5944 = vpack.c.bf16 %v5906, %v5906
        %v5945 = vpack.c.bf16 %v5909, %v5909
        %v5946 = vpack.c.bf16 %v5911, %v5911
        %v5947 = vpack.c.bf16 %v5914, %v5914
        %v5948 = vpack.c.bf16 %v5916, %v5916
        %v5949 = vpack.c.bf16 %v5919, %v5919
        %v5950 = vpack.c.bf16 %v5921, %v5921
        %v5951 = vpack.c.bf16 %v5924, %v5924
        %v5952 = vpack.c.bf16 %v5926, %v5926
        %v5953 = vpack.c.bf16 %v5929, %v5929
        %v5954 = vpack.c.bf16 %v5931, %v5931
        %v5955 = vpack.c.bf16 %v5934, %v5934
        %v5956 = vpack.c.bf16 %v5936, %v5936
        %v5957 = vpack.c.bf16 %v5939, %v5939
        %v5958 = vpack.c.bf16 %v5941, %v5941
        %v5960 = vpack.i.b16 %v5845, %v5845
        %v5962 = vperm.slane %v5960, 0
        %v5963 = vunpack.c.l.bf16 %v5943
        %v5964 = vunpack.c.l.bf16 %v5944
        %v5965 = vunpack.c.l.bf16 %v5945
        %v5966 = vunpack.c.l.bf16 %v5946
        %v5967 = vunpack.c.l.bf16 %v5947
        %v5968 = vunpack.c.l.bf16 %v5948
        %v5969 = vunpack.c.l.bf16 %v5949
        %v5970 = vunpack.c.l.bf16 %v5950
        %v5971 = vunpack.c.l.bf16 %v5951
        %v5972 = vunpack.c.l.bf16 %v5952
        %v5973 = vunpack.c.l.bf16 %v5953
        %v5974 = vunpack.c.l.bf16 %v5954
        %v5975 = vunpack.c.l.bf16 %v5955
        %v5976 = vunpack.c.l.bf16 %v5956
        %v5977 = vunpack.c.l.bf16 %v5957
        %v5978 = vunpack.c.l.bf16 %v5958
        %v5979 = vunpack.c.l.bf16 %v5962
        %v5980 = vadd.f32 %v5963, %v5979
        %v5981 = vadd.f32 %v5964, %v5979
        %v5982 = vadd.f32 %v5965, %v5979
        %v5983 = vadd.f32 %v5966, %v5979
        %v5984 = vadd.f32 %v5967, %v5979
        %v5985 = vadd.f32 %v5968, %v5979
        %v5986 = vadd.f32 %v5969, %v5979
        %v5987 = vadd.f32 %v5970, %v5979
        %v5988 = vadd.f32 %v5971, %v5979
        %v5989 = vadd.f32 %v5972, %v5979
        %v5990 = vadd.f32 %v5973, %v5979
        %v5991 = vadd.f32 %v5974, %v5979
        %v5992 = vadd.f32 %v5975, %v5979
        %v5993 = vadd.f32 %v5976, %v5979
        %v5994 = vadd.f32 %v5977, %v5979
        %v5995 = vadd.f32 %v5978, %v5979
        %v5996 = vpack.c.bf16 %v5980, %v5980
        %v5997 = vpack.c.bf16 %v5981, %v5981
        %v5998 = vpack.c.bf16 %v5982, %v5982
        %v5999 = vpack.c.bf16 %v5983, %v5983
        %v6000 = vpack.c.bf16 %v5984, %v5984
        %v6001 = vpack.c.bf16 %v5985, %v5985
        %v6002 = vpack.c.bf16 %v5986, %v5986
        %v6003 = vpack.c.bf16 %v5987, %v5987
        %v6004 = vpack.c.bf16 %v5988, %v5988
        %v6005 = vpack.c.bf16 %v5989, %v5989
        %v6006 = vpack.c.bf16 %v5990, %v5990
        %v6007 = vpack.c.bf16 %v5991, %v5991
        %v6008 = vpack.c.bf16 %v5992, %v5992
        %v6009 = vpack.c.bf16 %v5993, %v5993
        %v6010 = vpack.c.bf16 %v5994, %v5994
        %v6011 = vpack.c.bf16 %v5995, %v5995
        %v6012 = vunpack.c.l.bf16 %v5996
        %v6013 = vunpack.c.l.bf16 %v5997
        %v6014 = vunpack.c.l.bf16 %v5998
        %v6015 = vunpack.c.l.bf16 %v5999
        %v6016 = vunpack.c.l.bf16 %v6000
        %v6017 = vunpack.c.l.bf16 %v6001
        %v6018 = vunpack.c.l.bf16 %v6002
        %v6019 = vunpack.c.l.bf16 %v6003
        %v6020 = vunpack.c.l.bf16 %v6004
        %v6021 = vunpack.c.l.bf16 %v6005
        %v6022 = vunpack.c.l.bf16 %v6006
        %v6023 = vunpack.c.l.bf16 %v6007
        %v6024 = vunpack.c.l.bf16 %v6008
        %v6025 = vunpack.c.l.bf16 %v6009
        %v6026 = vunpack.c.l.bf16 %v6010
        %v6027 = vunpack.c.l.bf16 %v6011
        %v6028 = vmax.f32 %v6012, 0.0
        %v6029 = vmax.f32 %v6013, 0.0
        %v6030 = vmax.f32 %v6014, 0.0
        %v6031 = vmax.f32 %v6015, 0.0
        %v6032 = vmax.f32 %v6016, 0.0
        %v6033 = vmax.f32 %v6017, 0.0
        %v6034 = vmax.f32 %v6018, 0.0
        %v6035 = vmax.f32 %v6019, 0.0
        %v6036 = vmax.f32 %v6020, 0.0
        %v6037 = vmax.f32 %v6021, 0.0
        %v6038 = vmax.f32 %v6022, 0.0
        %v6039 = vmax.f32 %v6023, 0.0
        %v6040 = vmax.f32 %v6024, 0.0
        %v6041 = vmax.f32 %v6025, 0.0
        %v6042 = vmax.f32 %v6026, 0.0
        %v6043 = vmax.f32 %v6027, 0.0
        %v6044 = vpack.c.bf16 %v6029, %v6028
        %v6045 = vpack.c.bf16 %v6031, %v6030
        %v6046 = vpack.c.bf16 %v6033, %v6032
        %v6047 = vpack.c.bf16 %v6035, %v6034
        %v6048 = vpack.c.bf16 %v6037, %v6036
        %v6049 = vpack.c.bf16 %v6039, %v6038
        %v6050 = vpack.c.bf16 %v6041, %v6040
        %v6051 = vpack.c.bf16 %v6043, %v6042
        %v6052 = vld [vmem:[#allocation19] sm:$0xf]
        %v6053 = vld [vmem:[#allocation19 + $0x4] sm:$0xf]
        %v6054 = vld [vmem:[#allocation19 + $0x8] sm:$0xf]
        %v6055 = vld [vmem:[#allocation19 + $0xc] sm:$0xf]
        %v6056 = vld [vmem:[#allocation19 + $0x10] sm:$0xf]
        %v6057 = vld [vmem:[#allocation19 + $0x14] sm:$0xf]
        %v6058 = vld [vmem:[#allocation19 + $0x18] sm:$0xf]
        %v6059 = vld [vmem:[#allocation19 + $0x1c] sm:$0xf]
        %v6060 = vld [vmem:[#allocation19 + $0x20] sm:$0xf]
        %v6061 = vld [vmem:[#allocation19 + $0x24] sm:$0xf]
        %v6062 = vld [vmem:[#allocation19 + $0x28] sm:$0xf]
        %v6063 = vld [vmem:[#allocation19 + $0x2c] sm:$0xf]
        %v6064 = vld [vmem:[#allocation19 + $0x30] sm:$0xf]
        %v6065 = vld [vmem:[#allocation19 + $0x34] sm:$0xf]
        %v6066 = vld [vmem:[#allocation19 + $0x38] sm:$0xf]
        %v6067 = vld [vmem:[#allocation19 + $0x3c] sm:$0xf]
        %v6068 = vld [vmem:[#allocation20] sm:$0x1]
        %v6085 = vunpack.c.l.b16 %v6052
        %v6086 = vunpack.c.l.b16 %v6053
        %v6087 = vunpack.c.l.b16 %v6054
        %v6088 = vunpack.c.l.b16 %v6055
        %v6089 = vunpack.c.l.b16 %v6056
        %v6090 = vunpack.c.l.b16 %v6057
        %v6091 = vunpack.c.l.b16 %v6058
        %v6092 = vunpack.c.l.b16 %v6059
        %v6093 = vunpack.c.l.b16 %v6060
        %v6094 = vunpack.c.l.b16 %v6061
        %v6095 = vunpack.c.l.b16 %v6062
        %v6096 = vunpack.c.l.b16 %v6063
        %v6097 = vunpack.c.l.b16 %v6064
        %v6098 = vunpack.c.l.b16 %v6065
        %v6099 = vunpack.c.l.b16 %v6066
        %v6100 = vunpack.c.l.b16 %v6067
        %v6101 = vpack.c.b16 %v6086, %v6085
        %v6102 = vpack.c.b16 %v6088, %v6087
        %v6103 = vpack.c.b16 %v6090, %v6089
        %v6104 = vpack.c.b16 %v6092, %v6091
        %v6105 = vpack.c.b16 %v6094, %v6093
        %v6106 = vpack.c.b16 %v6096, %v6095
        %v6107 = vpack.c.b16 %v6098, %v6097
        %v6108 = vpack.c.b16 %v6100, %v6099
        %6117 = vmatpush.bf16.msra.mxu0 %v6108
        %6118 = vmatpush.bf16.msra.mxu0 %v6107
        %6119 = vmatpush.bf16.msra.mxu0 %v6106
        %6120 = vmatpush.bf16.msra.mxu0 %v6105
        %6121 = vmatpush.bf16.msra.mxu0 %v6104
        %6122 = vmatpush.bf16.msra.mxu0 %v6103
        %6123 = vmatpush.bf16.msra.mxu0 %v6102
        %6124 = vmatpush.bf16.msra.mxu0 %v6101
        %6125 = vmatmul.bf16.gmra.mxu0 %v6044
        %v6126 = vpop.f32.mrf.mxu0
        %v6127 = vadd.f32 0.0, %v6126
        %v6128 = vpop.f32.mrf.mxu0
        %v6129 = vadd.f32 0.0, %v6128
        %6130 = vmatmul.bf16.gmra.mxu0 %v6045
        %v6131 = vpop.f32.mrf.mxu0
        %v6132 = vadd.f32 0.0, %v6131
        %v6133 = vpop.f32.mrf.mxu0
        %v6134 = vadd.f32 0.0, %v6133
        %6135 = vmatmul.bf16.gmra.mxu0 %v6046
        %v6136 = vpop.f32.mrf.mxu0
        %v6137 = vadd.f32 0.0, %v6136
        %v6138 = vpop.f32.mrf.mxu0
        %v6139 = vadd.f32 0.0, %v6138
        %6140 = vmatmul.bf16.gmra.mxu0 %v6047
        %v6141 = vpop.f32.mrf.mxu0
        %v6142 = vadd.f32 0.0, %v6141
        %v6143 = vpop.f32.mrf.mxu0
        %v6144 = vadd.f32 0.0, %v6143
        %6145 = vmatmul.bf16.gmra.mxu0 %v6048
        %v6146 = vpop.f32.mrf.mxu0
        %v6147 = vadd.f32 0.0, %v6146
        %v6148 = vpop.f32.mrf.mxu0
        %v6149 = vadd.f32 0.0, %v6148
        %6150 = vmatmul.bf16.gmra.mxu0 %v6049
        %v6151 = vpop.f32.mrf.mxu0
        %v6152 = vadd.f32 0.0, %v6151
        %v6153 = vpop.f32.mrf.mxu0
        %v6154 = vadd.f32 0.0, %v6153
        %6155 = vmatmul.bf16.gmra.mxu0 %v6050
        %v6156 = vpop.f32.mrf.mxu0
        %v6157 = vadd.f32 0.0, %v6156
        %v6158 = vpop.f32.mrf.mxu0
        %v6159 = vadd.f32 0.0, %v6158
        %6160 = vmatmul.bf16.gmra.mxu0 %v6051
        %v6161 = vpop.f32.mrf.mxu0
        %v6162 = vadd.f32 0.0, %v6161
        %v6163 = vpop.f32.mrf.mxu0
        %v6164 = vadd.f32 0.0, %v6163
        %6165 = vdwg.mxu0
        %v6166 = vpack.c.bf16 %v6127, %v6127
        %v6167 = vpack.c.bf16 %v6129, %v6129
        %v6168 = vpack.c.bf16 %v6132, %v6132
        %v6169 = vpack.c.bf16 %v6134, %v6134
        %v6170 = vpack.c.bf16 %v6137, %v6137
        %v6171 = vpack.c.bf16 %v6139, %v6139
        %v6172 = vpack.c.bf16 %v6142, %v6142
        %v6173 = vpack.c.bf16 %v6144, %v6144
        %v6174 = vpack.c.bf16 %v6147, %v6147
        %v6175 = vpack.c.bf16 %v6149, %v6149
        %v6176 = vpack.c.bf16 %v6152, %v6152
        %v6177 = vpack.c.bf16 %v6154, %v6154
        %v6178 = vpack.c.bf16 %v6157, %v6157
        %v6179 = vpack.c.bf16 %v6159, %v6159
        %v6180 = vpack.c.bf16 %v6162, %v6162
        %v6181 = vpack.c.bf16 %v6164, %v6164
        %v6183 = vpack.i.b16 %v6068, %v6068
        %v6185 = vperm.slane %v6183, 0
        %v6186 = vunpack.c.l.bf16 %v6166
        %v6187 = vunpack.c.l.bf16 %v6167
        %v6188 = vunpack.c.l.bf16 %v6168
        %v6189 = vunpack.c.l.bf16 %v6169
        %v6190 = vunpack.c.l.bf16 %v6170
        %v6191 = vunpack.c.l.bf16 %v6171
        %v6192 = vunpack.c.l.bf16 %v6172
        %v6193 = vunpack.c.l.bf16 %v6173
        %v6194 = vunpack.c.l.bf16 %v6174
        %v6195 = vunpack.c.l.bf16 %v6175
        %v6196 = vunpack.c.l.bf16 %v6176
        %v6197 = vunpack.c.l.bf16 %v6177
        %v6198 = vunpack.c.l.bf16 %v6178
        %v6199 = vunpack.c.l.bf16 %v6179
        %v6200 = vunpack.c.l.bf16 %v6180
        %v6201 = vunpack.c.l.bf16 %v6181
        %v6202 = vunpack.c.l.bf16 %v6185
        %v6203 = vadd.f32 %v6186, %v6202
        %v6204 = vadd.f32 %v6187, %v6202
        %v6205 = vadd.f32 %v6188, %v6202
        %v6206 = vadd.f32 %v6189, %v6202
        %v6207 = vadd.f32 %v6190, %v6202
        %v6208 = vadd.f32 %v6191, %v6202
        %v6209 = vadd.f32 %v6192, %v6202
        %v6210 = vadd.f32 %v6193, %v6202
        %v6211 = vadd.f32 %v6194, %v6202
        %v6212 = vadd.f32 %v6195, %v6202
        %v6213 = vadd.f32 %v6196, %v6202
        %v6214 = vadd.f32 %v6197, %v6202
        %v6215 = vadd.f32 %v6198, %v6202
        %v6216 = vadd.f32 %v6199, %v6202
        %v6217 = vadd.f32 %v6200, %v6202
        %v6218 = vadd.f32 %v6201, %v6202
        %v6219 = vpack.c.bf16 %v6203, %v6203
        %v6220 = vpack.c.bf16 %v6204, %v6204
        %v6221 = vpack.c.bf16 %v6205, %v6205
        %v6222 = vpack.c.bf16 %v6206, %v6206
        %v6223 = vpack.c.bf16 %v6207, %v6207
        %v6224 = vpack.c.bf16 %v6208, %v6208
        %v6225 = vpack.c.bf16 %v6209, %v6209
        %v6226 = vpack.c.bf16 %v6210, %v6210
        %v6227 = vpack.c.bf16 %v6211, %v6211
        %v6228 = vpack.c.bf16 %v6212, %v6212
        %v6229 = vpack.c.bf16 %v6213, %v6213
        %v6230 = vpack.c.bf16 %v6214, %v6214
        %v6231 = vpack.c.bf16 %v6215, %v6215
        %v6232 = vpack.c.bf16 %v6216, %v6216
        %v6233 = vpack.c.bf16 %v6217, %v6217
        %v6234 = vpack.c.bf16 %v6218, %v6218
        %v6235 = vunpack.c.l.bf16 %v6219
        %v6236 = vunpack.c.l.bf16 %v6220
        %v6237 = vunpack.c.l.bf16 %v6221
        %v6238 = vunpack.c.l.bf16 %v6222
        %v6239 = vunpack.c.l.bf16 %v6223
        %v6240 = vunpack.c.l.bf16 %v6224
        %v6241 = vunpack.c.l.bf16 %v6225
        %v6242 = vunpack.c.l.bf16 %v6226
        %v6243 = vunpack.c.l.bf16 %v6227
        %v6244 = vunpack.c.l.bf16 %v6228
        %v6245 = vunpack.c.l.bf16 %v6229
        %v6246 = vunpack.c.l.bf16 %v6230
        %v6247 = vunpack.c.l.bf16 %v6231
        %v6248 = vunpack.c.l.bf16 %v6232
        %v6249 = vunpack.c.l.bf16 %v6233
        %v6250 = vunpack.c.l.bf16 %v6234
        %v6251 = vmax.f32 %v6235, 0.0
        %v6252 = vmax.f32 %v6236, 0.0
        %v6253 = vmax.f32 %v6237, 0.0
        %v6254 = vmax.f32 %v6238, 0.0
        %v6255 = vmax.f32 %v6239, 0.0
        %v6256 = vmax.f32 %v6240, 0.0
        %v6257 = vmax.f32 %v6241, 0.0
        %v6258 = vmax.f32 %v6242, 0.0
        %v6259 = vmax.f32 %v6243, 0.0
        %v6260 = vmax.f32 %v6244, 0.0
        %v6261 = vmax.f32 %v6245, 0.0
        %v6262 = vmax.f32 %v6246, 0.0
        %v6263 = vmax.f32 %v6247, 0.0
        %v6264 = vmax.f32 %v6248, 0.0
        %v6265 = vmax.f32 %v6249, 0.0
        %v6266 = vmax.f32 %v6250, 0.0
        %v6267 = vpack.c.bf16 %v6252, %v6251
        %v6268 = vpack.c.bf16 %v6254, %v6253
        %v6269 = vpack.c.bf16 %v6256, %v6255
        %v6270 = vpack.c.bf16 %v6258, %v6257
        %v6271 = vpack.c.bf16 %v6260, %v6259
        %v6272 = vpack.c.bf16 %v6262, %v6261
        %v6273 = vpack.c.bf16 %v6264, %v6263
        %v6274 = vpack.c.bf16 %v6266, %v6265
        %v6275 = vld [vmem:[#allocation22] sm:$0xff]
        %v6276 = vld [vmem:[#allocation22 + $0x8] sm:$0xff]
        %v6277 = vld [vmem:[#allocation22 + $0x10] sm:$0xff]
        %v6278 = vld [vmem:[#allocation22 + $0x18] sm:$0xff]
        %v6279 = vld [vmem:[#allocation22 + $0x20] sm:$0xff]
        %v6280 = vld [vmem:[#allocation22 + $0x28] sm:$0xff]
        %v6281 = vld [vmem:[#allocation22 + $0x30] sm:$0xff]
        %v6282 = vld [vmem:[#allocation22 + $0x38] sm:$0xff]
        %v6283 = vld [vmem:[#allocation22 + $0x40] sm:$0xff]
        %v6284 = vld [vmem:[#allocation22 + $0x48] sm:$0xff]
        %v6285 = vld [vmem:[#allocation22 + $0x50] sm:$0xff]
        %v6286 = vld [vmem:[#allocation22 + $0x58] sm:$0xff]
        %v6287 = vld [vmem:[#allocation22 + $0x60] sm:$0xff]
        %v6288 = vld [vmem:[#allocation22 + $0x68] sm:$0xff]
        %v6289 = vld [vmem:[#allocation22 + $0x70] sm:$0xff]
        %v6290 = vld [vmem:[#allocation22 + $0x78] sm:$0xff]
        %v6291 = vld [vmem:[#allocation23] sm:$0x3]
        %v6308 = vunpack.c.l.b16 %v6275
        %v6309 = vunpack.c.h.b16 %v6275
        %v6310 = vunpack.c.l.b16 %v6276
        %v6311 = vunpack.c.h.b16 %v6276
        %v6312 = vunpack.c.l.b16 %v6277
        %v6313 = vunpack.c.h.b16 %v6277
        %v6314 = vunpack.c.l.b16 %v6278
        %v6315 = vunpack.c.h.b16 %v6278
        %v6316 = vunpack.c.l.b16 %v6279
        %v6317 = vunpack.c.h.b16 %v6279
        %v6318 = vunpack.c.l.b16 %v6280
        %v6319 = vunpack.c.h.b16 %v6280
        %v6320 = vunpack.c.l.b16 %v6281
        %v6321 = vunpack.c.h.b16 %v6281
        %v6322 = vunpack.c.l.b16 %v6282
        %v6323 = vunpack.c.h.b16 %v6282
        %v6324 = vunpack.c.l.b16 %v6283
        %v6325 = vunpack.c.h.b16 %v6283
        %v6326 = vunpack.c.l.b16 %v6284
        %v6327 = vunpack.c.h.b16 %v6284
        %v6328 = vunpack.c.l.b16 %v6285
        %v6329 = vunpack.c.h.b16 %v6285
        %v6330 = vunpack.c.l.b16 %v6286
        %v6331 = vunpack.c.h.b16 %v6286
        %v6332 = vunpack.c.l.b16 %v6287
        %v6333 = vunpack.c.h.b16 %v6287
        %v6334 = vunpack.c.l.b16 %v6288
        %v6335 = vunpack.c.h.b16 %v6288
        %v6336 = vunpack.c.l.b16 %v6289
        %v6337 = vunpack.c.h.b16 %v6289
        %v6338 = vunpack.c.l.b16 %v6290
        %v6339 = vunpack.c.h.b16 %v6290
        %v6340 = vpack.c.b16 %v6310, %v6308
        %v6341 = vpack.c.b16 %v6311, %v6309
        %v6342 = vpack.c.b16 %v6314, %v6312
        %v6343 = vpack.c.b16 %v6315, %v6313
        %v6344 = vpack.c.b16 %v6318, %v6316
        %v6345 = vpack.c.b16 %v6319, %v6317
        %v6346 = vpack.c.b16 %v6322, %v6320
        %v6347 = vpack.c.b16 %v6323, %v6321
        %v6348 = vpack.c.b16 %v6326, %v6324
        %v6349 = vpack.c.b16 %v6327, %v6325
        %v6350 = vpack.c.b16 %v6330, %v6328
        %v6351 = vpack.c.b16 %v6331, %v6329
        %v6352 = vpack.c.b16 %v6334, %v6332
        %v6353 = vpack.c.b16 %v6335, %v6333
        %v6354 = vpack.c.b16 %v6338, %v6336
        %v6355 = vpack.c.b16 %v6339, %v6337
        %6372 = vmatpush.bf16.msra.mxu0 %v6354
        %6373 = vmatpush.bf16.msra.mxu0 %v6352
        %6374 = vmatpush.bf16.msra.mxu0 %v6350
        %6375 = vmatpush.bf16.msra.mxu0 %v6348
        %6376 = vmatpush.bf16.msra.mxu0 %v6346
        %6377 = vmatpush.bf16.msra.mxu0 %v6344
        %6378 = vmatpush.bf16.msra.mxu0 %v6342
        %6379 = vmatpush.bf16.msra.mxu0 %v6340
        %6380 = vmatmul.bf16.gmra.mxu0 %v6267
        %v6381 = vpop.f32.mrf.mxu0
        %v6382 = vadd.f32 0.0, %v6381
        %v6383 = vpop.f32.mrf.mxu0
        %v6384 = vadd.f32 0.0, %v6383
        %6385 = vmatmul.bf16.gmra.mxu0 %v6268
        %v6386 = vpop.f32.mrf.mxu0
        %v6387 = vadd.f32 0.0, %v6386
        %v6388 = vpop.f32.mrf.mxu0
        %v6389 = vadd.f32 0.0, %v6388
        %6390 = vmatmul.bf16.gmra.mxu0 %v6269
        %v6391 = vpop.f32.mrf.mxu0
        %v6392 = vadd.f32 0.0, %v6391
        %v6393 = vpop.f32.mrf.mxu0
        %v6394 = vadd.f32 0.0, %v6393
        %6395 = vmatmul.bf16.gmra.mxu0 %v6270
        %v6396 = vpop.f32.mrf.mxu0
        %v6397 = vadd.f32 0.0, %v6396
        %v6398 = vpop.f32.mrf.mxu0
        %v6399 = vadd.f32 0.0, %v6398
        %6400 = vmatmul.bf16.gmra.mxu0 %v6271
        %v6401 = vpop.f32.mrf.mxu0
        %v6402 = vadd.f32 0.0, %v6401
        %v6403 = vpop.f32.mrf.mxu0
        %v6404 = vadd.f32 0.0, %v6403
        %6405 = vmatmul.bf16.gmra.mxu0 %v6272
        %v6406 = vpop.f32.mrf.mxu0
        %v6407 = vadd.f32 0.0, %v6406
        %v6408 = vpop.f32.mrf.mxu0
        %v6409 = vadd.f32 0.0, %v6408
        %6410 = vmatmul.bf16.gmra.mxu0 %v6273
        %v6411 = vpop.f32.mrf.mxu0
        %v6412 = vadd.f32 0.0, %v6411
        %v6413 = vpop.f32.mrf.mxu0
        %v6414 = vadd.f32 0.0, %v6413
        %6415 = vmatmul.bf16.gmra.mxu0 %v6274
        %v6416 = vpop.f32.mrf.mxu0
        %v6417 = vadd.f32 0.0, %v6416
        %v6418 = vpop.f32.mrf.mxu0
        %v6419 = vadd.f32 0.0, %v6418
        %6420 = vdwg.mxu0
        %6421 = vmatpush.bf16.msra.mxu0 %v6355
        %6422 = vmatpush.bf16.msra.mxu0 %v6353
        %6423 = vmatpush.bf16.msra.mxu0 %v6351
        %6424 = vmatpush.bf16.msra.mxu0 %v6349
        %6425 = vmatpush.bf16.msra.mxu0 %v6347
        %6426 = vmatpush.bf16.msra.mxu0 %v6345
        %6427 = vmatpush.bf16.msra.mxu0 %v6343
        %6428 = vmatpush.bf16.msra.mxu0 %v6341
        %6429 = vmatmul.bf16.gmra.mxu0 %v6267
        %v6430 = vpop.f32.mrf.mxu0
        %v6431 = vadd.f32 0.0, %v6430
        %v6432 = vpop.f32.mrf.mxu0
        %v6433 = vadd.f32 0.0, %v6432
        %6434 = vmatmul.bf16.gmra.mxu0 %v6268
        %v6435 = vpop.f32.mrf.mxu0
        %v6436 = vadd.f32 0.0, %v6435
        %v6437 = vpop.f32.mrf.mxu0
        %v6438 = vadd.f32 0.0, %v6437
        %6439 = vmatmul.bf16.gmra.mxu0 %v6269
        %v6440 = vpop.f32.mrf.mxu0
        %v6441 = vadd.f32 0.0, %v6440
        %v6442 = vpop.f32.mrf.mxu0
        %v6443 = vadd.f32 0.0, %v6442
        %6444 = vmatmul.bf16.gmra.mxu0 %v6270
        %v6445 = vpop.f32.mrf.mxu0
        %v6446 = vadd.f32 0.0, %v6445
        %v6447 = vpop.f32.mrf.mxu0
        %v6448 = vadd.f32 0.0, %v6447
        %6449 = vmatmul.bf16.gmra.mxu0 %v6271
        %v6450 = vpop.f32.mrf.mxu0
        %v6451 = vadd.f32 0.0, %v6450
        %v6452 = vpop.f32.mrf.mxu0
        %v6453 = vadd.f32 0.0, %v6452
        %6454 = vmatmul.bf16.gmra.mxu0 %v6272
        %v6455 = vpop.f32.mrf.mxu0
        %v6456 = vadd.f32 0.0, %v6455
        %v6457 = vpop.f32.mrf.mxu0
        %v6458 = vadd.f32 0.0, %v6457
        %6459 = vmatmul.bf16.gmra.mxu0 %v6273
        %v6460 = vpop.f32.mrf.mxu0
        %v6461 = vadd.f32 0.0, %v6460
        %v6462 = vpop.f32.mrf.mxu0
        %v6463 = vadd.f32 0.0, %v6462
        %6464 = vmatmul.bf16.gmra.mxu0 %v6274
        %v6465 = vpop.f32.mrf.mxu0
        %v6466 = vadd.f32 0.0, %v6465
        %v6467 = vpop.f32.mrf.mxu0
        %v6468 = vadd.f32 0.0, %v6467
        %6469 = vdwg.mxu0
        %v6470 = vpack.c.bf16 %v6431, %v6382
        %v6471 = vpack.c.bf16 %v6433, %v6384
        %v6472 = vpack.c.bf16 %v6436, %v6387
        %v6473 = vpack.c.bf16 %v6438, %v6389
        %v6474 = vpack.c.bf16 %v6441, %v6392
        %v6475 = vpack.c.bf16 %v6443, %v6394
        %v6476 = vpack.c.bf16 %v6446, %v6397
        %v6477 = vpack.c.bf16 %v6448, %v6399
        %v6478 = vpack.c.bf16 %v6451, %v6402
        %v6479 = vpack.c.bf16 %v6453, %v6404
        %v6480 = vpack.c.bf16 %v6456, %v6407
        %v6481 = vpack.c.bf16 %v6458, %v6409
        %v6482 = vpack.c.bf16 %v6461, %v6412
        %v6483 = vpack.c.bf16 %v6463, %v6414
        %v6484 = vpack.c.bf16 %v6466, %v6417
        %v6485 = vpack.c.bf16 %v6468, %v6419
        %6487 = vst [vmem:[#allocation1] ss:$9 sm:$0xff] %v6291
        %v6488 = vld [vmem:[#allocation1] sm:$0xff]
        %v6489 = vld [vmem:[#allocation1 + $0x9] sm:$0xff]
        %v6490 = vpack.i.b16 %v6488, %v6488
        %v6492 = vperm.slane %v6490, 0
        %v6493 = vpack.i.b16 %v6489, %v6489
        %v6495 = vperm.slane %v6493, 0
        %v6496 = vunpack.c.l.bf16 %v6470
        %v6497 = vunpack.c.h.bf16 %v6470
        %v6498 = vunpack.c.l.bf16 %v6471
        %v6499 = vunpack.c.h.bf16 %v6471
        %v6500 = vunpack.c.l.bf16 %v6472
        %v6501 = vunpack.c.h.bf16 %v6472
        %v6502 = vunpack.c.l.bf16 %v6473
        %v6503 = vunpack.c.h.bf16 %v6473
        %v6504 = vunpack.c.l.bf16 %v6474
        %v6505 = vunpack.c.h.bf16 %v6474
        %v6506 = vunpack.c.l.bf16 %v6475
        %v6507 = vunpack.c.h.bf16 %v6475
        %v6508 = vunpack.c.l.bf16 %v6476
        %v6509 = vunpack.c.h.bf16 %v6476
        %v6510 = vunpack.c.l.bf16 %v6477
        %v6511 = vunpack.c.h.bf16 %v6477
        %v6512 = vunpack.c.l.bf16 %v6478
        %v6513 = vunpack.c.h.bf16 %v6478
        %v6514 = vunpack.c.l.bf16 %v6479
        %v6515 = vunpack.c.h.bf16 %v6479
        %v6516 = vunpack.c.l.bf16 %v6480
        %v6517 = vunpack.c.h.bf16 %v6480
        %v6518 = vunpack.c.l.bf16 %v6481
        %v6519 = vunpack.c.h.bf16 %v6481
        %v6520 = vunpack.c.l.bf16 %v6482
        %v6521 = vunpack.c.h.bf16 %v6482
        %v6522 = vunpack.c.l.bf16 %v6483
        %v6523 = vunpack.c.h.bf16 %v6483
        %v6524 = vunpack.c.l.bf16 %v6484
        %v6525 = vunpack.c.h.bf16 %v6484
        %v6526 = vunpack.c.l.bf16 %v6485
        %v6527 = vunpack.c.h.bf16 %v6485
        %v6528 = vunpack.c.l.bf16 %v6492
        %v6529 = vunpack.c.l.bf16 %v6495
        %v6530 = vadd.f32 %v6496, %v6528
        %v6531 = vadd.f32 %v6497, %v6529
        %v6532 = vadd.f32 %v6498, %v6528
        %v6533 = vadd.f32 %v6499, %v6529
        %v6534 = vadd.f32 %v6500, %v6528
        %v6535 = vadd.f32 %v6501, %v6529
        %v6536 = vadd.f32 %v6502, %v6528
        %v6537 = vadd.f32 %v6503, %v6529
        %v6538 = vadd.f32 %v6504, %v6528
        %v6539 = vadd.f32 %v6505, %v6529
        %v6540 = vadd.f32 %v6506, %v6528
        %v6541 = vadd.f32 %v6507, %v6529
        %v6542 = vadd.f32 %v6508, %v6528
        %v6543 = vadd.f32 %v6509, %v6529
        %v6544 = vadd.f32 %v6510, %v6528
        %v6545 = vadd.f32 %v6511, %v6529
        %v6546 = vadd.f32 %v6512, %v6528
        %v6547 = vadd.f32 %v6513, %v6529
        %v6548 = vadd.f32 %v6514, %v6528
        %v6549 = vadd.f32 %v6515, %v6529
        %v6550 = vadd.f32 %v6516, %v6528
        %v6551 = vadd.f32 %v6517, %v6529
        %v6552 = vadd.f32 %v6518, %v6528
        %v6553 = vadd.f32 %v6519, %v6529
        %v6554 = vadd.f32 %v6520, %v6528
        %v6555 = vadd.f32 %v6521, %v6529
        %v6556 = vadd.f32 %v6522, %v6528
        %v6557 = vadd.f32 %v6523, %v6529
        %v6558 = vadd.f32 %v6524, %v6528
        %v6559 = vadd.f32 %v6525, %v6529
        %v6560 = vadd.f32 %v6526, %v6528
        %v6561 = vadd.f32 %v6527, %v6529
        %v6562 = vpack.c.bf16 %v6531, %v6530
        %v6563 = vpack.c.bf16 %v6533, %v6532
        %v6564 = vpack.c.bf16 %v6535, %v6534
        %v6565 = vpack.c.bf16 %v6537, %v6536
        %v6566 = vpack.c.bf16 %v6539, %v6538
        %v6567 = vpack.c.bf16 %v6541, %v6540
        %v6568 = vpack.c.bf16 %v6543, %v6542
        %v6569 = vpack.c.bf16 %v6545, %v6544
        %v6570 = vpack.c.bf16 %v6547, %v6546
        %v6571 = vpack.c.bf16 %v6549, %v6548
        %v6572 = vpack.c.bf16 %v6551, %v6550
        %v6573 = vpack.c.bf16 %v6553, %v6552
        %v6574 = vpack.c.bf16 %v6555, %v6554
        %v6575 = vpack.c.bf16 %v6557, %v6556
        %v6576 = vpack.c.bf16 %v6559, %v6558
        %v6577 = vpack.c.bf16 %v6561, %v6560
        %v6578 = vunpack.c.l.bf16 %v6562
        %v6579 = vunpack.c.h.bf16 %v6562
        %v6580 = vunpack.c.l.bf16 %v6563
        %v6581 = vunpack.c.h.bf16 %v6563
        %v6582 = vunpack.c.l.bf16 %v6564
        %v6583 = vunpack.c.h.bf16 %v6564
        %v6584 = vunpack.c.l.bf16 %v6565
        %v6585 = vunpack.c.h.bf16 %v6565
        %v6586 = vunpack.c.l.bf16 %v6566
        %v6587 = vunpack.c.h.bf16 %v6566
        %v6588 = vunpack.c.l.bf16 %v6567
        %v6589 = vunpack.c.h.bf16 %v6567
        %v6590 = vunpack.c.l.bf16 %v6568
        %v6591 = vunpack.c.h.bf16 %v6568
        %v6592 = vunpack.c.l.bf16 %v6569
        %v6593 = vunpack.c.h.bf16 %v6569
        %v6594 = vunpack.c.l.bf16 %v6570
        %v6595 = vunpack.c.h.bf16 %v6570
        %v6596 = vunpack.c.l.bf16 %v6571
        %v6597 = vunpack.c.h.bf16 %v6571
        %v6598 = vunpack.c.l.bf16 %v6572
        %v6599 = vunpack.c.h.bf16 %v6572
        %v6600 = vunpack.c.l.bf16 %v6573
        %v6601 = vunpack.c.h.bf16 %v6573
        %v6602 = vunpack.c.l.bf16 %v6574
        %v6603 = vunpack.c.h.bf16 %v6574
        %v6604 = vunpack.c.l.bf16 %v6575
        %v6605 = vunpack.c.h.bf16 %v6575
        %v6606 = vunpack.c.l.bf16 %v6576
        %v6607 = vunpack.c.h.bf16 %v6576
        %v6608 = vunpack.c.l.bf16 %v6577
        %v6609 = vunpack.c.h.bf16 %v6577
        %v6610 = vmax.f32 %v6578, 0.0
        %v6611 = vmax.f32 %v6579, 0.0
        %v6612 = vmax.f32 %v6580, 0.0
        %v6613 = vmax.f32 %v6581, 0.0
        %v6614 = vmax.f32 %v6582, 0.0
        %v6615 = vmax.f32 %v6583, 0.0
        %v6616 = vmax.f32 %v6584, 0.0
        %v6617 = vmax.f32 %v6585, 0.0
        %v6618 = vmax.f32 %v6586, 0.0
        %v6619 = vmax.f32 %v6587, 0.0
        %v6620 = vmax.f32 %v6588, 0.0
        %v6621 = vmax.f32 %v6589, 0.0
        %v6622 = vmax.f32 %v6590, 0.0
        %v6623 = vmax.f32 %v6591, 0.0
        %v6624 = vmax.f32 %v6592, 0.0
        %v6625 = vmax.f32 %v6593, 0.0
        %v6626 = vmax.f32 %v6594, 0.0
        %v6627 = vmax.f32 %v6595, 0.0
        %v6628 = vmax.f32 %v6596, 0.0
        %v6629 = vmax.f32 %v6597, 0.0
        %v6630 = vmax.f32 %v6598, 0.0
        %v6631 = vmax.f32 %v6599, 0.0
        %v6632 = vmax.f32 %v6600, 0.0
        %v6633 = vmax.f32 %v6601, 0.0
        %v6634 = vmax.f32 %v6602, 0.0
        %v6635 = vmax.f32 %v6603, 0.0
        %v6636 = vmax.f32 %v6604, 0.0
        %v6637 = vmax.f32 %v6605, 0.0
        %v6638 = vmax.f32 %v6606, 0.0
        %v6639 = vmax.f32 %v6607, 0.0
        %v6640 = vmax.f32 %v6608, 0.0
        %v6641 = vmax.f32 %v6609, 0.0
        %v6642 = vpack.c.bf16 %v6612, %v6610
        %v6643 = vpack.c.bf16 %v6613, %v6611
        %v6644 = vpack.c.bf16 %v6616, %v6614
        %v6645 = vpack.c.bf16 %v6617, %v6615
        %v6646 = vpack.c.bf16 %v6620, %v6618
        %v6647 = vpack.c.bf16 %v6621, %v6619
        %v6648 = vpack.c.bf16 %v6624, %v6622
        %v6649 = vpack.c.bf16 %v6625, %v6623
        %v6650 = vpack.c.bf16 %v6628, %v6626
        %v6651 = vpack.c.bf16 %v6629, %v6627
        %v6652 = vpack.c.bf16 %v6632, %v6630
        %v6653 = vpack.c.bf16 %v6633, %v6631
        %v6654 = vpack.c.bf16 %v6636, %v6634
        %v6655 = vpack.c.bf16 %v6637, %v6635
        %v6656 = vpack.c.bf16 %v6640, %v6638
        %v6657 = vpack.c.bf16 %v6641, %v6639
        %v6658 = vld [vmem:[#allocation25] sm:$0xff]
        %v6659 = vld [vmem:[#allocation25 + $0x8] sm:$0xff]
        %v6660 = vld [vmem:[#allocation25 + $0x10] sm:$0xff]
        %v6661 = vld [vmem:[#allocation25 + $0x18] sm:$0xff]
        %v6662 = vld [vmem:[#allocation25 + $0x20] sm:$0xff]
        %v6663 = vld [vmem:[#allocation25 + $0x28] sm:$0xff]
        %v6664 = vld [vmem:[#allocation25 + $0x30] sm:$0xff]
        %v6665 = vld [vmem:[#allocation25 + $0x38] sm:$0xff]
        %v6666 = vld [vmem:[#allocation25 + $0x40] sm:$0xff]
        %v6667 = vld [vmem:[#allocation25 + $0x48] sm:$0xff]
        %v6668 = vld [vmem:[#allocation25 + $0x50] sm:$0xff]
        %v6669 = vld [vmem:[#allocation25 + $0x58] sm:$0xff]
        %v6670 = vld [vmem:[#allocation25 + $0x60] sm:$0xff]
        %v6671 = vld [vmem:[#allocation25 + $0x68] sm:$0xff]
        %v6672 = vld [vmem:[#allocation25 + $0x70] sm:$0xff]
        %v6673 = vld [vmem:[#allocation25 + $0x78] sm:$0xff]
        %v6674 = vld [vmem:[#allocation25 + $0x80] sm:$0xff]
        %v6675 = vld [vmem:[#allocation25 + $0x88] sm:$0xff]
        %v6676 = vld [vmem:[#allocation25 + $0x90] sm:$0xff]
        %v6677 = vld [vmem:[#allocation25 + $0x98] sm:$0xff]
        %v6678 = vld [vmem:[#allocation25 + $0xa0] sm:$0xff]
        %v6679 = vld [vmem:[#allocation25 + $0xa8] sm:$0xff]
        %v6680 = vld [vmem:[#allocation25 + $0xb0] sm:$0xff]
        %v6681 = vld [vmem:[#allocation25 + $0xb8] sm:$0xff]
        %v6682 = vld [vmem:[#allocation25 + $0xc0] sm:$0xff]
        %v6683 = vld [vmem:[#allocation25 + $0xc8] sm:$0xff]
        %v6684 = vld [vmem:[#allocation25 + $0xd0] sm:$0xff]
        %v6685 = vld [vmem:[#allocation25 + $0xd8] sm:$0xff]
        %v6686 = vld [vmem:[#allocation25 + $0xe0] sm:$0xff]
        %v6687 = vld [vmem:[#allocation25 + $0xe8] sm:$0xff]
        %v6688 = vld [vmem:[#allocation25 + $0xf0] sm:$0xff]
        %v6689 = vld [vmem:[#allocation25 + $0xf8] sm:$0xff]
        %v6690 = vld [vmem:[#allocation25 + $0x100] sm:$0xff]
        %v6691 = vld [vmem:[#allocation25 + $0x108] sm:$0xff]
        %v6692 = vld [vmem:[#allocation25 + $0x110] sm:$0xff]
        %v6693 = vld [vmem:[#allocation25 + $0x118] sm:$0xff]
        %v6694 = vld [vmem:[#allocation25 + $0x120] sm:$0xff]
        %v6695 = vld [vmem:[#allocation25 + $0x128] sm:$0xff]
        %v6696 = vld [vmem:[#allocation25 + $0x130] sm:$0xff]
        %v6697 = vld [vmem:[#allocation25 + $0x138] sm:$0xff]
        %v6698 = vld [vmem:[#allocation25 + $0x140] sm:$0xff]
        %v6699 = vld [vmem:[#allocation25 + $0x148] sm:$0xff]
        %v6700 = vld [vmem:[#allocation25 + $0x150] sm:$0xff]
        %v6701 = vld [vmem:[#allocation25 + $0x158] sm:$0xff]
        %v6702 = vld [vmem:[#allocation25 + $0x160] sm:$0xff]
        %v6703 = vld [vmem:[#allocation25 + $0x168] sm:$0xff]
        %v6704 = vld [vmem:[#allocation25 + $0x170] sm:$0xff]
        %v6705 = vld [vmem:[#allocation25 + $0x178] sm:$0xff]
        %v6706 = vld [vmem:[#allocation25 + $0x180] sm:$0xff]
        %v6707 = vld [vmem:[#allocation25 + $0x188] sm:$0xff]
        %v6708 = vld [vmem:[#allocation25 + $0x190] sm:$0xff]
        %v6709 = vld [vmem:[#allocation25 + $0x198] sm:$0xff]
        %v6710 = vld [vmem:[#allocation25 + $0x1a0] sm:$0xff]
        %v6711 = vld [vmem:[#allocation25 + $0x1a8] sm:$0xff]
        %v6712 = vld [vmem:[#allocation25 + $0x1b0] sm:$0xff]
        %v6713 = vld [vmem:[#allocation25 + $0x1b8] sm:$0xff]
        %v6714 = vld [vmem:[#allocation25 + $0x1c0] sm:$0xff]
        %v6715 = vld [vmem:[#allocation25 + $0x1c8] sm:$0xff]
        %v6716 = vld [vmem:[#allocation25 + $0x1d0] sm:$0xff]
        %v6717 = vld [vmem:[#allocation25 + $0x1d8] sm:$0xff]
        %v6718 = vld [vmem:[#allocation25 + $0x1e0] sm:$0xff]
        %v6719 = vld [vmem:[#allocation25 + $0x1e8] sm:$0xff]
        %v6720 = vld [vmem:[#allocation25 + $0x1f0] sm:$0xff]
        %v6721 = vld [vmem:[#allocation25 + $0x1f8] sm:$0xff]
        %v6722 = vld [vmem:[%s16] sm:$0xf]
        %v6787 = vunpack.c.l.b16 %v6658
        %v6788 = vunpack.c.h.b16 %v6658
        %v6789 = vunpack.c.l.b16 %v6659
        %v6790 = vunpack.c.h.b16 %v6659
        %v6791 = vunpack.c.l.b16 %v6660
        %v6792 = vunpack.c.h.b16 %v6660
        %v6793 = vunpack.c.l.b16 %v6661
        %v6794 = vunpack.c.h.b16 %v6661
        %v6795 = vunpack.c.l.b16 %v6662
        %v6796 = vunpack.c.h.b16 %v6662
        %v6797 = vunpack.c.l.b16 %v6663
        %v6798 = vunpack.c.h.b16 %v6663
        %v6799 = vunpack.c.l.b16 %v6664
        %v6800 = vunpack.c.h.b16 %v6664
        %v6801 = vunpack.c.l.b16 %v6665
        %v6802 = vunpack.c.h.b16 %v6665
        %v6803 = vunpack.c.l.b16 %v6666
        %v6804 = vunpack.c.h.b16 %v6666
        %v6805 = vunpack.c.l.b16 %v6667
        %v6806 = vunpack.c.h.b16 %v6667
        %v6807 = vunpack.c.l.b16 %v6668
        %v6808 = vunpack.c.h.b16 %v6668
        %v6809 = vunpack.c.l.b16 %v6669
        %v6810 = vunpack.c.h.b16 %v6669
        %v6811 = vunpack.c.l.b16 %v6670
        %v6812 = vunpack.c.h.b16 %v6670
        %v6813 = vunpack.c.l.b16 %v6671
        %v6814 = vunpack.c.h.b16 %v6671
        %v6815 = vunpack.c.l.b16 %v6672
        %v6816 = vunpack.c.h.b16 %v6672
        %v6817 = vunpack.c.l.b16 %v6673
        %v6818 = vunpack.c.h.b16 %v6673
        %v6819 = vunpack.c.l.b16 %v6674
        %v6820 = vunpack.c.h.b16 %v6674
        %v6821 = vunpack.c.l.b16 %v6675
        %v6822 = vunpack.c.h.b16 %v6675
        %v6823 = vunpack.c.l.b16 %v6676
        %v6824 = vunpack.c.h.b16 %v6676
        %v6825 = vunpack.c.l.b16 %v6677
        %v6826 = vunpack.c.h.b16 %v6677
        %v6827 = vunpack.c.l.b16 %v6678
        %v6828 = vunpack.c.h.b16 %v6678
        %v6829 = vunpack.c.l.b16 %v6679
        %v6830 = vunpack.c.h.b16 %v6679
        %v6831 = vunpack.c.l.b16 %v6680
        %v6832 = vunpack.c.h.b16 %v6680
        %v6833 = vunpack.c.l.b16 %v6681
        %v6834 = vunpack.c.h.b16 %v6681
        %v6835 = vunpack.c.l.b16 %v6682
        %v6836 = vunpack.c.h.b16 %v6682
        %v6837 = vunpack.c.l.b16 %v6683
        %v6838 = vunpack.c.h.b16 %v6683
        %v6839 = vunpack.c.l.b16 %v6684
        %v6840 = vunpack.c.h.b16 %v6684
        %v6841 = vunpack.c.l.b16 %v6685
        %v6842 = vunpack.c.h.b16 %v6685
        %v6843 = vunpack.c.l.b16 %v6686
        %v6844 = vunpack.c.h.b16 %v6686
        %v6845 = vunpack.c.l.b16 %v6687
        %v6846 = vunpack.c.h.b16 %v6687
        %v6847 = vunpack.c.l.b16 %v6688
        %v6848 = vunpack.c.h.b16 %v6688
        %v6849 = vunpack.c.l.b16 %v6689
        %v6850 = vunpack.c.h.b16 %v6689
        %v6851 = vunpack.c.l.b16 %v6690
        %v6852 = vunpack.c.h.b16 %v6690
        %v6853 = vunpack.c.l.b16 %v6691
        %v6854 = vunpack.c.h.b16 %v6691
        %v6855 = vunpack.c.l.b16 %v6692
        %v6856 = vunpack.c.h.b16 %v6692
        %v6857 = vunpack.c.l.b16 %v6693
        %v6858 = vunpack.c.h.b16 %v6693
        %v6859 = vunpack.c.l.b16 %v6694
        %v6860 = vunpack.c.h.b16 %v6694
        %v6861 = vunpack.c.l.b16 %v6695
        %v6862 = vunpack.c.h.b16 %v6695
        %v6863 = vunpack.c.l.b16 %v6696
        %v6864 = vunpack.c.h.b16 %v6696
        %v6865 = vunpack.c.l.b16 %v6697
        %v6866 = vunpack.c.h.b16 %v6697
        %v6867 = vunpack.c.l.b16 %v6698
        %v6868 = vunpack.c.h.b16 %v6698
        %v6869 = vunpack.c.l.b16 %v6699
        %v6870 = vunpack.c.h.b16 %v6699
        %v6871 = vunpack.c.l.b16 %v6700
        %v6872 = vunpack.c.h.b16 %v6700
        %v6873 = vunpack.c.l.b16 %v6701
        %v6874 = vunpack.c.h.b16 %v6701
        %v6875 = vunpack.c.l.b16 %v6702
        %v6876 = vunpack.c.h.b16 %v6702
        %v6877 = vunpack.c.l.b16 %v6703
        %v6878 = vunpack.c.h.b16 %v6703
        %v6879 = vunpack.c.l.b16 %v6704
        %v6880 = vunpack.c.h.b16 %v6704
        %v6881 = vunpack.c.l.b16 %v6705
        %v6882 = vunpack.c.h.b16 %v6705
        %v6883 = vunpack.c.l.b16 %v6706
        %v6884 = vunpack.c.h.b16 %v6706
        %v6885 = vunpack.c.l.b16 %v6707
        %v6886 = vunpack.c.h.b16 %v6707
        %v6887 = vunpack.c.l.b16 %v6708
        %v6888 = vunpack.c.h.b16 %v6708
        %v6889 = vunpack.c.l.b16 %v6709
        %v6890 = vunpack.c.h.b16 %v6709
        %v6891 = vunpack.c.l.b16 %v6710
        %v6892 = vunpack.c.h.b16 %v6710
        %v6893 = vunpack.c.l.b16 %v6711
        %v6894 = vunpack.c.h.b16 %v6711
        %v6895 = vunpack.c.l.b16 %v6712
        %v6896 = vunpack.c.h.b16 %v6712
        %v6897 = vunpack.c.l.b16 %v6713
        %v6898 = vunpack.c.h.b16 %v6713
        %v6899 = vunpack.c.l.b16 %v6714
        %v6900 = vunpack.c.h.b16 %v6714
        %v6901 = vunpack.c.l.b16 %v6715
        %v6902 = vunpack.c.h.b16 %v6715
        %v6903 = vunpack.c.l.b16 %v6716
        %v6904 = vunpack.c.h.b16 %v6716
        %v6905 = vunpack.c.l.b16 %v6717
        %v6906 = vunpack.c.h.b16 %v6717
        %v6907 = vunpack.c.l.b16 %v6718
        %v6908 = vunpack.c.h.b16 %v6718
        %v6909 = vunpack.c.l.b16 %v6719
        %v6910 = vunpack.c.h.b16 %v6719
        %v6911 = vunpack.c.l.b16 %v6720
        %v6912 = vunpack.c.h.b16 %v6720
        %v6913 = vunpack.c.l.b16 %v6721
        %v6914 = vunpack.c.h.b16 %v6721
        %v6915 = vpack.c.b16 %v6791, %v6787
        %v6916 = vpack.c.b16 %v6792, %v6788
        %v6917 = vpack.c.b16 %v6793, %v6789
        %v6918 = vpack.c.b16 %v6794, %v6790
        %v6919 = vpack.c.b16 %v6799, %v6795
        %v6920 = vpack.c.b16 %v6800, %v6796
        %v6921 = vpack.c.b16 %v6801, %v6797
        %v6922 = vpack.c.b16 %v6802, %v6798
        %v6923 = vpack.c.b16 %v6807, %v6803
        %v6924 = vpack.c.b16 %v6808, %v6804
        %v6925 = vpack.c.b16 %v6809, %v6805
        %v6926 = vpack.c.b16 %v6810, %v6806
        %v6927 = vpack.c.b16 %v6815, %v6811
        %v6928 = vpack.c.b16 %v6816, %v6812
        %v6929 = vpack.c.b16 %v6817, %v6813
        %v6930 = vpack.c.b16 %v6818, %v6814
        %v6931 = vpack.c.b16 %v6823, %v6819
        %v6932 = vpack.c.b16 %v6824, %v6820
        %v6933 = vpack.c.b16 %v6825, %v6821
        %v6934 = vpack.c.b16 %v6826, %v6822
        %v6935 = vpack.c.b16 %v6831, %v6827
        %v6936 = vpack.c.b16 %v6832, %v6828
        %v6937 = vpack.c.b16 %v6833, %v6829
        %v6938 = vpack.c.b16 %v6834, %v6830
        %v6939 = vpack.c.b16 %v6839, %v6835
        %v6940 = vpack.c.b16 %v6840, %v6836
        %v6941 = vpack.c.b16 %v6841, %v6837
        %v6942 = vpack.c.b16 %v6842, %v6838
        %v6943 = vpack.c.b16 %v6847, %v6843
        %v6944 = vpack.c.b16 %v6848, %v6844
        %v6945 = vpack.c.b16 %v6849, %v6845
        %v6946 = vpack.c.b16 %v6850, %v6846
        %v6947 = vpack.c.b16 %v6855, %v6851
        %v6948 = vpack.c.b16 %v6856, %v6852
        %v6949 = vpack.c.b16 %v6857, %v6853
        %v6950 = vpack.c.b16 %v6858, %v6854
        %v6951 = vpack.c.b16 %v6863, %v6859
        %v6952 = vpack.c.b16 %v6864, %v6860
        %v6953 = vpack.c.b16 %v6865, %v6861
        %v6954 = vpack.c.b16 %v6866, %v6862
        %v6955 = vpack.c.b16 %v6871, %v6867
        %v6956 = vpack.c.b16 %v6872, %v6868
        %v6957 = vpack.c.b16 %v6873, %v6869
        %v6958 = vpack.c.b16 %v6874, %v6870
        %v6959 = vpack.c.b16 %v6879, %v6875
        %v6960 = vpack.c.b16 %v6880, %v6876
        %v6961 = vpack.c.b16 %v6881, %v6877
        %v6962 = vpack.c.b16 %v6882, %v6878
        %v6963 = vpack.c.b16 %v6887, %v6883
        %v6964 = vpack.c.b16 %v6888, %v6884
        %v6965 = vpack.c.b16 %v6889, %v6885
        %v6966 = vpack.c.b16 %v6890, %v6886
        %v6967 = vpack.c.b16 %v6895, %v6891
        %v6968 = vpack.c.b16 %v6896, %v6892
        %v6969 = vpack.c.b16 %v6897, %v6893
        %v6970 = vpack.c.b16 %v6898, %v6894
        %v6971 = vpack.c.b16 %v6903, %v6899
        %v6972 = vpack.c.b16 %v6904, %v6900
        %v6973 = vpack.c.b16 %v6905, %v6901
        %v6974 = vpack.c.b16 %v6906, %v6902
        %v6975 = vpack.c.b16 %v6911, %v6907
        %v6976 = vpack.c.b16 %v6912, %v6908
        %v6977 = vpack.c.b16 %v6913, %v6909
        %v6978 = vpack.c.b16 %v6914, %v6910
        %7043 = vmatpush.bf16.msra.mxu0 %v6943
        %7044 = vmatpush.bf16.msra.mxu0 %v6939
        %7045 = vmatpush.bf16.msra.mxu0 %v6935
        %7046 = vmatpush.bf16.msra.mxu0 %v6931
        %7047 = vmatpush.bf16.msra.mxu0 %v6927
        %7048 = vmatpush.bf16.msra.mxu0 %v6923
        %7049 = vmatpush.bf16.msra.mxu0 %v6919
        %7050 = vmatpush.bf16.msra.mxu0 %v6915
        %7051 = vmatmul.bf16.gmra.mxu0 %v6642
        %v7052 = vpop.f32.mrf.mxu0
        %v7053 = vadd.f32 0.0, %v7052
        %v7054 = vpop.f32.mrf.mxu0
        %v7055 = vadd.f32 0.0, %v7054
        %7056 = vmatmul.bf16.gmra.mxu0 %v6644
        %v7057 = vpop.f32.mrf.mxu0
        %v7058 = vadd.f32 0.0, %v7057
        %v7059 = vpop.f32.mrf.mxu0
        %v7060 = vadd.f32 0.0, %v7059
        %7061 = vmatmul.bf16.gmra.mxu0 %v6646
        %v7062 = vpop.f32.mrf.mxu0
        %v7063 = vadd.f32 0.0, %v7062
        %v7064 = vpop.f32.mrf.mxu0
        %v7065 = vadd.f32 0.0, %v7064
        %7066 = vmatmul.bf16.gmra.mxu0 %v6648
        %v7067 = vpop.f32.mrf.mxu0
        %v7068 = vadd.f32 0.0, %v7067
        %v7069 = vpop.f32.mrf.mxu0
        %v7070 = vadd.f32 0.0, %v7069
        %7071 = vmatmul.bf16.gmra.mxu0 %v6650
        %v7072 = vpop.f32.mrf.mxu0
        %v7073 = vadd.f32 0.0, %v7072
        %v7074 = vpop.f32.mrf.mxu0
        %v7075 = vadd.f32 0.0, %v7074
        %7076 = vmatmul.bf16.gmra.mxu0 %v6652
        %v7077 = vpop.f32.mrf.mxu0
        %v7078 = vadd.f32 0.0, %v7077
        %v7079 = vpop.f32.mrf.mxu0
        %v7080 = vadd.f32 0.0, %v7079
        %7081 = vmatmul.bf16.gmra.mxu0 %v6654
        %v7082 = vpop.f32.mrf.mxu0
        %v7083 = vadd.f32 0.0, %v7082
        %v7084 = vpop.f32.mrf.mxu0
        %v7085 = vadd.f32 0.0, %v7084
        %7086 = vmatmul.bf16.gmra.mxu0 %v6656
        %v7087 = vpop.f32.mrf.mxu0
        %v7088 = vadd.f32 0.0, %v7087
        %v7089 = vpop.f32.mrf.mxu0
        %v7090 = vadd.f32 0.0, %v7089
        %7091 = vdwg.mxu0
        %7092 = vmatpush.bf16.msra.mxu0 %v6975
        %7093 = vmatpush.bf16.msra.mxu0 %v6971
        %7094 = vmatpush.bf16.msra.mxu0 %v6967
        %7095 = vmatpush.bf16.msra.mxu0 %v6963
        %7096 = vmatpush.bf16.msra.mxu0 %v6959
        %7097 = vmatpush.bf16.msra.mxu0 %v6955
        %7098 = vmatpush.bf16.msra.mxu0 %v6951
        %7099 = vmatpush.bf16.msra.mxu0 %v6947
        %7100 = vmatmul.bf16.gmra.mxu0 %v6643
        %v7101 = vpop.f32.mrf.mxu0
        %v7102 = vadd.f32 %v7053, %v7101
        %v7103 = vpop.f32.mrf.mxu0
        %v7104 = vadd.f32 %v7055, %v7103
        %7105 = vmatmul.bf16.gmra.mxu0 %v6645
        %v7106 = vpop.f32.mrf.mxu0
        %v7107 = vadd.f32 %v7058, %v7106
        %v7108 = vpop.f32.mrf.mxu0
        %v7109 = vadd.f32 %v7060, %v7108
        %7110 = vmatmul.bf16.gmra.mxu0 %v6647
        %v7111 = vpop.f32.mrf.mxu0
        %v7112 = vadd.f32 %v7063, %v7111
        %v7113 = vpop.f32.mrf.mxu0
        %v7114 = vadd.f32 %v7065, %v7113
        %7115 = vmatmul.bf16.gmra.mxu0 %v6649
        %v7116 = vpop.f32.mrf.mxu0
        %v7117 = vadd.f32 %v7068, %v7116
        %v7118 = vpop.f32.mrf.mxu0
        %v7119 = vadd.f32 %v7070, %v7118
        %7120 = vmatmul.bf16.gmra.mxu0 %v6651
        %v7121 = vpop.f32.mrf.mxu0
        %v7122 = vadd.f32 %v7073, %v7121
        %v7123 = vpop.f32.mrf.mxu0
        %v7124 = vadd.f32 %v7075, %v7123
        %7125 = vmatmul.bf16.gmra.mxu0 %v6653
        %v7126 = vpop.f32.mrf.mxu0
        %v7127 = vadd.f32 %v7078, %v7126
        %v7128 = vpop.f32.mrf.mxu0
        %v7129 = vadd.f32 %v7080, %v7128
        %7130 = vmatmul.bf16.gmra.mxu0 %v6655
        %v7131 = vpop.f32.mrf.mxu0
        %v7132 = vadd.f32 %v7083, %v7131
        %v7133 = vpop.f32.mrf.mxu0
        %v7134 = vadd.f32 %v7085, %v7133
        %7135 = vmatmul.bf16.gmra.mxu0 %v6657
        %v7136 = vpop.f32.mrf.mxu0
        %v7137 = vadd.f32 %v7088, %v7136
        %v7138 = vpop.f32.mrf.mxu0
        %v7139 = vadd.f32 %v7090, %v7138
        %7140 = vdwg.mxu0
        %7141 = vmatpush.bf16.msra.mxu0 %v6944
        %7142 = vmatpush.bf16.msra.mxu0 %v6940
        %7143 = vmatpush.bf16.msra.mxu0 %v6936
        %7144 = vmatpush.bf16.msra.mxu0 %v6932
        %7145 = vmatpush.bf16.msra.mxu0 %v6928
        %7146 = vmatpush.bf16.msra.mxu0 %v6924
        %7147 = vmatpush.bf16.msra.mxu0 %v6920
        %7148 = vmatpush.bf16.msra.mxu0 %v6916
        %7149 = vmatmul.bf16.gmra.mxu0 %v6642
        %v7150 = vpop.f32.mrf.mxu0
        %v7151 = vadd.f32 0.0, %v7150
        %v7152 = vpop.f32.mrf.mxu0
        %v7153 = vadd.f32 0.0, %v7152
        %7154 = vmatmul.bf16.gmra.mxu0 %v6644
        %v7155 = vpop.f32.mrf.mxu0
        %v7156 = vadd.f32 0.0, %v7155
        %v7157 = vpop.f32.mrf.mxu0
        %v7158 = vadd.f32 0.0, %v7157
        %7159 = vmatmul.bf16.gmra.mxu0 %v6646
        %v7160 = vpop.f32.mrf.mxu0
        %v7161 = vadd.f32 0.0, %v7160
        %v7162 = vpop.f32.mrf.mxu0
        %v7163 = vadd.f32 0.0, %v7162
        %7164 = vmatmul.bf16.gmra.mxu0 %v6648
        %v7165 = vpop.f32.mrf.mxu0
        %v7166 = vadd.f32 0.0, %v7165
        %v7167 = vpop.f32.mrf.mxu0
        %v7168 = vadd.f32 0.0, %v7167
        %7169 = vmatmul.bf16.gmra.mxu0 %v6650
        %v7170 = vpop.f32.mrf.mxu0
        %v7171 = vadd.f32 0.0, %v7170
        %v7172 = vpop.f32.mrf.mxu0
        %v7173 = vadd.f32 0.0, %v7172
        %7174 = vmatmul.bf16.gmra.mxu0 %v6652
        %v7175 = vpop.f32.mrf.mxu0
        %v7176 = vadd.f32 0.0, %v7175
        %v7177 = vpop.f32.mrf.mxu0
        %v7178 = vadd.f32 0.0, %v7177
        %7179 = vmatmul.bf16.gmra.mxu0 %v6654
        %v7180 = vpop.f32.mrf.mxu0
        %v7181 = vadd.f32 0.0, %v7180
        %v7182 = vpop.f32.mrf.mxu0
        %v7183 = vadd.f32 0.0, %v7182
        %7184 = vmatmul.bf16.gmra.mxu0 %v6656
        %v7185 = vpop.f32.mrf.mxu0
        %v7186 = vadd.f32 0.0, %v7185
        %v7187 = vpop.f32.mrf.mxu0
        %v7188 = vadd.f32 0.0, %v7187
        %7189 = vdwg.mxu0
        %7190 = vmatpush.bf16.msra.mxu0 %v6976
        %7191 = vmatpush.bf16.msra.mxu0 %v6972
        %7192 = vmatpush.bf16.msra.mxu0 %v6968
        %7193 = vmatpush.bf16.msra.mxu0 %v6964
        %7194 = vmatpush.bf16.msra.mxu0 %v6960
        %7195 = vmatpush.bf16.msra.mxu0 %v6956
        %7196 = vmatpush.bf16.msra.mxu0 %v6952
        %7197 = vmatpush.bf16.msra.mxu0 %v6948
        %7198 = vmatmul.bf16.gmra.mxu0 %v6643
        %v7199 = vpop.f32.mrf.mxu0
        %v7200 = vadd.f32 %v7151, %v7199
        %v7201 = vpop.f32.mrf.mxu0
        %v7202 = vadd.f32 %v7153, %v7201
        %7203 = vmatmul.bf16.gmra.mxu0 %v6645
        %v7204 = vpop.f32.mrf.mxu0
        %v7205 = vadd.f32 %v7156, %v7204
        %v7206 = vpop.f32.mrf.mxu0
        %v7207 = vadd.f32 %v7158, %v7206
        %7208 = vmatmul.bf16.gmra.mxu0 %v6647
        %v7209 = vpop.f32.mrf.mxu0
        %v7210 = vadd.f32 %v7161, %v7209
        %v7211 = vpop.f32.mrf.mxu0
        %v7212 = vadd.f32 %v7163, %v7211
        %7213 = vmatmul.bf16.gmra.mxu0 %v6649
        %v7214 = vpop.f32.mrf.mxu0
        %v7215 = vadd.f32 %v7166, %v7214
        %v7216 = vpop.f32.mrf.mxu0
        %v7217 = vadd.f32 %v7168, %v7216
        %7218 = vmatmul.bf16.gmra.mxu0 %v6651
        %v7219 = vpop.f32.mrf.mxu0
        %v7220 = vadd.f32 %v7171, %v7219
        %v7221 = vpop.f32.mrf.mxu0
        %v7222 = vadd.f32 %v7173, %v7221
        %7223 = vmatmul.bf16.gmra.mxu0 %v6653
        %v7224 = vpop.f32.mrf.mxu0
        %v7225 = vadd.f32 %v7176, %v7224
        %v7226 = vpop.f32.mrf.mxu0
        %v7227 = vadd.f32 %v7178, %v7226
        %7228 = vmatmul.bf16.gmra.mxu0 %v6655
        %v7229 = vpop.f32.mrf.mxu0
        %v7230 = vadd.f32 %v7181, %v7229
        %v7231 = vpop.f32.mrf.mxu0
        %v7232 = vadd.f32 %v7183, %v7231
        %7233 = vmatmul.bf16.gmra.mxu0 %v6657
        %v7234 = vpop.f32.mrf.mxu0
        %v7235 = vadd.f32 %v7186, %v7234
        %v7236 = vpop.f32.mrf.mxu0
        %v7237 = vadd.f32 %v7188, %v7236
        %7238 = vdwg.mxu0
        %7239 = vmatpush.bf16.msra.mxu0 %v6945
        %7240 = vmatpush.bf16.msra.mxu0 %v6941
        %7241 = vmatpush.bf16.msra.mxu0 %v6937
        %7242 = vmatpush.bf16.msra.mxu0 %v6933
        %7243 = vmatpush.bf16.msra.mxu0 %v6929
        %7244 = vmatpush.bf16.msra.mxu0 %v6925
        %7245 = vmatpush.bf16.msra.mxu0 %v6921
        %7246 = vmatpush.bf16.msra.mxu0 %v6917
        %7247 = vmatmul.bf16.gmra.mxu0 %v6642
        %v7248 = vpop.f32.mrf.mxu0
        %v7249 = vadd.f32 0.0, %v7248
        %v7250 = vpop.f32.mrf.mxu0
        %v7251 = vadd.f32 0.0, %v7250
        %7252 = vmatmul.bf16.gmra.mxu0 %v6644
        %v7253 = vpop.f32.mrf.mxu0
        %v7254 = vadd.f32 0.0, %v7253
        %v7255 = vpop.f32.mrf.mxu0
        %v7256 = vadd.f32 0.0, %v7255
        %7257 = vmatmul.bf16.gmra.mxu0 %v6646
        %v7258 = vpop.f32.mrf.mxu0
        %v7259 = vadd.f32 0.0, %v7258
        %v7260 = vpop.f32.mrf.mxu0
        %v7261 = vadd.f32 0.0, %v7260
        %7262 = vmatmul.bf16.gmra.mxu0 %v6648
        %v7263 = vpop.f32.mrf.mxu0
        %v7264 = vadd.f32 0.0, %v7263
        %v7265 = vpop.f32.mrf.mxu0
        %v7266 = vadd.f32 0.0, %v7265
        %7267 = vmatmul.bf16.gmra.mxu0 %v6650
        %v7268 = vpop.f32.mrf.mxu0
        %v7269 = vadd.f32 0.0, %v7268
        %v7270 = vpop.f32.mrf.mxu0
        %v7271 = vadd.f32 0.0, %v7270
        %7272 = vmatmul.bf16.gmra.mxu0 %v6652
        %v7273 = vpop.f32.mrf.mxu0
        %v7274 = vadd.f32 0.0, %v7273
        %v7275 = vpop.f32.mrf.mxu0
        %v7276 = vadd.f32 0.0, %v7275
        %7277 = vmatmul.bf16.gmra.mxu0 %v6654
        %v7278 = vpop.f32.mrf.mxu0
        %v7279 = vadd.f32 0.0, %v7278
        %v7280 = vpop.f32.mrf.mxu0
        %v7281 = vadd.f32 0.0, %v7280
        %7282 = vmatmul.bf16.gmra.mxu0 %v6656
        %v7283 = vpop.f32.mrf.mxu0
        %v7284 = vadd.f32 0.0, %v7283
        %v7285 = vpop.f32.mrf.mxu0
        %v7286 = vadd.f32 0.0, %v7285
        %7287 = vdwg.mxu0
        %7288 = vmatpush.bf16.msra.mxu0 %v6977
        %7289 = vmatpush.bf16.msra.mxu0 %v6973
        %7290 = vmatpush.bf16.msra.mxu0 %v6969
        %7291 = vmatpush.bf16.msra.mxu0 %v6965
        %7292 = vmatpush.bf16.msra.mxu0 %v6961
        %7293 = vmatpush.bf16.msra.mxu0 %v6957
        %7294 = vmatpush.bf16.msra.mxu0 %v6953
        %7295 = vmatpush.bf16.msra.mxu0 %v6949
        %7296 = vmatmul.bf16.gmra.mxu0 %v6643
        %v7297 = vpop.f32.mrf.mxu0
        %v7298 = vadd.f32 %v7249, %v7297
        %v7299 = vpop.f32.mrf.mxu0
        %v7300 = vadd.f32 %v7251, %v7299
        %7301 = vmatmul.bf16.gmra.mxu0 %v6645
        %v7302 = vpop.f32.mrf.mxu0
        %v7303 = vadd.f32 %v7254, %v7302
        %v7304 = vpop.f32.mrf.mxu0
        %v7305 = vadd.f32 %v7256, %v7304
        %7306 = vmatmul.bf16.gmra.mxu0 %v6647
        %v7307 = vpop.f32.mrf.mxu0
        %v7308 = vadd.f32 %v7259, %v7307
        %v7309 = vpop.f32.mrf.mxu0
        %v7310 = vadd.f32 %v7261, %v7309
        %7311 = vmatmul.bf16.gmra.mxu0 %v6649
        %v7312 = vpop.f32.mrf.mxu0
        %v7313 = vadd.f32 %v7264, %v7312
        %v7314 = vpop.f32.mrf.mxu0
        %v7315 = vadd.f32 %v7266, %v7314
        %7316 = vmatmul.bf16.gmra.mxu0 %v6651
        %v7317 = vpop.f32.mrf.mxu0
        %v7318 = vadd.f32 %v7269, %v7317
        %v7319 = vpop.f32.mrf.mxu0
        %v7320 = vadd.f32 %v7271, %v7319
        %7321 = vmatmul.bf16.gmra.mxu0 %v6653
        %v7322 = vpop.f32.mrf.mxu0
        %v7323 = vadd.f32 %v7274, %v7322
        %v7324 = vpop.f32.mrf.mxu0
        %v7325 = vadd.f32 %v7276, %v7324
        %7326 = vmatmul.bf16.gmra.mxu0 %v6655
        %v7327 = vpop.f32.mrf.mxu0
        %v7328 = vadd.f32 %v7279, %v7327
        %v7329 = vpop.f32.mrf.mxu0
        %v7330 = vadd.f32 %v7281, %v7329
        %7331 = vmatmul.bf16.gmra.mxu0 %v6657
        %v7332 = vpop.f32.mrf.mxu0
        %v7333 = vadd.f32 %v7284, %v7332
        %v7334 = vpop.f32.mrf.mxu0
        %v7335 = vadd.f32 %v7286, %v7334
        %7336 = vdwg.mxu0
        %7337 = vmatpush.bf16.msra.mxu0 %v6946
        %7338 = vmatpush.bf16.msra.mxu0 %v6942
        %7339 = vmatpush.bf16.msra.mxu0 %v6938
        %7340 = vmatpush.bf16.msra.mxu0 %v6934
        %7341 = vmatpush.bf16.msra.mxu0 %v6930
        %7342 = vmatpush.bf16.msra.mxu0 %v6926
        %7343 = vmatpush.bf16.msra.mxu0 %v6922
        %7344 = vmatpush.bf16.msra.mxu0 %v6918
        %7345 = vmatmul.bf16.gmra.mxu0 %v6642
        %v7346 = vpop.f32.mrf.mxu0
        %v7347 = vadd.f32 0.0, %v7346
        %v7348 = vpop.f32.mrf.mxu0
        %v7349 = vadd.f32 0.0, %v7348
        %7350 = vmatmul.bf16.gmra.mxu0 %v6644
        %v7351 = vpop.f32.mrf.mxu0
        %v7352 = vadd.f32 0.0, %v7351
        %v7353 = vpop.f32.mrf.mxu0
        %v7354 = vadd.f32 0.0, %v7353
        %7355 = vmatmul.bf16.gmra.mxu0 %v6646
        %v7356 = vpop.f32.mrf.mxu0
        %v7357 = vadd.f32 0.0, %v7356
        %v7358 = vpop.f32.mrf.mxu0
        %v7359 = vadd.f32 0.0, %v7358
        %7360 = vmatmul.bf16.gmra.mxu0 %v6648
        %v7361 = vpop.f32.mrf.mxu0
        %v7362 = vadd.f32 0.0, %v7361
        %v7363 = vpop.f32.mrf.mxu0
        %v7364 = vadd.f32 0.0, %v7363
        %7365 = vmatmul.bf16.gmra.mxu0 %v6650
        %v7366 = vpop.f32.mrf.mxu0
        %v7367 = vadd.f32 0.0, %v7366
        %v7368 = vpop.f32.mrf.mxu0
        %v7369 = vadd.f32 0.0, %v7368
        %7370 = vmatmul.bf16.gmra.mxu0 %v6652
        %v7371 = vpop.f32.mrf.mxu0
        %v7372 = vadd.f32 0.0, %v7371
        %v7373 = vpop.f32.mrf.mxu0
        %v7374 = vadd.f32 0.0, %v7373
        %7375 = vmatmul.bf16.gmra.mxu0 %v6654
        %v7376 = vpop.f32.mrf.mxu0
        %v7377 = vadd.f32 0.0, %v7376
        %v7378 = vpop.f32.mrf.mxu0
        %v7379 = vadd.f32 0.0, %v7378
        %7380 = vmatmul.bf16.gmra.mxu0 %v6656
        %v7381 = vpop.f32.mrf.mxu0
        %v7382 = vadd.f32 0.0, %v7381
        %v7383 = vpop.f32.mrf.mxu0
        %v7384 = vadd.f32 0.0, %v7383
        %7385 = vdwg.mxu0
        %7386 = vmatpush.bf16.msra.mxu0 %v6978
        %7387 = vmatpush.bf16.msra.mxu0 %v6974
        %7388 = vmatpush.bf16.msra.mxu0 %v6970
        %7389 = vmatpush.bf16.msra.mxu0 %v6966
        %7390 = vmatpush.bf16.msra.mxu0 %v6962
        %7391 = vmatpush.bf16.msra.mxu0 %v6958
        %7392 = vmatpush.bf16.msra.mxu0 %v6954
        %7393 = vmatpush.bf16.msra.mxu0 %v6950
        %7394 = vmatmul.bf16.gmra.mxu0 %v6643
        %v7395 = vpop.f32.mrf.mxu0
        %v7396 = vadd.f32 %v7347, %v7395
        %v7397 = vpop.f32.mrf.mxu0
        %v7398 = vadd.f32 %v7349, %v7397
        %7399 = vmatmul.bf16.gmra.mxu0 %v6645
        %v7400 = vpop.f32.mrf.mxu0
        %v7401 = vadd.f32 %v7352, %v7400
        %v7402 = vpop.f32.mrf.mxu0
        %v7403 = vadd.f32 %v7354, %v7402
        %7404 = vmatmul.bf16.gmra.mxu0 %v6647
        %v7405 = vpop.f32.mrf.mxu0
        %v7406 = vadd.f32 %v7357, %v7405
        %v7407 = vpop.f32.mrf.mxu0
        %v7408 = vadd.f32 %v7359, %v7407
        %7409 = vmatmul.bf16.gmra.mxu0 %v6649
        %v7410 = vpop.f32.mrf.mxu0
        %v7411 = vadd.f32 %v7362, %v7410
        %v7412 = vpop.f32.mrf.mxu0
        %v7413 = vadd.f32 %v7364, %v7412
        %7414 = vmatmul.bf16.gmra.mxu0 %v6651
        %v7415 = vpop.f32.mrf.mxu0
        %v7416 = vadd.f32 %v7367, %v7415
        %v7417 = vpop.f32.mrf.mxu0
        %v7418 = vadd.f32 %v7369, %v7417
        %7419 = vmatmul.bf16.gmra.mxu0 %v6653
        %v7420 = vpop.f32.mrf.mxu0
        %v7421 = vadd.f32 %v7372, %v7420
        %v7422 = vpop.f32.mrf.mxu0
        %v7423 = vadd.f32 %v7374, %v7422
        %7424 = vmatmul.bf16.gmra.mxu0 %v6655
        %v7425 = vpop.f32.mrf.mxu0
        %v7426 = vadd.f32 %v7377, %v7425
        %v7427 = vpop.f32.mrf.mxu0
        %v7428 = vadd.f32 %v7379, %v7427
        %7429 = vmatmul.bf16.gmra.mxu0 %v6657
        %v7430 = vpop.f32.mrf.mxu0
        %v7431 = vadd.f32 %v7382, %v7430
        %v7432 = vpop.f32.mrf.mxu0
        %v7433 = vadd.f32 %v7384, %v7432
        %7434 = vdwg.mxu0
        %v7435 = vpack.c.bf16 %v7200, %v7102
        %v7436 = vpack.c.bf16 %v7396, %v7298
        %v7437 = vpack.c.bf16 %v7202, %v7104
        %v7438 = vpack.c.bf16 %v7398, %v7300
        %v7439 = vpack.c.bf16 %v7205, %v7107
        %v7440 = vpack.c.bf16 %v7401, %v7303
        %v7441 = vpack.c.bf16 %v7207, %v7109
        %v7442 = vpack.c.bf16 %v7403, %v7305
        %v7443 = vpack.c.bf16 %v7210, %v7112
        %v7444 = vpack.c.bf16 %v7406, %v7308
        %v7445 = vpack.c.bf16 %v7212, %v7114
        %v7446 = vpack.c.bf16 %v7408, %v7310
        %v7447 = vpack.c.bf16 %v7215, %v7117
        %v7448 = vpack.c.bf16 %v7411, %v7313
        %v7449 = vpack.c.bf16 %v7217, %v7119
        %v7450 = vpack.c.bf16 %v7413, %v7315
        %v7451 = vpack.c.bf16 %v7220, %v7122
        %v7452 = vpack.c.bf16 %v7416, %v7318
        %v7453 = vpack.c.bf16 %v7222, %v7124
        %v7454 = vpack.c.bf16 %v7418, %v7320
        %v7455 = vpack.c.bf16 %v7225, %v7127
        %v7456 = vpack.c.bf16 %v7421, %v7323
        %v7457 = vpack.c.bf16 %v7227, %v7129
        %v7458 = vpack.c.bf16 %v7423, %v7325
        %v7459 = vpack.c.bf16 %v7230, %v7132
        %v7460 = vpack.c.bf16 %v7426, %v7328
        %v7461 = vpack.c.bf16 %v7232, %v7134
        %v7462 = vpack.c.bf16 %v7428, %v7330
        %v7463 = vpack.c.bf16 %v7235, %v7137
        %v7464 = vpack.c.bf16 %v7431, %v7333
        %v7465 = vpack.c.bf16 %v7237, %v7139
        %v7466 = vpack.c.bf16 %v7433, %v7335
        %7468 = vst [vmem:[#allocation1] ss:$9 sm:$0xff] %v6722
        %v7469 = vld [vmem:[#allocation1] sm:$0xff]
        %v7470 = vld [vmem:[#allocation1 + $0x9] sm:$0xff]
        %v7471 = vld [vmem:[#allocation1 + $0x12] sm:$0xff]
        %v7472 = vld [vmem:[#allocation1 + $0x1b] sm:$0xff]
        %v7473 = vpack.i.b16 %v7469, %v7469
        %v7475 = vperm.slane %v7473, 0
        %v7476 = vpack.i.b16 %v7470, %v7470
        %v7478 = vperm.slane %v7476, 0
        %v7479 = vpack.i.b16 %v7471, %v7471
        %v7481 = vperm.slane %v7479, 0
        %v7482 = vpack.i.b16 %v7472, %v7472
        %v7484 = vperm.slane %v7482, 0
        %v7485 = vunpack.c.l.bf16 %v7435
        %v7486 = vunpack.c.h.bf16 %v7435
        %v7487 = vunpack.c.l.bf16 %v7436
        %v7488 = vunpack.c.h.bf16 %v7436
        %v7489 = vunpack.c.l.bf16 %v7437
        %v7490 = vunpack.c.h.bf16 %v7437
        %v7491 = vunpack.c.l.bf16 %v7438
        %v7492 = vunpack.c.h.bf16 %v7438
        %v7493 = vunpack.c.l.bf16 %v7439
        %v7494 = vunpack.c.h.bf16 %v7439
        %v7495 = vunpack.c.l.bf16 %v7440
        %v7496 = vunpack.c.h.bf16 %v7440
        %v7497 = vunpack.c.l.bf16 %v7441
        %v7498 = vunpack.c.h.bf16 %v7441
        %v7499 = vunpack.c.l.bf16 %v7442
        %v7500 = vunpack.c.h.bf16 %v7442
        %v7501 = vunpack.c.l.bf16 %v7443
        %v7502 = vunpack.c.h.bf16 %v7443
        %v7503 = vunpack.c.l.bf16 %v7444
        %v7504 = vunpack.c.h.bf16 %v7444
        %v7505 = vunpack.c.l.bf16 %v7445
        %v7506 = vunpack.c.h.bf16 %v7445
        %v7507 = vunpack.c.l.bf16 %v7446
        %v7508 = vunpack.c.h.bf16 %v7446
        %v7509 = vunpack.c.l.bf16 %v7447
        %v7510 = vunpack.c.h.bf16 %v7447
        %v7511 = vunpack.c.l.bf16 %v7448
        %v7512 = vunpack.c.h.bf16 %v7448
        %v7513 = vunpack.c.l.bf16 %v7449
        %v7514 = vunpack.c.h.bf16 %v7449
        %v7515 = vunpack.c.l.bf16 %v7450
        %v7516 = vunpack.c.h.bf16 %v7450
        %v7517 = vunpack.c.l.bf16 %v7451
        %v7518 = vunpack.c.h.bf16 %v7451
        %v7519 = vunpack.c.l.bf16 %v7452
        %v7520 = vunpack.c.h.bf16 %v7452
        %v7521 = vunpack.c.l.bf16 %v7453
        %v7522 = vunpack.c.h.bf16 %v7453
        %v7523 = vunpack.c.l.bf16 %v7454
        %v7524 = vunpack.c.h.bf16 %v7454
        %v7525 = vunpack.c.l.bf16 %v7455
        %v7526 = vunpack.c.h.bf16 %v7455
        %v7527 = vunpack.c.l.bf16 %v7456
        %v7528 = vunpack.c.h.bf16 %v7456
        %v7529 = vunpack.c.l.bf16 %v7457
        %v7530 = vunpack.c.h.bf16 %v7457
        %v7531 = vunpack.c.l.bf16 %v7458
        %v7532 = vunpack.c.h.bf16 %v7458
        %v7533 = vunpack.c.l.bf16 %v7459
        %v7534 = vunpack.c.h.bf16 %v7459
        %v7535 = vunpack.c.l.bf16 %v7460
        %v7536 = vunpack.c.h.bf16 %v7460
        %v7537 = vunpack.c.l.bf16 %v7461
        %v7538 = vunpack.c.h.bf16 %v7461
        %v7539 = vunpack.c.l.bf16 %v7462
        %v7540 = vunpack.c.h.bf16 %v7462
        %v7541 = vunpack.c.l.bf16 %v7463
        %v7542 = vunpack.c.h.bf16 %v7463
        %v7543 = vunpack.c.l.bf16 %v7464
        %v7544 = vunpack.c.h.bf16 %v7464
        %v7545 = vunpack.c.l.bf16 %v7465
        %v7546 = vunpack.c.h.bf16 %v7465
        %v7547 = vunpack.c.l.bf16 %v7466
        %v7548 = vunpack.c.h.bf16 %v7466
        %v7549 = vunpack.c.l.bf16 %v7475
        %v7550 = vunpack.c.l.bf16 %v7478
        %v7551 = vunpack.c.l.bf16 %v7481
        %v7552 = vunpack.c.l.bf16 %v7484
        %v7553 = vadd.f32 %v7485, %v7549
        %v7554 = vadd.f32 %v7486, %v7550
        %v7555 = vadd.f32 %v7487, %v7551
        %v7556 = vadd.f32 %v7488, %v7552
        %v7557 = vadd.f32 %v7489, %v7549
        %v7558 = vadd.f32 %v7490, %v7550
        %v7559 = vadd.f32 %v7491, %v7551
        %v7560 = vadd.f32 %v7492, %v7552
        %v7561 = vadd.f32 %v7493, %v7549
        %v7562 = vadd.f32 %v7494, %v7550
        %v7563 = vadd.f32 %v7495, %v7551
        %v7564 = vadd.f32 %v7496, %v7552
        %v7565 = vadd.f32 %v7497, %v7549
        %v7566 = vadd.f32 %v7498, %v7550
        %v7567 = vadd.f32 %v7499, %v7551
        %v7568 = vadd.f32 %v7500, %v7552
        %v7569 = vadd.f32 %v7501, %v7549
        %v7570 = vadd.f32 %v7502, %v7550
        %v7571 = vadd.f32 %v7503, %v7551
        %v7572 = vadd.f32 %v7504, %v7552
        %v7573 = vadd.f32 %v7505, %v7549
        %v7574 = vadd.f32 %v7506, %v7550
        %v7575 = vadd.f32 %v7507, %v7551
        %v7576 = vadd.f32 %v7508, %v7552
        %v7577 = vadd.f32 %v7509, %v7549
        %v7578 = vadd.f32 %v7510, %v7550
        %v7579 = vadd.f32 %v7511, %v7551
        %v7580 = vadd.f32 %v7512, %v7552
        %v7581 = vadd.f32 %v7513, %v7549
        %v7582 = vadd.f32 %v7514, %v7550
        %v7583 = vadd.f32 %v7515, %v7551
        %v7584 = vadd.f32 %v7516, %v7552
        %v7585 = vadd.f32 %v7517, %v7549
        %v7586 = vadd.f32 %v7518, %v7550
        %v7587 = vadd.f32 %v7519, %v7551
        %v7588 = vadd.f32 %v7520, %v7552
        %v7589 = vadd.f32 %v7521, %v7549
        %v7590 = vadd.f32 %v7522, %v7550
        %v7591 = vadd.f32 %v7523, %v7551
        %v7592 = vadd.f32 %v7524, %v7552
        %v7593 = vadd.f32 %v7525, %v7549
        %v7594 = vadd.f32 %v7526, %v7550
        %v7595 = vadd.f32 %v7527, %v7551
        %v7596 = vadd.f32 %v7528, %v7552
        %v7597 = vadd.f32 %v7529, %v7549
        %v7598 = vadd.f32 %v7530, %v7550
        %v7599 = vadd.f32 %v7531, %v7551
        %v7600 = vadd.f32 %v7532, %v7552
        %v7601 = vadd.f32 %v7533, %v7549
        %v7602 = vadd.f32 %v7534, %v7550
        %v7603 = vadd.f32 %v7535, %v7551
        %v7604 = vadd.f32 %v7536, %v7552
        %v7605 = vadd.f32 %v7537, %v7549
        %v7606 = vadd.f32 %v7538, %v7550
        %v7607 = vadd.f32 %v7539, %v7551
        %v7608 = vadd.f32 %v7540, %v7552
        %v7609 = vadd.f32 %v7541, %v7549
        %v7610 = vadd.f32 %v7542, %v7550
        %v7611 = vadd.f32 %v7543, %v7551
        %v7612 = vadd.f32 %v7544, %v7552
        %v7613 = vadd.f32 %v7545, %v7549
        %v7614 = vadd.f32 %v7546, %v7550
        %v7615 = vadd.f32 %v7547, %v7551
        %v7616 = vadd.f32 %v7548, %v7552
        %v7617 = vpack.c.bf16 %v7554, %v7553
        %v7618 = vpack.c.bf16 %v7556, %v7555
        %v7619 = vpack.c.bf16 %v7558, %v7557
        %v7620 = vpack.c.bf16 %v7560, %v7559
        %v7621 = vpack.c.bf16 %v7562, %v7561
        %v7622 = vpack.c.bf16 %v7564, %v7563
        %v7623 = vpack.c.bf16 %v7566, %v7565
        %v7624 = vpack.c.bf16 %v7568, %v7567
        %v7625 = vpack.c.bf16 %v7570, %v7569
        %v7626 = vpack.c.bf16 %v7572, %v7571
        %v7627 = vpack.c.bf16 %v7574, %v7573
        %v7628 = vpack.c.bf16 %v7576, %v7575
        %v7629 = vpack.c.bf16 %v7578, %v7577
        %v7630 = vpack.c.bf16 %v7580, %v7579
        %v7631 = vpack.c.bf16 %v7582, %v7581
        %v7632 = vpack.c.bf16 %v7584, %v7583
        %v7633 = vpack.c.bf16 %v7586, %v7585
        %v7634 = vpack.c.bf16 %v7588, %v7587
        %v7635 = vpack.c.bf16 %v7590, %v7589
        %v7636 = vpack.c.bf16 %v7592, %v7591
        %v7637 = vpack.c.bf16 %v7594, %v7593
        %v7638 = vpack.c.bf16 %v7596, %v7595
        %v7639 = vpack.c.bf16 %v7598, %v7597
        %v7640 = vpack.c.bf16 %v7600, %v7599
        %v7641 = vpack.c.bf16 %v7602, %v7601
        %v7642 = vpack.c.bf16 %v7604, %v7603
        %v7643 = vpack.c.bf16 %v7606, %v7605
        %v7644 = vpack.c.bf16 %v7608, %v7607
        %v7645 = vpack.c.bf16 %v7610, %v7609
        %v7646 = vpack.c.bf16 %v7612, %v7611
        %v7647 = vpack.c.bf16 %v7614, %v7613
        %v7648 = vpack.c.bf16 %v7616, %v7615
        %v7649 = vunpack.c.l.bf16 %v7617
        %v7650 = vunpack.c.h.bf16 %v7617
        %v7651 = vunpack.c.l.bf16 %v7618
        %v7652 = vunpack.c.h.bf16 %v7618
        %v7653 = vunpack.c.l.bf16 %v7619
        %v7654 = vunpack.c.h.bf16 %v7619
        %v7655 = vunpack.c.l.bf16 %v7620
        %v7656 = vunpack.c.h.bf16 %v7620
        %v7657 = vunpack.c.l.bf16 %v7621
        %v7658 = vunpack.c.h.bf16 %v7621
        %v7659 = vunpack.c.l.bf16 %v7622
        %v7660 = vunpack.c.h.bf16 %v7622
        %v7661 = vunpack.c.l.bf16 %v7623
        %v7662 = vunpack.c.h.bf16 %v7623
        %v7663 = vunpack.c.l.bf16 %v7624
        %v7664 = vunpack.c.h.bf16 %v7624
        %v7665 = vunpack.c.l.bf16 %v7625
        %v7666 = vunpack.c.h.bf16 %v7625
        %v7667 = vunpack.c.l.bf16 %v7626
        %v7668 = vunpack.c.h.bf16 %v7626
        %v7669 = vunpack.c.l.bf16 %v7627
        %v7670 = vunpack.c.h.bf16 %v7627
        %v7671 = vunpack.c.l.bf16 %v7628
        %v7672 = vunpack.c.h.bf16 %v7628
        %v7673 = vunpack.c.l.bf16 %v7629
        %v7674 = vunpack.c.h.bf16 %v7629
        %v7675 = vunpack.c.l.bf16 %v7630
        %v7676 = vunpack.c.h.bf16 %v7630
        %v7677 = vunpack.c.l.bf16 %v7631
        %v7678 = vunpack.c.h.bf16 %v7631
        %v7679 = vunpack.c.l.bf16 %v7632
        %v7680 = vunpack.c.h.bf16 %v7632
        %v7681 = vunpack.c.l.bf16 %v7633
        %v7682 = vunpack.c.h.bf16 %v7633
        %v7683 = vunpack.c.l.bf16 %v7634
        %v7684 = vunpack.c.h.bf16 %v7634
        %v7685 = vunpack.c.l.bf16 %v7635
        %v7686 = vunpack.c.h.bf16 %v7635
        %v7687 = vunpack.c.l.bf16 %v7636
        %v7688 = vunpack.c.h.bf16 %v7636
        %v7689 = vunpack.c.l.bf16 %v7637
        %v7690 = vunpack.c.h.bf16 %v7637
        %v7691 = vunpack.c.l.bf16 %v7638
        %v7692 = vunpack.c.h.bf16 %v7638
        %v7693 = vunpack.c.l.bf16 %v7639
        %v7694 = vunpack.c.h.bf16 %v7639
        %v7695 = vunpack.c.l.bf16 %v7640
        %v7696 = vunpack.c.h.bf16 %v7640
        %v7697 = vunpack.c.l.bf16 %v7641
        %v7698 = vunpack.c.h.bf16 %v7641
        %v7699 = vunpack.c.l.bf16 %v7642
        %v7700 = vunpack.c.h.bf16 %v7642
        %v7701 = vunpack.c.l.bf16 %v7643
        %v7702 = vunpack.c.h.bf16 %v7643
        %v7703 = vunpack.c.l.bf16 %v7644
        %v7704 = vunpack.c.h.bf16 %v7644
        %v7705 = vunpack.c.l.bf16 %v7645
        %v7706 = vunpack.c.h.bf16 %v7645
        %v7707 = vunpack.c.l.bf16 %v7646
        %v7708 = vunpack.c.h.bf16 %v7646
        %v7709 = vunpack.c.l.bf16 %v7647
        %v7710 = vunpack.c.h.bf16 %v7647
        %v7711 = vunpack.c.l.bf16 %v7648
        %v7712 = vunpack.c.h.bf16 %v7648
        %v7713 = vmax.f32 %v7649, 0.0
        %v7714 = vmax.f32 %v7650, 0.0
        %v7715 = vmax.f32 %v7651, 0.0
        %v7716 = vmax.f32 %v7652, 0.0
        %v7717 = vmax.f32 %v7653, 0.0
        %v7718 = vmax.f32 %v7654, 0.0
        %v7719 = vmax.f32 %v7655, 0.0
        %v7720 = vmax.f32 %v7656, 0.0
        %v7721 = vmax.f32 %v7657, 0.0
        %v7722 = vmax.f32 %v7658, 0.0
        %v7723 = vmax.f32 %v7659, 0.0
        %v7724 = vmax.f32 %v7660, 0.0
        %v7725 = vmax.f32 %v7661, 0.0
        %v7726 = vmax.f32 %v7662, 0.0
        %v7727 = vmax.f32 %v7663, 0.0
        %v7728 = vmax.f32 %v7664, 0.0
        %v7729 = vmax.f32 %v7665, 0.0
        %v7730 = vmax.f32 %v7666, 0.0
        %v7731 = vmax.f32 %v7667, 0.0
        %v7732 = vmax.f32 %v7668, 0.0
        %v7733 = vmax.f32 %v7669, 0.0
        %v7734 = vmax.f32 %v7670, 0.0
        %v7735 = vmax.f32 %v7671, 0.0
        %v7736 = vmax.f32 %v7672, 0.0
        %v7737 = vmax.f32 %v7673, 0.0
        %v7738 = vmax.f32 %v7674, 0.0
        %v7739 = vmax.f32 %v7675, 0.0
        %v7740 = vmax.f32 %v7676, 0.0
        %v7741 = vmax.f32 %v7677, 0.0
        %v7742 = vmax.f32 %v7678, 0.0
        %v7743 = vmax.f32 %v7679, 0.0
        %v7744 = vmax.f32 %v7680, 0.0
        %v7745 = vmax.f32 %v7681, 0.0
        %v7746 = vmax.f32 %v7682, 0.0
        %v7747 = vmax.f32 %v7683, 0.0
        %v7748 = vmax.f32 %v7684, 0.0
        %v7749 = vmax.f32 %v7685, 0.0
        %v7750 = vmax.f32 %v7686, 0.0
        %v7751 = vmax.f32 %v7687, 0.0
        %v7752 = vmax.f32 %v7688, 0.0
        %v7753 = vmax.f32 %v7689, 0.0
        %v7754 = vmax.f32 %v7690, 0.0
        %v7755 = vmax.f32 %v7691, 0.0
        %v7756 = vmax.f32 %v7692, 0.0
        %v7757 = vmax.f32 %v7693, 0.0
        %v7758 = vmax.f32 %v7694, 0.0
        %v7759 = vmax.f32 %v7695, 0.0
        %v7760 = vmax.f32 %v7696, 0.0
        %v7761 = vmax.f32 %v7697, 0.0
        %v7762 = vmax.f32 %v7698, 0.0
        %v7763 = vmax.f32 %v7699, 0.0
        %v7764 = vmax.f32 %v7700, 0.0
        %v7765 = vmax.f32 %v7701, 0.0
        %v7766 = vmax.f32 %v7702, 0.0
        %v7767 = vmax.f32 %v7703, 0.0
        %v7768 = vmax.f32 %v7704, 0.0
        %v7769 = vmax.f32 %v7705, 0.0
        %v7770 = vmax.f32 %v7706, 0.0
        %v7771 = vmax.f32 %v7707, 0.0
        %v7772 = vmax.f32 %v7708, 0.0
        %v7773 = vmax.f32 %v7709, 0.0
        %v7774 = vmax.f32 %v7710, 0.0
        %v7775 = vmax.f32 %v7711, 0.0
        %v7776 = vmax.f32 %v7712, 0.0
        %v7777 = vpack.c.bf16 %v7717, %v7713
        %v7778 = vpack.c.bf16 %v7718, %v7714
        %v7779 = vpack.c.bf16 %v7719, %v7715
        %v7780 = vpack.c.bf16 %v7720, %v7716
        %v7781 = vpack.c.bf16 %v7725, %v7721
        %v7782 = vpack.c.bf16 %v7726, %v7722
        %v7783 = vpack.c.bf16 %v7727, %v7723
        %v7784 = vpack.c.bf16 %v7728, %v7724
        %v7785 = vpack.c.bf16 %v7733, %v7729
        %v7786 = vpack.c.bf16 %v7734, %v7730
        %v7787 = vpack.c.bf16 %v7735, %v7731
        %v7788 = vpack.c.bf16 %v7736, %v7732
        %v7789 = vpack.c.bf16 %v7741, %v7737
        %v7790 = vpack.c.bf16 %v7742, %v7738
        %v7791 = vpack.c.bf16 %v7743, %v7739
        %v7792 = vpack.c.bf16 %v7744, %v7740
        %v7793 = vpack.c.bf16 %v7749, %v7745
        %v7794 = vpack.c.bf16 %v7750, %v7746
        %v7795 = vpack.c.bf16 %v7751, %v7747
        %v7796 = vpack.c.bf16 %v7752, %v7748
        %v7797 = vpack.c.bf16 %v7757, %v7753
        %v7798 = vpack.c.bf16 %v7758, %v7754
        %v7799 = vpack.c.bf16 %v7759, %v7755
        %v7800 = vpack.c.bf16 %v7760, %v7756
        %v7801 = vpack.c.bf16 %v7765, %v7761
        %v7802 = vpack.c.bf16 %v7766, %v7762
        %v7803 = vpack.c.bf16 %v7767, %v7763
        %v7804 = vpack.c.bf16 %v7768, %v7764
        %v7805 = vpack.c.bf16 %v7773, %v7769
        %v7806 = vpack.c.bf16 %v7774, %v7770
        %v7807 = vpack.c.bf16 %v7775, %v7771
        %v7808 = vpack.c.bf16 %v7776, %v7772
        %v7809 = vld [vmem:[#allocation26] sm:$0xff]
        %v7810 = vld [vmem:[#allocation26 + $0x8] sm:$0xff]
        %v7811 = vld [vmem:[#allocation26 + $0x10] sm:$0xff]
        %v7812 = vld [vmem:[#allocation26 + $0x18] sm:$0xf]
        %v7813 = vld [vmem:[#allocation26 + $0x1c] sm:$0xff]
        %v7814 = vld [vmem:[#allocation26 + $0x24] sm:$0xff]
        %v7815 = vld [vmem:[#allocation26 + $0x2c] sm:$0xff]
        %v7816 = vld [vmem:[#allocation26 + $0x34] sm:$0xf]
        %v7817 = vld [vmem:[#allocation26 + $0x38] sm:$0xff]
        %v7818 = vld [vmem:[#allocation26 + $0x40] sm:$0xff]
        %v7819 = vld [vmem:[#allocation26 + $0x48] sm:$0xff]
        %v7820 = vld [vmem:[#allocation26 + $0x50] sm:$0xf]
        %v7821 = vld [vmem:[#allocation26 + $0x54] sm:$0xff]
        %v7822 = vld [vmem:[#allocation26 + $0x5c] sm:$0xff]
        %v7823 = vld [vmem:[#allocation26 + $0x64] sm:$0xff]
        %v7824 = vld [vmem:[#allocation26 + $0x6c] sm:$0xf]
        %v7825 = vld [vmem:[#allocation26 + $0x70] sm:$0xff]
        %v7826 = vld [vmem:[#allocation26 + $0x78] sm:$0xff]
        %v7827 = vld [vmem:[#allocation26 + $0x80] sm:$0xff]
        %v7828 = vld [vmem:[#allocation26 + $0x88] sm:$0xf]
        %v7829 = vld [vmem:[#allocation26 + $0x8c] sm:$0xff]
        %v7830 = vld [vmem:[#allocation26 + $0x94] sm:$0xff]
        %v7831 = vld [vmem:[#allocation26 + $0x9c] sm:$0xff]
        %v7832 = vld [vmem:[#allocation26 + $0xa4] sm:$0xf]
        %v7833 = vld [vmem:[#allocation26 + $0xa8] sm:$0xff]
        %v7834 = vld [vmem:[#allocation26 + $0xb0] sm:$0xff]
        %v7835 = vld [vmem:[#allocation26 + $0xb8] sm:$0xff]
        %v7836 = vld [vmem:[#allocation26 + $0xc0] sm:$0xf]
        %v7837 = vld [vmem:[#allocation26 + $0xc4] sm:$0xff]
        %v7838 = vld [vmem:[#allocation26 + $0xcc] sm:$0xff]
        %v7839 = vld [vmem:[#allocation26 + $0xd4] sm:$0xff]
        %v7840 = vld [vmem:[#allocation26 + $0xdc] sm:$0xf]
        %v7841 = vld [vmem:[#allocation26 + $0xe0] sm:$0xff]
        %v7842 = vld [vmem:[#allocation26 + $0xe8] sm:$0xff]
        %v7843 = vld [vmem:[#allocation26 + $0xf0] sm:$0xff]
        %v7844 = vld [vmem:[#allocation26 + $0xf8] sm:$0xf]
        %v7845 = vld [vmem:[#allocation26 + $0xfc] sm:$0xff]
        %v7846 = vld [vmem:[#allocation26 + $0x104] sm:$0xff]
        %v7847 = vld [vmem:[#allocation26 + $0x10c] sm:$0xff]
        %v7848 = vld [vmem:[#allocation26 + $0x114] sm:$0xf]
        %v7849 = vld [vmem:[#allocation26 + $0x118] sm:$0xff]
        %v7850 = vld [vmem:[#allocation26 + $0x120] sm:$0xff]
        %v7851 = vld [vmem:[#allocation26 + $0x128] sm:$0xff]
        %v7852 = vld [vmem:[#allocation26 + $0x130] sm:$0xf]
        %v7853 = vld [vmem:[#allocation26 + $0x134] sm:$0xff]
        %v7854 = vld [vmem:[#allocation26 + $0x13c] sm:$0xff]
        %v7855 = vld [vmem:[#allocation26 + $0x144] sm:$0xff]
        %v7856 = vld [vmem:[#allocation26 + $0x14c] sm:$0xf]
        %v7857 = vld [vmem:[#allocation26 + $0x150] sm:$0xff]
        %v7858 = vld [vmem:[#allocation26 + $0x158] sm:$0xff]
        %v7859 = vld [vmem:[#allocation26 + $0x160] sm:$0xff]
        %v7860 = vld [vmem:[#allocation26 + $0x168] sm:$0xf]
        %v7861 = vld [vmem:[#allocation26 + $0x16c] sm:$0xff]
        %v7862 = vld [vmem:[#allocation26 + $0x174] sm:$0xff]
        %v7863 = vld [vmem:[#allocation26 + $0x17c] sm:$0xff]
        %v7864 = vld [vmem:[#allocation26 + $0x184] sm:$0xf]
        %v7865 = vld [vmem:[#allocation26 + $0x188] sm:$0xff]
        %v7866 = vld [vmem:[#allocation26 + $0x190] sm:$0xff]
        %v7867 = vld [vmem:[#allocation26 + $0x198] sm:$0xff]
        %v7868 = vld [vmem:[#allocation26 + $0x1a0] sm:$0xf]
        %v7869 = vld [vmem:[#allocation26 + $0x1a4] sm:$0xff]
        %v7870 = vld [vmem:[#allocation26 + $0x1ac] sm:$0xff]
        %v7871 = vld [vmem:[#allocation26 + $0x1b4] sm:$0xff]
        %v7872 = vld [vmem:[#allocation26 + $0x1bc] sm:$0xf]
        %v7873 = vld [vmem:[#allocation26 + $0x1c0] sm:$0xff]
        %v7874 = vld [vmem:[#allocation26 + $0x1c8] sm:$0xff]
        %v7875 = vld [vmem:[#allocation26 + $0x1d0] sm:$0xff]
        %v7876 = vld [vmem:[#allocation26 + $0x1d8] sm:$0xf]
        %v7877 = vld [vmem:[#allocation26 + $0x1dc] sm:$0xff]
        %v7878 = vld [vmem:[#allocation26 + $0x1e4] sm:$0xff]
        %v7879 = vld [vmem:[#allocation26 + $0x1ec] sm:$0xff]
        %v7880 = vld [vmem:[#allocation26 + $0x1f4] sm:$0xf]
        %v7881 = vld [vmem:[#allocation26 + $0x1f8] sm:$0xff]
        %v7882 = vld [vmem:[#allocation26 + $0x200] sm:$0xff]
        %v7883 = vld [vmem:[#allocation26 + $0x208] sm:$0xff]
        %v7884 = vld [vmem:[#allocation26 + $0x210] sm:$0xf]
        %v7885 = vld [vmem:[#allocation26 + $0x214] sm:$0xff]
        %v7886 = vld [vmem:[#allocation26 + $0x21c] sm:$0xff]
        %v7887 = vld [vmem:[#allocation26 + $0x224] sm:$0xff]
        %v7888 = vld [vmem:[#allocation26 + $0x22c] sm:$0xf]
        %v7889 = vld [vmem:[#allocation26 + $0x230] sm:$0xff]
        %v7890 = vld [vmem:[#allocation26 + $0x238] sm:$0xff]
        %v7891 = vld [vmem:[#allocation26 + $0x240] sm:$0xff]
        %v7892 = vld [vmem:[#allocation26 + $0x248] sm:$0xf]
        %v7893 = vld [vmem:[#allocation26 + $0x24c] sm:$0xff]
        %v7894 = vld [vmem:[#allocation26 + $0x254] sm:$0xff]
        %v7895 = vld [vmem:[#allocation26 + $0x25c] sm:$0xff]
        %v7896 = vld [vmem:[#allocation26 + $0x264] sm:$0xf]
        %v7897 = vld [vmem:[#allocation26 + $0x268] sm:$0xff]
        %v7898 = vld [vmem:[#allocation26 + $0x270] sm:$0xff]
        %v7899 = vld [vmem:[#allocation26 + $0x278] sm:$0xff]
        %v7900 = vld [vmem:[#allocation26 + $0x280] sm:$0xf]
        %v7901 = vld [vmem:[#allocation26 + $0x284] sm:$0xff]
        %v7902 = vld [vmem:[#allocation26 + $0x28c] sm:$0xff]
        %v7903 = vld [vmem:[#allocation26 + $0x294] sm:$0xff]
        %v7904 = vld [vmem:[#allocation26 + $0x29c] sm:$0xf]
        %v7905 = vld [vmem:[#allocation26 + $0x2a0] sm:$0xff]
        %v7906 = vld [vmem:[#allocation26 + $0x2a8] sm:$0xff]
        %v7907 = vld [vmem:[#allocation26 + $0x2b0] sm:$0xff]
        %v7908 = vld [vmem:[#allocation26 + $0x2b8] sm:$0xf]
        %v7909 = vld [vmem:[#allocation26 + $0x2bc] sm:$0xff]
        %v7910 = vld [vmem:[#allocation26 + $0x2c4] sm:$0xff]
        %v7911 = vld [vmem:[#allocation26 + $0x2cc] sm:$0xff]
        %v7912 = vld [vmem:[#allocation26 + $0x2d4] sm:$0xf]
        %v7913 = vld [vmem:[#allocation26 + $0x2d8] sm:$0xff]
        %v7914 = vld [vmem:[#allocation26 + $0x2e0] sm:$0xff]
        %v7915 = vld [vmem:[#allocation26 + $0x2e8] sm:$0xff]
        %v7916 = vld [vmem:[#allocation26 + $0x2f0] sm:$0xf]
        %v7917 = vld [vmem:[#allocation26 + $0x2f4] sm:$0xff]
        %v7918 = vld [vmem:[#allocation26 + $0x2fc] sm:$0xff]
        %v7919 = vld [vmem:[#allocation26 + $0x304] sm:$0xff]
        %v7920 = vld [vmem:[#allocation26 + $0x30c] sm:$0xf]
        %v7921 = vld [vmem:[#allocation26 + $0x310] sm:$0xff]
        %v7922 = vld [vmem:[#allocation26 + $0x318] sm:$0xff]
        %v7923 = vld [vmem:[#allocation26 + $0x320] sm:$0xff]
        %v7924 = vld [vmem:[#allocation26 + $0x328] sm:$0xf]
        %v7925 = vld [vmem:[#allocation26 + $0x32c] sm:$0xff]
        %v7926 = vld [vmem:[#allocation26 + $0x334] sm:$0xff]
        %v7927 = vld [vmem:[#allocation26 + $0x33c] sm:$0xff]
        %v7928 = vld [vmem:[#allocation26 + $0x344] sm:$0xf]
        %v7929 = vld [vmem:[#allocation26 + $0x348] sm:$0xff]
        %v7930 = vld [vmem:[#allocation26 + $0x350] sm:$0xff]
        %v7931 = vld [vmem:[#allocation26 + $0x358] sm:$0xff]
        %v7932 = vld [vmem:[#allocation26 + $0x360] sm:$0xf]
        %v7933 = vld [vmem:[#allocation26 + $0x364] sm:$0xff]
        %v7934 = vld [vmem:[#allocation26 + $0x36c] sm:$0xff]
        %v7935 = vld [vmem:[#allocation26 + $0x374] sm:$0xff]
        %v7936 = vld [vmem:[#allocation26 + $0x37c] sm:$0xf]
        %v7937 = vld [vmem:[#allocation26 + $0x380] sm:$0xff]
        %v7938 = vld [vmem:[#allocation26 + $0x388] sm:$0xff]
        %v7939 = vld [vmem:[#allocation26 + $0x390] sm:$0xff]
        %v7940 = vld [vmem:[#allocation26 + $0x398] sm:$0xf]
        %v7941 = vld [vmem:[#allocation26 + $0x39c] sm:$0xff]
        %v7942 = vld [vmem:[#allocation26 + $0x3a4] sm:$0xff]
        %v7943 = vld [vmem:[#allocation26 + $0x3ac] sm:$0xff]
        %v7944 = vld [vmem:[#allocation26 + $0x3b4] sm:$0xf]
        %v7945 = vld [vmem:[#allocation26 + $0x3b8] sm:$0xff]
        %v7946 = vld [vmem:[#allocation26 + $0x3c0] sm:$0xff]
        %v7947 = vld [vmem:[#allocation26 + $0x3c8] sm:$0xff]
        %v7948 = vld [vmem:[#allocation26 + $0x3d0] sm:$0xf]
        %v7949 = vld [vmem:[#allocation26 + $0x3d4] sm:$0xff]
        %v7950 = vld [vmem:[#allocation26 + $0x3dc] sm:$0xff]
        %v7951 = vld [vmem:[#allocation26 + $0x3e4] sm:$0xff]
        %v7952 = vld [vmem:[#allocation26 + $0x3ec] sm:$0xf]
        %v7953 = vld [vmem:[#allocation26 + $0x3f0] sm:$0xff]
        %v7954 = vld [vmem:[#allocation26 + $0x3f8] sm:$0xff]
        %v7955 = vld [vmem:[#allocation26 + $0x400] sm:$0xff]
        %v7956 = vld [vmem:[#allocation26 + $0x408] sm:$0xf]
        %v7957 = vld [vmem:[#allocation26 + $0x40c] sm:$0xff]
        %v7958 = vld [vmem:[#allocation26 + $0x414] sm:$0xff]
        %v7959 = vld [vmem:[#allocation26 + $0x41c] sm:$0xff]
        %v7960 = vld [vmem:[#allocation26 + $0x424] sm:$0xf]
        %v7961 = vld [vmem:[#allocation26 + $0x428] sm:$0xff]
        %v7962 = vld [vmem:[#allocation26 + $0x430] sm:$0xff]
        %v7963 = vld [vmem:[#allocation26 + $0x438] sm:$0xff]
        %v7964 = vld [vmem:[#allocation26 + $0x440] sm:$0xf]
        %v7965 = vld [vmem:[#allocation26 + $0x444] sm:$0xff]
        %v7966 = vld [vmem:[#allocation26 + $0x44c] sm:$0xff]
        %v7967 = vld [vmem:[#allocation26 + $0x454] sm:$0xff]
        %v7968 = vld [vmem:[#allocation26 + $0x45c] sm:$0xf]
        %v7969 = vld [vmem:[#allocation26 + $0x460] sm:$0xff]
        %v7970 = vld [vmem:[#allocation26 + $0x468] sm:$0xff]
        %v7971 = vld [vmem:[#allocation26 + $0x470] sm:$0xff]
        %v7972 = vld [vmem:[#allocation26 + $0x478] sm:$0xf]
        %v7973 = vld [vmem:[#allocation26 + $0x47c] sm:$0xff]
        %v7974 = vld [vmem:[#allocation26 + $0x484] sm:$0xff]
        %v7975 = vld [vmem:[#allocation26 + $0x48c] sm:$0xff]
        %v7976 = vld [vmem:[#allocation26 + $0x494] sm:$0xf]
        %v7977 = vld [vmem:[#allocation26 + $0x498] sm:$0xff]
        %v7978 = vld [vmem:[#allocation26 + $0x4a0] sm:$0xff]
        %v7979 = vld [vmem:[#allocation26 + $0x4a8] sm:$0xff]
        %v7980 = vld [vmem:[#allocation26 + $0x4b0] sm:$0xf]
        %v7981 = vld [vmem:[#allocation26 + $0x4b4] sm:$0xff]
        %v7982 = vld [vmem:[#allocation26 + $0x4bc] sm:$0xff]
        %v7983 = vld [vmem:[#allocation26 + $0x4c4] sm:$0xff]
        %v7984 = vld [vmem:[#allocation26 + $0x4cc] sm:$0xf]
        %v7985 = vld [vmem:[#allocation26 + $0x4d0] sm:$0xff]
        %v7986 = vld [vmem:[#allocation26 + $0x4d8] sm:$0xff]
        %v7987 = vld [vmem:[#allocation26 + $0x4e0] sm:$0xff]
        %v7988 = vld [vmem:[#allocation26 + $0x4e8] sm:$0xf]
        %v7989 = vld [vmem:[#allocation26 + $0x4ec] sm:$0xff]
        %v7990 = vld [vmem:[#allocation26 + $0x4f4] sm:$0xff]
        %v7991 = vld [vmem:[#allocation26 + $0x4fc] sm:$0xff]
        %v7992 = vld [vmem:[#allocation26 + $0x504] sm:$0xf]
        %v7993 = vld [vmem:[#allocation26 + $0x508] sm:$0xff]
        %v7994 = vld [vmem:[#allocation26 + $0x510] sm:$0xff]
        %v7995 = vld [vmem:[#allocation26 + $0x518] sm:$0xff]
        %v7996 = vld [vmem:[#allocation26 + $0x520] sm:$0xf]
        %v7997 = vld [vmem:[#allocation26 + $0x524] sm:$0xff]
        %v7998 = vld [vmem:[#allocation26 + $0x52c] sm:$0xff]
        %v7999 = vld [vmem:[#allocation26 + $0x534] sm:$0xff]
        %v8000 = vld [vmem:[#allocation26 + $0x53c] sm:$0xf]
        %v8001 = vld [vmem:[#allocation26 + $0x540] sm:$0xff]
        %v8002 = vld [vmem:[#allocation26 + $0x548] sm:$0xff]
        %v8003 = vld [vmem:[#allocation26 + $0x550] sm:$0xff]
        %v8004 = vld [vmem:[#allocation26 + $0x558] sm:$0xf]
        %v8005 = vld [vmem:[#allocation26 + $0x55c] sm:$0xff]
        %v8006 = vld [vmem:[#allocation26 + $0x564] sm:$0xff]
        %v8007 = vld [vmem:[#allocation26 + $0x56c] sm:$0xff]
        %v8008 = vld [vmem:[#allocation26 + $0x574] sm:$0xf]
        %v8009 = vld [vmem:[#allocation26 + $0x578] sm:$0xff]
        %v8010 = vld [vmem:[#allocation26 + $0x580] sm:$0xff]
        %v8011 = vld [vmem:[#allocation26 + $0x588] sm:$0xff]
        %v8012 = vld [vmem:[#allocation26 + $0x590] sm:$0xf]
        %v8013 = vld [vmem:[#allocation26 + $0x594] sm:$0xff]
        %v8014 = vld [vmem:[#allocation26 + $0x59c] sm:$0xff]
        %v8015 = vld [vmem:[#allocation26 + $0x5a4] sm:$0xff]
        %v8016 = vld [vmem:[#allocation26 + $0x5ac] sm:$0xf]
        %v8017 = vld [vmem:[#allocation26 + $0x5b0] sm:$0xff]
        %v8018 = vld [vmem:[#allocation26 + $0x5b8] sm:$0xff]
        %v8019 = vld [vmem:[#allocation26 + $0x5c0] sm:$0xff]
        %v8020 = vld [vmem:[#allocation26 + $0x5c8] sm:$0xf]
        %v8021 = vld [vmem:[#allocation26 + $0x5cc] sm:$0xff]
        %v8022 = vld [vmem:[#allocation26 + $0x5d4] sm:$0xff]
        %v8023 = vld [vmem:[#allocation26 + $0x5dc] sm:$0xff]
        %v8024 = vld [vmem:[#allocation26 + $0x5e4] sm:$0xf]
        %v8025 = vld [vmem:[#allocation26 + $0x5e8] sm:$0xff]
        %v8026 = vld [vmem:[#allocation26 + $0x5f0] sm:$0xff]
        %v8027 = vld [vmem:[#allocation26 + $0x5f8] sm:$0xff]
        %v8028 = vld [vmem:[#allocation26 + $0x600] sm:$0xf]
        %v8029 = vld [vmem:[#allocation26 + $0x604] sm:$0xff]
        %v8030 = vld [vmem:[#allocation26 + $0x60c] sm:$0xff]
        %v8031 = vld [vmem:[#allocation26 + $0x614] sm:$0xff]
        %v8032 = vld [vmem:[#allocation26 + $0x61c] sm:$0xf]
        %v8033 = vld [vmem:[#allocation26 + $0x620] sm:$0xff]
        %v8034 = vld [vmem:[#allocation26 + $0x628] sm:$0xff]
        %v8035 = vld [vmem:[#allocation26 + $0x630] sm:$0xff]
        %v8036 = vld [vmem:[#allocation26 + $0x638] sm:$0xf]
        %v8037 = vld [vmem:[#allocation26 + $0x63c] sm:$0xff]
        %v8038 = vld [vmem:[#allocation26 + $0x644] sm:$0xff]
        %v8039 = vld [vmem:[#allocation26 + $0x64c] sm:$0xff]
        %v8040 = vld [vmem:[#allocation26 + $0x654] sm:$0xf]
        %v8041 = vld [vmem:[#allocation26 + $0x658] sm:$0xff]
        %v8042 = vld [vmem:[#allocation26 + $0x660] sm:$0xff]
        %v8043 = vld [vmem:[#allocation26 + $0x668] sm:$0xff]
        %v8044 = vld [vmem:[#allocation26 + $0x670] sm:$0xf]
        %v8045 = vld [vmem:[#allocation26 + $0x674] sm:$0xff]
        %v8046 = vld [vmem:[#allocation26 + $0x67c] sm:$0xff]
        %v8047 = vld [vmem:[#allocation26 + $0x684] sm:$0xff]
        %v8048 = vld [vmem:[#allocation26 + $0x68c] sm:$0xf]
        %v8049 = vld [vmem:[#allocation26 + $0x690] sm:$0xff]
        %v8050 = vld [vmem:[#allocation26 + $0x698] sm:$0xff]
        %v8051 = vld [vmem:[#allocation26 + $0x6a0] sm:$0xff]
        %v8052 = vld [vmem:[#allocation26 + $0x6a8] sm:$0xf]
        %v8053 = vld [vmem:[#allocation26 + $0x6ac] sm:$0xff]
        %v8054 = vld [vmem:[#allocation26 + $0x6b4] sm:$0xff]
        %v8055 = vld [vmem:[#allocation26 + $0x6bc] sm:$0xff]
        %v8056 = vld [vmem:[#allocation26 + $0x6c4] sm:$0xf]
        %v8057 = vld [vmem:[#allocation26 + $0x6c8] sm:$0xff]
        %v8058 = vld [vmem:[#allocation26 + $0x6d0] sm:$0xff]
        %v8059 = vld [vmem:[#allocation26 + $0x6d8] sm:$0xff]
        %v8060 = vld [vmem:[#allocation26 + $0x6e0] sm:$0xf]
        %v8061 = vld [vmem:[#allocation26 + $0x6e4] sm:$0xff]
        %v8062 = vld [vmem:[#allocation26 + $0x6ec] sm:$0xff]
        %v8063 = vld [vmem:[#allocation26 + $0x6f4] sm:$0xff]
        %v8064 = vld [vmem:[#allocation26 + $0x6fc] sm:$0xf]
        %v8065 = vld [vmem:[%s18] sm:$0x7f]
        %v8322 = vunpack.c.l.b16 %v7809
        %v8323 = vunpack.c.h.b16 %v7809
        %v8324 = vunpack.c.l.b16 %v7810
        %v8325 = vunpack.c.h.b16 %v7810
        %v8326 = vunpack.c.l.b16 %v7811
        %v8327 = vunpack.c.h.b16 %v7811
        %v8328 = vunpack.c.l.b16 %v7812
        %v8329 = vunpack.c.l.b16 %v7813
        %v8330 = vunpack.c.h.b16 %v7813
        %v8331 = vunpack.c.l.b16 %v7814
        %v8332 = vunpack.c.h.b16 %v7814
        %v8333 = vunpack.c.l.b16 %v7815
        %v8334 = vunpack.c.h.b16 %v7815
        %v8335 = vunpack.c.l.b16 %v7816
        %v8336 = vunpack.c.l.b16 %v7817
        %v8337 = vunpack.c.h.b16 %v7817
        %v8338 = vunpack.c.l.b16 %v7818
        %v8339 = vunpack.c.h.b16 %v7818
        %v8340 = vunpack.c.l.b16 %v7819
        %v8341 = vunpack.c.h.b16 %v7819
        %v8342 = vunpack.c.l.b16 %v7820
        %v8343 = vunpack.c.l.b16 %v7821
        %v8344 = vunpack.c.h.b16 %v7821
        %v8345 = vunpack.c.l.b16 %v7822
        %v8346 = vunpack.c.h.b16 %v7822
        %v8347 = vunpack.c.l.b16 %v7823
        %v8348 = vunpack.c.h.b16 %v7823
        %v8349 = vunpack.c.l.b16 %v7824
        %v8350 = vunpack.c.l.b16 %v7825
        %v8351 = vunpack.c.h.b16 %v7825
        %v8352 = vunpack.c.l.b16 %v7826
        %v8353 = vunpack.c.h.b16 %v7826
        %v8354 = vunpack.c.l.b16 %v7827
        %v8355 = vunpack.c.h.b16 %v7827
        %v8356 = vunpack.c.l.b16 %v7828
        %v8357 = vunpack.c.l.b16 %v7829
        %v8358 = vunpack.c.h.b16 %v7829
        %v8359 = vunpack.c.l.b16 %v7830
        %v8360 = vunpack.c.h.b16 %v7830
        %v8361 = vunpack.c.l.b16 %v7831
        %v8362 = vunpack.c.h.b16 %v7831
        %v8363 = vunpack.c.l.b16 %v7832
        %v8364 = vunpack.c.l.b16 %v7833
        %v8365 = vunpack.c.h.b16 %v7833
        %v8366 = vunpack.c.l.b16 %v7834
        %v8367 = vunpack.c.h.b16 %v7834
        %v8368 = vunpack.c.l.b16 %v7835
        %v8369 = vunpack.c.h.b16 %v7835
        %v8370 = vunpack.c.l.b16 %v7836
        %v8371 = vunpack.c.l.b16 %v7837
        %v8372 = vunpack.c.h.b16 %v7837
        %v8373 = vunpack.c.l.b16 %v7838
        %v8374 = vunpack.c.h.b16 %v7838
        %v8375 = vunpack.c.l.b16 %v7839
        %v8376 = vunpack.c.h.b16 %v7839
        %v8377 = vunpack.c.l.b16 %v7840
        %v8378 = vunpack.c.l.b16 %v7841
        %v8379 = vunpack.c.h.b16 %v7841
        %v8380 = vunpack.c.l.b16 %v7842
        %v8381 = vunpack.c.h.b16 %v7842
        %v8382 = vunpack.c.l.b16 %v7843
        %v8383 = vunpack.c.h.b16 %v7843
        %v8384 = vunpack.c.l.b16 %v7844
        %v8385 = vunpack.c.l.b16 %v7845
        %v8386 = vunpack.c.h.b16 %v7845
        %v8387 = vunpack.c.l.b16 %v7846
        %v8388 = vunpack.c.h.b16 %v7846
        %v8389 = vunpack.c.l.b16 %v7847
        %v8390 = vunpack.c.h.b16 %v7847
        %v8391 = vunpack.c.l.b16 %v7848
        %v8392 = vunpack.c.l.b16 %v7849
        %v8393 = vunpack.c.h.b16 %v7849
        %v8394 = vunpack.c.l.b16 %v7850
        %v8395 = vunpack.c.h.b16 %v7850
        %v8396 = vunpack.c.l.b16 %v7851
        %v8397 = vunpack.c.h.b16 %v7851
        %v8398 = vunpack.c.l.b16 %v7852
        %v8399 = vunpack.c.l.b16 %v7853
        %v8400 = vunpack.c.h.b16 %v7853
        %v8401 = vunpack.c.l.b16 %v7854
        %v8402 = vunpack.c.h.b16 %v7854
        %v8403 = vunpack.c.l.b16 %v7855
        %v8404 = vunpack.c.h.b16 %v7855
        %v8405 = vunpack.c.l.b16 %v7856
        %v8406 = vunpack.c.l.b16 %v7857
        %v8407 = vunpack.c.h.b16 %v7857
        %v8408 = vunpack.c.l.b16 %v7858
        %v8409 = vunpack.c.h.b16 %v7858
        %v8410 = vunpack.c.l.b16 %v7859
        %v8411 = vunpack.c.h.b16 %v7859
        %v8412 = vunpack.c.l.b16 %v7860
        %v8413 = vunpack.c.l.b16 %v7861
        %v8414 = vunpack.c.h.b16 %v7861
        %v8415 = vunpack.c.l.b16 %v7862
        %v8416 = vunpack.c.h.b16 %v7862
        %v8417 = vunpack.c.l.b16 %v7863
        %v8418 = vunpack.c.h.b16 %v7863
        %v8419 = vunpack.c.l.b16 %v7864
        %v8420 = vunpack.c.l.b16 %v7865
        %v8421 = vunpack.c.h.b16 %v7865
        %v8422 = vunpack.c.l.b16 %v7866
        %v8423 = vunpack.c.h.b16 %v7866
        %v8424 = vunpack.c.l.b16 %v7867
        %v8425 = vunpack.c.h.b16 %v7867
        %v8426 = vunpack.c.l.b16 %v7868
        %v8427 = vunpack.c.l.b16 %v7869
        %v8428 = vunpack.c.h.b16 %v7869
        %v8429 = vunpack.c.l.b16 %v7870
        %v8430 = vunpack.c.h.b16 %v7870
        %v8431 = vunpack.c.l.b16 %v7871
        %v8432 = vunpack.c.h.b16 %v7871
        %v8433 = vunpack.c.l.b16 %v7872
        %v8434 = vunpack.c.l.b16 %v7873
        %v8435 = vunpack.c.h.b16 %v7873
        %v8436 = vunpack.c.l.b16 %v7874
        %v8437 = vunpack.c.h.b16 %v7874
        %v8438 = vunpack.c.l.b16 %v7875
        %v8439 = vunpack.c.h.b16 %v7875
        %v8440 = vunpack.c.l.b16 %v7876
        %v8441 = vunpack.c.l.b16 %v7877
        %v8442 = vunpack.c.h.b16 %v7877
        %v8443 = vunpack.c.l.b16 %v7878
        %v8444 = vunpack.c.h.b16 %v7878
        %v8445 = vunpack.c.l.b16 %v7879
        %v8446 = vunpack.c.h.b16 %v7879
        %v8447 = vunpack.c.l.b16 %v7880
        %v8448 = vunpack.c.l.b16 %v7881
        %v8449 = vunpack.c.h.b16 %v7881
        %v8450 = vunpack.c.l.b16 %v7882
        %v8451 = vunpack.c.h.b16 %v7882
        %v8452 = vunpack.c.l.b16 %v7883
        %v8453 = vunpack.c.h.b16 %v7883
        %v8454 = vunpack.c.l.b16 %v7884
        %v8455 = vunpack.c.l.b16 %v7885
        %v8456 = vunpack.c.h.b16 %v7885
        %v8457 = vunpack.c.l.b16 %v7886
        %v8458 = vunpack.c.h.b16 %v7886
        %v8459 = vunpack.c.l.b16 %v7887
        %v8460 = vunpack.c.h.b16 %v7887
        %v8461 = vunpack.c.l.b16 %v7888
        %v8462 = vunpack.c.l.b16 %v7889
        %v8463 = vunpack.c.h.b16 %v7889
        %v8464 = vunpack.c.l.b16 %v7890
        %v8465 = vunpack.c.h.b16 %v7890
        %v8466 = vunpack.c.l.b16 %v7891
        %v8467 = vunpack.c.h.b16 %v7891
        %v8468 = vunpack.c.l.b16 %v7892
        %v8469 = vunpack.c.l.b16 %v7893
        %v8470 = vunpack.c.h.b16 %v7893
        %v8471 = vunpack.c.l.b16 %v7894
        %v8472 = vunpack.c.h.b16 %v7894
        %v8473 = vunpack.c.l.b16 %v7895
        %v8474 = vunpack.c.h.b16 %v7895
        %v8475 = vunpack.c.l.b16 %v7896
        %v8476 = vunpack.c.l.b16 %v7897
        %v8477 = vunpack.c.h.b16 %v7897
        %v8478 = vunpack.c.l.b16 %v7898
        %v8479 = vunpack.c.h.b16 %v7898
        %v8480 = vunpack.c.l.b16 %v7899
        %v8481 = vunpack.c.h.b16 %v7899
        %v8482 = vunpack.c.l.b16 %v7900
        %v8483 = vunpack.c.l.b16 %v7901
        %v8484 = vunpack.c.h.b16 %v7901
        %v8485 = vunpack.c.l.b16 %v7902
        %v8486 = vunpack.c.h.b16 %v7902
        %v8487 = vunpack.c.l.b16 %v7903
        %v8488 = vunpack.c.h.b16 %v7903
        %v8489 = vunpack.c.l.b16 %v7904
        %v8490 = vunpack.c.l.b16 %v7905
        %v8491 = vunpack.c.h.b16 %v7905
        %v8492 = vunpack.c.l.b16 %v7906
        %v8493 = vunpack.c.h.b16 %v7906
        %v8494 = vunpack.c.l.b16 %v7907
        %v8495 = vunpack.c.h.b16 %v7907
        %v8496 = vunpack.c.l.b16 %v7908
        %v8497 = vunpack.c.l.b16 %v7909
        %v8498 = vunpack.c.h.b16 %v7909
        %v8499 = vunpack.c.l.b16 %v7910
        %v8500 = vunpack.c.h.b16 %v7910
        %v8501 = vunpack.c.l.b16 %v7911
        %v8502 = vunpack.c.h.b16 %v7911
        %v8503 = vunpack.c.l.b16 %v7912
        %v8504 = vunpack.c.l.b16 %v7913
        %v8505 = vunpack.c.h.b16 %v7913
        %v8506 = vunpack.c.l.b16 %v7914
        %v8507 = vunpack.c.h.b16 %v7914
        %v8508 = vunpack.c.l.b16 %v7915
        %v8509 = vunpack.c.h.b16 %v7915
        %v8510 = vunpack.c.l.b16 %v7916
        %v8511 = vunpack.c.l.b16 %v7917
        %v8512 = vunpack.c.h.b16 %v7917
        %v8513 = vunpack.c.l.b16 %v7918
        %v8514 = vunpack.c.h.b16 %v7918
        %v8515 = vunpack.c.l.b16 %v7919
        %v8516 = vunpack.c.h.b16 %v7919
        %v8517 = vunpack.c.l.b16 %v7920
        %v8518 = vunpack.c.l.b16 %v7921
        %v8519 = vunpack.c.h.b16 %v7921
        %v8520 = vunpack.c.l.b16 %v7922
        %v8521 = vunpack.c.h.b16 %v7922
        %v8522 = vunpack.c.l.b16 %v7923
        %v8523 = vunpack.c.h.b16 %v7923
        %v8524 = vunpack.c.l.b16 %v7924
        %v8525 = vunpack.c.l.b16 %v7925
        %v8526 = vunpack.c.h.b16 %v7925
        %v8527 = vunpack.c.l.b16 %v7926
        %v8528 = vunpack.c.h.b16 %v7926
        %v8529 = vunpack.c.l.b16 %v7927
        %v8530 = vunpack.c.h.b16 %v7927
        %v8531 = vunpack.c.l.b16 %v7928
        %v8532 = vunpack.c.l.b16 %v7929
        %v8533 = vunpack.c.h.b16 %v7929
        %v8534 = vunpack.c.l.b16 %v7930
        %v8535 = vunpack.c.h.b16 %v7930
        %v8536 = vunpack.c.l.b16 %v7931
        %v8537 = vunpack.c.h.b16 %v7931
        %v8538 = vunpack.c.l.b16 %v7932
        %v8539 = vunpack.c.l.b16 %v7933
        %v8540 = vunpack.c.h.b16 %v7933
        %v8541 = vunpack.c.l.b16 %v7934
        %v8542 = vunpack.c.h.b16 %v7934
        %v8543 = vunpack.c.l.b16 %v7935
        %v8544 = vunpack.c.h.b16 %v7935
        %v8545 = vunpack.c.l.b16 %v7936
        %v8546 = vunpack.c.l.b16 %v7937
        %v8547 = vunpack.c.h.b16 %v7937
        %v8548 = vunpack.c.l.b16 %v7938
        %v8549 = vunpack.c.h.b16 %v7938
        %v8550 = vunpack.c.l.b16 %v7939
        %v8551 = vunpack.c.h.b16 %v7939
        %v8552 = vunpack.c.l.b16 %v7940
        %v8553 = vunpack.c.l.b16 %v7941
        %v8554 = vunpack.c.h.b16 %v7941
        %v8555 = vunpack.c.l.b16 %v7942
        %v8556 = vunpack.c.h.b16 %v7942
        %v8557 = vunpack.c.l.b16 %v7943
        %v8558 = vunpack.c.h.b16 %v7943
        %v8559 = vunpack.c.l.b16 %v7944
        %v8560 = vunpack.c.l.b16 %v7945
        %v8561 = vunpack.c.h.b16 %v7945
        %v8562 = vunpack.c.l.b16 %v7946
        %v8563 = vunpack.c.h.b16 %v7946
        %v8564 = vunpack.c.l.b16 %v7947
        %v8565 = vunpack.c.h.b16 %v7947
        %v8566 = vunpack.c.l.b16 %v7948
        %v8567 = vunpack.c.l.b16 %v7949
        %v8568 = vunpack.c.h.b16 %v7949
        %v8569 = vunpack.c.l.b16 %v7950
        %v8570 = vunpack.c.h.b16 %v7950
        %v8571 = vunpack.c.l.b16 %v7951
        %v8572 = vunpack.c.h.b16 %v7951
        %v8573 = vunpack.c.l.b16 %v7952
        %v8574 = vunpack.c.l.b16 %v7953
        %v8575 = vunpack.c.h.b16 %v7953
        %v8576 = vunpack.c.l.b16 %v7954
        %v8577 = vunpack.c.h.b16 %v7954
        %v8578 = vunpack.c.l.b16 %v7955
        %v8579 = vunpack.c.h.b16 %v7955
        %v8580 = vunpack.c.l.b16 %v7956
        %v8581 = vunpack.c.l.b16 %v7957
        %v8582 = vunpack.c.h.b16 %v7957
        %v8583 = vunpack.c.l.b16 %v7958
        %v8584 = vunpack.c.h.b16 %v7958
        %v8585 = vunpack.c.l.b16 %v7959
        %v8586 = vunpack.c.h.b16 %v7959
        %v8587 = vunpack.c.l.b16 %v7960
        %v8588 = vunpack.c.l.b16 %v7961
        %v8589 = vunpack.c.h.b16 %v7961
        %v8590 = vunpack.c.l.b16 %v7962
        %v8591 = vunpack.c.h.b16 %v7962
        %v8592 = vunpack.c.l.b16 %v7963
        %v8593 = vunpack.c.h.b16 %v7963
        %v8594 = vunpack.c.l.b16 %v7964
        %v8595 = vunpack.c.l.b16 %v7965
        %v8596 = vunpack.c.h.b16 %v7965
        %v8597 = vunpack.c.l.b16 %v7966
        %v8598 = vunpack.c.h.b16 %v7966
        %v8599 = vunpack.c.l.b16 %v7967
        %v8600 = vunpack.c.h.b16 %v7967
        %v8601 = vunpack.c.l.b16 %v7968
        %v8602 = vunpack.c.l.b16 %v7969
        %v8603 = vunpack.c.h.b16 %v7969
        %v8604 = vunpack.c.l.b16 %v7970
        %v8605 = vunpack.c.h.b16 %v7970
        %v8606 = vunpack.c.l.b16 %v7971
        %v8607 = vunpack.c.h.b16 %v7971
        %v8608 = vunpack.c.l.b16 %v7972
        %v8609 = vunpack.c.l.b16 %v7973
        %v8610 = vunpack.c.h.b16 %v7973
        %v8611 = vunpack.c.l.b16 %v7974
        %v8612 = vunpack.c.h.b16 %v7974
        %v8613 = vunpack.c.l.b16 %v7975
        %v8614 = vunpack.c.h.b16 %v7975
        %v8615 = vunpack.c.l.b16 %v7976
        %v8616 = vunpack.c.l.b16 %v7977
        %v8617 = vunpack.c.h.b16 %v7977
        %v8618 = vunpack.c.l.b16 %v7978
        %v8619 = vunpack.c.h.b16 %v7978
        %v8620 = vunpack.c.l.b16 %v7979
        %v8621 = vunpack.c.h.b16 %v7979
        %v8622 = vunpack.c.l.b16 %v7980
        %v8623 = vunpack.c.l.b16 %v7981
        %v8624 = vunpack.c.h.b16 %v7981
        %v8625 = vunpack.c.l.b16 %v7982
        %v8626 = vunpack.c.h.b16 %v7982
        %v8627 = vunpack.c.l.b16 %v7983
        %v8628 = vunpack.c.h.b16 %v7983
        %v8629 = vunpack.c.l.b16 %v7984
        %v8630 = vunpack.c.l.b16 %v7985
        %v8631 = vunpack.c.h.b16 %v7985
        %v8632 = vunpack.c.l.b16 %v7986
        %v8633 = vunpack.c.h.b16 %v7986
        %v8634 = vunpack.c.l.b16 %v7987
        %v8635 = vunpack.c.h.b16 %v7987
        %v8636 = vunpack.c.l.b16 %v7988
        %v8637 = vunpack.c.l.b16 %v7989
        %v8638 = vunpack.c.h.b16 %v7989
        %v8639 = vunpack.c.l.b16 %v7990
        %v8640 = vunpack.c.h.b16 %v7990
        %v8641 = vunpack.c.l.b16 %v7991
        %v8642 = vunpack.c.h.b16 %v7991
        %v8643 = vunpack.c.l.b16 %v7992
        %v8644 = vunpack.c.l.b16 %v7993
        %v8645 = vunpack.c.h.b16 %v7993
        %v8646 = vunpack.c.l.b16 %v7994
        %v8647 = vunpack.c.h.b16 %v7994
        %v8648 = vunpack.c.l.b16 %v7995
        %v8649 = vunpack.c.h.b16 %v7995
        %v8650 = vunpack.c.l.b16 %v7996
        %v8651 = vunpack.c.l.b16 %v7997
        %v8652 = vunpack.c.h.b16 %v7997
        %v8653 = vunpack.c.l.b16 %v7998
        %v8654 = vunpack.c.h.b16 %v7998
        %v8655 = vunpack.c.l.b16 %v7999
        %v8656 = vunpack.c.h.b16 %v7999
        %v8657 = vunpack.c.l.b16 %v8000
        %v8658 = vunpack.c.l.b16 %v8001
        %v8659 = vunpack.c.h.b16 %v8001
        %v8660 = vunpack.c.l.b16 %v8002
        %v8661 = vunpack.c.h.b16 %v8002
        %v8662 = vunpack.c.l.b16 %v8003
        %v8663 = vunpack.c.h.b16 %v8003
        %v8664 = vunpack.c.l.b16 %v8004
        %v8665 = vunpack.c.l.b16 %v8005
        %v8666 = vunpack.c.h.b16 %v8005
        %v8667 = vunpack.c.l.b16 %v8006
        %v8668 = vunpack.c.h.b16 %v8006
        %v8669 = vunpack.c.l.b16 %v8007
        %v8670 = vunpack.c.h.b16 %v8007
        %v8671 = vunpack.c.l.b16 %v8008
        %v8672 = vunpack.c.l.b16 %v8009
        %v8673 = vunpack.c.h.b16 %v8009
        %v8674 = vunpack.c.l.b16 %v8010
        %v8675 = vunpack.c.h.b16 %v8010
        %v8676 = vunpack.c.l.b16 %v8011
        %v8677 = vunpack.c.h.b16 %v8011
        %v8678 = vunpack.c.l.b16 %v8012
        %v8679 = vunpack.c.l.b16 %v8013
        %v8680 = vunpack.c.h.b16 %v8013
        %v8681 = vunpack.c.l.b16 %v8014
        %v8682 = vunpack.c.h.b16 %v8014
        %v8683 = vunpack.c.l.b16 %v8015
        %v8684 = vunpack.c.h.b16 %v8015
        %v8685 = vunpack.c.l.b16 %v8016
        %v8686 = vunpack.c.l.b16 %v8017
        %v8687 = vunpack.c.h.b16 %v8017
        %v8688 = vunpack.c.l.b16 %v8018
        %v8689 = vunpack.c.h.b16 %v8018
        %v8690 = vunpack.c.l.b16 %v8019
        %v8691 = vunpack.c.h.b16 %v8019
        %v8692 = vunpack.c.l.b16 %v8020
        %v8693 = vunpack.c.l.b16 %v8021
        %v8694 = vunpack.c.h.b16 %v8021
        %v8695 = vunpack.c.l.b16 %v8022
        %v8696 = vunpack.c.h.b16 %v8022
        %v8697 = vunpack.c.l.b16 %v8023
        %v8698 = vunpack.c.h.b16 %v8023
        %v8699 = vunpack.c.l.b16 %v8024
        %v8700 = vunpack.c.l.b16 %v8025
        %v8701 = vunpack.c.h.b16 %v8025
        %v8702 = vunpack.c.l.b16 %v8026
        %v8703 = vunpack.c.h.b16 %v8026
        %v8704 = vunpack.c.l.b16 %v8027
        %v8705 = vunpack.c.h.b16 %v8027
        %v8706 = vunpack.c.l.b16 %v8028
        %v8707 = vunpack.c.l.b16 %v8029
        %v8708 = vunpack.c.h.b16 %v8029
        %v8709 = vunpack.c.l.b16 %v8030
        %v8710 = vunpack.c.h.b16 %v8030
        %v8711 = vunpack.c.l.b16 %v8031
        %v8712 = vunpack.c.h.b16 %v8031
        %v8713 = vunpack.c.l.b16 %v8032
        %v8714 = vunpack.c.l.b16 %v8033
        %v8715 = vunpack.c.h.b16 %v8033
        %v8716 = vunpack.c.l.b16 %v8034
        %v8717 = vunpack.c.h.b16 %v8034
        %v8718 = vunpack.c.l.b16 %v8035
        %v8719 = vunpack.c.h.b16 %v8035
        %v8720 = vunpack.c.l.b16 %v8036
        %v8721 = vunpack.c.l.b16 %v8037
        %v8722 = vunpack.c.h.b16 %v8037
        %v8723 = vunpack.c.l.b16 %v8038
        %v8724 = vunpack.c.h.b16 %v8038
        %v8725 = vunpack.c.l.b16 %v8039
        %v8726 = vunpack.c.h.b16 %v8039
        %v8727 = vunpack.c.l.b16 %v8040
        %v8728 = vunpack.c.l.b16 %v8041
        %v8729 = vunpack.c.h.b16 %v8041
        %v8730 = vunpack.c.l.b16 %v8042
        %v8731 = vunpack.c.h.b16 %v8042
        %v8732 = vunpack.c.l.b16 %v8043
        %v8733 = vunpack.c.h.b16 %v8043
        %v8734 = vunpack.c.l.b16 %v8044
        %v8735 = vunpack.c.l.b16 %v8045
        %v8736 = vunpack.c.h.b16 %v8045
        %v8737 = vunpack.c.l.b16 %v8046
        %v8738 = vunpack.c.h.b16 %v8046
        %v8739 = vunpack.c.l.b16 %v8047
        %v8740 = vunpack.c.h.b16 %v8047
        %v8741 = vunpack.c.l.b16 %v8048
        %v8742 = vunpack.c.l.b16 %v8049
        %v8743 = vunpack.c.h.b16 %v8049
        %v8744 = vunpack.c.l.b16 %v8050
        %v8745 = vunpack.c.h.b16 %v8050
        %v8746 = vunpack.c.l.b16 %v8051
        %v8747 = vunpack.c.h.b16 %v8051
        %v8748 = vunpack.c.l.b16 %v8052
        %v8749 = vunpack.c.l.b16 %v8053
        %v8750 = vunpack.c.h.b16 %v8053
        %v8751 = vunpack.c.l.b16 %v8054
        %v8752 = vunpack.c.h.b16 %v8054
        %v8753 = vunpack.c.l.b16 %v8055
        %v8754 = vunpack.c.h.b16 %v8055
        %v8755 = vunpack.c.l.b16 %v8056
        %v8756 = vunpack.c.l.b16 %v8057
        %v8757 = vunpack.c.h.b16 %v8057
        %v8758 = vunpack.c.l.b16 %v8058
        %v8759 = vunpack.c.h.b16 %v8058
        %v8760 = vunpack.c.l.b16 %v8059
        %v8761 = vunpack.c.h.b16 %v8059
        %v8762 = vunpack.c.l.b16 %v8060
        %v8763 = vunpack.c.l.b16 %v8061
        %v8764 = vunpack.c.h.b16 %v8061
        %v8765 = vunpack.c.l.b16 %v8062
        %v8766 = vunpack.c.h.b16 %v8062
        %v8767 = vunpack.c.l.b16 %v8063
        %v8768 = vunpack.c.h.b16 %v8063
        %v8769 = vunpack.c.l.b16 %v8064
        %v8770 = vpack.c.b16 %v8329, %v8322
        %v8771 = vpack.c.b16 %v8330, %v8323
        %v8772 = vpack.c.b16 %v8331, %v8324
        %v8773 = vpack.c.b16 %v8332, %v8325
        %v8774 = vpack.c.b16 %v8333, %v8326
        %v8775 = vpack.c.b16 %v8334, %v8327
        %v8776 = vpack.c.b16 %v8335, %v8328
        %v8777 = vpack.c.b16 %v8343, %v8336
        %v8778 = vpack.c.b16 %v8344, %v8337
        %v8779 = vpack.c.b16 %v8345, %v8338
        %v8780 = vpack.c.b16 %v8346, %v8339
        %v8781 = vpack.c.b16 %v8347, %v8340
        %v8782 = vpack.c.b16 %v8348, %v8341
        %v8783 = vpack.c.b16 %v8349, %v8342
        %v8784 = vpack.c.b16 %v8357, %v8350
        %v8785 = vpack.c.b16 %v8358, %v8351
        %v8786 = vpack.c.b16 %v8359, %v8352
        %v8787 = vpack.c.b16 %v8360, %v8353
        %v8788 = vpack.c.b16 %v8361, %v8354
        %v8789 = vpack.c.b16 %v8362, %v8355
        %v8790 = vpack.c.b16 %v8363, %v8356
        %v8791 = vpack.c.b16 %v8371, %v8364
        %v8792 = vpack.c.b16 %v8372, %v8365
        %v8793 = vpack.c.b16 %v8373, %v8366
        %v8794 = vpack.c.b16 %v8374, %v8367
        %v8795 = vpack.c.b16 %v8375, %v8368
        %v8796 = vpack.c.b16 %v8376, %v8369
        %v8797 = vpack.c.b16 %v8377, %v8370
        %v8798 = vpack.c.b16 %v8385, %v8378
        %v8799 = vpack.c.b16 %v8386, %v8379
        %v8800 = vpack.c.b16 %v8387, %v8380
        %v8801 = vpack.c.b16 %v8388, %v8381
        %v8802 = vpack.c.b16 %v8389, %v8382
        %v8803 = vpack.c.b16 %v8390, %v8383
        %v8804 = vpack.c.b16 %v8391, %v8384
        %v8805 = vpack.c.b16 %v8399, %v8392
        %v8806 = vpack.c.b16 %v8400, %v8393
        %v8807 = vpack.c.b16 %v8401, %v8394
        %v8808 = vpack.c.b16 %v8402, %v8395
        %v8809 = vpack.c.b16 %v8403, %v8396
        %v8810 = vpack.c.b16 %v8404, %v8397
        %v8811 = vpack.c.b16 %v8405, %v8398
        %v8812 = vpack.c.b16 %v8413, %v8406
        %v8813 = vpack.c.b16 %v8414, %v8407
        %v8814 = vpack.c.b16 %v8415, %v8408
        %v8815 = vpack.c.b16 %v8416, %v8409
        %v8816 = vpack.c.b16 %v8417, %v8410
        %v8817 = vpack.c.b16 %v8418, %v8411
        %v8818 = vpack.c.b16 %v8419, %v8412
        %v8819 = vpack.c.b16 %v8427, %v8420
        %v8820 = vpack.c.b16 %v8428, %v8421
        %v8821 = vpack.c.b16 %v8429, %v8422
        %v8822 = vpack.c.b16 %v8430, %v8423
        %v8823 = vpack.c.b16 %v8431, %v8424
        %v8824 = vpack.c.b16 %v8432, %v8425
        %v8825 = vpack.c.b16 %v8433, %v8426
        %v8826 = vpack.c.b16 %v8441, %v8434
        %v8827 = vpack.c.b16 %v8442, %v8435
        %v8828 = vpack.c.b16 %v8443, %v8436
        %v8829 = vpack.c.b16 %v8444, %v8437
        %v8830 = vpack.c.b16 %v8445, %v8438
        %v8831 = vpack.c.b16 %v8446, %v8439
        %v8832 = vpack.c.b16 %v8447, %v8440
        %v8833 = vpack.c.b16 %v8455, %v8448
        %v8834 = vpack.c.b16 %v8456, %v8449
        %v8835 = vpack.c.b16 %v8457, %v8450
        %v8836 = vpack.c.b16 %v8458, %v8451
        %v8837 = vpack.c.b16 %v8459, %v8452
        %v8838 = vpack.c.b16 %v8460, %v8453
        %v8839 = vpack.c.b16 %v8461, %v8454
        %v8840 = vpack.c.b16 %v8469, %v8462
        %v8841 = vpack.c.b16 %v8470, %v8463
        %v8842 = vpack.c.b16 %v8471, %v8464
        %v8843 = vpack.c.b16 %v8472, %v8465
        %v8844 = vpack.c.b16 %v8473, %v8466
        %v8845 = vpack.c.b16 %v8474, %v8467
        %v8846 = vpack.c.b16 %v8475, %v8468
        %v8847 = vpack.c.b16 %v8483, %v8476
        %v8848 = vpack.c.b16 %v8484, %v8477
        %v8849 = vpack.c.b16 %v8485, %v8478
        %v8850 = vpack.c.b16 %v8486, %v8479
        %v8851 = vpack.c.b16 %v8487, %v8480
        %v8852 = vpack.c.b16 %v8488, %v8481
        %v8853 = vpack.c.b16 %v8489, %v8482
        %v8854 = vpack.c.b16 %v8497, %v8490
        %v8855 = vpack.c.b16 %v8498, %v8491
        %v8856 = vpack.c.b16 %v8499, %v8492
        %v8857 = vpack.c.b16 %v8500, %v8493
        %v8858 = vpack.c.b16 %v8501, %v8494
        %v8859 = vpack.c.b16 %v8502, %v8495
        %v8860 = vpack.c.b16 %v8503, %v8496
        %v8861 = vpack.c.b16 %v8511, %v8504
        %v8862 = vpack.c.b16 %v8512, %v8505
        %v8863 = vpack.c.b16 %v8513, %v8506
        %v8864 = vpack.c.b16 %v8514, %v8507
        %v8865 = vpack.c.b16 %v8515, %v8508
        %v8866 = vpack.c.b16 %v8516, %v8509
        %v8867 = vpack.c.b16 %v8517, %v8510
        %v8868 = vpack.c.b16 %v8525, %v8518
        %v8869 = vpack.c.b16 %v8526, %v8519
        %v8870 = vpack.c.b16 %v8527, %v8520
        %v8871 = vpack.c.b16 %v8528, %v8521
        %v8872 = vpack.c.b16 %v8529, %v8522
        %v8873 = vpack.c.b16 %v8530, %v8523
        %v8874 = vpack.c.b16 %v8531, %v8524
        %v8875 = vpack.c.b16 %v8539, %v8532
        %v8876 = vpack.c.b16 %v8540, %v8533
        %v8877 = vpack.c.b16 %v8541, %v8534
        %v8878 = vpack.c.b16 %v8542, %v8535
        %v8879 = vpack.c.b16 %v8543, %v8536
        %v8880 = vpack.c.b16 %v8544, %v8537
        %v8881 = vpack.c.b16 %v8545, %v8538
        %v8882 = vpack.c.b16 %v8553, %v8546
        %v8883 = vpack.c.b16 %v8554, %v8547
        %v8884 = vpack.c.b16 %v8555, %v8548
        %v8885 = vpack.c.b16 %v8556, %v8549
        %v8886 = vpack.c.b16 %v8557, %v8550
        %v8887 = vpack.c.b16 %v8558, %v8551
        %v8888 = vpack.c.b16 %v8559, %v8552
        %v8889 = vpack.c.b16 %v8567, %v8560
        %v8890 = vpack.c.b16 %v8568, %v8561
        %v8891 = vpack.c.b16 %v8569, %v8562
        %v8892 = vpack.c.b16 %v8570, %v8563
        %v8893 = vpack.c.b16 %v8571, %v8564
        %v8894 = vpack.c.b16 %v8572, %v8565
        %v8895 = vpack.c.b16 %v8573, %v8566
        %v8896 = vpack.c.b16 %v8581, %v8574
        %v8897 = vpack.c.b16 %v8582, %v8575
        %v8898 = vpack.c.b16 %v8583, %v8576
        %v8899 = vpack.c.b16 %v8584, %v8577
        %v8900 = vpack.c.b16 %v8585, %v8578
        %v8901 = vpack.c.b16 %v8586, %v8579
        %v8902 = vpack.c.b16 %v8587, %v8580
        %v8903 = vpack.c.b16 %v8595, %v8588
        %v8904 = vpack.c.b16 %v8596, %v8589
        %v8905 = vpack.c.b16 %v8597, %v8590
        %v8906 = vpack.c.b16 %v8598, %v8591
        %v8907 = vpack.c.b16 %v8599, %v8592
        %v8908 = vpack.c.b16 %v8600, %v8593
        %v8909 = vpack.c.b16 %v8601, %v8594
        %v8910 = vpack.c.b16 %v8609, %v8602
        %v8911 = vpack.c.b16 %v8610, %v8603
        %v8912 = vpack.c.b16 %v8611, %v8604
        %v8913 = vpack.c.b16 %v8612, %v8605
        %v8914 = vpack.c.b16 %v8613, %v8606
        %v8915 = vpack.c.b16 %v8614, %v8607
        %v8916 = vpack.c.b16 %v8615, %v8608
        %v8917 = vpack.c.b16 %v8623, %v8616
        %v8918 = vpack.c.b16 %v8624, %v8617
        %v8919 = vpack.c.b16 %v8625, %v8618
        %v8920 = vpack.c.b16 %v8626, %v8619
        %v8921 = vpack.c.b16 %v8627, %v8620
        %v8922 = vpack.c.b16 %v8628, %v8621
        %v8923 = vpack.c.b16 %v8629, %v8622
        %v8924 = vpack.c.b16 %v8637, %v8630
        %v8925 = vpack.c.b16 %v8638, %v8631
        %v8926 = vpack.c.b16 %v8639, %v8632
        %v8927 = vpack.c.b16 %v8640, %v8633
        %v8928 = vpack.c.b16 %v8641, %v8634
        %v8929 = vpack.c.b16 %v8642, %v8635
        %v8930 = vpack.c.b16 %v8643, %v8636
        %v8931 = vpack.c.b16 %v8651, %v8644
        %v8932 = vpack.c.b16 %v8652, %v8645
        %v8933 = vpack.c.b16 %v8653, %v8646
        %v8934 = vpack.c.b16 %v8654, %v8647
        %v8935 = vpack.c.b16 %v8655, %v8648
        %v8936 = vpack.c.b16 %v8656, %v8649
        %v8937 = vpack.c.b16 %v8657, %v8650
        %v8938 = vpack.c.b16 %v8665, %v8658
        %v8939 = vpack.c.b16 %v8666, %v8659
        %v8940 = vpack.c.b16 %v8667, %v8660
        %v8941 = vpack.c.b16 %v8668, %v8661
        %v8942 = vpack.c.b16 %v8669, %v8662
        %v8943 = vpack.c.b16 %v8670, %v8663
        %v8944 = vpack.c.b16 %v8671, %v8664
        %v8945 = vpack.c.b16 %v8679, %v8672
        %v8946 = vpack.c.b16 %v8680, %v8673
        %v8947 = vpack.c.b16 %v8681, %v8674
        %v8948 = vpack.c.b16 %v8682, %v8675
        %v8949 = vpack.c.b16 %v8683, %v8676
        %v8950 = vpack.c.b16 %v8684, %v8677
        %v8951 = vpack.c.b16 %v8685, %v8678
        %v8952 = vpack.c.b16 %v8693, %v8686
        %v8953 = vpack.c.b16 %v8694, %v8687
        %v8954 = vpack.c.b16 %v8695, %v8688
        %v8955 = vpack.c.b16 %v8696, %v8689
        %v8956 = vpack.c.b16 %v8697, %v8690
        %v8957 = vpack.c.b16 %v8698, %v8691
        %v8958 = vpack.c.b16 %v8699, %v8692
        %v8959 = vpack.c.b16 %v8707, %v8700
        %v8960 = vpack.c.b16 %v8708, %v8701
        %v8961 = vpack.c.b16 %v8709, %v8702
        %v8962 = vpack.c.b16 %v8710, %v8703
        %v8963 = vpack.c.b16 %v8711, %v8704
        %v8964 = vpack.c.b16 %v8712, %v8705
        %v8965 = vpack.c.b16 %v8713, %v8706
        %v8966 = vpack.c.b16 %v8721, %v8714
        %v8967 = vpack.c.b16 %v8722, %v8715
        %v8968 = vpack.c.b16 %v8723, %v8716
        %v8969 = vpack.c.b16 %v8724, %v8717
        %v8970 = vpack.c.b16 %v8725, %v8718
        %v8971 = vpack.c.b16 %v8726, %v8719
        %v8972 = vpack.c.b16 %v8727, %v8720
        %v8973 = vpack.c.b16 %v8735, %v8728
        %v8974 = vpack.c.b16 %v8736, %v8729
        %v8975 = vpack.c.b16 %v8737, %v8730
        %v8976 = vpack.c.b16 %v8738, %v8731
        %v8977 = vpack.c.b16 %v8739, %v8732
        %v8978 = vpack.c.b16 %v8740, %v8733
        %v8979 = vpack.c.b16 %v8741, %v8734
        %v8980 = vpack.c.b16 %v8749, %v8742
        %v8981 = vpack.c.b16 %v8750, %v8743
        %v8982 = vpack.c.b16 %v8751, %v8744
        %v8983 = vpack.c.b16 %v8752, %v8745
        %v8984 = vpack.c.b16 %v8753, %v8746
        %v8985 = vpack.c.b16 %v8754, %v8747
        %v8986 = vpack.c.b16 %v8755, %v8748
        %v8987 = vpack.c.b16 %v8763, %v8756
        %v8988 = vpack.c.b16 %v8764, %v8757
        %v8989 = vpack.c.b16 %v8765, %v8758
        %v8990 = vpack.c.b16 %v8766, %v8759
        %v8991 = vpack.c.b16 %v8767, %v8760
        %v8992 = vpack.c.b16 %v8768, %v8761
        %v8993 = vpack.c.b16 %v8769, %v8762
        %9218 = vmatpush.bf16.msra.mxu0 %v8819
        %9219 = vmatpush.bf16.msra.mxu0 %v8812
        %9220 = vmatpush.bf16.msra.mxu0 %v8805
        %9221 = vmatpush.bf16.msra.mxu0 %v8798
        %9222 = vmatpush.bf16.msra.mxu0 %v8791
        %9223 = vmatpush.bf16.msra.mxu0 %v8784
        %9224 = vmatpush.bf16.msra.mxu0 %v8777
        %9225 = vmatpush.bf16.msra.mxu0 %v8770
        %9226 = vmatmul.bf16.gmra.mxu0 %v7777
        %v9227 = vpop.f32.mrf.mxu0
        %v9228 = vadd.f32 0.0, %v9227
        %v9229 = vpop.f32.mrf.mxu0
        %v9230 = vadd.f32 0.0, %v9229
        %9231 = vmatmul.bf16.gmra.mxu0 %v7781
        %v9232 = vpop.f32.mrf.mxu0
        %v9233 = vadd.f32 0.0, %v9232
        %v9234 = vpop.f32.mrf.mxu0
        %v9235 = vadd.f32 0.0, %v9234
        %9236 = vmatmul.bf16.gmra.mxu0 %v7785
        %v9237 = vpop.f32.mrf.mxu0
        %v9238 = vadd.f32 0.0, %v9237
        %v9239 = vpop.f32.mrf.mxu0
        %v9240 = vadd.f32 0.0, %v9239
        %9241 = vmatmul.bf16.gmra.mxu0 %v7789
        %v9242 = vpop.f32.mrf.mxu0
        %v9243 = vadd.f32 0.0, %v9242
        %v9244 = vpop.f32.mrf.mxu0
        %v9245 = vadd.f32 0.0, %v9244
        %9246 = vmatmul.bf16.gmra.mxu0 %v7793
        %v9247 = vpop.f32.mrf.mxu0
        %v9248 = vadd.f32 0.0, %v9247
        %v9249 = vpop.f32.mrf.mxu0
        %v9250 = vadd.f32 0.0, %v9249
        %9251 = vmatmul.bf16.gmra.mxu0 %v7797
        %v9252 = vpop.f32.mrf.mxu0
        %v9253 = vadd.f32 0.0, %v9252
        %v9254 = vpop.f32.mrf.mxu0
        %v9255 = vadd.f32 0.0, %v9254
        %9256 = vmatmul.bf16.gmra.mxu0 %v7801
        %v9257 = vpop.f32.mrf.mxu0
        %v9258 = vadd.f32 0.0, %v9257
        %v9259 = vpop.f32.mrf.mxu0
        %v9260 = vadd.f32 0.0, %v9259
        %9261 = vmatmul.bf16.gmra.mxu0 %v7805
        %v9262 = vpop.f32.mrf.mxu0
        %v9263 = vadd.f32 0.0, %v9262
        %v9264 = vpop.f32.mrf.mxu0
        %v9265 = vadd.f32 0.0, %v9264
        %9266 = vdwg.mxu0
        %9267 = vmatpush.bf16.msra.mxu0 %v8875
        %9268 = vmatpush.bf16.msra.mxu0 %v8868
        %9269 = vmatpush.bf16.msra.mxu0 %v8861
        %9270 = vmatpush.bf16.msra.mxu0 %v8854
        %9271 = vmatpush.bf16.msra.mxu0 %v8847
        %9272 = vmatpush.bf16.msra.mxu0 %v8840
        %9273 = vmatpush.bf16.msra.mxu0 %v8833
        %9274 = vmatpush.bf16.msra.mxu0 %v8826
        %9275 = vmatmul.bf16.gmra.mxu0 %v7778
        %v9276 = vpop.f32.mrf.mxu0
        %v9277 = vadd.f32 %v9228, %v9276
        %v9278 = vpop.f32.mrf.mxu0
        %v9279 = vadd.f32 %v9230, %v9278
        %9280 = vmatmul.bf16.gmra.mxu0 %v7782
        %v9281 = vpop.f32.mrf.mxu0
        %v9282 = vadd.f32 %v9233, %v9281
        %v9283 = vpop.f32.mrf.mxu0
        %v9284 = vadd.f32 %v9235, %v9283
        %9285 = vmatmul.bf16.gmra.mxu0 %v7786
        %v9286 = vpop.f32.mrf.mxu0
        %v9287 = vadd.f32 %v9238, %v9286
        %v9288 = vpop.f32.mrf.mxu0
        %v9289 = vadd.f32 %v9240, %v9288
        %9290 = vmatmul.bf16.gmra.mxu0 %v7790
        %v9291 = vpop.f32.mrf.mxu0
        %v9292 = vadd.f32 %v9243, %v9291
        %v9293 = vpop.f32.mrf.mxu0
        %v9294 = vadd.f32 %v9245, %v9293
        %9295 = vmatmul.bf16.gmra.mxu0 %v7794
        %v9296 = vpop.f32.mrf.mxu0
        %v9297 = vadd.f32 %v9248, %v9296
        %v9298 = vpop.f32.mrf.mxu0
        %v9299 = vadd.f32 %v9250, %v9298
        %9300 = vmatmul.bf16.gmra.mxu0 %v7798
        %v9301 = vpop.f32.mrf.mxu0
        %v9302 = vadd.f32 %v9253, %v9301
        %v9303 = vpop.f32.mrf.mxu0
        %v9304 = vadd.f32 %v9255, %v9303
        %9305 = vmatmul.bf16.gmra.mxu0 %v7802
        %v9306 = vpop.f32.mrf.mxu0
        %v9307 = vadd.f32 %v9258, %v9306
        %v9308 = vpop.f32.mrf.mxu0
        %v9309 = vadd.f32 %v9260, %v9308
        %9310 = vmatmul.bf16.gmra.mxu0 %v7806
        %v9311 = vpop.f32.mrf.mxu0
        %v9312 = vadd.f32 %v9263, %v9311
        %v9313 = vpop.f32.mrf.mxu0
        %v9314 = vadd.f32 %v9265, %v9313
        %9315 = vdwg.mxu0
        %9316 = vmatpush.bf16.msra.mxu0 %v8931
        %9317 = vmatpush.bf16.msra.mxu0 %v8924
        %9318 = vmatpush.bf16.msra.mxu0 %v8917
        %9319 = vmatpush.bf16.msra.mxu0 %v8910
        %9320 = vmatpush.bf16.msra.mxu0 %v8903
        %9321 = vmatpush.bf16.msra.mxu0 %v8896
        %9322 = vmatpush.bf16.msra.mxu0 %v8889
        %9323 = vmatpush.bf16.msra.mxu0 %v8882
        %9324 = vmatmul.bf16.gmra.mxu0 %v7779
        %v9325 = vpop.f32.mrf.mxu0
        %v9326 = vadd.f32 %v9277, %v9325
        %v9327 = vpop.f32.mrf.mxu0
        %v9328 = vadd.f32 %v9279, %v9327
        %9329 = vmatmul.bf16.gmra.mxu0 %v7783
        %v9330 = vpop.f32.mrf.mxu0
        %v9331 = vadd.f32 %v9282, %v9330
        %v9332 = vpop.f32.mrf.mxu0
        %v9333 = vadd.f32 %v9284, %v9332
        %9334 = vmatmul.bf16.gmra.mxu0 %v7787
        %v9335 = vpop.f32.mrf.mxu0
        %v9336 = vadd.f32 %v9287, %v9335
        %v9337 = vpop.f32.mrf.mxu0
        %v9338 = vadd.f32 %v9289, %v9337
        %9339 = vmatmul.bf16.gmra.mxu0 %v7791
        %v9340 = vpop.f32.mrf.mxu0
        %v9341 = vadd.f32 %v9292, %v9340
        %v9342 = vpop.f32.mrf.mxu0
        %v9343 = vadd.f32 %v9294, %v9342
        %9344 = vmatmul.bf16.gmra.mxu0 %v7795
        %v9345 = vpop.f32.mrf.mxu0
        %v9346 = vadd.f32 %v9297, %v9345
        %v9347 = vpop.f32.mrf.mxu0
        %v9348 = vadd.f32 %v9299, %v9347
        %9349 = vmatmul.bf16.gmra.mxu0 %v7799
        %v9350 = vpop.f32.mrf.mxu0
        %v9351 = vadd.f32 %v9302, %v9350
        %v9352 = vpop.f32.mrf.mxu0
        %v9353 = vadd.f32 %v9304, %v9352
        %9354 = vmatmul.bf16.gmra.mxu0 %v7803
        %v9355 = vpop.f32.mrf.mxu0
        %v9356 = vadd.f32 %v9307, %v9355
        %v9357 = vpop.f32.mrf.mxu0
        %v9358 = vadd.f32 %v9309, %v9357
        %9359 = vmatmul.bf16.gmra.mxu0 %v7807
        %v9360 = vpop.f32.mrf.mxu0
        %v9361 = vadd.f32 %v9312, %v9360
        %v9362 = vpop.f32.mrf.mxu0
        %v9363 = vadd.f32 %v9314, %v9362
        %9364 = vdwg.mxu0
        %9365 = vmatpush.bf16.msra.mxu0 %v8987
        %9366 = vmatpush.bf16.msra.mxu0 %v8980
        %9367 = vmatpush.bf16.msra.mxu0 %v8973
        %9368 = vmatpush.bf16.msra.mxu0 %v8966
        %9369 = vmatpush.bf16.msra.mxu0 %v8959
        %9370 = vmatpush.bf16.msra.mxu0 %v8952
        %9371 = vmatpush.bf16.msra.mxu0 %v8945
        %9372 = vmatpush.bf16.msra.mxu0 %v8938
        %9373 = vmatmul.bf16.gmra.mxu0 %v7780
        %v9374 = vpop.f32.mrf.mxu0
        %v9375 = vadd.f32 %v9326, %v9374
        %v9376 = vpop.f32.mrf.mxu0
        %v9377 = vadd.f32 %v9328, %v9376
        %9378 = vmatmul.bf16.gmra.mxu0 %v7784
        %v9379 = vpop.f32.mrf.mxu0
        %v9380 = vadd.f32 %v9331, %v9379
        %v9381 = vpop.f32.mrf.mxu0
        %v9382 = vadd.f32 %v9333, %v9381
        %9383 = vmatmul.bf16.gmra.mxu0 %v7788
        %v9384 = vpop.f32.mrf.mxu0
        %v9385 = vadd.f32 %v9336, %v9384
        %v9386 = vpop.f32.mrf.mxu0
        %v9387 = vadd.f32 %v9338, %v9386
        %9388 = vmatmul.bf16.gmra.mxu0 %v7792
        %v9389 = vpop.f32.mrf.mxu0
        %v9390 = vadd.f32 %v9341, %v9389
        %v9391 = vpop.f32.mrf.mxu0
        %v9392 = vadd.f32 %v9343, %v9391
        %9393 = vmatmul.bf16.gmra.mxu0 %v7796
        %v9394 = vpop.f32.mrf.mxu0
        %v9395 = vadd.f32 %v9346, %v9394
        %v9396 = vpop.f32.mrf.mxu0
        %v9397 = vadd.f32 %v9348, %v9396
        %9398 = vmatmul.bf16.gmra.mxu0 %v7800
        %v9399 = vpop.f32.mrf.mxu0
        %v9400 = vadd.f32 %v9351, %v9399
        %v9401 = vpop.f32.mrf.mxu0
        %v9402 = vadd.f32 %v9353, %v9401
        %9403 = vmatmul.bf16.gmra.mxu0 %v7804
        %v9404 = vpop.f32.mrf.mxu0
        %v9405 = vadd.f32 %v9356, %v9404
        %v9406 = vpop.f32.mrf.mxu0
        %v9407 = vadd.f32 %v9358, %v9406
        %9408 = vmatmul.bf16.gmra.mxu0 %v7808
        %v9409 = vpop.f32.mrf.mxu0
        %v9410 = vadd.f32 %v9361, %v9409
        %v9411 = vpop.f32.mrf.mxu0
        %v9412 = vadd.f32 %v9363, %v9411
        %9413 = vdwg.mxu0
        %9414 = vmatpush.bf16.msra.mxu0 %v8820
        %9415 = vmatpush.bf16.msra.mxu0 %v8813
        %9416 = vmatpush.bf16.msra.mxu0 %v8806
        %9417 = vmatpush.bf16.msra.mxu0 %v8799
        %9418 = vmatpush.bf16.msra.mxu0 %v8792
        %9419 = vmatpush.bf16.msra.mxu0 %v8785
        %9420 = vmatpush.bf16.msra.mxu0 %v8778
        %9421 = vmatpush.bf16.msra.mxu0 %v8771
        %9422 = vmatmul.bf16.gmra.mxu0 %v7777
        %v9423 = vpop.f32.mrf.mxu0
        %v9424 = vadd.f32 0.0, %v9423
        %v9425 = vpop.f32.mrf.mxu0
        %v9426 = vadd.f32 0.0, %v9425
        %9427 = vmatmul.bf16.gmra.mxu0 %v7781
        %v9428 = vpop.f32.mrf.mxu0
        %v9429 = vadd.f32 0.0, %v9428
        %v9430 = vpop.f32.mrf.mxu0
        %v9431 = vadd.f32 0.0, %v9430
        %9432 = vmatmul.bf16.gmra.mxu0 %v7785
        %v9433 = vpop.f32.mrf.mxu0
        %v9434 = vadd.f32 0.0, %v9433
        %v9435 = vpop.f32.mrf.mxu0
        %v9436 = vadd.f32 0.0, %v9435
        %9437 = vmatmul.bf16.gmra.mxu0 %v7789
        %v9438 = vpop.f32.mrf.mxu0
        %v9439 = vadd.f32 0.0, %v9438
        %v9440 = vpop.f32.mrf.mxu0
        %v9441 = vadd.f32 0.0, %v9440
        %9442 = vmatmul.bf16.gmra.mxu0 %v7793
        %v9443 = vpop.f32.mrf.mxu0
        %v9444 = vadd.f32 0.0, %v9443
        %v9445 = vpop.f32.mrf.mxu0
        %v9446 = vadd.f32 0.0, %v9445
        %9447 = vmatmul.bf16.gmra.mxu0 %v7797
        %v9448 = vpop.f32.mrf.mxu0
        %v9449 = vadd.f32 0.0, %v9448
        %v9450 = vpop.f32.mrf.mxu0
        %v9451 = vadd.f32 0.0, %v9450
        %9452 = vmatmul.bf16.gmra.mxu0 %v7801
        %v9453 = vpop.f32.mrf.mxu0
        %v9454 = vadd.f32 0.0, %v9453
        %v9455 = vpop.f32.mrf.mxu0
        %v9456 = vadd.f32 0.0, %v9455
        %9457 = vmatmul.bf16.gmra.mxu0 %v7805
        %v9458 = vpop.f32.mrf.mxu0
        %v9459 = vadd.f32 0.0, %v9458
        %v9460 = vpop.f32.mrf.mxu0
        %v9461 = vadd.f32 0.0, %v9460
        %9462 = vdwg.mxu0
        %9463 = vmatpush.bf16.msra.mxu0 %v8876
        %9464 = vmatpush.bf16.msra.mxu0 %v8869
        %9465 = vmatpush.bf16.msra.mxu0 %v8862
        %9466 = vmatpush.bf16.msra.mxu0 %v8855
        %9467 = vmatpush.bf16.msra.mxu0 %v8848
        %9468 = vmatpush.bf16.msra.mxu0 %v8841
        %9469 = vmatpush.bf16.msra.mxu0 %v8834
        %9470 = vmatpush.bf16.msra.mxu0 %v8827
        %9471 = vmatmul.bf16.gmra.mxu0 %v7778
        %v9472 = vpop.f32.mrf.mxu0
        %v9473 = vadd.f32 %v9424, %v9472
        %v9474 = vpop.f32.mrf.mxu0
        %v9475 = vadd.f32 %v9426, %v9474
        %9476 = vmatmul.bf16.gmra.mxu0 %v7782
        %v9477 = vpop.f32.mrf.mxu0
        %v9478 = vadd.f32 %v9429, %v9477
        %v9479 = vpop.f32.mrf.mxu0
        %v9480 = vadd.f32 %v9431, %v9479
        %9481 = vmatmul.bf16.gmra.mxu0 %v7786
        %v9482 = vpop.f32.mrf.mxu0
        %v9483 = vadd.f32 %v9434, %v9482
        %v9484 = vpop.f32.mrf.mxu0
        %v9485 = vadd.f32 %v9436, %v9484
        %9486 = vmatmul.bf16.gmra.mxu0 %v7790
        %v9487 = vpop.f32.mrf.mxu0
        %v9488 = vadd.f32 %v9439, %v9487
        %v9489 = vpop.f32.mrf.mxu0
        %v9490 = vadd.f32 %v9441, %v9489
        %9491 = vmatmul.bf16.gmra.mxu0 %v7794
        %v9492 = vpop.f32.mrf.mxu0
        %v9493 = vadd.f32 %v9444, %v9492
        %v9494 = vpop.f32.mrf.mxu0
        %v9495 = vadd.f32 %v9446, %v9494
        %9496 = vmatmul.bf16.gmra.mxu0 %v7798
        %v9497 = vpop.f32.mrf.mxu0
        %v9498 = vadd.f32 %v9449, %v9497
        %v9499 = vpop.f32.mrf.mxu0
        %v9500 = vadd.f32 %v9451, %v9499
        %9501 = vmatmul.bf16.gmra.mxu0 %v7802
        %v9502 = vpop.f32.mrf.mxu0
        %v9503 = vadd.f32 %v9454, %v9502
        %v9504 = vpop.f32.mrf.mxu0
        %v9505 = vadd.f32 %v9456, %v9504
        %9506 = vmatmul.bf16.gmra.mxu0 %v7806
        %v9507 = vpop.f32.mrf.mxu0
        %v9508 = vadd.f32 %v9459, %v9507
        %v9509 = vpop.f32.mrf.mxu0
        %v9510 = vadd.f32 %v9461, %v9509
        %9511 = vdwg.mxu0
        %9512 = vmatpush.bf16.msra.mxu0 %v8932
        %9513 = vmatpush.bf16.msra.mxu0 %v8925
        %9514 = vmatpush.bf16.msra.mxu0 %v8918
        %9515 = vmatpush.bf16.msra.mxu0 %v8911
        %9516 = vmatpush.bf16.msra.mxu0 %v8904
        %9517 = vmatpush.bf16.msra.mxu0 %v8897
        %9518 = vmatpush.bf16.msra.mxu0 %v8890
        %9519 = vmatpush.bf16.msra.mxu0 %v8883
        %9520 = vmatmul.bf16.gmra.mxu0 %v7779
        %v9521 = vpop.f32.mrf.mxu0
        %v9522 = vadd.f32 %v9473, %v9521
        %v9523 = vpop.f32.mrf.mxu0
        %v9524 = vadd.f32 %v9475, %v9523
        %9525 = vmatmul.bf16.gmra.mxu0 %v7783
        %v9526 = vpop.f32.mrf.mxu0
        %v9527 = vadd.f32 %v9478, %v9526
        %v9528 = vpop.f32.mrf.mxu0
        %v9529 = vadd.f32 %v9480, %v9528
        %9530 = vmatmul.bf16.gmra.mxu0 %v7787
        %v9531 = vpop.f32.mrf.mxu0
        %v9532 = vadd.f32 %v9483, %v9531
        %v9533 = vpop.f32.mrf.mxu0
        %v9534 = vadd.f32 %v9485, %v9533
        %9535 = vmatmul.bf16.gmra.mxu0 %v7791
        %v9536 = vpop.f32.mrf.mxu0
        %v9537 = vadd.f32 %v9488, %v9536
        %v9538 = vpop.f32.mrf.mxu0
        %v9539 = vadd.f32 %v9490, %v9538
        %9540 = vmatmul.bf16.gmra.mxu0 %v7795
        %v9541 = vpop.f32.mrf.mxu0
        %v9542 = vadd.f32 %v9493, %v9541
        %v9543 = vpop.f32.mrf.mxu0
        %v9544 = vadd.f32 %v9495, %v9543
        %9545 = vmatmul.bf16.gmra.mxu0 %v7799
        %v9546 = vpop.f32.mrf.mxu0
        %v9547 = vadd.f32 %v9498, %v9546
        %v9548 = vpop.f32.mrf.mxu0
        %v9549 = vadd.f32 %v9500, %v9548
        %9550 = vmatmul.bf16.gmra.mxu0 %v7803
        %v9551 = vpop.f32.mrf.mxu0
        %v9552 = vadd.f32 %v9503, %v9551
        %v9553 = vpop.f32.mrf.mxu0
        %v9554 = vadd.f32 %v9505, %v9553
        %9555 = vmatmul.bf16.gmra.mxu0 %v7807
        %v9556 = vpop.f32.mrf.mxu0
        %v9557 = vadd.f32 %v9508, %v9556
        %v9558 = vpop.f32.mrf.mxu0
        %v9559 = vadd.f32 %v9510, %v9558
        %9560 = vdwg.mxu0
        %9561 = vmatpush.bf16.msra.mxu0 %v8988
        %9562 = vmatpush.bf16.msra.mxu0 %v8981
        %9563 = vmatpush.bf16.msra.mxu0 %v8974
        %9564 = vmatpush.bf16.msra.mxu0 %v8967
        %9565 = vmatpush.bf16.msra.mxu0 %v8960
        %9566 = vmatpush.bf16.msra.mxu0 %v8953
        %9567 = vmatpush.bf16.msra.mxu0 %v8946
        %9568 = vmatpush.bf16.msra.mxu0 %v8939
        %9569 = vmatmul.bf16.gmra.mxu0 %v7780
        %v9570 = vpop.f32.mrf.mxu0
        %v9571 = vadd.f32 %v9522, %v9570
        %v9572 = vpop.f32.mrf.mxu0
        %v9573 = vadd.f32 %v9524, %v9572
        %9574 = vmatmul.bf16.gmra.mxu0 %v7784
        %v9575 = vpop.f32.mrf.mxu0
        %v9576 = vadd.f32 %v9527, %v9575
        %v9577 = vpop.f32.mrf.mxu0
        %v9578 = vadd.f32 %v9529, %v9577
        %9579 = vmatmul.bf16.gmra.mxu0 %v7788
        %v9580 = vpop.f32.mrf.mxu0
        %v9581 = vadd.f32 %v9532, %v9580
        %v9582 = vpop.f32.mrf.mxu0
        %v9583 = vadd.f32 %v9534, %v9582
        %9584 = vmatmul.bf16.gmra.mxu0 %v7792
        %v9585 = vpop.f32.mrf.mxu0
        %v9586 = vadd.f32 %v9537, %v9585
        %v9587 = vpop.f32.mrf.mxu0
        %v9588 = vadd.f32 %v9539, %v9587
        %9589 = vmatmul.bf16.gmra.mxu0 %v7796
        %v9590 = vpop.f32.mrf.mxu0
        %v9591 = vadd.f32 %v9542, %v9590
        %v9592 = vpop.f32.mrf.mxu0
        %v9593 = vadd.f32 %v9544, %v9592
        %9594 = vmatmul.bf16.gmra.mxu0 %v7800
        %v9595 = vpop.f32.mrf.mxu0
        %v9596 = vadd.f32 %v9547, %v9595
        %v9597 = vpop.f32.mrf.mxu0
        %v9598 = vadd.f32 %v9549, %v9597
        %9599 = vmatmul.bf16.gmra.mxu0 %v7804
        %v9600 = vpop.f32.mrf.mxu0
        %v9601 = vadd.f32 %v9552, %v9600
        %v9602 = vpop.f32.mrf.mxu0
        %v9603 = vadd.f32 %v9554, %v9602
        %9604 = vmatmul.bf16.gmra.mxu0 %v7808
        %v9605 = vpop.f32.mrf.mxu0
        %v9606 = vadd.f32 %v9557, %v9605
        %v9607 = vpop.f32.mrf.mxu0
        %v9608 = vadd.f32 %v9559, %v9607
        %9609 = vdwg.mxu0
        %9610 = vmatpush.bf16.msra.mxu0 %v8821
        %9611 = vmatpush.bf16.msra.mxu0 %v8814
        %9612 = vmatpush.bf16.msra.mxu0 %v8807
        %9613 = vmatpush.bf16.msra.mxu0 %v8800
        %9614 = vmatpush.bf16.msra.mxu0 %v8793
        %9615 = vmatpush.bf16.msra.mxu0 %v8786
        %9616 = vmatpush.bf16.msra.mxu0 %v8779
        %9617 = vmatpush.bf16.msra.mxu0 %v8772
        %9618 = vmatmul.bf16.gmra.mxu0 %v7777
        %v9619 = vpop.f32.mrf.mxu0
        %v9620 = vadd.f32 0.0, %v9619
        %v9621 = vpop.f32.mrf.mxu0
        %v9622 = vadd.f32 0.0, %v9621
        %9623 = vmatmul.bf16.gmra.mxu0 %v7781
        %v9624 = vpop.f32.mrf.mxu0
        %v9625 = vadd.f32 0.0, %v9624
        %v9626 = vpop.f32.mrf.mxu0
        %v9627 = vadd.f32 0.0, %v9626
        %9628 = vmatmul.bf16.gmra.mxu0 %v7785
        %v9629 = vpop.f32.mrf.mxu0
        %v9630 = vadd.f32 0.0, %v9629
        %v9631 = vpop.f32.mrf.mxu0
        %v9632 = vadd.f32 0.0, %v9631
        %9633 = vmatmul.bf16.gmra.mxu0 %v7789
        %v9634 = vpop.f32.mrf.mxu0
        %v9635 = vadd.f32 0.0, %v9634
        %v9636 = vpop.f32.mrf.mxu0
        %v9637 = vadd.f32 0.0, %v9636
        %9638 = vmatmul.bf16.gmra.mxu0 %v7793
        %v9639 = vpop.f32.mrf.mxu0
        %v9640 = vadd.f32 0.0, %v9639
        %v9641 = vpop.f32.mrf.mxu0
        %v9642 = vadd.f32 0.0, %v9641
        %9643 = vmatmul.bf16.gmra.mxu0 %v7797
        %v9644 = vpop.f32.mrf.mxu0
        %v9645 = vadd.f32 0.0, %v9644
        %v9646 = vpop.f32.mrf.mxu0
        %v9647 = vadd.f32 0.0, %v9646
        %9648 = vmatmul.bf16.gmra.mxu0 %v7801
        %v9649 = vpop.f32.mrf.mxu0
        %v9650 = vadd.f32 0.0, %v9649
        %v9651 = vpop.f32.mrf.mxu0
        %v9652 = vadd.f32 0.0, %v9651
        %9653 = vmatmul.bf16.gmra.mxu0 %v7805
        %v9654 = vpop.f32.mrf.mxu0
        %v9655 = vadd.f32 0.0, %v9654
        %v9656 = vpop.f32.mrf.mxu0
        %v9657 = vadd.f32 0.0, %v9656
        %9658 = vdwg.mxu0
        %9659 = vmatpush.bf16.msra.mxu0 %v8877
        %9660 = vmatpush.bf16.msra.mxu0 %v8870
        %9661 = vmatpush.bf16.msra.mxu0 %v8863
        %9662 = vmatpush.bf16.msra.mxu0 %v8856
        %9663 = vmatpush.bf16.msra.mxu0 %v8849
        %9664 = vmatpush.bf16.msra.mxu0 %v8842
        %9665 = vmatpush.bf16.msra.mxu0 %v8835
        %9666 = vmatpush.bf16.msra.mxu0 %v8828
        %9667 = vmatmul.bf16.gmra.mxu0 %v7778
        %v9668 = vpop.f32.mrf.mxu0
        %v9669 = vadd.f32 %v9620, %v9668
        %v9670 = vpop.f32.mrf.mxu0
        %v9671 = vadd.f32 %v9622, %v9670
        %9672 = vmatmul.bf16.gmra.mxu0 %v7782
        %v9673 = vpop.f32.mrf.mxu0
        %v9674 = vadd.f32 %v9625, %v9673
        %v9675 = vpop.f32.mrf.mxu0
        %v9676 = vadd.f32 %v9627, %v9675
        %9677 = vmatmul.bf16.gmra.mxu0 %v7786
        %v9678 = vpop.f32.mrf.mxu0
        %v9679 = vadd.f32 %v9630, %v9678
        %v9680 = vpop.f32.mrf.mxu0
        %v9681 = vadd.f32 %v9632, %v9680
        %9682 = vmatmul.bf16.gmra.mxu0 %v7790
        %v9683 = vpop.f32.mrf.mxu0
        %v9684 = vadd.f32 %v9635, %v9683
        %v9685 = vpop.f32.mrf.mxu0
        %v9686 = vadd.f32 %v9637, %v9685
        %9687 = vmatmul.bf16.gmra.mxu0 %v7794
        %v9688 = vpop.f32.mrf.mxu0
        %v9689 = vadd.f32 %v9640, %v9688
        %v9690 = vpop.f32.mrf.mxu0
        %v9691 = vadd.f32 %v9642, %v9690
        %9692 = vmatmul.bf16.gmra.mxu0 %v7798
        %v9693 = vpop.f32.mrf.mxu0
        %v9694 = vadd.f32 %v9645, %v9693
        %v9695 = vpop.f32.mrf.mxu0
        %v9696 = vadd.f32 %v9647, %v9695
        %9697 = vmatmul.bf16.gmra.mxu0 %v7802
        %v9698 = vpop.f32.mrf.mxu0
        %v9699 = vadd.f32 %v9650, %v9698
        %v9700 = vpop.f32.mrf.mxu0
        %v9701 = vadd.f32 %v9652, %v9700
        %9702 = vmatmul.bf16.gmra.mxu0 %v7806
        %v9703 = vpop.f32.mrf.mxu0
        %v9704 = vadd.f32 %v9655, %v9703
        %v9705 = vpop.f32.mrf.mxu0
        %v9706 = vadd.f32 %v9657, %v9705
        %9707 = vdwg.mxu0
        %9708 = vmatpush.bf16.msra.mxu0 %v8933
        %9709 = vmatpush.bf16.msra.mxu0 %v8926
        %9710 = vmatpush.bf16.msra.mxu0 %v8919
        %9711 = vmatpush.bf16.msra.mxu0 %v8912
        %9712 = vmatpush.bf16.msra.mxu0 %v8905
        %9713 = vmatpush.bf16.msra.mxu0 %v8898
        %9714 = vmatpush.bf16.msra.mxu0 %v8891
        %9715 = vmatpush.bf16.msra.mxu0 %v8884
        %9716 = vmatmul.bf16.gmra.mxu0 %v7779
        %v9717 = vpop.f32.mrf.mxu0
        %v9718 = vadd.f32 %v9669, %v9717
        %v9719 = vpop.f32.mrf.mxu0
        %v9720 = vadd.f32 %v9671, %v9719
        %9721 = vmatmul.bf16.gmra.mxu0 %v7783
        %v9722 = vpop.f32.mrf.mxu0
        %v9723 = vadd.f32 %v9674, %v9722
        %v9724 = vpop.f32.mrf.mxu0
        %v9725 = vadd.f32 %v9676, %v9724
        %9726 = vmatmul.bf16.gmra.mxu0 %v7787
        %v9727 = vpop.f32.mrf.mxu0
        %v9728 = vadd.f32 %v9679, %v9727
        %v9729 = vpop.f32.mrf.mxu0
        %v9730 = vadd.f32 %v9681, %v9729
        %9731 = vmatmul.bf16.gmra.mxu0 %v7791
        %v9732 = vpop.f32.mrf.mxu0
        %v9733 = vadd.f32 %v9684, %v9732
        %v9734 = vpop.f32.mrf.mxu0
        %v9735 = vadd.f32 %v9686, %v9734
        %9736 = vmatmul.bf16.gmra.mxu0 %v7795
        %v9737 = vpop.f32.mrf.mxu0
        %v9738 = vadd.f32 %v9689, %v9737
        %v9739 = vpop.f32.mrf.mxu0
        %v9740 = vadd.f32 %v9691, %v9739
        %9741 = vmatmul.bf16.gmra.mxu0 %v7799
        %v9742 = vpop.f32.mrf.mxu0
        %v9743 = vadd.f32 %v9694, %v9742
        %v9744 = vpop.f32.mrf.mxu0
        %v9745 = vadd.f32 %v9696, %v9744
        %9746 = vmatmul.bf16.gmra.mxu0 %v7803
        %v9747 = vpop.f32.mrf.mxu0
        %v9748 = vadd.f32 %v9699, %v9747
        %v9749 = vpop.f32.mrf.mxu0
        %v9750 = vadd.f32 %v9701, %v9749
        %9751 = vmatmul.bf16.gmra.mxu0 %v7807
        %v9752 = vpop.f32.mrf.mxu0
        %v9753 = vadd.f32 %v9704, %v9752
        %v9754 = vpop.f32.mrf.mxu0
        %v9755 = vadd.f32 %v9706, %v9754
        %9756 = vdwg.mxu0
        %9757 = vmatpush.bf16.msra.mxu0 %v8989
        %9758 = vmatpush.bf16.msra.mxu0 %v8982
        %9759 = vmatpush.bf16.msra.mxu0 %v8975
        %9760 = vmatpush.bf16.msra.mxu0 %v8968
        %9761 = vmatpush.bf16.msra.mxu0 %v8961
        %9762 = vmatpush.bf16.msra.mxu0 %v8954
        %9763 = vmatpush.bf16.msra.mxu0 %v8947
        %9764 = vmatpush.bf16.msra.mxu0 %v8940
        %9765 = vmatmul.bf16.gmra.mxu0 %v7780
        %v9766 = vpop.f32.mrf.mxu0
        %v9767 = vadd.f32 %v9718, %v9766
        %v9768 = vpop.f32.mrf.mxu0
        %v9769 = vadd.f32 %v9720, %v9768
        %9770 = vmatmul.bf16.gmra.mxu0 %v7784
        %v9771 = vpop.f32.mrf.mxu0
        %v9772 = vadd.f32 %v9723, %v9771
        %v9773 = vpop.f32.mrf.mxu0
        %v9774 = vadd.f32 %v9725, %v9773
        %9775 = vmatmul.bf16.gmra.mxu0 %v7788
        %v9776 = vpop.f32.mrf.mxu0
        %v9777 = vadd.f32 %v9728, %v9776
        %v9778 = vpop.f32.mrf.mxu0
        %v9779 = vadd.f32 %v9730, %v9778
        %9780 = vmatmul.bf16.gmra.mxu0 %v7792
        %v9781 = vpop.f32.mrf.mxu0
        %v9782 = vadd.f32 %v9733, %v9781
        %v9783 = vpop.f32.mrf.mxu0
        %v9784 = vadd.f32 %v9735, %v9783
        %9785 = vmatmul.bf16.gmra.mxu0 %v7796
        %v9786 = vpop.f32.mrf.mxu0
        %v9787 = vadd.f32 %v9738, %v9786
        %v9788 = vpop.f32.mrf.mxu0
        %v9789 = vadd.f32 %v9740, %v9788
        %9790 = vmatmul.bf16.gmra.mxu0 %v7800
        %v9791 = vpop.f32.mrf.mxu0
        %v9792 = vadd.f32 %v9743, %v9791
        %v9793 = vpop.f32.mrf.mxu0
        %v9794 = vadd.f32 %v9745, %v9793
        %9795 = vmatmul.bf16.gmra.mxu0 %v7804
        %v9796 = vpop.f32.mrf.mxu0
        %v9797 = vadd.f32 %v9748, %v9796
        %v9798 = vpop.f32.mrf.mxu0
        %v9799 = vadd.f32 %v9750, %v9798
        %9800 = vmatmul.bf16.gmra.mxu0 %v7808
        %v9801 = vpop.f32.mrf.mxu0
        %v9802 = vadd.f32 %v9753, %v9801
        %v9803 = vpop.f32.mrf.mxu0
        %v9804 = vadd.f32 %v9755, %v9803
        %9805 = vdwg.mxu0
        %9806 = vmatpush.bf16.msra.mxu0 %v8822
        %9807 = vmatpush.bf16.msra.mxu0 %v8815
        %9808 = vmatpush.bf16.msra.mxu0 %v8808
        %9809 = vmatpush.bf16.msra.mxu0 %v8801
        %9810 = vmatpush.bf16.msra.mxu0 %v8794
        %9811 = vmatpush.bf16.msra.mxu0 %v8787
        %9812 = vmatpush.bf16.msra.mxu0 %v8780
        %9813 = vmatpush.bf16.msra.mxu0 %v8773
        %9814 = vmatmul.bf16.gmra.mxu0 %v7777
        %v9815 = vpop.f32.mrf.mxu0
        %v9816 = vadd.f32 0.0, %v9815
        %v9817 = vpop.f32.mrf.mxu0
        %v9818 = vadd.f32 0.0, %v9817
        %9819 = vmatmul.bf16.gmra.mxu0 %v7781
        %v9820 = vpop.f32.mrf.mxu0
        %v9821 = vadd.f32 0.0, %v9820
        %v9822 = vpop.f32.mrf.mxu0
        %v9823 = vadd.f32 0.0, %v9822
        %9824 = vmatmul.bf16.gmra.mxu0 %v7785
        %v9825 = vpop.f32.mrf.mxu0
        %v9826 = vadd.f32 0.0, %v9825
        %v9827 = vpop.f32.mrf.mxu0
        %v9828 = vadd.f32 0.0, %v9827
        %9829 = vmatmul.bf16.gmra.mxu0 %v7789
        %v9830 = vpop.f32.mrf.mxu0
        %v9831 = vadd.f32 0.0, %v9830
        %v9832 = vpop.f32.mrf.mxu0
        %v9833 = vadd.f32 0.0, %v9832
        %9834 = vmatmul.bf16.gmra.mxu0 %v7793
        %v9835 = vpop.f32.mrf.mxu0
        %v9836 = vadd.f32 0.0, %v9835
        %v9837 = vpop.f32.mrf.mxu0
        %v9838 = vadd.f32 0.0, %v9837
        %9839 = vmatmul.bf16.gmra.mxu0 %v7797
        %v9840 = vpop.f32.mrf.mxu0
        %v9841 = vadd.f32 0.0, %v9840
        %v9842 = vpop.f32.mrf.mxu0
        %v9843 = vadd.f32 0.0, %v9842
        %9844 = vmatmul.bf16.gmra.mxu0 %v7801
        %v9845 = vpop.f32.mrf.mxu0
        %v9846 = vadd.f32 0.0, %v9845
        %v9847 = vpop.f32.mrf.mxu0
        %v9848 = vadd.f32 0.0, %v9847
        %9849 = vmatmul.bf16.gmra.mxu0 %v7805
        %v9850 = vpop.f32.mrf.mxu0
        %v9851 = vadd.f32 0.0, %v9850
        %v9852 = vpop.f32.mrf.mxu0
        %v9853 = vadd.f32 0.0, %v9852
        %9854 = vdwg.mxu0
        %9855 = vmatpush.bf16.msra.mxu0 %v8878
        %9856 = vmatpush.bf16.msra.mxu0 %v8871
        %9857 = vmatpush.bf16.msra.mxu0 %v8864
        %9858 = vmatpush.bf16.msra.mxu0 %v8857
        %9859 = vmatpush.bf16.msra.mxu0 %v8850
        %9860 = vmatpush.bf16.msra.mxu0 %v8843
        %9861 = vmatpush.bf16.msra.mxu0 %v8836
        %9862 = vmatpush.bf16.msra.mxu0 %v8829
        %9863 = vmatmul.bf16.gmra.mxu0 %v7778
        %v9864 = vpop.f32.mrf.mxu0
        %v9865 = vadd.f32 %v9816, %v9864
        %v9866 = vpop.f32.mrf.mxu0
        %v9867 = vadd.f32 %v9818, %v9866
        %9868 = vmatmul.bf16.gmra.mxu0 %v7782
        %v9869 = vpop.f32.mrf.mxu0
        %v9870 = vadd.f32 %v9821, %v9869
        %v9871 = vpop.f32.mrf.mxu0
        %v9872 = vadd.f32 %v9823, %v9871
        %9873 = vmatmul.bf16.gmra.mxu0 %v7786
        %v9874 = vpop.f32.mrf.mxu0
        %v9875 = vadd.f32 %v9826, %v9874
        %v9876 = vpop.f32.mrf.mxu0
        %v9877 = vadd.f32 %v9828, %v9876
        %9878 = vmatmul.bf16.gmra.mxu0 %v7790
        %v9879 = vpop.f32.mrf.mxu0
        %v9880 = vadd.f32 %v9831, %v9879
        %v9881 = vpop.f32.mrf.mxu0
        %v9882 = vadd.f32 %v9833, %v9881
        %9883 = vmatmul.bf16.gmra.mxu0 %v7794
        %v9884 = vpop.f32.mrf.mxu0
        %v9885 = vadd.f32 %v9836, %v9884
        %v9886 = vpop.f32.mrf.mxu0
        %v9887 = vadd.f32 %v9838, %v9886
        %9888 = vmatmul.bf16.gmra.mxu0 %v7798
        %v9889 = vpop.f32.mrf.mxu0
        %v9890 = vadd.f32 %v9841, %v9889
        %v9891 = vpop.f32.mrf.mxu0
        %v9892 = vadd.f32 %v9843, %v9891
        %9893 = vmatmul.bf16.gmra.mxu0 %v7802
        %v9894 = vpop.f32.mrf.mxu0
        %v9895 = vadd.f32 %v9846, %v9894
        %v9896 = vpop.f32.mrf.mxu0
        %v9897 = vadd.f32 %v9848, %v9896
        %9898 = vmatmul.bf16.gmra.mxu0 %v7806
        %v9899 = vpop.f32.mrf.mxu0
        %v9900 = vadd.f32 %v9851, %v9899
        %v9901 = vpop.f32.mrf.mxu0
        %v9902 = vadd.f32 %v9853, %v9901
        %9903 = vdwg.mxu0
        %9904 = vmatpush.bf16.msra.mxu0 %v8934
        %9905 = vmatpush.bf16.msra.mxu0 %v8927
        %9906 = vmatpush.bf16.msra.mxu0 %v8920
        %9907 = vmatpush.bf16.msra.mxu0 %v8913
        %9908 = vmatpush.bf16.msra.mxu0 %v8906
        %9909 = vmatpush.bf16.msra.mxu0 %v8899
        %9910 = vmatpush.bf16.msra.mxu0 %v8892
        %9911 = vmatpush.bf16.msra.mxu0 %v8885
        %9912 = vmatmul.bf16.gmra.mxu0 %v7779
        %v9913 = vpop.f32.mrf.mxu0
        %v9914 = vadd.f32 %v9865, %v9913
        %v9915 = vpop.f32.mrf.mxu0
        %v9916 = vadd.f32 %v9867, %v9915
        %9917 = vmatmul.bf16.gmra.mxu0 %v7783
        %v9918 = vpop.f32.mrf.mxu0
        %v9919 = vadd.f32 %v9870, %v9918
        %v9920 = vpop.f32.mrf.mxu0
        %v9921 = vadd.f32 %v9872, %v9920
        %9922 = vmatmul.bf16.gmra.mxu0 %v7787
        %v9923 = vpop.f32.mrf.mxu0
        %v9924 = vadd.f32 %v9875, %v9923
        %v9925 = vpop.f32.mrf.mxu0
        %v9926 = vadd.f32 %v9877, %v9925
        %9927 = vmatmul.bf16.gmra.mxu0 %v7791
        %v9928 = vpop.f32.mrf.mxu0
        %v9929 = vadd.f32 %v9880, %v9928
        %v9930 = vpop.f32.mrf.mxu0
        %v9931 = vadd.f32 %v9882, %v9930
        %9932 = vmatmul.bf16.gmra.mxu0 %v7795
        %v9933 = vpop.f32.mrf.mxu0
        %v9934 = vadd.f32 %v9885, %v9933
        %v9935 = vpop.f32.mrf.mxu0
        %v9936 = vadd.f32 %v9887, %v9935
        %9937 = vmatmul.bf16.gmra.mxu0 %v7799
        %v9938 = vpop.f32.mrf.mxu0
        %v9939 = vadd.f32 %v9890, %v9938
        %v9940 = vpop.f32.mrf.mxu0
        %v9941 = vadd.f32 %v9892, %v9940
        %9942 = vmatmul.bf16.gmra.mxu0 %v7803
        %v9943 = vpop.f32.mrf.mxu0
        %v9944 = vadd.f32 %v9895, %v9943
        %v9945 = vpop.f32.mrf.mxu0
        %v9946 = vadd.f32 %v9897, %v9945
        %9947 = vmatmul.bf16.gmra.mxu0 %v7807
        %v9948 = vpop.f32.mrf.mxu0
        %v9949 = vadd.f32 %v9900, %v9948
        %v9950 = vpop.f32.mrf.mxu0
        %v9951 = vadd.f32 %v9902, %v9950
        %9952 = vdwg.mxu0
        %9953 = vmatpush.bf16.msra.mxu0 %v8990
        %9954 = vmatpush.bf16.msra.mxu0 %v8983
        %9955 = vmatpush.bf16.msra.mxu0 %v8976
        %9956 = vmatpush.bf16.msra.mxu0 %v8969
        %9957 = vmatpush.bf16.msra.mxu0 %v8962
        %9958 = vmatpush.bf16.msra.mxu0 %v8955
        %9959 = vmatpush.bf16.msra.mxu0 %v8948
        %9960 = vmatpush.bf16.msra.mxu0 %v8941
        %9961 = vmatmul.bf16.gmra.mxu0 %v7780
        %v9962 = vpop.f32.mrf.mxu0
        %v9963 = vadd.f32 %v9914, %v9962
        %v9964 = vpop.f32.mrf.mxu0
        %v9965 = vadd.f32 %v9916, %v9964
        %9966 = vmatmul.bf16.gmra.mxu0 %v7784
        %v9967 = vpop.f32.mrf.mxu0
        %v9968 = vadd.f32 %v9919, %v9967
        %v9969 = vpop.f32.mrf.mxu0
        %v9970 = vadd.f32 %v9921, %v9969
        %9971 = vmatmul.bf16.gmra.mxu0 %v7788
        %v9972 = vpop.f32.mrf.mxu0
        %v9973 = vadd.f32 %v9924, %v9972
        %v9974 = vpop.f32.mrf.mxu0
        %v9975 = vadd.f32 %v9926, %v9974
        %9976 = vmatmul.bf16.gmra.mxu0 %v7792
        %v9977 = vpop.f32.mrf.mxu0
        %v9978 = vadd.f32 %v9929, %v9977
        %v9979 = vpop.f32.mrf.mxu0
        %v9980 = vadd.f32 %v9931, %v9979
        %9981 = vmatmul.bf16.gmra.mxu0 %v7796
        %v9982 = vpop.f32.mrf.mxu0
        %v9983 = vadd.f32 %v9934, %v9982
        %v9984 = vpop.f32.mrf.mxu0
        %v9985 = vadd.f32 %v9936, %v9984
        %9986 = vmatmul.bf16.gmra.mxu0 %v7800
        %v9987 = vpop.f32.mrf.mxu0
        %v9988 = vadd.f32 %v9939, %v9987
        %v9989 = vpop.f32.mrf.mxu0
        %v9990 = vadd.f32 %v9941, %v9989
        %9991 = vmatmul.bf16.gmra.mxu0 %v7804
        %v9992 = vpop.f32.mrf.mxu0
        %v9993 = vadd.f32 %v9944, %v9992
        %v9994 = vpop.f32.mrf.mxu0
        %v9995 = vadd.f32 %v9946, %v9994
        %9996 = vmatmul.bf16.gmra.mxu0 %v7808
        %v9997 = vpop.f32.mrf.mxu0
        %v9998 = vadd.f32 %v9949, %v9997
        %v9999 = vpop.f32.mrf.mxu0
        %v10000 = vadd.f32 %v9951, %v9999
        %10001 = vdwg.mxu0
        %10002 = vmatpush.bf16.msra.mxu0 %v8823
        %10003 = vmatpush.bf16.msra.mxu0 %v8816
        %10004 = vmatpush.bf16.msra.mxu0 %v8809
        %10005 = vmatpush.bf16.msra.mxu0 %v8802
        %10006 = vmatpush.bf16.msra.mxu0 %v8795
        %10007 = vmatpush.bf16.msra.mxu0 %v8788
        %10008 = vmatpush.bf16.msra.mxu0 %v8781
        %10009 = vmatpush.bf16.msra.mxu0 %v8774
        %10010 = vmatmul.bf16.gmra.mxu0 %v7777
        %v10011 = vpop.f32.mrf.mxu0
        %v10012 = vadd.f32 0.0, %v10011
        %v10013 = vpop.f32.mrf.mxu0
        %v10014 = vadd.f32 0.0, %v10013
        %10015 = vmatmul.bf16.gmra.mxu0 %v7781
        %v10016 = vpop.f32.mrf.mxu0
        %v10017 = vadd.f32 0.0, %v10016
        %v10018 = vpop.f32.mrf.mxu0
        %v10019 = vadd.f32 0.0, %v10018
        %10020 = vmatmul.bf16.gmra.mxu0 %v7785
        %v10021 = vpop.f32.mrf.mxu0
        %v10022 = vadd.f32 0.0, %v10021
        %v10023 = vpop.f32.mrf.mxu0
        %v10024 = vadd.f32 0.0, %v10023
        %10025 = vmatmul.bf16.gmra.mxu0 %v7789
        %v10026 = vpop.f32.mrf.mxu0
        %v10027 = vadd.f32 0.0, %v10026
        %v10028 = vpop.f32.mrf.mxu0
        %v10029 = vadd.f32 0.0, %v10028
        %10030 = vmatmul.bf16.gmra.mxu0 %v7793
        %v10031 = vpop.f32.mrf.mxu0
        %v10032 = vadd.f32 0.0, %v10031
        %v10033 = vpop.f32.mrf.mxu0
        %v10034 = vadd.f32 0.0, %v10033
        %10035 = vmatmul.bf16.gmra.mxu0 %v7797
        %v10036 = vpop.f32.mrf.mxu0
        %v10037 = vadd.f32 0.0, %v10036
        %v10038 = vpop.f32.mrf.mxu0
        %v10039 = vadd.f32 0.0, %v10038
        %10040 = vmatmul.bf16.gmra.mxu0 %v7801
        %v10041 = vpop.f32.mrf.mxu0
        %v10042 = vadd.f32 0.0, %v10041
        %v10043 = vpop.f32.mrf.mxu0
        %v10044 = vadd.f32 0.0, %v10043
        %10045 = vmatmul.bf16.gmra.mxu0 %v7805
        %v10046 = vpop.f32.mrf.mxu0
        %v10047 = vadd.f32 0.0, %v10046
        %v10048 = vpop.f32.mrf.mxu0
        %v10049 = vadd.f32 0.0, %v10048
        %10050 = vdwg.mxu0
        %10051 = vmatpush.bf16.msra.mxu0 %v8879
        %10052 = vmatpush.bf16.msra.mxu0 %v8872
        %10053 = vmatpush.bf16.msra.mxu0 %v8865
        %10054 = vmatpush.bf16.msra.mxu0 %v8858
        %10055 = vmatpush.bf16.msra.mxu0 %v8851
        %10056 = vmatpush.bf16.msra.mxu0 %v8844
        %10057 = vmatpush.bf16.msra.mxu0 %v8837
        %10058 = vmatpush.bf16.msra.mxu0 %v8830
        %10059 = vmatmul.bf16.gmra.mxu0 %v7778
        %v10060 = vpop.f32.mrf.mxu0
        %v10061 = vadd.f32 %v10012, %v10060
        %v10062 = vpop.f32.mrf.mxu0
        %v10063 = vadd.f32 %v10014, %v10062
        %10064 = vmatmul.bf16.gmra.mxu0 %v7782
        %v10065 = vpop.f32.mrf.mxu0
        %v10066 = vadd.f32 %v10017, %v10065
        %v10067 = vpop.f32.mrf.mxu0
        %v10068 = vadd.f32 %v10019, %v10067
        %10069 = vmatmul.bf16.gmra.mxu0 %v7786
        %v10070 = vpop.f32.mrf.mxu0
        %v10071 = vadd.f32 %v10022, %v10070
        %v10072 = vpop.f32.mrf.mxu0
        %v10073 = vadd.f32 %v10024, %v10072
        %10074 = vmatmul.bf16.gmra.mxu0 %v7790
        %v10075 = vpop.f32.mrf.mxu0
        %v10076 = vadd.f32 %v10027, %v10075
        %v10077 = vpop.f32.mrf.mxu0
        %v10078 = vadd.f32 %v10029, %v10077
        %10079 = vmatmul.bf16.gmra.mxu0 %v7794
        %v10080 = vpop.f32.mrf.mxu0
        %v10081 = vadd.f32 %v10032, %v10080
        %v10082 = vpop.f32.mrf.mxu0
        %v10083 = vadd.f32 %v10034, %v10082
        %10084 = vmatmul.bf16.gmra.mxu0 %v7798
        %v10085 = vpop.f32.mrf.mxu0
        %v10086 = vadd.f32 %v10037, %v10085
        %v10087 = vpop.f32.mrf.mxu0
        %v10088 = vadd.f32 %v10039, %v10087
        %10089 = vmatmul.bf16.gmra.mxu0 %v7802
        %v10090 = vpop.f32.mrf.mxu0
        %v10091 = vadd.f32 %v10042, %v10090
        %v10092 = vpop.f32.mrf.mxu0
        %v10093 = vadd.f32 %v10044, %v10092
        %10094 = vmatmul.bf16.gmra.mxu0 %v7806
        %v10095 = vpop.f32.mrf.mxu0
        %v10096 = vadd.f32 %v10047, %v10095
        %v10097 = vpop.f32.mrf.mxu0
        %v10098 = vadd.f32 %v10049, %v10097
        %10099 = vdwg.mxu0
        %10100 = vmatpush.bf16.msra.mxu0 %v8935
        %10101 = vmatpush.bf16.msra.mxu0 %v8928
        %10102 = vmatpush.bf16.msra.mxu0 %v8921
        %10103 = vmatpush.bf16.msra.mxu0 %v8914
        %10104 = vmatpush.bf16.msra.mxu0 %v8907
        %10105 = vmatpush.bf16.msra.mxu0 %v8900
        %10106 = vmatpush.bf16.msra.mxu0 %v8893
        %10107 = vmatpush.bf16.msra.mxu0 %v8886
        %10108 = vmatmul.bf16.gmra.mxu0 %v7779
        %v10109 = vpop.f32.mrf.mxu0
        %v10110 = vadd.f32 %v10061, %v10109
        %v10111 = vpop.f32.mrf.mxu0
        %v10112 = vadd.f32 %v10063, %v10111
        %10113 = vmatmul.bf16.gmra.mxu0 %v7783
        %v10114 = vpop.f32.mrf.mxu0
        %v10115 = vadd.f32 %v10066, %v10114
        %v10116 = vpop.f32.mrf.mxu0
        %v10117 = vadd.f32 %v10068, %v10116
        %10118 = vmatmul.bf16.gmra.mxu0 %v7787
        %v10119 = vpop.f32.mrf.mxu0
        %v10120 = vadd.f32 %v10071, %v10119
        %v10121 = vpop.f32.mrf.mxu0
        %v10122 = vadd.f32 %v10073, %v10121
        %10123 = vmatmul.bf16.gmra.mxu0 %v7791
        %v10124 = vpop.f32.mrf.mxu0
        %v10125 = vadd.f32 %v10076, %v10124
        %v10126 = vpop.f32.mrf.mxu0
        %v10127 = vadd.f32 %v10078, %v10126
        %10128 = vmatmul.bf16.gmra.mxu0 %v7795
        %v10129 = vpop.f32.mrf.mxu0
        %v10130 = vadd.f32 %v10081, %v10129
        %v10131 = vpop.f32.mrf.mxu0
        %v10132 = vadd.f32 %v10083, %v10131
        %10133 = vmatmul.bf16.gmra.mxu0 %v7799
        %v10134 = vpop.f32.mrf.mxu0
        %v10135 = vadd.f32 %v10086, %v10134
        %v10136 = vpop.f32.mrf.mxu0
        %v10137 = vadd.f32 %v10088, %v10136
        %10138 = vmatmul.bf16.gmra.mxu0 %v7803
        %v10139 = vpop.f32.mrf.mxu0
        %v10140 = vadd.f32 %v10091, %v10139
        %v10141 = vpop.f32.mrf.mxu0
        %v10142 = vadd.f32 %v10093, %v10141
        %10143 = vmatmul.bf16.gmra.mxu0 %v7807
        %v10144 = vpop.f32.mrf.mxu0
        %v10145 = vadd.f32 %v10096, %v10144
        %v10146 = vpop.f32.mrf.mxu0
        %v10147 = vadd.f32 %v10098, %v10146
        %10148 = vdwg.mxu0
        %10149 = vmatpush.bf16.msra.mxu0 %v8991
        %10150 = vmatpush.bf16.msra.mxu0 %v8984
        %10151 = vmatpush.bf16.msra.mxu0 %v8977
        %10152 = vmatpush.bf16.msra.mxu0 %v8970
        %10153 = vmatpush.bf16.msra.mxu0 %v8963
        %10154 = vmatpush.bf16.msra.mxu0 %v8956
        %10155 = vmatpush.bf16.msra.mxu0 %v8949
        %10156 = vmatpush.bf16.msra.mxu0 %v8942
        %10157 = vmatmul.bf16.gmra.mxu0 %v7780
        %v10158 = vpop.f32.mrf.mxu0
        %v10159 = vadd.f32 %v10110, %v10158
        %v10160 = vpop.f32.mrf.mxu0
        %v10161 = vadd.f32 %v10112, %v10160
        %10162 = vmatmul.bf16.gmra.mxu0 %v7784
        %v10163 = vpop.f32.mrf.mxu0
        %v10164 = vadd.f32 %v10115, %v10163
        %v10165 = vpop.f32.mrf.mxu0
        %v10166 = vadd.f32 %v10117, %v10165
        %10167 = vmatmul.bf16.gmra.mxu0 %v7788
        %v10168 = vpop.f32.mrf.mxu0
        %v10169 = vadd.f32 %v10120, %v10168
        %v10170 = vpop.f32.mrf.mxu0
        %v10171 = vadd.f32 %v10122, %v10170
        %10172 = vmatmul.bf16.gmra.mxu0 %v7792
        %v10173 = vpop.f32.mrf.mxu0
        %v10174 = vadd.f32 %v10125, %v10173
        %v10175 = vpop.f32.mrf.mxu0
        %v10176 = vadd.f32 %v10127, %v10175
        %10177 = vmatmul.bf16.gmra.mxu0 %v7796
        %v10178 = vpop.f32.mrf.mxu0
        %v10179 = vadd.f32 %v10130, %v10178
        %v10180 = vpop.f32.mrf.mxu0
        %v10181 = vadd.f32 %v10132, %v10180
        %10182 = vmatmul.bf16.gmra.mxu0 %v7800
        %v10183 = vpop.f32.mrf.mxu0
        %v10184 = vadd.f32 %v10135, %v10183
        %v10185 = vpop.f32.mrf.mxu0
        %v10186 = vadd.f32 %v10137, %v10185
        %10187 = vmatmul.bf16.gmra.mxu0 %v7804
        %v10188 = vpop.f32.mrf.mxu0
        %v10189 = vadd.f32 %v10140, %v10188
        %v10190 = vpop.f32.mrf.mxu0
        %v10191 = vadd.f32 %v10142, %v10190
        %10192 = vmatmul.bf16.gmra.mxu0 %v7808
        %v10193 = vpop.f32.mrf.mxu0
        %v10194 = vadd.f32 %v10145, %v10193
        %v10195 = vpop.f32.mrf.mxu0
        %v10196 = vadd.f32 %v10147, %v10195
        %10197 = vdwg.mxu0
        %10198 = vmatpush.bf16.msra.mxu0 %v8824
        %10199 = vmatpush.bf16.msra.mxu0 %v8817
        %10200 = vmatpush.bf16.msra.mxu0 %v8810
        %10201 = vmatpush.bf16.msra.mxu0 %v8803
        %10202 = vmatpush.bf16.msra.mxu0 %v8796
        %10203 = vmatpush.bf16.msra.mxu0 %v8789
        %10204 = vmatpush.bf16.msra.mxu0 %v8782
        %10205 = vmatpush.bf16.msra.mxu0 %v8775
        %10206 = vmatmul.bf16.gmra.mxu0 %v7777
        %v10207 = vpop.f32.mrf.mxu0
        %v10208 = vadd.f32 0.0, %v10207
        %v10209 = vpop.f32.mrf.mxu0
        %v10210 = vadd.f32 0.0, %v10209
        %10211 = vmatmul.bf16.gmra.mxu0 %v7781
        %v10212 = vpop.f32.mrf.mxu0
        %v10213 = vadd.f32 0.0, %v10212
        %v10214 = vpop.f32.mrf.mxu0
        %v10215 = vadd.f32 0.0, %v10214
        %10216 = vmatmul.bf16.gmra.mxu0 %v7785
        %v10217 = vpop.f32.mrf.mxu0
        %v10218 = vadd.f32 0.0, %v10217
        %v10219 = vpop.f32.mrf.mxu0
        %v10220 = vadd.f32 0.0, %v10219
        %10221 = vmatmul.bf16.gmra.mxu0 %v7789
        %v10222 = vpop.f32.mrf.mxu0
        %v10223 = vadd.f32 0.0, %v10222
        %v10224 = vpop.f32.mrf.mxu0
        %v10225 = vadd.f32 0.0, %v10224
        %10226 = vmatmul.bf16.gmra.mxu0 %v7793
        %v10227 = vpop.f32.mrf.mxu0
        %v10228 = vadd.f32 0.0, %v10227
        %v10229 = vpop.f32.mrf.mxu0
        %v10230 = vadd.f32 0.0, %v10229
        %10231 = vmatmul.bf16.gmra.mxu0 %v7797
        %v10232 = vpop.f32.mrf.mxu0
        %v10233 = vadd.f32 0.0, %v10232
        %v10234 = vpop.f32.mrf.mxu0
        %v10235 = vadd.f32 0.0, %v10234
        %10236 = vmatmul.bf16.gmra.mxu0 %v7801
        %v10237 = vpop.f32.mrf.mxu0
        %v10238 = vadd.f32 0.0, %v10237
        %v10239 = vpop.f32.mrf.mxu0
        %v10240 = vadd.f32 0.0, %v10239
        %10241 = vmatmul.bf16.gmra.mxu0 %v7805
        %v10242 = vpop.f32.mrf.mxu0
        %v10243 = vadd.f32 0.0, %v10242
        %v10244 = vpop.f32.mrf.mxu0
        %v10245 = vadd.f32 0.0, %v10244
        %10246 = vdwg.mxu0
        %10247 = vmatpush.bf16.msra.mxu0 %v8880
        %10248 = vmatpush.bf16.msra.mxu0 %v8873
        %10249 = vmatpush.bf16.msra.mxu0 %v8866
        %10250 = vmatpush.bf16.msra.mxu0 %v8859
        %10251 = vmatpush.bf16.msra.mxu0 %v8852
        %10252 = vmatpush.bf16.msra.mxu0 %v8845
        %10253 = vmatpush.bf16.msra.mxu0 %v8838
        %10254 = vmatpush.bf16.msra.mxu0 %v8831
        %10255 = vmatmul.bf16.gmra.mxu0 %v7778
        %v10256 = vpop.f32.mrf.mxu0
        %v10257 = vadd.f32 %v10208, %v10256
        %v10258 = vpop.f32.mrf.mxu0
        %v10259 = vadd.f32 %v10210, %v10258
        %10260 = vmatmul.bf16.gmra.mxu0 %v7782
        %v10261 = vpop.f32.mrf.mxu0
        %v10262 = vadd.f32 %v10213, %v10261
        %v10263 = vpop.f32.mrf.mxu0
        %v10264 = vadd.f32 %v10215, %v10263
        %10265 = vmatmul.bf16.gmra.mxu0 %v7786
        %v10266 = vpop.f32.mrf.mxu0
        %v10267 = vadd.f32 %v10218, %v10266
        %v10268 = vpop.f32.mrf.mxu0
        %v10269 = vadd.f32 %v10220, %v10268
        %10270 = vmatmul.bf16.gmra.mxu0 %v7790
        %v10271 = vpop.f32.mrf.mxu0
        %v10272 = vadd.f32 %v10223, %v10271
        %v10273 = vpop.f32.mrf.mxu0
        %v10274 = vadd.f32 %v10225, %v10273
        %10275 = vmatmul.bf16.gmra.mxu0 %v7794
        %v10276 = vpop.f32.mrf.mxu0
        %v10277 = vadd.f32 %v10228, %v10276
        %v10278 = vpop.f32.mrf.mxu0
        %v10279 = vadd.f32 %v10230, %v10278
        %10280 = vmatmul.bf16.gmra.mxu0 %v7798
        %v10281 = vpop.f32.mrf.mxu0
        %v10282 = vadd.f32 %v10233, %v10281
        %v10283 = vpop.f32.mrf.mxu0
        %v10284 = vadd.f32 %v10235, %v10283
        %10285 = vmatmul.bf16.gmra.mxu0 %v7802
        %v10286 = vpop.f32.mrf.mxu0
        %v10287 = vadd.f32 %v10238, %v10286
        %v10288 = vpop.f32.mrf.mxu0
        %v10289 = vadd.f32 %v10240, %v10288
        %10290 = vmatmul.bf16.gmra.mxu0 %v7806
        %v10291 = vpop.f32.mrf.mxu0
        %v10292 = vadd.f32 %v10243, %v10291
        %v10293 = vpop.f32.mrf.mxu0
        %v10294 = vadd.f32 %v10245, %v10293
        %10295 = vdwg.mxu0
        %10296 = vmatpush.bf16.msra.mxu0 %v8936
        %10297 = vmatpush.bf16.msra.mxu0 %v8929
        %10298 = vmatpush.bf16.msra.mxu0 %v8922
        %10299 = vmatpush.bf16.msra.mxu0 %v8915
        %10300 = vmatpush.bf16.msra.mxu0 %v8908
        %10301 = vmatpush.bf16.msra.mxu0 %v8901
        %10302 = vmatpush.bf16.msra.mxu0 %v8894
        %10303 = vmatpush.bf16.msra.mxu0 %v8887
        %10304 = vmatmul.bf16.gmra.mxu0 %v7779
        %v10305 = vpop.f32.mrf.mxu0
        %v10306 = vadd.f32 %v10257, %v10305
        %v10307 = vpop.f32.mrf.mxu0
        %v10308 = vadd.f32 %v10259, %v10307
        %10309 = vmatmul.bf16.gmra.mxu0 %v7783
        %v10310 = vpop.f32.mrf.mxu0
        %v10311 = vadd.f32 %v10262, %v10310
        %v10312 = vpop.f32.mrf.mxu0
        %v10313 = vadd.f32 %v10264, %v10312
        %10314 = vmatmul.bf16.gmra.mxu0 %v7787
        %v10315 = vpop.f32.mrf.mxu0
        %v10316 = vadd.f32 %v10267, %v10315
        %v10317 = vpop.f32.mrf.mxu0
        %v10318 = vadd.f32 %v10269, %v10317
        %10319 = vmatmul.bf16.gmra.mxu0 %v7791
        %v10320 = vpop.f32.mrf.mxu0
        %v10321 = vadd.f32 %v10272, %v10320
        %v10322 = vpop.f32.mrf.mxu0
        %v10323 = vadd.f32 %v10274, %v10322
        %10324 = vmatmul.bf16.gmra.mxu0 %v7795
        %v10325 = vpop.f32.mrf.mxu0
        %v10326 = vadd.f32 %v10277, %v10325
        %v10327 = vpop.f32.mrf.mxu0
        %v10328 = vadd.f32 %v10279, %v10327
        %10329 = vmatmul.bf16.gmra.mxu0 %v7799
        %v10330 = vpop.f32.mrf.mxu0
        %v10331 = vadd.f32 %v10282, %v10330
        %v10332 = vpop.f32.mrf.mxu0
        %v10333 = vadd.f32 %v10284, %v10332
        %10334 = vmatmul.bf16.gmra.mxu0 %v7803
        %v10335 = vpop.f32.mrf.mxu0
        %v10336 = vadd.f32 %v10287, %v10335
        %v10337 = vpop.f32.mrf.mxu0
        %v10338 = vadd.f32 %v10289, %v10337
        %10339 = vmatmul.bf16.gmra.mxu0 %v7807
        %v10340 = vpop.f32.mrf.mxu0
        %v10341 = vadd.f32 %v10292, %v10340
        %v10342 = vpop.f32.mrf.mxu0
        %v10343 = vadd.f32 %v10294, %v10342
        %10344 = vdwg.mxu0
        %10345 = vmatpush.bf16.msra.mxu0 %v8992
        %10346 = vmatpush.bf16.msra.mxu0 %v8985
        %10347 = vmatpush.bf16.msra.mxu0 %v8978
        %10348 = vmatpush.bf16.msra.mxu0 %v8971
        %10349 = vmatpush.bf16.msra.mxu0 %v8964
        %10350 = vmatpush.bf16.msra.mxu0 %v8957
        %10351 = vmatpush.bf16.msra.mxu0 %v8950
        %10352 = vmatpush.bf16.msra.mxu0 %v8943
        %10353 = vmatmul.bf16.gmra.mxu0 %v7780
        %v10354 = vpop.f32.mrf.mxu0
        %v10355 = vadd.f32 %v10306, %v10354
        %v10356 = vpop.f32.mrf.mxu0
        %v10357 = vadd.f32 %v10308, %v10356
        %10358 = vmatmul.bf16.gmra.mxu0 %v7784
        %v10359 = vpop.f32.mrf.mxu0
        %v10360 = vadd.f32 %v10311, %v10359
        %v10361 = vpop.f32.mrf.mxu0
        %v10362 = vadd.f32 %v10313, %v10361
        %10363 = vmatmul.bf16.gmra.mxu0 %v7788
        %v10364 = vpop.f32.mrf.mxu0
        %v10365 = vadd.f32 %v10316, %v10364
        %v10366 = vpop.f32.mrf.mxu0
        %v10367 = vadd.f32 %v10318, %v10366
        %10368 = vmatmul.bf16.gmra.mxu0 %v7792
        %v10369 = vpop.f32.mrf.mxu0
        %v10370 = vadd.f32 %v10321, %v10369
        %v10371 = vpop.f32.mrf.mxu0
        %v10372 = vadd.f32 %v10323, %v10371
        %10373 = vmatmul.bf16.gmra.mxu0 %v7796
        %v10374 = vpop.f32.mrf.mxu0
        %v10375 = vadd.f32 %v10326, %v10374
        %v10376 = vpop.f32.mrf.mxu0
        %v10377 = vadd.f32 %v10328, %v10376
        %10378 = vmatmul.bf16.gmra.mxu0 %v7800
        %v10379 = vpop.f32.mrf.mxu0
        %v10380 = vadd.f32 %v10331, %v10379
        %v10381 = vpop.f32.mrf.mxu0
        %v10382 = vadd.f32 %v10333, %v10381
        %10383 = vmatmul.bf16.gmra.mxu0 %v7804
        %v10384 = vpop.f32.mrf.mxu0
        %v10385 = vadd.f32 %v10336, %v10384
        %v10386 = vpop.f32.mrf.mxu0
        %v10387 = vadd.f32 %v10338, %v10386
        %10388 = vmatmul.bf16.gmra.mxu0 %v7808
        %v10389 = vpop.f32.mrf.mxu0
        %v10390 = vadd.f32 %v10341, %v10389
        %v10391 = vpop.f32.mrf.mxu0
        %v10392 = vadd.f32 %v10343, %v10391
        %10393 = vdwg.mxu0
        %10394 = vmatpush.bf16.msra.mxu0 %v8825
        %10395 = vmatpush.bf16.msra.mxu0 %v8818
        %10396 = vmatpush.bf16.msra.mxu0 %v8811
        %10397 = vmatpush.bf16.msra.mxu0 %v8804
        %10398 = vmatpush.bf16.msra.mxu0 %v8797
        %10399 = vmatpush.bf16.msra.mxu0 %v8790
        %10400 = vmatpush.bf16.msra.mxu0 %v8783
        %10401 = vmatpush.bf16.msra.mxu0 %v8776
        %10402 = vmatmul.bf16.gmra.mxu0 %v7777
        %v10403 = vpop.f32.mrf.mxu0
        %v10404 = vadd.f32 0.0, %v10403
        %v10405 = vpop.f32.mrf.mxu0
        %v10406 = vadd.f32 0.0, %v10405
        %10407 = vmatmul.bf16.gmra.mxu0 %v7781
        %v10408 = vpop.f32.mrf.mxu0
        %v10409 = vadd.f32 0.0, %v10408
        %v10410 = vpop.f32.mrf.mxu0
        %v10411 = vadd.f32 0.0, %v10410
        %10412 = vmatmul.bf16.gmra.mxu0 %v7785
        %v10413 = vpop.f32.mrf.mxu0
        %v10414 = vadd.f32 0.0, %v10413
        %v10415 = vpop.f32.mrf.mxu0
        %v10416 = vadd.f32 0.0, %v10415
        %10417 = vmatmul.bf16.gmra.mxu0 %v7789
        %v10418 = vpop.f32.mrf.mxu0
        %v10419 = vadd.f32 0.0, %v10418
        %v10420 = vpop.f32.mrf.mxu0
        %v10421 = vadd.f32 0.0, %v10420
        %10422 = vmatmul.bf16.gmra.mxu0 %v7793
        %v10423 = vpop.f32.mrf.mxu0
        %v10424 = vadd.f32 0.0, %v10423
        %v10425 = vpop.f32.mrf.mxu0
        %v10426 = vadd.f32 0.0, %v10425
        %10427 = vmatmul.bf16.gmra.mxu0 %v7797
        %v10428 = vpop.f32.mrf.mxu0
        %v10429 = vadd.f32 0.0, %v10428
        %v10430 = vpop.f32.mrf.mxu0
        %v10431 = vadd.f32 0.0, %v10430
        %10432 = vmatmul.bf16.gmra.mxu0 %v7801
        %v10433 = vpop.f32.mrf.mxu0
        %v10434 = vadd.f32 0.0, %v10433
        %v10435 = vpop.f32.mrf.mxu0
        %v10436 = vadd.f32 0.0, %v10435
        %10437 = vmatmul.bf16.gmra.mxu0 %v7805
        %v10438 = vpop.f32.mrf.mxu0
        %v10439 = vadd.f32 0.0, %v10438
        %v10440 = vpop.f32.mrf.mxu0
        %v10441 = vadd.f32 0.0, %v10440
        %10442 = vdwg.mxu0
        %10443 = vmatpush.bf16.msra.mxu0 %v8881
        %10444 = vmatpush.bf16.msra.mxu0 %v8874
        %10445 = vmatpush.bf16.msra.mxu0 %v8867
        %10446 = vmatpush.bf16.msra.mxu0 %v8860
        %10447 = vmatpush.bf16.msra.mxu0 %v8853
        %10448 = vmatpush.bf16.msra.mxu0 %v8846
        %10449 = vmatpush.bf16.msra.mxu0 %v8839
        %10450 = vmatpush.bf16.msra.mxu0 %v8832
        %10451 = vmatmul.bf16.gmra.mxu0 %v7778
        %v10452 = vpop.f32.mrf.mxu0
        %v10453 = vadd.f32 %v10404, %v10452
        %v10454 = vpop.f32.mrf.mxu0
        %v10455 = vadd.f32 %v10406, %v10454
        %10456 = vmatmul.bf16.gmra.mxu0 %v7782
        %v10457 = vpop.f32.mrf.mxu0
        %v10458 = vadd.f32 %v10409, %v10457
        %v10459 = vpop.f32.mrf.mxu0
        %v10460 = vadd.f32 %v10411, %v10459
        %10461 = vmatmul.bf16.gmra.mxu0 %v7786
        %v10462 = vpop.f32.mrf.mxu0
        %v10463 = vadd.f32 %v10414, %v10462
        %v10464 = vpop.f32.mrf.mxu0
        %v10465 = vadd.f32 %v10416, %v10464
        %10466 = vmatmul.bf16.gmra.mxu0 %v7790
        %v10467 = vpop.f32.mrf.mxu0
        %v10468 = vadd.f32 %v10419, %v10467
        %v10469 = vpop.f32.mrf.mxu0
        %v10470 = vadd.f32 %v10421, %v10469
        %10471 = vmatmul.bf16.gmra.mxu0 %v7794
        %v10472 = vpop.f32.mrf.mxu0
        %v10473 = vadd.f32 %v10424, %v10472
        %v10474 = vpop.f32.mrf.mxu0
        %v10475 = vadd.f32 %v10426, %v10474
        %10476 = vmatmul.bf16.gmra.mxu0 %v7798
        %v10477 = vpop.f32.mrf.mxu0
        %v10478 = vadd.f32 %v10429, %v10477
        %v10479 = vpop.f32.mrf.mxu0
        %v10480 = vadd.f32 %v10431, %v10479
        %10481 = vmatmul.bf16.gmra.mxu0 %v7802
        %v10482 = vpop.f32.mrf.mxu0
        %v10483 = vadd.f32 %v10434, %v10482
        %v10484 = vpop.f32.mrf.mxu0
        %v10485 = vadd.f32 %v10436, %v10484
        %10486 = vmatmul.bf16.gmra.mxu0 %v7806
        %v10487 = vpop.f32.mrf.mxu0
        %v10488 = vadd.f32 %v10439, %v10487
        %v10489 = vpop.f32.mrf.mxu0
        %v10490 = vadd.f32 %v10441, %v10489
        %10491 = vdwg.mxu0
        %10492 = vmatpush.bf16.msra.mxu0 %v8937
        %10493 = vmatpush.bf16.msra.mxu0 %v8930
        %10494 = vmatpush.bf16.msra.mxu0 %v8923
        %10495 = vmatpush.bf16.msra.mxu0 %v8916
        %10496 = vmatpush.bf16.msra.mxu0 %v8909
        %10497 = vmatpush.bf16.msra.mxu0 %v8902
        %10498 = vmatpush.bf16.msra.mxu0 %v8895
        %10499 = vmatpush.bf16.msra.mxu0 %v8888
        %10500 = vmatmul.bf16.gmra.mxu0 %v7779
        %v10501 = vpop.f32.mrf.mxu0
        %v10502 = vadd.f32 %v10453, %v10501
        %v10503 = vpop.f32.mrf.mxu0
        %v10504 = vadd.f32 %v10455, %v10503
        %10505 = vmatmul.bf16.gmra.mxu0 %v7783
        %v10506 = vpop.f32.mrf.mxu0
        %v10507 = vadd.f32 %v10458, %v10506
        %v10508 = vpop.f32.mrf.mxu0
        %v10509 = vadd.f32 %v10460, %v10508
        %10510 = vmatmul.bf16.gmra.mxu0 %v7787
        %v10511 = vpop.f32.mrf.mxu0
        %v10512 = vadd.f32 %v10463, %v10511
        %v10513 = vpop.f32.mrf.mxu0
        %v10514 = vadd.f32 %v10465, %v10513
        %10515 = vmatmul.bf16.gmra.mxu0 %v7791
        %v10516 = vpop.f32.mrf.mxu0
        %v10517 = vadd.f32 %v10468, %v10516
        %v10518 = vpop.f32.mrf.mxu0
        %v10519 = vadd.f32 %v10470, %v10518
        %10520 = vmatmul.bf16.gmra.mxu0 %v7795
        %v10521 = vpop.f32.mrf.mxu0
        %v10522 = vadd.f32 %v10473, %v10521
        %v10523 = vpop.f32.mrf.mxu0
        %v10524 = vadd.f32 %v10475, %v10523
        %10525 = vmatmul.bf16.gmra.mxu0 %v7799
        %v10526 = vpop.f32.mrf.mxu0
        %v10527 = vadd.f32 %v10478, %v10526
        %v10528 = vpop.f32.mrf.mxu0
        %v10529 = vadd.f32 %v10480, %v10528
        %10530 = vmatmul.bf16.gmra.mxu0 %v7803
        %v10531 = vpop.f32.mrf.mxu0
        %v10532 = vadd.f32 %v10483, %v10531
        %v10533 = vpop.f32.mrf.mxu0
        %v10534 = vadd.f32 %v10485, %v10533
        %10535 = vmatmul.bf16.gmra.mxu0 %v7807
        %v10536 = vpop.f32.mrf.mxu0
        %v10537 = vadd.f32 %v10488, %v10536
        %v10538 = vpop.f32.mrf.mxu0
        %v10539 = vadd.f32 %v10490, %v10538
        %10540 = vdwg.mxu0
        %10541 = vmatpush.bf16.msra.mxu0 %v8993
        %10542 = vmatpush.bf16.msra.mxu0 %v8986
        %10543 = vmatpush.bf16.msra.mxu0 %v8979
        %10544 = vmatpush.bf16.msra.mxu0 %v8972
        %10545 = vmatpush.bf16.msra.mxu0 %v8965
        %10546 = vmatpush.bf16.msra.mxu0 %v8958
        %10547 = vmatpush.bf16.msra.mxu0 %v8951
        %10548 = vmatpush.bf16.msra.mxu0 %v8944
        %10549 = vmatmul.bf16.gmra.mxu0 %v7780
        %v10550 = vpop.f32.mrf.mxu0
        %v10551 = vadd.f32 %v10502, %v10550
        %v10552 = vpop.f32.mrf.mxu0
        %v10553 = vadd.f32 %v10504, %v10552
        %10554 = vmatmul.bf16.gmra.mxu0 %v7784
        %v10555 = vpop.f32.mrf.mxu0
        %v10556 = vadd.f32 %v10507, %v10555
        %v10557 = vpop.f32.mrf.mxu0
        %v10558 = vadd.f32 %v10509, %v10557
        %10559 = vmatmul.bf16.gmra.mxu0 %v7788
        %v10560 = vpop.f32.mrf.mxu0
        %v10561 = vadd.f32 %v10512, %v10560
        %v10562 = vpop.f32.mrf.mxu0
        %v10563 = vadd.f32 %v10514, %v10562
        %10564 = vmatmul.bf16.gmra.mxu0 %v7792
        %v10565 = vpop.f32.mrf.mxu0
        %v10566 = vadd.f32 %v10517, %v10565
        %v10567 = vpop.f32.mrf.mxu0
        %v10568 = vadd.f32 %v10519, %v10567
        %10569 = vmatmul.bf16.gmra.mxu0 %v7796
        %v10570 = vpop.f32.mrf.mxu0
        %v10571 = vadd.f32 %v10522, %v10570
        %v10572 = vpop.f32.mrf.mxu0
        %v10573 = vadd.f32 %v10524, %v10572
        %10574 = vmatmul.bf16.gmra.mxu0 %v7800
        %v10575 = vpop.f32.mrf.mxu0
        %v10576 = vadd.f32 %v10527, %v10575
        %v10577 = vpop.f32.mrf.mxu0
        %v10578 = vadd.f32 %v10529, %v10577
        %10579 = vmatmul.bf16.gmra.mxu0 %v7804
        %v10580 = vpop.f32.mrf.mxu0
        %v10581 = vadd.f32 %v10532, %v10580
        %v10582 = vpop.f32.mrf.mxu0
        %v10583 = vadd.f32 %v10534, %v10582
        %10584 = vmatmul.bf16.gmra.mxu0 %v7808
        %v10585 = vpop.f32.mrf.mxu0
        %v10586 = vadd.f32 %v10537, %v10585
        %v10587 = vpop.f32.mrf.mxu0
        %v10588 = vadd.f32 %v10539, %v10587
        %10589 = vdwg.mxu0
        %v10590 = vpack.c.bf16 %v9571, %v9375
        %v10591 = vpack.c.bf16 %v9963, %v9767
        %v10592 = vpack.c.bf16 %v10355, %v10159
        %v10593 = vpack.c.bf16 %v10551, %v10551
        %v10594 = vpack.c.bf16 %v9573, %v9377
        %v10595 = vpack.c.bf16 %v9965, %v9769
        %v10596 = vpack.c.bf16 %v10357, %v10161
        %v10597 = vpack.c.bf16 %v10553, %v10553
        %v10598 = vpack.c.bf16 %v9576, %v9380
        %v10599 = vpack.c.bf16 %v9968, %v9772
        %v10600 = vpack.c.bf16 %v10360, %v10164
        %v10601 = vpack.c.bf16 %v10556, %v10556
        %v10602 = vpack.c.bf16 %v9578, %v9382
        %v10603 = vpack.c.bf16 %v9970, %v9774
        %v10604 = vpack.c.bf16 %v10362, %v10166
        %v10605 = vpack.c.bf16 %v10558, %v10558
        %v10606 = vpack.c.bf16 %v9581, %v9385
        %v10607 = vpack.c.bf16 %v9973, %v9777
        %v10608 = vpack.c.bf16 %v10365, %v10169
        %v10609 = vpack.c.bf16 %v10561, %v10561
        %v10610 = vpack.c.bf16 %v9583, %v9387
        %v10611 = vpack.c.bf16 %v9975, %v9779
        %v10612 = vpack.c.bf16 %v10367, %v10171
        %v10613 = vpack.c.bf16 %v10563, %v10563
        %v10614 = vpack.c.bf16 %v9586, %v9390
        %v10615 = vpack.c.bf16 %v9978, %v9782
        %v10616 = vpack.c.bf16 %v10370, %v10174
        %v10617 = vpack.c.bf16 %v10566, %v10566
        %v10618 = vpack.c.bf16 %v9588, %v9392
        %v10619 = vpack.c.bf16 %v9980, %v9784
        %v10620 = vpack.c.bf16 %v10372, %v10176
        %v10621 = vpack.c.bf16 %v10568, %v10568
        %v10622 = vpack.c.bf16 %v9591, %v9395
        %v10623 = vpack.c.bf16 %v9983, %v9787
        %v10624 = vpack.c.bf16 %v10375, %v10179
        %v10625 = vpack.c.bf16 %v10571, %v10571
        %v10626 = vpack.c.bf16 %v9593, %v9397
        %v10627 = vpack.c.bf16 %v9985, %v9789
        %v10628 = vpack.c.bf16 %v10377, %v10181
        %v10629 = vpack.c.bf16 %v10573, %v10573
        %v10630 = vpack.c.bf16 %v9596, %v9400
        %v10631 = vpack.c.bf16 %v9988, %v9792
        %v10632 = vpack.c.bf16 %v10380, %v10184
        %v10633 = vpack.c.bf16 %v10576, %v10576
        %v10634 = vpack.c.bf16 %v9598, %v9402
        %v10635 = vpack.c.bf16 %v9990, %v9794
        %v10636 = vpack.c.bf16 %v10382, %v10186
        %v10637 = vpack.c.bf16 %v10578, %v10578
        %v10638 = vpack.c.bf16 %v9601, %v9405
        %v10639 = vpack.c.bf16 %v9993, %v9797
        %v10640 = vpack.c.bf16 %v10385, %v10189
        %v10641 = vpack.c.bf16 %v10581, %v10581
        %v10642 = vpack.c.bf16 %v9603, %v9407
        %v10643 = vpack.c.bf16 %v9995, %v9799
        %v10644 = vpack.c.bf16 %v10387, %v10191
        %v10645 = vpack.c.bf16 %v10583, %v10583
        %v10646 = vpack.c.bf16 %v9606, %v9410
        %v10647 = vpack.c.bf16 %v9998, %v9802
        %v10648 = vpack.c.bf16 %v10390, %v10194
        %v10649 = vpack.c.bf16 %v10586, %v10586
        %v10650 = vpack.c.bf16 %v9608, %v9412
        %v10651 = vpack.c.bf16 %v10000, %v9804
        %v10652 = vpack.c.bf16 %v10392, %v10196
        %v10653 = vpack.c.bf16 %v10588, %v10588
        %10655 = vst [vmem:[#allocation1] ss:$9 sm:$0xff] %v8065
        %v10656 = vld [vmem:[#allocation1] sm:$0xff]
        %v10657 = vld [vmem:[#allocation1 + $0x9] sm:$0xff]
        %v10658 = vld [vmem:[#allocation1 + $0x12] sm:$0xff]
        %v10659 = vld [vmem:[#allocation1 + $0x1b] sm:$0xff]
        %v10660 = vld [vmem:[#allocation1 + $0x24] sm:$0xff]
        %v10661 = vld [vmem:[#allocation1 + $0x2d] sm:$0xff]
        %v10662 = vld [vmem:[#allocation1 + $0x36] sm:$0xff]
        %v10663 = vpack.i.b16 %v10656, %v10656
        %v10665 = vperm.slane %v10663, 0
        %v10666 = vpack.i.b16 %v10657, %v10657
        %v10668 = vperm.slane %v10666, 0
        %v10669 = vpack.i.b16 %v10658, %v10658
        %v10671 = vperm.slane %v10669, 0
        %v10672 = vpack.i.b16 %v10659, %v10659
        %v10674 = vperm.slane %v10672, 0
        %v10675 = vpack.i.b16 %v10660, %v10660
        %v10677 = vperm.slane %v10675, 0
        %v10678 = vpack.i.b16 %v10661, %v10661
        %v10680 = vperm.slane %v10678, 0
        %v10681 = vpack.i.b16 %v10662, %v10662
        %v10683 = vperm.slane %v10681, 0
        %v10684 = vunpack.c.l.bf16 %v10590
        %v10685 = vunpack.c.h.bf16 %v10590
        %v10686 = vunpack.c.l.bf16 %v10591
        %v10687 = vunpack.c.h.bf16 %v10591
        %v10688 = vunpack.c.l.bf16 %v10592
        %v10689 = vunpack.c.h.bf16 %v10592
        %v10690 = vunpack.c.l.bf16 %v10593
        %v10691 = vunpack.c.l.bf16 %v10594
        %v10692 = vunpack.c.h.bf16 %v10594
        %v10693 = vunpack.c.l.bf16 %v10595
        %v10694 = vunpack.c.h.bf16 %v10595
        %v10695 = vunpack.c.l.bf16 %v10596
        %v10696 = vunpack.c.h.bf16 %v10596
        %v10697 = vunpack.c.l.bf16 %v10597
        %v10698 = vunpack.c.l.bf16 %v10598
        %v10699 = vunpack.c.h.bf16 %v10598
        %v10700 = vunpack.c.l.bf16 %v10599
        %v10701 = vunpack.c.h.bf16 %v10599
        %v10702 = vunpack.c.l.bf16 %v10600
        %v10703 = vunpack.c.h.bf16 %v10600
        %v10704 = vunpack.c.l.bf16 %v10601
        %v10705 = vunpack.c.l.bf16 %v10602
        %v10706 = vunpack.c.h.bf16 %v10602
        %v10707 = vunpack.c.l.bf16 %v10603
        %v10708 = vunpack.c.h.bf16 %v10603
        %v10709 = vunpack.c.l.bf16 %v10604
        %v10710 = vunpack.c.h.bf16 %v10604
        %v10711 = vunpack.c.l.bf16 %v10605
        %v10712 = vunpack.c.l.bf16 %v10606
        %v10713 = vunpack.c.h.bf16 %v10606
        %v10714 = vunpack.c.l.bf16 %v10607
        %v10715 = vunpack.c.h.bf16 %v10607
        %v10716 = vunpack.c.l.bf16 %v10608
        %v10717 = vunpack.c.h.bf16 %v10608
        %v10718 = vunpack.c.l.bf16 %v10609
        %v10719 = vunpack.c.l.bf16 %v10610
        %v10720 = vunpack.c.h.bf16 %v10610
        %v10721 = vunpack.c.l.bf16 %v10611
        %v10722 = vunpack.c.h.bf16 %v10611
        %v10723 = vunpack.c.l.bf16 %v10612
        %v10724 = vunpack.c.h.bf16 %v10612
        %v10725 = vunpack.c.l.bf16 %v10613
        %v10726 = vunpack.c.l.bf16 %v10614
        %v10727 = vunpack.c.h.bf16 %v10614
        %v10728 = vunpack.c.l.bf16 %v10615
        %v10729 = vunpack.c.h.bf16 %v10615
        %v10730 = vunpack.c.l.bf16 %v10616
        %v10731 = vunpack.c.h.bf16 %v10616
        %v10732 = vunpack.c.l.bf16 %v10617
        %v10733 = vunpack.c.l.bf16 %v10618
        %v10734 = vunpack.c.h.bf16 %v10618
        %v10735 = vunpack.c.l.bf16 %v10619
        %v10736 = vunpack.c.h.bf16 %v10619
        %v10737 = vunpack.c.l.bf16 %v10620
        %v10738 = vunpack.c.h.bf16 %v10620
        %v10739 = vunpack.c.l.bf16 %v10621
        %v10740 = vunpack.c.l.bf16 %v10622
        %v10741 = vunpack.c.h.bf16 %v10622
        %v10742 = vunpack.c.l.bf16 %v10623
        %v10743 = vunpack.c.h.bf16 %v10623
        %v10744 = vunpack.c.l.bf16 %v10624
        %v10745 = vunpack.c.h.bf16 %v10624
        %v10746 = vunpack.c.l.bf16 %v10625
        %v10747 = vunpack.c.l.bf16 %v10626
        %v10748 = vunpack.c.h.bf16 %v10626
        %v10749 = vunpack.c.l.bf16 %v10627
        %v10750 = vunpack.c.h.bf16 %v10627
        %v10751 = vunpack.c.l.bf16 %v10628
        %v10752 = vunpack.c.h.bf16 %v10628
        %v10753 = vunpack.c.l.bf16 %v10629
        %v10754 = vunpack.c.l.bf16 %v10630
        %v10755 = vunpack.c.h.bf16 %v10630
        %v10756 = vunpack.c.l.bf16 %v10631
        %v10757 = vunpack.c.h.bf16 %v10631
        %v10758 = vunpack.c.l.bf16 %v10632
        %v10759 = vunpack.c.h.bf16 %v10632
        %v10760 = vunpack.c.l.bf16 %v10633
        %v10761 = vunpack.c.l.bf16 %v10634
        %v10762 = vunpack.c.h.bf16 %v10634
        %v10763 = vunpack.c.l.bf16 %v10635
        %v10764 = vunpack.c.h.bf16 %v10635
        %v10765 = vunpack.c.l.bf16 %v10636
        %v10766 = vunpack.c.h.bf16 %v10636
        %v10767 = vunpack.c.l.bf16 %v10637
        %v10768 = vunpack.c.l.bf16 %v10638
        %v10769 = vunpack.c.h.bf16 %v10638
        %v10770 = vunpack.c.l.bf16 %v10639
        %v10771 = vunpack.c.h.bf16 %v10639
        %v10772 = vunpack.c.l.bf16 %v10640
        %v10773 = vunpack.c.h.bf16 %v10640
        %v10774 = vunpack.c.l.bf16 %v10641
        %v10775 = vunpack.c.l.bf16 %v10642
        %v10776 = vunpack.c.h.bf16 %v10642
        %v10777 = vunpack.c.l.bf16 %v10643
        %v10778 = vunpack.c.h.bf16 %v10643
        %v10779 = vunpack.c.l.bf16 %v10644
        %v10780 = vunpack.c.h.bf16 %v10644
        %v10781 = vunpack.c.l.bf16 %v10645
        %v10782 = vunpack.c.l.bf16 %v10646
        %v10783 = vunpack.c.h.bf16 %v10646
        %v10784 = vunpack.c.l.bf16 %v10647
        %v10785 = vunpack.c.h.bf16 %v10647
        %v10786 = vunpack.c.l.bf16 %v10648
        %v10787 = vunpack.c.h.bf16 %v10648
        %v10788 = vunpack.c.l.bf16 %v10649
        %v10789 = vunpack.c.l.bf16 %v10650
        %v10790 = vunpack.c.h.bf16 %v10650
        %v10791 = vunpack.c.l.bf16 %v10651
        %v10792 = vunpack.c.h.bf16 %v10651
        %v10793 = vunpack.c.l.bf16 %v10652
        %v10794 = vunpack.c.h.bf16 %v10652
        %v10795 = vunpack.c.l.bf16 %v10653
        %v10796 = vunpack.c.l.bf16 %v10665
        %v10797 = vunpack.c.l.bf16 %v10668
        %v10798 = vunpack.c.l.bf16 %v10671
        %v10799 = vunpack.c.l.bf16 %v10674
        %v10800 = vunpack.c.l.bf16 %v10677
        %v10801 = vunpack.c.l.bf16 %v10680
        %v10802 = vunpack.c.l.bf16 %v10683
        %v10803 = vadd.f32 %v10684, %v10796
        %v10804 = vadd.f32 %v10685, %v10797
        %v10805 = vadd.f32 %v10686, %v10798
        %v10806 = vadd.f32 %v10687, %v10799
        %v10807 = vadd.f32 %v10688, %v10800
        %v10808 = vadd.f32 %v10689, %v10801
        %v10809 = vadd.f32 %v10690, %v10802
        %v10810 = vadd.f32 %v10691, %v10796
        %v10811 = vadd.f32 %v10692, %v10797
        %v10812 = vadd.f32 %v10693, %v10798
        %v10813 = vadd.f32 %v10694, %v10799
        %v10814 = vadd.f32 %v10695, %v10800
        %v10815 = vadd.f32 %v10696, %v10801
        %v10816 = vadd.f32 %v10697, %v10802
        %v10817 = vadd.f32 %v10698, %v10796
        %v10818 = vadd.f32 %v10699, %v10797
        %v10819 = vadd.f32 %v10700, %v10798
        %v10820 = vadd.f32 %v10701, %v10799
        %v10821 = vadd.f32 %v10702, %v10800
        %v10822 = vadd.f32 %v10703, %v10801
        %v10823 = vadd.f32 %v10704, %v10802
        %v10824 = vadd.f32 %v10705, %v10796
        %v10825 = vadd.f32 %v10706, %v10797
        %v10826 = vadd.f32 %v10707, %v10798
        %v10827 = vadd.f32 %v10708, %v10799
        %v10828 = vadd.f32 %v10709, %v10800
        %v10829 = vadd.f32 %v10710, %v10801
        %v10830 = vadd.f32 %v10711, %v10802
        %v10831 = vadd.f32 %v10712, %v10796
        %v10832 = vadd.f32 %v10713, %v10797
        %v10833 = vadd.f32 %v10714, %v10798
        %v10834 = vadd.f32 %v10715, %v10799
        %v10835 = vadd.f32 %v10716, %v10800
        %v10836 = vadd.f32 %v10717, %v10801
        %v10837 = vadd.f32 %v10718, %v10802
        %v10838 = vadd.f32 %v10719, %v10796
        %v10839 = vadd.f32 %v10720, %v10797
        %v10840 = vadd.f32 %v10721, %v10798
        %v10841 = vadd.f32 %v10722, %v10799
        %v10842 = vadd.f32 %v10723, %v10800
        %v10843 = vadd.f32 %v10724, %v10801
        %v10844 = vadd.f32 %v10725, %v10802
        %v10845 = vadd.f32 %v10726, %v10796
        %v10846 = vadd.f32 %v10727, %v10797
        %v10847 = vadd.f32 %v10728, %v10798
        %v10848 = vadd.f32 %v10729, %v10799
        %v10849 = vadd.f32 %v10730, %v10800
        %v10850 = vadd.f32 %v10731, %v10801
        %v10851 = vadd.f32 %v10732, %v10802
        %v10852 = vadd.f32 %v10733, %v10796
        %v10853 = vadd.f32 %v10734, %v10797
        %v10854 = vadd.f32 %v10735, %v10798
        %v10855 = vadd.f32 %v10736, %v10799
        %v10856 = vadd.f32 %v10737, %v10800
        %v10857 = vadd.f32 %v10738, %v10801
        %v10858 = vadd.f32 %v10739, %v10802
        %v10859 = vadd.f32 %v10740, %v10796
        %v10860 = vadd.f32 %v10741, %v10797
        %v10861 = vadd.f32 %v10742, %v10798
        %v10862 = vadd.f32 %v10743, %v10799
        %v10863 = vadd.f32 %v10744, %v10800
        %v10864 = vadd.f32 %v10745, %v10801
        %v10865 = vadd.f32 %v10746, %v10802
        %v10866 = vadd.f32 %v10747, %v10796
        %v10867 = vadd.f32 %v10748, %v10797
        %v10868 = vadd.f32 %v10749, %v10798
        %v10869 = vadd.f32 %v10750, %v10799
        %v10870 = vadd.f32 %v10751, %v10800
        %v10871 = vadd.f32 %v10752, %v10801
        %v10872 = vadd.f32 %v10753, %v10802
        %v10873 = vadd.f32 %v10754, %v10796
        %v10874 = vadd.f32 %v10755, %v10797
        %v10875 = vadd.f32 %v10756, %v10798
        %v10876 = vadd.f32 %v10757, %v10799
        %v10877 = vadd.f32 %v10758, %v10800
        %v10878 = vadd.f32 %v10759, %v10801
        %v10879 = vadd.f32 %v10760, %v10802
        %v10880 = vadd.f32 %v10761, %v10796
        %v10881 = vadd.f32 %v10762, %v10797
        %v10882 = vadd.f32 %v10763, %v10798
        %v10883 = vadd.f32 %v10764, %v10799
        %v10884 = vadd.f32 %v10765, %v10800
        %v10885 = vadd.f32 %v10766, %v10801
        %v10886 = vadd.f32 %v10767, %v10802
        %v10887 = vadd.f32 %v10768, %v10796
        %v10888 = vadd.f32 %v10769, %v10797
        %v10889 = vadd.f32 %v10770, %v10798
        %v10890 = vadd.f32 %v10771, %v10799
        %v10891 = vadd.f32 %v10772, %v10800
        %v10892 = vadd.f32 %v10773, %v10801
        %v10893 = vadd.f32 %v10774, %v10802
        %v10894 = vadd.f32 %v10775, %v10796
        %v10895 = vadd.f32 %v10776, %v10797
        %v10896 = vadd.f32 %v10777, %v10798
        %v10897 = vadd.f32 %v10778, %v10799
        %v10898 = vadd.f32 %v10779, %v10800
        %v10899 = vadd.f32 %v10780, %v10801
        %v10900 = vadd.f32 %v10781, %v10802
        %v10901 = vadd.f32 %v10782, %v10796
        %v10902 = vadd.f32 %v10783, %v10797
        %v10903 = vadd.f32 %v10784, %v10798
        %v10904 = vadd.f32 %v10785, %v10799
        %v10905 = vadd.f32 %v10786, %v10800
        %v10906 = vadd.f32 %v10787, %v10801
        %v10907 = vadd.f32 %v10788, %v10802
        %v10908 = vadd.f32 %v10789, %v10796
        %v10909 = vadd.f32 %v10790, %v10797
        %v10910 = vadd.f32 %v10791, %v10798
        %v10911 = vadd.f32 %v10792, %v10799
        %v10912 = vadd.f32 %v10793, %v10800
        %v10913 = vadd.f32 %v10794, %v10801
        %v10914 = vadd.f32 %v10795, %v10802
        %v10915 = vpack.c.bf16 %v10804, %v10803
        %v10916 = vpack.c.bf16 %v10806, %v10805
        %v10917 = vpack.c.bf16 %v10808, %v10807
        %v10918 = vpack.c.bf16 %v10809, %v10809
        %v10919 = vpack.c.bf16 %v10811, %v10810
        %v10920 = vpack.c.bf16 %v10813, %v10812
        %v10921 = vpack.c.bf16 %v10815, %v10814
        %v10922 = vpack.c.bf16 %v10816, %v10816
        %v10923 = vpack.c.bf16 %v10818, %v10817
        %v10924 = vpack.c.bf16 %v10820, %v10819
        %v10925 = vpack.c.bf16 %v10822, %v10821
        %v10926 = vpack.c.bf16 %v10823, %v10823
        %v10927 = vpack.c.bf16 %v10825, %v10824
        %v10928 = vpack.c.bf16 %v10827, %v10826
        %v10929 = vpack.c.bf16 %v10829, %v10828
        %v10930 = vpack.c.bf16 %v10830, %v10830
        %v10931 = vpack.c.bf16 %v10832, %v10831
        %v10932 = vpack.c.bf16 %v10834, %v10833
        %v10933 = vpack.c.bf16 %v10836, %v10835
        %v10934 = vpack.c.bf16 %v10837, %v10837
        %v10935 = vpack.c.bf16 %v10839, %v10838
        %v10936 = vpack.c.bf16 %v10841, %v10840
        %v10937 = vpack.c.bf16 %v10843, %v10842
        %v10938 = vpack.c.bf16 %v10844, %v10844
        %v10939 = vpack.c.bf16 %v10846, %v10845
        %v10940 = vpack.c.bf16 %v10848, %v10847
        %v10941 = vpack.c.bf16 %v10850, %v10849
        %v10942 = vpack.c.bf16 %v10851, %v10851
        %v10943 = vpack.c.bf16 %v10853, %v10852
        %v10944 = vpack.c.bf16 %v10855, %v10854
        %v10945 = vpack.c.bf16 %v10857, %v10856
        %v10946 = vpack.c.bf16 %v10858, %v10858
        %v10947 = vpack.c.bf16 %v10860, %v10859
        %v10948 = vpack.c.bf16 %v10862, %v10861
        %v10949 = vpack.c.bf16 %v10864, %v10863
        %v10950 = vpack.c.bf16 %v10865, %v10865
        %v10951 = vpack.c.bf16 %v10867, %v10866
        %v10952 = vpack.c.bf16 %v10869, %v10868
        %v10953 = vpack.c.bf16 %v10871, %v10870
        %v10954 = vpack.c.bf16 %v10872, %v10872
        %v10955 = vpack.c.bf16 %v10874, %v10873
        %v10956 = vpack.c.bf16 %v10876, %v10875
        %v10957 = vpack.c.bf16 %v10878, %v10877
        %v10958 = vpack.c.bf16 %v10879, %v10879
        %v10959 = vpack.c.bf16 %v10881, %v10880
        %v10960 = vpack.c.bf16 %v10883, %v10882
        %v10961 = vpack.c.bf16 %v10885, %v10884
        %v10962 = vpack.c.bf16 %v10886, %v10886
        %v10963 = vpack.c.bf16 %v10888, %v10887
        %v10964 = vpack.c.bf16 %v10890, %v10889
        %v10965 = vpack.c.bf16 %v10892, %v10891
        %v10966 = vpack.c.bf16 %v10893, %v10893
        %v10967 = vpack.c.bf16 %v10895, %v10894
        %v10968 = vpack.c.bf16 %v10897, %v10896
        %v10969 = vpack.c.bf16 %v10899, %v10898
        %v10970 = vpack.c.bf16 %v10900, %v10900
        %v10971 = vpack.c.bf16 %v10902, %v10901
        %v10972 = vpack.c.bf16 %v10904, %v10903
        %v10973 = vpack.c.bf16 %v10906, %v10905
        %v10974 = vpack.c.bf16 %v10907, %v10907
        %v10975 = vpack.c.bf16 %v10909, %v10908
        %v10976 = vpack.c.bf16 %v10911, %v10910
        %v10977 = vpack.c.bf16 %v10913, %v10912
        %v10978 = vpack.c.bf16 %v10914, %v10914
        %10979 = vst [vmem:[%s859] sm:$0xff] %v10915
        %10980 = vst [vmem:[%s859 + $0x8] sm:$0xff] %v10916
        %10981 = vst [vmem:[%s859 + $0x10] sm:$0xff] %v10917
        %10982 = vst [vmem:[%s859 + $0x18] sm:$0xf] %v10918
        %10983 = vst [vmem:[%s859 + $0x1c] sm:$0xff] %v10919
        %10984 = vst [vmem:[%s859 + $0x24] sm:$0xff] %v10920
        %10985 = vst [vmem:[%s859 + $0x2c] sm:$0xff] %v10921
        %10986 = vst [vmem:[%s859 + $0x34] sm:$0xf] %v10922
        %10987 = vst [vmem:[%s859 + $0x38] sm:$0xff] %v10923
        %10988 = vst [vmem:[%s859 + $0x40] sm:$0xff] %v10924
        %10989 = vst [vmem:[%s859 + $0x48] sm:$0xff] %v10925
        %10990 = vst [vmem:[%s859 + $0x50] sm:$0xf] %v10926
        %10991 = vst [vmem:[%s859 + $0x54] sm:$0xff] %v10927
        %10992 = vst [vmem:[%s859 + $0x5c] sm:$0xff] %v10928
        %10993 = vst [vmem:[%s859 + $0x64] sm:$0xff] %v10929
        %10994 = vst [vmem:[%s859 + $0x6c] sm:$0xf] %v10930
        %10995 = vst [vmem:[%s859 + $0x70] sm:$0xff] %v10931
        %10996 = vst [vmem:[%s859 + $0x78] sm:$0xff] %v10932
        %10997 = vst [vmem:[%s859 + $0x80] sm:$0xff] %v10933
        %10998 = vst [vmem:[%s859 + $0x88] sm:$0xf] %v10934
        %10999 = vst [vmem:[%s859 + $0x8c] sm:$0xff] %v10935
        %11000 = vst [vmem:[%s859 + $0x94] sm:$0xff] %v10936
        %11001 = vst [vmem:[%s859 + $0x9c] sm:$0xff] %v10937
        %11002 = vst [vmem:[%s859 + $0xa4] sm:$0xf] %v10938
        %11003 = vst [vmem:[%s859 + $0xa8] sm:$0xff] %v10939
        %11004 = vst [vmem:[%s859 + $0xb0] sm:$0xff] %v10940
        %11005 = vst [vmem:[%s859 + $0xb8] sm:$0xff] %v10941
        %11006 = vst [vmem:[%s859 + $0xc0] sm:$0xf] %v10942
        %11007 = vst [vmem:[%s859 + $0xc4] sm:$0xff] %v10943
        %11008 = vst [vmem:[%s859 + $0xcc] sm:$0xff] %v10944
        %11009 = vst [vmem:[%s859 + $0xd4] sm:$0xff] %v10945
        %11010 = vst [vmem:[%s859 + $0xdc] sm:$0xf] %v10946
        %11011 = vst [vmem:[%s859 + $0xe0] sm:$0xff] %v10947
        %11012 = vst [vmem:[%s859 + $0xe8] sm:$0xff] %v10948
        %11013 = vst [vmem:[%s859 + $0xf0] sm:$0xff] %v10949
        %11014 = vst [vmem:[%s859 + $0xf8] sm:$0xf] %v10950
        %11015 = vst [vmem:[%s859 + $0xfc] sm:$0xff] %v10951
        %11016 = vst [vmem:[%s859 + $0x104] sm:$0xff] %v10952
        %11017 = vst [vmem:[%s859 + $0x10c] sm:$0xff] %v10953
        %11018 = vst [vmem:[%s859 + $0x114] sm:$0xf] %v10954
        %11019 = vst [vmem:[%s859 + $0x118] sm:$0xff] %v10955
        %11020 = vst [vmem:[%s859 + $0x120] sm:$0xff] %v10956
        %11021 = vst [vmem:[%s859 + $0x128] sm:$0xff] %v10957
        %11022 = vst [vmem:[%s859 + $0x130] sm:$0xf] %v10958
        %11023 = vst [vmem:[%s859 + $0x134] sm:$0xff] %v10959
        %11024 = vst [vmem:[%s859 + $0x13c] sm:$0xff] %v10960
        %11025 = vst [vmem:[%s859 + $0x144] sm:$0xff] %v10961
        %11026 = vst [vmem:[%s859 + $0x14c] sm:$0xf] %v10962
        %11027 = vst [vmem:[%s859 + $0x150] sm:$0xff] %v10963
        %11028 = vst [vmem:[%s859 + $0x158] sm:$0xff] %v10964
        %11029 = vst [vmem:[%s859 + $0x160] sm:$0xff] %v10965
        %11030 = vst [vmem:[%s859 + $0x168] sm:$0xf] %v10966
        %11031 = vst [vmem:[%s859 + $0x16c] sm:$0xff] %v10967
        %11032 = vst [vmem:[%s859 + $0x174] sm:$0xff] %v10968
        %11033 = vst [vmem:[%s859 + $0x17c] sm:$0xff] %v10969
        %11034 = vst [vmem:[%s859 + $0x184] sm:$0xf] %v10970
        %11035 = vst [vmem:[%s859 + $0x188] sm:$0xff] %v10971
        %11036 = vst [vmem:[%s859 + $0x190] sm:$0xff] %v10972
        %11037 = vst [vmem:[%s859 + $0x198] sm:$0xff] %v10973
        %11038 = vst [vmem:[%s859 + $0x1a0] sm:$0xf] %v10974
        %11039 = vst [vmem:[%s859 + $0x1a4] sm:$0xff] %v10975
        %11040 = vst [vmem:[%s859 + $0x1ac] sm:$0xff] %v10976
        %11041 = vst [vmem:[%s859 + $0x1b4] sm:$0xff] %v10977
        %11042 = vst [vmem:[%s859 + $0x1bc] sm:$0xf] %v10978
        %s11043 = sand.u32 %s456, 1
        %s11044 = scalar_lea.sflag [#allocation4], %s11043
        %s11045 = sand.u32 %s456, 1
        %s11046 = smul.addr %s11045, 448
        %s11047 = scalar_lea.vmem [#allocation28], %s11046
        // Predicated region
        $region161: #{big_autoencoder_padded.1} parent=95 // pred_check
          %p11048 = pneg %p466
        $region162: #{big_autoencoder_padded.1} parent=95 // pred_check_branch
          %11050 = sbr.rel (%p11048) target = $region164
        $region163: #{big_autoencoder_padded.1} parent=95 // pred_region
          %s11051 = smul.u32 16, %s44
          %11053 = vsyncadd %s11044, 0
          %s11054 = smul.addr %s11051, 7
          %s11055 = smul.addr %s11054, 4
          %s11056 = scalar_lea.hbm %s19, %s11055
          %s11057 = sshll.u32 %s11047, 4
          %s11058 = int_to_ptr.vmem [resolvable:$true] %s11057
          %s11059 = sshll.u32 %s11056, 4
          %s11060 = int_to_ptr.hbm [resolvable:$true] %s11059
          %11065 = dma.vmem_to_hbm [thread:$0]  %s11058, 7168, %s11060, %s11044, 448, 448, 28
        $region164: #{big_autoencoder_padded.1} parent=95 // pred_fallthru
          _
      $region96: #{big_autoencoder_padded.1} parent=5 // pred_fallthru
        _
      %p11066 = scmp.le.s32.totalorder 2, %s39
      // Predicated region
      $region165: #{big_autoencoder_padded.1} parent=5 // pred_check
        %p11067 = pneg %p11066
      $region166: #{big_autoencoder_padded.1} parent=5 // pred_check_branch
        %11069 = sbr.rel (%p11067) target = $region168
      $region167: #{big_autoencoder_padded.1} parent=5 // pred_region
        %s11070 = ssub.s32 %s39, 2
        // Predicated region
        $region169: #{big_autoencoder_padded.1} parent=167 // pred_check
          %p11071 = pneg %p472
        $region170: #{big_autoencoder_padded.1} parent=167 // pred_check_branch
          %11073 = sbr.rel (%p11071) target = $region172
        $region171: #{big_autoencoder_padded.1} parent=167 // pred_region
          %s11074 = sand.u32 %s457, 1
          %s11075 = scalar_lea.sflag [#allocation4], %s11074
          %s11076 = sand.u32 %s457, 1
          %s11077 = smul.addr %s11076, 448
          %s11078 = scalar_lea.vmem [#allocation28], %s11077
          %11080 = dma.done %s11075, 7168
        $region172: #{big_autoencoder_padded.1} parent=167 // pred_fallthru
          _
      $region168: #{big_autoencoder_padded.1} parent=5 // pred_fallthru
        _
    $region6: #{big_autoencoder_padded.1} parent=1 // loop_footer
      %s43 = sadd.s32 1, %s39
    $region7: #{big_autoencoder_padded.1} parent=1 // loop_footer_branch
      %38 = sbr.rel target = $region3
    $region8: #{big_autoencoder_padded.1} parent=1 // loop_exit
      _
    %11081 = vsyncpa [#allocation3], 1
    %s11082 = scalar_lea.sflag [#allocation3], 1
    %11083 = vsyncpa %s11082, 1
    %11084 = vsyncpa [#allocation6], 1
    %11085 = vsyncpa [#allocation9], 1
    %11086 = vsyncpa [#allocation12], 1
    %11087 = vsyncpa [#allocation15], 1
    %11088 = vsyncpa [#allocation18], 1
    %11089 = vsyncpa [#allocation21], 1
    %11090 = vsyncpa [#allocation24], 1
    %11091 = vsyncpa [#allocation27], 1
    %11092 = vsyncpa [#allocation4], 1
    %s11093 = scalar_lea.sflag [#allocation4], 1
    %11094 = vsyncpa %s11093, 1

</llo_original>
